<compile_context>
chip_gen: v7x
topology: tpu7x:2x2x1
jax: 0.10.0
libtpu: 0.0.40
codegen_flags: <defaults>
</compile_context>

<pallas_src>
import jax
import jax.numpy as jnp
from jax.experimental import pallas as pl
from jax.experimental.pallas import tpu as pltpu


def aspp_forward(x, conv_ws, conv_bs, w_out, b_out, rates=(6, 12, 18)):
    """Fused ASPP forward. NCHW in / NCHW out.

    x        : (N, Cin, H, W)
    conv_ws  : list of 3 arrays, each (Cout, Cin, 3, 3)   (PyTorch OIHW)
    conv_bs  : list of 3 arrays, each (Cout,)
    w_out    : (Cout, 3*Cout)   1x1 projection weight (flattened OI)
    b_out    : (Cout,)
    """
    N, Cin, H, W = x.shape
    Cout = conv_ws[0].shape[0]
    nb = len(rates)
    max_r = max(rates)
    Hp, Wp = H + 2 * max_r, W + 2 * max_r
    HW = H * W
    cdtype = x.dtype

    # ---- glue: pad once, channels-last, pack per-tap weight matrices --------
    xp = jnp.pad(jnp.transpose(x, (0, 2, 3, 1)),
                 ((0, 0), (max_r, max_r), (max_r, max_r), (0, 0)))  # (N,Hp,Wp,Cin)

    # (nb, 9, Cin, Cout): tap t = ky*3 + kx  ->  W[:, :, ky, kx]^T
    wconv = jnp.stack([w.transpose(2, 3, 1, 0).reshape(9, Cin, Cout)
                       for w in conv_ws]).astype(cdtype)
    bconv = jnp.stack(conv_bs).reshape(nb, 1, Cout).astype(jnp.float32)
    # (nb, Cout, Cout): per-branch slice of the 1x1 projection (already .T)
    wout = jnp.stack([w_out[:, b * Cout:(b + 1) * Cout].T
                      for b in range(nb)]).astype(cdtype)
    bout = b_out.reshape(1, Cout).astype(jnp.float32)

    def kernel(x_ref, wconv_ref, bconv_ref, wout_ref, bout_ref, o_ref):
        out_acc = jnp.zeros((HW, Cout), jnp.float32)
        for b in range(nb):                        # static unroll: 3 branches
            r = rates[b]
            acc = jnp.zeros((HW, Cout), jnp.float32)
            for ky in range(3):                    # static unroll: 9 taps
                for kx in range(3):
                    dy = max_r + (ky - 1) * r
                    dx = max_r + (kx - 1) * r
                    patch = x_ref[0, dy:dy + H, dx:dx + W, :]   # (H, W, Cin)
                    patch2 = patch.reshape(HW, Cin)             # leading-dim merge
                    acc = acc + jnp.dot(patch2, wconv_ref[b, ky * 3 + kx],
                                        preferred_element_type=jnp.float32)
            branch = jnp.maximum(acc + bconv_ref[b], 0.0).astype(cdtype)  # ReLU
            out_acc = out_acc + jnp.dot(branch, wout_ref[b],
                                        preferred_element_type=jnp.float32)
        o_ref[0] = (out_acc + bout_ref[...]).astype(o_ref.dtype)

    itemsize = jnp.dtype(cdtype).itemsize
    cost = pl.CostEstimate(
        flops=int(2 * N * HW * Cout * nb * (9 * Cin + Cout)),
        transcendentals=0,
        bytes_accessed=int((xp.size + N * HW * Cout
                            + wconv.size + wout.size) * itemsize),
    )

    out = pl.pallas_call(
        kernel,
        out_shape=jax.ShapeDtypeStruct((N, HW, Cout), cdtype),
        grid_spec=pltpu.PrefetchScalarGridSpec(
            num_scalar_prefetch=0,
            grid=(N,),
            in_specs=[
                pl.BlockSpec((1, Hp, Wp, Cin), lambda n: (n, 0, 0, 0)),   # image
                pl.BlockSpec((nb, 9, Cin, Cout), lambda n: (0, 0, 0, 0)),  # conv W (resident)
                pl.BlockSpec((nb, 1, Cout), lambda n: (0, 0, 0)),          # conv b
                pl.BlockSpec((nb, Cout, Cout), lambda n: (0, 0, 0)),       # 1x1 W slices
                pl.BlockSpec((1, Cout), lambda n: (0, 0)),                 # 1x1 b
            ],
            out_specs=pl.BlockSpec((1, HW, Cout), lambda n: (n, 0, 0)),
        ),
        compiler_params=pltpu.CompilerParams(
            dimension_semantics=("parallel",),     # even grid -> both v7x TCs
            vmem_limit_bytes=32 * 1024 * 1024,
        ),
        cost_estimate=cost,
    )(xp, wconv, bconv, wout, bout)

    # (N, HW, Cout) -> (N, Cout, H, W)
    return jnp.transpose(out, (0, 2, 1)).reshape(N, Cout, H, W)


def aspp_reference(x, conv_ws, conv_bs, w_out, b_out, rates=(6, 12, 18)):
    """Pure-JAX reference (same math as the PyTorch module)."""
    hp = jax.lax.Precision.HIGHEST
    branches = []
    for w, b, r in zip(conv_ws, conv_bs, rates):
        y = jax.lax.conv_general_dilated(
            x, w, window_strides=(1, 1), padding=((r, r), (r, r)),
            rhs_dilation=(r, r),
            dimension_numbers=("NCHW", "OIHW", "NCHW"), precision=hp)
        branches.append(jnp.maximum(y + b[None, :, None, None], 0.0))
    cat = jnp.concatenate(branches, axis=1)
    y = jnp.einsum("oc,nchw->nohw", w_out, cat, precision=hp)
    return y + b_out[None, :, None, None]


if __name__ == "__main__":
    key = jax.random.PRNGKey(0)
    k = jax.random.split(key, 9)

    N, Cin, Cout, H, W = 2, 4, 8, 16, 16
    rates = (6, 12, 18)

    x = jax.random.normal(k[0], (N, Cin, H, W), jnp.float32)
    # Kaiming-normal-ish conv weights (exact init values are irrelevant to the kernel)
    conv_ws = [jax.random.normal(k[1 + i], (Cout, Cin, 3, 3), jnp.float32)
               * jnp.sqrt(2.0 / (Cin * 9)) for i in range(3)]
    conv_bs = [0.1 * jax.random.normal(k[4 + i], (Cout,), jnp.float32)
               for i in range(3)]
    w_out = jax.random.normal(k[7], (Cout, 3 * Cout), jnp.float32) \
        * jnp.sqrt(2.0 / (3 * Cout))
    b_out = 0.1 * jax.random.normal(k[8], (Cout,), jnp.float32)

    y = aspp_forward(x, conv_ws, conv_bs, w_out, b_out, rates=rates)
    y = jax.block_until_ready(y)

    y_ref = aspp_reference(x, conv_ws, conv_bs, w_out, b_out, rates=rates)

    assert y.shape == (N, Cout, H, W), y.shape
    assert y.dtype == x.dtype
    max_err = float(jnp.max(jnp.abs(y - y_ref)))
    assert jnp.allclose(y, y_ref, atol=2e-2, rtol=2e-2), f"mismatch, max_err={max_err}"
    print("KERNEL_OK")
</pallas_src>

<mosaic_0001>
module attributes {stable_mosaic.version = 11 : i64} {
  func.func @kernel(%arg0: i32, %arg1: memref<1x52x52x4xf32, #tpu.memory_space<vmem>>, %arg2: memref<3x9x4x8xf32, #tpu.memory_space<vmem>>, %arg3: memref<3x1x8xf32, #tpu.memory_space<vmem>>, %arg4: memref<3x8x8xf32, #tpu.memory_space<vmem>>, %arg5: memref<1x8xf32, #tpu.memory_space<vmem>>, %arg6: memref<1x256x8xf32, #tpu.memory_space<vmem>>) attributes {dimension_semantics = [#tpu.dimension_semantics<parallel>], iteration_bounds = array<i64: 2>, scalar_prefetch = 0 : i64, scratch_operands = 0 : i64, tpu.core_type = #tpu.core_type<tc>, window_params = [{transform_indices = @transform_0, window_bounds = array<i64: 1, 52, 52, 4>}, {pipeline_mode = #tpu.pipeline_mode<synchronous>, transform_indices = @transform_1, window_bounds = array<i64: 3, 9, 4, 8>}, {pipeline_mode = #tpu.pipeline_mode<synchronous>, transform_indices = @transform_2, window_bounds = array<i64: 3, 1, 8>}, {pipeline_mode = #tpu.pipeline_mode<synchronous>, transform_indices = @transform_3, window_bounds = array<i64: 3, 8, 8>}, {pipeline_mode = #tpu.pipeline_mode<synchronous>, transform_indices = @transform_4, window_bounds = array<i64: 1, 8>}, {transform_indices = @transform_5, window_bounds = array<i64: 1, 256, 8>}]} {
    %cst = arith.constant 0.000000e+00 : f32
    %0 = vector.broadcast %cst : f32 to vector<256x8xf32>
    %cst_0 = arith.constant 0.000000e+00 : f32
    %1 = vector.broadcast %cst_0 : f32 to vector<256x8xf32>
    %c0 = arith.constant 0 : index
    %c12 = arith.constant 12 : index
    %c12_1 = arith.constant 12 : index
    %c0_2 = arith.constant 0 : index
    %2 = vector.load %arg1[%c0, %c12, %c12_1, %c0_2] : memref<1x52x52x4xf32, #tpu.memory_space<vmem>>, vector<1x16x16x4xf32>
    %3 = vector.shape_cast %2 : vector<1x16x16x4xf32> to vector<16x16x4xf32>
    %4 = vector.shape_cast %3 : vector<16x16x4xf32> to vector<256x4xf32>
    %c0_3 = arith.constant 0 : index
    %c0_4 = arith.constant 0 : index
    %c0_5 = arith.constant 0 : index
    %c0_6 = arith.constant 0 : index
    %5 = vector.load %arg2[%c0_3, %c0_4, %c0_5, %c0_6] : memref<3x9x4x8xf32, #tpu.memory_space<vmem>>, vector<1x1x4x8xf32>
    %6 = vector.shape_cast %5 : vector<1x1x4x8xf32> to vector<4x8xf32>
    %cst_7 = arith.constant dense<0.000000e+00> : vector<256x8xf32>
    %7 = tpu.matmul %4, %6, %cst_7 {dimension_numbers = #tpu.dot_dimension_numbers<[1], [0], [0], [1], [0, 0, 1, 1], [], []>} : vector<256x4xf32>, vector<4x8xf32>, vector<256x8xf32> -> vector<256x8xf32>
    %8 = arith.addf %1, %7 : vector<256x8xf32>
    %c0_8 = arith.constant 0 : index
    %c12_9 = arith.constant 12 : index
    %c18 = arith.constant 18 : index
    %c0_10 = arith.constant 0 : index
    %9 = vector.load %arg1[%c0_8, %c12_9, %c18, %c0_10] : memref<1x52x52x4xf32, #tpu.memory_space<vmem>>, vector<1x16x16x4xf32>
    %10 = vector.shape_cast %9 : vector<1x16x16x4xf32> to vector<16x16x4xf32>
    %11 = vector.shape_cast %10 : vector<16x16x4xf32> to vector<256x4xf32>
    %c0_11 = arith.constant 0 : index
    %c1 = arith.constant 1 : index
    %c0_12 = arith.constant 0 : index
    %c0_13 = arith.constant 0 : index
    %12 = vector.load %arg2[%c0_11, %c1, %c0_12, %c0_13] : memref<3x9x4x8xf32, #tpu.memory_space<vmem>>, vector<1x1x4x8xf32>
    %13 = vector.shape_cast %12 : vector<1x1x4x8xf32> to vector<4x8xf32>
    %cst_14 = arith.constant dense<0.000000e+00> : vector<256x8xf32>
    %14 = tpu.matmul %11, %13, %cst_14 {dimension_numbers = #tpu.dot_dimension_numbers<[1], [0], [0], [1], [0, 0, 1, 1], [], []>} : vector<256x4xf32>, vector<4x8xf32>, vector<256x8xf32> -> vector<256x8xf32>
    %15 = arith.addf %8, %14 : vector<256x8xf32>
    %c0_15 = arith.constant 0 : index
    %c12_16 = arith.constant 12 : index
    %c24 = arith.constant 24 : index
    %c0_17 = arith.constant 0 : index
    %16 = vector.load %arg1[%c0_15, %c12_16, %c24, %c0_17] : memref<1x52x52x4xf32, #tpu.memory_space<vmem>>, vector<1x16x16x4xf32>
    %17 = vector.shape_cast %16 : vector<1x16x16x4xf32> to vector<16x16x4xf32>
    %18 = vector.shape_cast %17 : vector<16x16x4xf32> to vector<256x4xf32>
    %c0_18 = arith.constant 0 : index
    %c2 = arith.constant 2 : index
    %c0_19 = arith.constant 0 : index
    %c0_20 = arith.constant 0 : index
    %19 = vector.load %arg2[%c0_18, %c2, %c0_19, %c0_20] : memref<3x9x4x8xf32, #tpu.memory_space<vmem>>, vector<1x1x4x8xf32>
    %20 = vector.shape_cast %19 : vector<1x1x4x8xf32> to vector<4x8xf32>
    %cst_21 = arith.constant dense<0.000000e+00> : vector<256x8xf32>
    %21 = tpu.matmul %18, %20, %cst_21 {dimension_numbers = #tpu.dot_dimension_numbers<[1], [0], [0], [1], [0, 0, 1, 1], [], []>} : vector<256x4xf32>, vector<4x8xf32>, vector<256x8xf32> -> vector<256x8xf32>
    %22 = arith.addf %15, %21 : vector<256x8xf32>
    %c0_22 = arith.constant 0 : index
    %c18_23 = arith.constant 18 : index
    %c12_24 = arith.constant 12 : index
    %c0_25 = arith.constant 0 : index
    %23 = vector.load %arg1[%c0_22, %c18_23, %c12_24, %c0_25] : memref<1x52x52x4xf32, #tpu.memory_space<vmem>>, vector<1x16x16x4xf32>
    %24 = vector.shape_cast %23 : vector<1x16x16x4xf32> to vector<16x16x4xf32>
    %25 = vector.shape_cast %24 : vector<16x16x4xf32> to vector<256x4xf32>
    %c0_26 = arith.constant 0 : index
    %c3 = arith.constant 3 : index
    %c0_27 = arith.constant 0 : index
    %c0_28 = arith.constant 0 : index
    %26 = vector.load %arg2[%c0_26, %c3, %c0_27, %c0_28] : memref<3x9x4x8xf32, #tpu.memory_space<vmem>>, vector<1x1x4x8xf32>
    %27 = vector.shape_cast %26 : vector<1x1x4x8xf32> to vector<4x8xf32>
    %cst_29 = arith.constant dense<0.000000e+00> : vector<256x8xf32>
    %28 = tpu.matmul %25, %27, %cst_29 {dimension_numbers = #tpu.dot_dimension_numbers<[1], [0], [0], [1], [0, 0, 1, 1], [], []>} : vector<256x4xf32>, vector<4x8xf32>, vector<256x8xf32> -> vector<256x8xf32>
    %29 = arith.addf %22, %28 : vector<256x8xf32>
    %c0_30 = arith.constant 0 : index
    %c18_31 = arith.constant 18 : index
    %c18_32 = arith.constant 18 : index
    %c0_33 = arith.constant 0 : index
    %30 = vector.load %arg1[%c0_30, %c18_31, %c18_32, %c0_33] : memref<1x52x52x4xf32, #tpu.memory_space<vmem>>, vector<1x16x16x4xf32>
    %31 = vector.shape_cast %30 : vector<1x16x16x4xf32> to vector<16x16x4xf32>
    %32 = vector.shape_cast %31 : vector<16x16x4xf32> to vector<256x4xf32>
    %c0_34 = arith.constant 0 : index
    %c4 = arith.constant 4 : index
    %c0_35 = arith.constant 0 : index
    %c0_36 = arith.constant 0 : index
    %33 = vector.load %arg2[%c0_34, %c4, %c0_35, %c0_36] : memref<3x9x4x8xf32, #tpu.memory_space<vmem>>, vector<1x1x4x8xf32>
    %34 = vector.shape_cast %33 : vector<1x1x4x8xf32> to vector<4x8xf32>
    %cst_37 = arith.constant dense<0.000000e+00> : vector<256x8xf32>
    %35 = tpu.matmul %32, %34, %cst_37 {dimension_numbers = #tpu.dot_dimension_numbers<[1], [0], [0], [1], [0, 0, 1, 1], [], []>} : vector<256x4xf32>, vector<4x8xf32>, vector<256x8xf32> -> vector<256x8xf32>
    %36 = arith.addf %29, %35 : vector<256x8xf32>
    %c0_38 = arith.constant 0 : index
    %c18_39 = arith.constant 18 : index
    %c24_40 = arith.constant 24 : index
    %c0_41 = arith.constant 0 : index
    %37 = vector.load %arg1[%c0_38, %c18_39, %c24_40, %c0_41] : memref<1x52x52x4xf32, #tpu.memory_space<vmem>>, vector<1x16x16x4xf32>
    %38 = vector.shape_cast %37 : vector<1x16x16x4xf32> to vector<16x16x4xf32>
    %39 = vector.shape_cast %38 : vector<16x16x4xf32> to vector<256x4xf32>
    %c0_42 = arith.constant 0 : index
    %c5 = arith.constant 5 : index
    %c0_43 = arith.constant 0 : index
    %c0_44 = arith.constant 0 : index
    %40 = vector.load %arg2[%c0_42, %c5, %c0_43, %c0_44] : memref<3x9x4x8xf32, #tpu.memory_space<vmem>>, vector<1x1x4x8xf32>
    %41 = vector.shape_cast %40 : vector<1x1x4x8xf32> to vector<4x8xf32>
    %cst_45 = arith.constant dense<0.000000e+00> : vector<256x8xf32>
    %42 = tpu.matmul %39, %41, %cst_45 {dimension_numbers = #tpu.dot_dimension_numbers<[1], [0], [0], [1], [0, 0, 1, 1], [], []>} : vector<256x4xf32>, vector<4x8xf32>, vector<256x8xf32> -> vector<256x8xf32>
    %43 = arith.addf %36, %42 : vector<256x8xf32>
    %c0_46 = arith.constant 0 : index
    %c24_47 = arith.constant 24 : index
    %c12_48 = arith.constant 12 : index
    %c0_49 = arith.constant 0 : index
    %44 = vector.load %arg1[%c0_46, %c24_47, %c12_48, %c0_49] : memref<1x52x52x4xf32, #tpu.memory_space<vmem>>, vector<1x16x16x4xf32>
    %45 = vector.shape_cast %44 : vector<1x16x16x4xf32> to vector<16x16x4xf32>
    %46 = vector.shape_cast %45 : vector<16x16x4xf32> to vector<256x4xf32>
    %c0_50 = arith.constant 0 : index
    %c6 = arith.constant 6 : index
    %c0_51 = arith.constant 0 : index
    %c0_52 = arith.constant 0 : index
    %47 = vector.load %arg2[%c0_50, %c6, %c0_51, %c0_52] : memref<3x9x4x8xf32, #tpu.memory_space<vmem>>, vector<1x1x4x8xf32>
    %48 = vector.shape_cast %47 : vector<1x1x4x8xf32> to vector<4x8xf32>
    %cst_53 = arith.constant dense<0.000000e+00> : vector<256x8xf32>
    %49 = tpu.matmul %46, %48, %cst_53 {dimension_numbers = #tpu.dot_dimension_numbers<[1], [0], [0], [1], [0, 0, 1, 1], [], []>} : vector<256x4xf32>, vector<4x8xf32>, vector<256x8xf32> -> vector<256x8xf32>
    %50 = arith.addf %43, %49 : vector<256x8xf32>
    %c0_54 = arith.constant 0 : index
    %c24_55 = arith.constant 24 : index
    %c18_56 = arith.constant 18 : index
    %c0_57 = arith.constant 0 : index
    %51 = vector.load %arg1[%c0_54, %c24_55, %c18_56, %c0_57] : memref<1x52x52x4xf32, #tpu.memory_space<vmem>>, vector<1x16x16x4xf32>
    %52 = vector.shape_cast %51 : vector<1x16x16x4xf32> to vector<16x16x4xf32>
    %53 = vector.shape_cast %52 : vector<16x16x4xf32> to vector<256x4xf32>
    %c0_58 = arith.constant 0 : index
    %c7 = arith.constant 7 : index
    %c0_59 = arith.constant 0 : index
    %c0_60 = arith.constant 0 : index
    %54 = vector.load %arg2[%c0_58, %c7, %c0_59, %c0_60] : memref<3x9x4x8xf32, #tpu.memory_space<vmem>>, vector<1x1x4x8xf32>
    %55 = vector.shape_cast %54 : vector<1x1x4x8xf32> to vector<4x8xf32>
    %cst_61 = arith.constant dense<0.000000e+00> : vector<256x8xf32>
    %56 = tpu.matmul %53, %55, %cst_61 {dimension_numbers = #tpu.dot_dimension_numbers<[1], [0], [0], [1], [0, 0, 1, 1], [], []>} : vector<256x4xf32>, vector<4x8xf32>, vector<256x8xf32> -> vector<256x8xf32>
    %57 = arith.addf %50, %56 : vector<256x8xf32>
    %c0_62 = arith.constant 0 : index
    %c24_63 = arith.constant 24 : index
    %c24_64 = arith.constant 24 : index
    %c0_65 = arith.constant 0 : index
    %58 = vector.load %arg1[%c0_62, %c24_63, %c24_64, %c0_65] : memref<1x52x52x4xf32, #tpu.memory_space<vmem>>, vector<1x16x16x4xf32>
    %59 = vector.shape_cast %58 : vector<1x16x16x4xf32> to vector<16x16x4xf32>
    %60 = vector.shape_cast %59 : vector<16x16x4xf32> to vector<256x4xf32>
    %c0_66 = arith.constant 0 : index
    %c8 = arith.constant 8 : index
    %c0_67 = arith.constant 0 : index
    %c0_68 = arith.constant 0 : index
    %61 = vector.load %arg2[%c0_66, %c8, %c0_67, %c0_68] : memref<3x9x4x8xf32, #tpu.memory_space<vmem>>, vector<1x1x4x8xf32>
    %62 = vector.shape_cast %61 : vector<1x1x4x8xf32> to vector<4x8xf32>
    %cst_69 = arith.constant dense<0.000000e+00> : vector<256x8xf32>
    %63 = tpu.matmul %60, %62, %cst_69 {dimension_numbers = #tpu.dot_dimension_numbers<[1], [0], [0], [1], [0, 0, 1, 1], [], []>} : vector<256x4xf32>, vector<4x8xf32>, vector<256x8xf32> -> vector<256x8xf32>
    %64 = arith.addf %57, %63 : vector<256x8xf32>
    %c0_70 = arith.constant 0 : index
    %c0_71 = arith.constant 0 : index
    %c0_72 = arith.constant 0 : index
    %65 = vector.load %arg3[%c0_70, %c0_71, %c0_72] : memref<3x1x8xf32, #tpu.memory_space<vmem>>, vector<1x1x8xf32>
    %66 = vector.shape_cast %65 : vector<1x1x8xf32> to vector<1x8xf32>
    %67 = vector.broadcast %66 : vector<1x8xf32> to vector<256x8xf32>
    %68 = arith.addf %64, %67 : vector<256x8xf32>
    %cst_73 = arith.constant 0.000000e+00 : f32
    %69 = vector.broadcast %cst_73 : f32 to vector<256x8xf32>
    %70 = arith.maximumf %68, %69 : vector<256x8xf32>
    %c0_74 = arith.constant 0 : index
    %c0_75 = arith.constant 0 : index
    %c0_76 = arith.constant 0 : index
    %71 = vector.load %arg4[%c0_74, %c0_75, %c0_76] : memref<3x8x8xf32, #tpu.memory_space<vmem>>, vector<1x8x8xf32>
    %72 = vector.shape_cast %71 : vector<1x8x8xf32> to vector<8x8xf32>
    %cst_77 = arith.constant dense<0.000000e+00> : vector<256x8xf32>
    %73 = tpu.matmul %70, %72, %cst_77 {dimension_numbers = #tpu.dot_dimension_numbers<[1], [0], [0], [1], [0, 0, 1, 1], [], []>} : vector<256x8xf32>, vector<8x8xf32>, vector<256x8xf32> -> vector<256x8xf32>
    %74 = arith.addf %0, %73 : vector<256x8xf32>
    %cst_78 = arith.constant 0.000000e+00 : f32
    %75 = vector.broadcast %cst_78 : f32 to vector<256x8xf32>
    %c0_79 = arith.constant 0 : index
    %c6_80 = arith.constant 6 : index
    %c6_81 = arith.constant 6 : index
    %c0_82 = arith.constant 0 : index
    %76 = vector.load %arg1[%c0_79, %c6_80, %c6_81, %c0_82] : memref<1x52x52x4xf32, #tpu.memory_space<vmem>>, vector<1x16x16x4xf32>
    %77 = vector.shape_cast %76 : vector<1x16x16x4xf32> to vector<16x16x4xf32>
    %78 = vector.shape_cast %77 : vector<16x16x4xf32> to vector<256x4xf32>
    %c1_83 = arith.constant 1 : index
    %c0_84 = arith.constant 0 : index
    %c0_85 = arith.constant 0 : index
    %c0_86 = arith.constant 0 : index
    %79 = vector.load %arg2[%c1_83, %c0_84, %c0_85, %c0_86] : memref<3x9x4x8xf32, #tpu.memory_space<vmem>>, vector<1x1x4x8xf32>
    %80 = vector.shape_cast %79 : vector<1x1x4x8xf32> to vector<4x8xf32>
    %cst_87 = arith.constant dense<0.000000e+00> : vector<256x8xf32>
    %81 = tpu.matmul %78, %80, %cst_87 {dimension_numbers = #tpu.dot_dimension_numbers<[1], [0], [0], [1], [0, 0, 1, 1], [], []>} : vector<256x4xf32>, vector<4x8xf32>, vector<256x8xf32> -> vector<256x8xf32>
    %82 = arith.addf %75, %81 : vector<256x8xf32>
    %c0_88 = arith.constant 0 : index
    %c6_89 = arith.constant 6 : index
    %c18_90 = arith.constant 18 : index
    %c0_91 = arith.constant 0 : index
    %83 = vector.load %arg1[%c0_88, %c6_89, %c18_90, %c0_91] : memref<1x52x52x4xf32, #tpu.memory_space<vmem>>, vector<1x16x16x4xf32>
    %84 = vector.shape_cast %83 : vector<1x16x16x4xf32> to vector<16x16x4xf32>
    %85 = vector.shape_cast %84 : vector<16x16x4xf32> to vector<256x4xf32>
    %c1_92 = arith.constant 1 : index
    %c1_93 = arith.constant 1 : index
    %c0_94 = arith.constant 0 : index
    %c0_95 = arith.constant 0 : index
    %86 = vector.load %arg2[%c1_92, %c1_93, %c0_94, %c0_95] : memref<3x9x4x8xf32, #tpu.memory_space<vmem>>, vector<1x1x4x8xf32>
    %87 = vector.shape_cast %86 : vector<1x1x4x8xf32> to vector<4x8xf32>
    %cst_96 = arith.constant dense<0.000000e+00> : vector<256x8xf32>
    %88 = tpu.matmul %85, %87, %cst_96 {dimension_numbers = #tpu.dot_dimension_numbers<[1], [0], [0], [1], [0, 0, 1, 1], [], []>} : vector<256x4xf32>, vector<4x8xf32>, vector<256x8xf32> -> vector<256x8xf32>
    %89 = arith.addf %82, %88 : vector<256x8xf32>
    %c0_97 = arith.constant 0 : index
    %c6_98 = arith.constant 6 : index
    %c30 = arith.constant 30 : index
    %c0_99 = arith.constant 0 : index
    %90 = vector.load %arg1[%c0_97, %c6_98, %c30, %c0_99] : memref<1x52x52x4xf32, #tpu.memory_space<vmem>>, vector<1x16x16x4xf32>
    %91 = vector.shape_cast %90 : vector<1x16x16x4xf32> to vector<16x16x4xf32>
    %92 = vector.shape_cast %91 : vector<16x16x4xf32> to vector<256x4xf32>
    %c1_100 = arith.constant 1 : index
    %c2_101 = arith.constant 2 : index
    %c0_102 = arith.constant 0 : index
    %c0_103 = arith.constant 0 : index
    %93 = vector.load %arg2[%c1_100, %c2_101, %c0_102, %c0_103] : memref<3x9x4x8xf32, #tpu.memory_space<vmem>>, vector<1x1x4x8xf32>
    %94 = vector.shape_cast %93 : vector<1x1x4x8xf32> to vector<4x8xf32>
    %cst_104 = arith.constant dense<0.000000e+00> : vector<256x8xf32>
    %95 = tpu.matmul %92, %94, %cst_104 {dimension_numbers = #tpu.dot_dimension_numbers<[1], [0], [0], [1], [0, 0, 1, 1], [], []>} : vector<256x4xf32>, vector<4x8xf32>, vector<256x8xf32> -> vector<256x8xf32>
    %96 = arith.addf %89, %95 : vector<256x8xf32>
    %c0_105 = arith.constant 0 : index
    %c18_106 = arith.constant 18 : index
    %c6_107 = arith.constant 6 : index
    %c0_108 = arith.constant 0 : index
    %97 = vector.load %arg1[%c0_105, %c18_106, %c6_107, %c0_108] : memref<1x52x52x4xf32, #tpu.memory_space<vmem>>, vector<1x16x16x4xf32>
    %98 = vector.shape_cast %97 : vector<1x16x16x4xf32> to vector<16x16x4xf32>
    %99 = vector.shape_cast %98 : vector<16x16x4xf32> to vector<256x4xf32>
    %c1_109 = arith.constant 1 : index
    %c3_110 = arith.constant 3 : index
    %c0_111 = arith.constant 0 : index
    %c0_112 = arith.constant 0 : index
    %100 = vector.load %arg2[%c1_109, %c3_110, %c0_111, %c0_112] : memref<3x9x4x8xf32, #tpu.memory_space<vmem>>, vector<1x1x4x8xf32>
    %101 = vector.shape_cast %100 : vector<1x1x4x8xf32> to vector<4x8xf32>
    %cst_113 = arith.constant dense<0.000000e+00> : vector<256x8xf32>
    %102 = tpu.matmul %99, %101, %cst_113 {dimension_numbers = #tpu.dot_dimension_numbers<[1], [0], [0], [1], [0, 0, 1, 1], [], []>} : vector<256x4xf32>, vector<4x8xf32>, vector<256x8xf32> -> vector<256x8xf32>
    %103 = arith.addf %96, %102 : vector<256x8xf32>
    %c0_114 = arith.constant 0 : index
    %c18_115 = arith.constant 18 : index
    %c18_116 = arith.constant 18 : index
    %c0_117 = arith.constant 0 : index
    %104 = vector.load %arg1[%c0_114, %c18_115, %c18_116, %c0_117] : memref<1x52x52x4xf32, #tpu.memory_space<vmem>>, vector<1x16x16x4xf32>
    %105 = vector.shape_cast %104 : vector<1x16x16x4xf32> to vector<16x16x4xf32>
    %106 = vector.shape_cast %105 : vector<16x16x4xf32> to vector<256x4xf32>
    %c1_118 = arith.constant 1 : index
    %c4_119 = arith.constant 4 : index
    %c0_120 = arith.constant 0 : index
    %c0_121 = arith.constant 0 : index
    %107 = vector.load %arg2[%c1_118, %c4_119, %c0_120, %c0_121] : memref<3x9x4x8xf32, #tpu.memory_space<vmem>>, vector<1x1x4x8xf32>
    %108 = vector.shape_cast %107 : vector<1x1x4x8xf32> to vector<4x8xf32>
    %cst_122 = arith.constant dense<0.000000e+00> : vector<256x8xf32>
    %109 = tpu.matmul %106, %108, %cst_122 {dimension_numbers = #tpu.dot_dimension_numbers<[1], [0], [0], [1], [0, 0, 1, 1], [], []>} : vector<256x4xf32>, vector<4x8xf32>, vector<256x8xf32> -> vector<256x8xf32>
    %110 = arith.addf %103, %109 : vector<256x8xf32>
    %c0_123 = arith.constant 0 : index
    %c18_124 = arith.constant 18 : index
    %c30_125 = arith.constant 30 : index
    %c0_126 = arith.constant 0 : index
    %111 = vector.load %arg1[%c0_123, %c18_124, %c30_125, %c0_126] : memref<1x52x52x4xf32, #tpu.memory_space<vmem>>, vector<1x16x16x4xf32>
    %112 = vector.shape_cast %111 : vector<1x16x16x4xf32> to vector<16x16x4xf32>
    %113 = vector.shape_cast %112 : vector<16x16x4xf32> to vector<256x4xf32>
    %c1_127 = arith.constant 1 : index
    %c5_128 = arith.constant 5 : index
    %c0_129 = arith.constant 0 : index
    %c0_130 = arith.constant 0 : index
    %114 = vector.load %arg2[%c1_127, %c5_128, %c0_129, %c0_130] : memref<3x9x4x8xf32, #tpu.memory_space<vmem>>, vector<1x1x4x8xf32>
    %115 = vector.shape_cast %114 : vector<1x1x4x8xf32> to vector<4x8xf32>
    %cst_131 = arith.constant dense<0.000000e+00> : vector<256x8xf32>
    %116 = tpu.matmul %113, %115, %cst_131 {dimension_numbers = #tpu.dot_dimension_numbers<[1], [0], [0], [1], [0, 0, 1, 1], [], []>} : vector<256x4xf32>, vector<4x8xf32>, vector<256x8xf32> -> vector<256x8xf32>
    %117 = arith.addf %110, %116 : vector<256x8xf32>
    %c0_132 = arith.constant 0 : index
    %c30_133 = arith.constant 30 : index
    %c6_134 = arith.constant 6 : index
    %c0_135 = arith.constant 0 : index
    %118 = vector.load %arg1[%c0_132, %c30_133, %c6_134, %c0_135] : memref<1x52x52x4xf32, #tpu.memory_space<vmem>>, vector<1x16x16x4xf32>
    %119 = vector.shape_cast %118 : vector<1x16x16x4xf32> to vector<16x16x4xf32>
    %120 = vector.shape_cast %119 : vector<16x16x4xf32> to vector<256x4xf32>
    %c1_136 = arith.constant 1 : index
    %c6_137 = arith.constant 6 : index
    %c0_138 = arith.constant 0 : index
    %c0_139 = arith.constant 0 : index
    %121 = vector.load %arg2[%c1_136, %c6_137, %c0_138, %c0_139] : memref<3x9x4x8xf32, #tpu.memory_space<vmem>>, vector<1x1x4x8xf32>
    %122 = vector.shape_cast %121 : vector<1x1x4x8xf32> to vector<4x8xf32>
    %cst_140 = arith.constant dense<0.000000e+00> : vector<256x8xf32>
    %123 = tpu.matmul %120, %122, %cst_140 {dimension_numbers = #tpu.dot_dimension_numbers<[1], [0], [0], [1], [0, 0, 1, 1], [], []>} : vector<256x4xf32>, vector<4x8xf32>, vector<256x8xf32> -> vector<256x8xf32>
    %124 = arith.addf %117, %123 : vector<256x8xf32>
    %c0_141 = arith.constant 0 : index
    %c30_142 = arith.constant 30 : index
    %c18_143 = arith.constant 18 : index
    %c0_144 = arith.constant 0 : index
    %125 = vector.load %arg1[%c0_141, %c30_142, %c18_143, %c0_144] : memref<1x52x52x4xf32, #tpu.memory_space<vmem>>, vector<1x16x16x4xf32>
    %126 = vector.shape_cast %125 : vector<1x16x16x4xf32> to vector<16x16x4xf32>
    %127 = vector.shape_cast %126 : vector<16x16x4xf32> to vector<256x4xf32>
    %c1_145 = arith.constant 1 : index
    %c7_146 = arith.constant 7 : index
    %c0_147 = arith.constant 0 : index
    %c0_148 = arith.constant 0 : index
    %128 = vector.load %arg2[%c1_145, %c7_146, %c0_147, %c0_148] : memref<3x9x4x8xf32, #tpu.memory_space<vmem>>, vector<1x1x4x8xf32>
    %129 = vector.shape_cast %128 : vector<1x1x4x8xf32> to vector<4x8xf32>
    %cst_149 = arith.constant dense<0.000000e+00> : vector<256x8xf32>
    %130 = tpu.matmul %127, %129, %cst_149 {dimension_numbers = #tpu.dot_dimension_numbers<[1], [0], [0], [1], [0, 0, 1, 1], [], []>} : vector<256x4xf32>, vector<4x8xf32>, vector<256x8xf32> -> vector<256x8xf32>
    %131 = arith.addf %124, %130 : vector<256x8xf32>
    %c0_150 = arith.constant 0 : index
    %c30_151 = arith.constant 30 : index
    %c30_152 = arith.constant 30 : index
    %c0_153 = arith.constant 0 : index
    %132 = vector.load %arg1[%c0_150, %c30_151, %c30_152, %c0_153] : memref<1x52x52x4xf32, #tpu.memory_space<vmem>>, vector<1x16x16x4xf32>
    %133 = vector.shape_cast %132 : vector<1x16x16x4xf32> to vector<16x16x4xf32>
    %134 = vector.shape_cast %133 : vector<16x16x4xf32> to vector<256x4xf32>
    %c1_154 = arith.constant 1 : index
    %c8_155 = arith.constant 8 : index
    %c0_156 = arith.constant 0 : index
    %c0_157 = arith.constant 0 : index
    %135 = vector.load %arg2[%c1_154, %c8_155, %c0_156, %c0_157] : memref<3x9x4x8xf32, #tpu.memory_space<vmem>>, vector<1x1x4x8xf32>
    %136 = vector.shape_cast %135 : vector<1x1x4x8xf32> to vector<4x8xf32>
    %cst_158 = arith.constant dense<0.000000e+00> : vector<256x8xf32>
    %137 = tpu.matmul %134, %136, %cst_158 {dimension_numbers = #tpu.dot_dimension_numbers<[1], [0], [0], [1], [0, 0, 1, 1], [], []>} : vector<256x4xf32>, vector<4x8xf32>, vector<256x8xf32> -> vector<256x8xf32>
    %138 = arith.addf %131, %137 : vector<256x8xf32>
    %c1_159 = arith.constant 1 : index
    %c0_160 = arith.constant 0 : index
    %c0_161 = arith.constant 0 : index
    %139 = vector.load %arg3[%c1_159, %c0_160, %c0_161] : memref<3x1x8xf32, #tpu.memory_space<vmem>>, vector<1x1x8xf32>
    %140 = vector.shape_cast %139 : vector<1x1x8xf32> to vector<1x8xf32>
    %141 = vector.broadcast %140 : vector<1x8xf32> to vector<256x8xf32>
    %142 = arith.addf %138, %141 : vector<256x8xf32>
    %cst_162 = arith.constant 0.000000e+00 : f32
    %143 = vector.broadcast %cst_162 : f32 to vector<256x8xf32>
    %144 = arith.maximumf %142, %143 : vector<256x8xf32>
    %c1_163 = arith.constant 1 : index
    %c0_164 = arith.constant 0 : index
    %c0_165 = arith.constant 0 : index
    %145 = vector.load %arg4[%c1_163, %c0_164, %c0_165] : memref<3x8x8xf32, #tpu.memory_space<vmem>>, vector<1x8x8xf32>
    %146 = vector.shape_cast %145 : vector<1x8x8xf32> to vector<8x8xf32>
    %cst_166 = arith.constant dense<0.000000e+00> : vector<256x8xf32>
    %147 = tpu.matmul %144, %146, %cst_166 {dimension_numbers = #tpu.dot_dimension_numbers<[1], [0], [0], [1], [0, 0, 1, 1], [], []>} : vector<256x8xf32>, vector<8x8xf32>, vector<256x8xf32> -> vector<256x8xf32>
    %148 = arith.addf %74, %147 : vector<256x8xf32>
    %cst_167 = arith.constant 0.000000e+00 : f32
    %149 = vector.broadcast %cst_167 : f32 to vector<256x8xf32>
    %c0_168 = arith.constant 0 : index
    %c0_169 = arith.constant 0 : index
    %c0_170 = arith.constant 0 : index
    %c0_171 = arith.constant 0 : index
    %150 = vector.load %arg1[%c0_168, %c0_169, %c0_170, %c0_171] : memref<1x52x52x4xf32, #tpu.memory_space<vmem>>, vector<1x16x16x4xf32>
    %151 = vector.shape_cast %150 : vector<1x16x16x4xf32> to vector<16x16x4xf32>
    %152 = vector.shape_cast %151 : vector<16x16x4xf32> to vector<256x4xf32>
    %c2_172 = arith.constant 2 : index
    %c0_173 = arith.constant 0 : index
    %c0_174 = arith.constant 0 : index
    %c0_175 = arith.constant 0 : index
    %153 = vector.load %arg2[%c2_172, %c0_173, %c0_174, %c0_175] : memref<3x9x4x8xf32, #tpu.memory_space<vmem>>, vector<1x1x4x8xf32>
    %154 = vector.shape_cast %153 : vector<1x1x4x8xf32> to vector<4x8xf32>
    %cst_176 = arith.constant dense<0.000000e+00> : vector<256x8xf32>
    %155 = tpu.matmul %152, %154, %cst_176 {dimension_numbers = #tpu.dot_dimension_numbers<[1], [0], [0], [1], [0, 0, 1, 1], [], []>} : vector<256x4xf32>, vector<4x8xf32>, vector<256x8xf32> -> vector<256x8xf32>
    %156 = arith.addf %149, %155 : vector<256x8xf32>
    %c0_177 = arith.constant 0 : index
    %c0_178 = arith.constant 0 : index
    %c18_179 = arith.constant 18 : index
    %c0_180 = arith.constant 0 : index
    %157 = vector.load %arg1[%c0_177, %c0_178, %c18_179, %c0_180] : memref<1x52x52x4xf32, #tpu.memory_space<vmem>>, vector<1x16x16x4xf32>
    %158 = vector.shape_cast %157 : vector<1x16x16x4xf32> to vector<16x16x4xf32>
    %159 = vector.shape_cast %158 : vector<16x16x4xf32> to vector<256x4xf32>
    %c2_181 = arith.constant 2 : index
    %c1_182 = arith.constant 1 : index
    %c0_183 = arith.constant 0 : index
    %c0_184 = arith.constant 0 : index
    %160 = vector.load %arg2[%c2_181, %c1_182, %c0_183, %c0_184] : memref<3x9x4x8xf32, #tpu.memory_space<vmem>>, vector<1x1x4x8xf32>
    %161 = vector.shape_cast %160 : vector<1x1x4x8xf32> to vector<4x8xf32>
    %cst_185 = arith.constant dense<0.000000e+00> : vector<256x8xf32>
    %162 = tpu.matmul %159, %161, %cst_185 {dimension_numbers = #tpu.dot_dimension_numbers<[1], [0], [0], [1], [0, 0, 1, 1], [], []>} : vector<256x4xf32>, vector<4x8xf32>, vector<256x8xf32> -> vector<256x8xf32>
    %163 = arith.addf %156, %162 : vector<256x8xf32>
    %c0_186 = arith.constant 0 : index
    %c0_187 = arith.constant 0 : index
    %c36 = arith.constant 36 : index
    %c0_188 = arith.constant 0 : index
    %164 = vector.load %arg1[%c0_186, %c0_187, %c36, %c0_188] : memref<1x52x52x4xf32, #tpu.memory_space<vmem>>, vector<1x16x16x4xf32>
    %165 = vector.shape_cast %164 : vector<1x16x16x4xf32> to vector<16x16x4xf32>
    %166 = vector.shape_cast %165 : vector<16x16x4xf32> to vector<256x4xf32>
    %c2_189 = arith.constant 2 : index
    %c2_190 = arith.constant 2 : index
    %c0_191 = arith.constant 0 : index
    %c0_192 = arith.constant 0 : index
    %167 = vector.load %arg2[%c2_189, %c2_190, %c0_191, %c0_192] : memref<3x9x4x8xf32, #tpu.memory_space<vmem>>, vector<1x1x4x8xf32>
    %168 = vector.shape_cast %167 : vector<1x1x4x8xf32> to vector<4x8xf32>
    %cst_193 = arith.constant dense<0.000000e+00> : vector<256x8xf32>
    %169 = tpu.matmul %166, %168, %cst_193 {dimension_numbers = #tpu.dot_dimension_numbers<[1], [0], [0], [1], [0, 0, 1, 1], [], []>} : vector<256x4xf32>, vector<4x8xf32>, vector<256x8xf32> -> vector<256x8xf32>
    %170 = arith.addf %163, %169 : vector<256x8xf32>
    %c0_194 = arith.constant 0 : index
    %c18_195 = arith.constant 18 : index
    %c0_196 = arith.constant 0 : index
    %c0_197 = arith.constant 0 : index
    %171 = vector.load %arg1[%c0_194, %c18_195, %c0_196, %c0_197] : memref<1x52x52x4xf32, #tpu.memory_space<vmem>>, vector<1x16x16x4xf32>
    %172 = vector.shape_cast %171 : vector<1x16x16x4xf32> to vector<16x16x4xf32>
    %173 = vector.shape_cast %172 : vector<16x16x4xf32> to vector<256x4xf32>
    %c2_198 = arith.constant 2 : index
    %c3_199 = arith.constant 3 : index
    %c0_200 = arith.constant 0 : index
    %c0_201 = arith.constant 0 : index
    %174 = vector.load %arg2[%c2_198, %c3_199, %c0_200, %c0_201] : memref<3x9x4x8xf32, #tpu.memory_space<vmem>>, vector<1x1x4x8xf32>
    %175 = vector.shape_cast %174 : vector<1x1x4x8xf32> to vector<4x8xf32>
    %cst_202 = arith.constant dense<0.000000e+00> : vector<256x8xf32>
    %176 = tpu.matmul %173, %175, %cst_202 {dimension_numbers = #tpu.dot_dimension_numbers<[1], [0], [0], [1], [0, 0, 1, 1], [], []>} : vector<256x4xf32>, vector<4x8xf32>, vector<256x8xf32> -> vector<256x8xf32>
    %177 = arith.addf %170, %176 : vector<256x8xf32>
    %c0_203 = arith.constant 0 : index
    %c18_204 = arith.constant 18 : index
    %c18_205 = arith.constant 18 : index
    %c0_206 = arith.constant 0 : index
    %178 = vector.load %arg1[%c0_203, %c18_204, %c18_205, %c0_206] : memref<1x52x52x4xf32, #tpu.memory_space<vmem>>, vector<1x16x16x4xf32>
    %179 = vector.shape_cast %178 : vector<1x16x16x4xf32> to vector<16x16x4xf32>
    %180 = vector.shape_cast %179 : vector<16x16x4xf32> to vector<256x4xf32>
    %c2_207 = arith.constant 2 : index
    %c4_208 = arith.constant 4 : index
    %c0_209 = arith.constant 0 : index
    %c0_210 = arith.constant 0 : index
    %181 = vector.load %arg2[%c2_207, %c4_208, %c0_209, %c0_210] : memref<3x9x4x8xf32, #tpu.memory_space<vmem>>, vector<1x1x4x8xf32>
    %182 = vector.shape_cast %181 : vector<1x1x4x8xf32> to vector<4x8xf32>
    %cst_211 = arith.constant dense<0.000000e+00> : vector<256x8xf32>
    %183 = tpu.matmul %180, %182, %cst_211 {dimension_numbers = #tpu.dot_dimension_numbers<[1], [0], [0], [1], [0, 0, 1, 1], [], []>} : vector<256x4xf32>, vector<4x8xf32>, vector<256x8xf32> -> vector<256x8xf32>
    %184 = arith.addf %177, %183 : vector<256x8xf32>
    %c0_212 = arith.constant 0 : index
    %c18_213 = arith.constant 18 : index
    %c36_214 = arith.constant 36 : index
    %c0_215 = arith.constant 0 : index
    %185 = vector.load %arg1[%c0_212, %c18_213, %c36_214, %c0_215] : memref<1x52x52x4xf32, #tpu.memory_space<vmem>>, vector<1x16x16x4xf32>
    %186 = vector.shape_cast %185 : vector<1x16x16x4xf32> to vector<16x16x4xf32>
    %187 = vector.shape_cast %186 : vector<16x16x4xf32> to vector<256x4xf32>
    %c2_216 = arith.constant 2 : index
    %c5_217 = arith.constant 5 : index
    %c0_218 = arith.constant 0 : index
    %c0_219 = arith.constant 0 : index
    %188 = vector.load %arg2[%c2_216, %c5_217, %c0_218, %c0_219] : memref<3x9x4x8xf32, #tpu.memory_space<vmem>>, vector<1x1x4x8xf32>
    %189 = vector.shape_cast %188 : vector<1x1x4x8xf32> to vector<4x8xf32>
    %cst_220 = arith.constant dense<0.000000e+00> : vector<256x8xf32>
    %190 = tpu.matmul %187, %189, %cst_220 {dimension_numbers = #tpu.dot_dimension_numbers<[1], [0], [0], [1], [0, 0, 1, 1], [], []>} : vector<256x4xf32>, vector<4x8xf32>, vector<256x8xf32> -> vector<256x8xf32>
    %191 = arith.addf %184, %190 : vector<256x8xf32>
    %c0_221 = arith.constant 0 : index
    %c36_222 = arith.constant 36 : index
    %c0_223 = arith.constant 0 : index
    %c0_224 = arith.constant 0 : index
    %192 = vector.load %arg1[%c0_221, %c36_222, %c0_223, %c0_224] : memref<1x52x52x4xf32, #tpu.memory_space<vmem>>, vector<1x16x16x4xf32>
    %193 = vector.shape_cast %192 : vector<1x16x16x4xf32> to vector<16x16x4xf32>
    %194 = vector.shape_cast %193 : vector<16x16x4xf32> to vector<256x4xf32>
    %c2_225 = arith.constant 2 : index
    %c6_226 = arith.constant 6 : index
    %c0_227 = arith.constant 0 : index
    %c0_228 = arith.constant 0 : index
    %195 = vector.load %arg2[%c2_225, %c6_226, %c0_227, %c0_228] : memref<3x9x4x8xf32, #tpu.memory_space<vmem>>, vector<1x1x4x8xf32>
    %196 = vector.shape_cast %195 : vector<1x1x4x8xf32> to vector<4x8xf32>
    %cst_229 = arith.constant dense<0.000000e+00> : vector<256x8xf32>
    %197 = tpu.matmul %194, %196, %cst_229 {dimension_numbers = #tpu.dot_dimension_numbers<[1], [0], [0], [1], [0, 0, 1, 1], [], []>} : vector<256x4xf32>, vector<4x8xf32>, vector<256x8xf32> -> vector<256x8xf32>
    %198 = arith.addf %191, %197 : vector<256x8xf32>
    %c0_230 = arith.constant 0 : index
    %c36_231 = arith.constant 36 : index
    %c18_232 = arith.constant 18 : index
    %c0_233 = arith.constant 0 : index
    %199 = vector.load %arg1[%c0_230, %c36_231, %c18_232, %c0_233] : memref<1x52x52x4xf32, #tpu.memory_space<vmem>>, vector<1x16x16x4xf32>
    %200 = vector.shape_cast %199 : vector<1x16x16x4xf32> to vector<16x16x4xf32>
    %201 = vector.shape_cast %200 : vector<16x16x4xf32> to vector<256x4xf32>
    %c2_234 = arith.constant 2 : index
    %c7_235 = arith.constant 7 : index
    %c0_236 = arith.constant 0 : index
    %c0_237 = arith.constant 0 : index
    %202 = vector.load %arg2[%c2_234, %c7_235, %c0_236, %c0_237] : memref<3x9x4x8xf32, #tpu.memory_space<vmem>>, vector<1x1x4x8xf32>
    %203 = vector.shape_cast %202 : vector<1x1x4x8xf32> to vector<4x8xf32>
    %cst_238 = arith.constant dense<0.000000e+00> : vector<256x8xf32>
    %204 = tpu.matmul %201, %203, %cst_238 {dimension_numbers = #tpu.dot_dimension_numbers<[1], [0], [0], [1], [0, 0, 1, 1], [], []>} : vector<256x4xf32>, vector<4x8xf32>, vector<256x8xf32> -> vector<256x8xf32>
    %205 = arith.addf %198, %204 : vector<256x8xf32>
    %c0_239 = arith.constant 0 : index
    %c36_240 = arith.constant 36 : index
    %c36_241 = arith.constant 36 : index
    %c0_242 = arith.constant 0 : index
    %206 = vector.load %arg1[%c0_239, %c36_240, %c36_241, %c0_242] : memref<1x52x52x4xf32, #tpu.memory_space<vmem>>, vector<1x16x16x4xf32>
    %207 = vector.shape_cast %206 : vector<1x16x16x4xf32> to vector<16x16x4xf32>
    %208 = vector.shape_cast %207 : vector<16x16x4xf32> to vector<256x4xf32>
    %c2_243 = arith.constant 2 : index
    %c8_244 = arith.constant 8 : index
    %c0_245 = arith.constant 0 : index
    %c0_246 = arith.constant 0 : index
    %209 = vector.load %arg2[%c2_243, %c8_244, %c0_245, %c0_246] : memref<3x9x4x8xf32, #tpu.memory_space<vmem>>, vector<1x1x4x8xf32>
    %210 = vector.shape_cast %209 : vector<1x1x4x8xf32> to vector<4x8xf32>
    %cst_247 = arith.constant dense<0.000000e+00> : vector<256x8xf32>
    %211 = tpu.matmul %208, %210, %cst_247 {dimension_numbers = #tpu.dot_dimension_numbers<[1], [0], [0], [1], [0, 0, 1, 1], [], []>} : vector<256x4xf32>, vector<4x8xf32>, vector<256x8xf32> -> vector<256x8xf32>
    %212 = arith.addf %205, %211 : vector<256x8xf32>
    %c2_248 = arith.constant 2 : index
    %c0_249 = arith.constant 0 : index
    %c0_250 = arith.constant 0 : index
    %213 = vector.load %arg3[%c2_248, %c0_249, %c0_250] : memref<3x1x8xf32, #tpu.memory_space<vmem>>, vector<1x1x8xf32>
    %214 = vector.shape_cast %213 : vector<1x1x8xf32> to vector<1x8xf32>
    %215 = vector.broadcast %214 : vector<1x8xf32> to vector<256x8xf32>
    %216 = arith.addf %212, %215 : vector<256x8xf32>
    %cst_251 = arith.constant 0.000000e+00 : f32
    %217 = vector.broadcast %cst_251 : f32 to vector<256x8xf32>
    %218 = arith.maximumf %216, %217 : vector<256x8xf32>
    %c2_252 = arith.constant 2 : index
    %c0_253 = arith.constant 0 : index
    %c0_254 = arith.constant 0 : index
    %219 = vector.load %arg4[%c2_252, %c0_253, %c0_254] : memref<3x8x8xf32, #tpu.memory_space<vmem>>, vector<1x8x8xf32>
    %220 = vector.shape_cast %219 : vector<1x8x8xf32> to vector<8x8xf32>
    %cst_255 = arith.constant dense<0.000000e+00> : vector<256x8xf32>
    %221 = tpu.matmul %218, %220, %cst_255 {dimension_numbers = #tpu.dot_dimension_numbers<[1], [0], [0], [1], [0, 0, 1, 1], [], []>} : vector<256x8xf32>, vector<8x8xf32>, vector<256x8xf32> -> vector<256x8xf32>
    %222 = arith.addf %148, %221 : vector<256x8xf32>
    %c0_256 = arith.constant 0 : index
    %c0_257 = arith.constant 0 : index
    %223 = vector.load %arg5[%c0_256, %c0_257] : memref<1x8xf32, #tpu.memory_space<vmem>>, vector<1x8xf32>
    %224 = vector.broadcast %223 : vector<1x8xf32> to vector<256x8xf32>
    %225 = arith.addf %222, %224 : vector<256x8xf32>
    %c0_258 = arith.constant 0 : index
    %c0_259 = arith.constant 0 : index
    %c0_260 = arith.constant 0 : index
    %226 = vector.load %arg6[%c0_258, %c0_259, %c0_260] : memref<1x256x8xf32, #tpu.memory_space<vmem>>, vector<1x256x8xf32>
    %227 = vector.shape_cast %226 : vector<1x256x8xf32> to vector<256x8xf32>
    %228 = vector.shape_cast %225 : vector<256x8xf32> to vector<1x256x8xf32>
    tpu.vector_store %arg6[%c0_258, %c0_259, %c0_260], %228 {strides = array<i32>} : memref<1x256x8xf32, #tpu.memory_space<vmem>>, vector<1x256x8xf32>,
    return
  }
  func.func @transform_0(%arg0: i32) -> (i32, i32, i32, i32) {
    %c0_i32 = arith.constant 0 : i32
    %c0_i32_0 = arith.constant 0 : i32
    %c0_i32_1 = arith.constant 0 : i32
    %c0_i32_2 = arith.constant 0 : i32
    return %arg0, %c0_i32, %c0_i32_0, %c0_i32_1 : i32, i32, i32, i32
  }
  func.func @transform_1(%arg0: i32) -> (i32, i32, i32, i32) {
    %c0_i32 = arith.constant 0 : i32
    %c0_i32_0 = arith.constant 0 : i32
    %c0_i32_1 = arith.constant 0 : i32
    %c0_i32_2 = arith.constant 0 : i32
    %c0_i32_3 = arith.constant 0 : i32
    return %c0_i32, %c0_i32_0, %c0_i32_1, %c0_i32_2 : i32, i32, i32, i32
  }
  func.func @transform_2(%arg0: i32) -> (i32, i32, i32) {
    %c0_i32 = arith.constant 0 : i32
    %c0_i32_0 = arith.constant 0 : i32
    %c0_i32_1 = arith.constant 0 : i32
    %c0_i32_2 = arith.constant 0 : i32
    return %c0_i32, %c0_i32_0, %c0_i32_1 : i32, i32, i32
  }
  func.func @transform_3(%arg0: i32) -> (i32, i32, i32) {
    %c0_i32 = arith.constant 0 : i32
    %c0_i32_0 = arith.constant 0 : i32
    %c0_i32_1 = arith.constant 0 : i32
    %c0_i32_2 = arith.constant 0 : i32
    return %c0_i32, %c0_i32_0, %c0_i32_1 : i32, i32, i32
  }
  func.func @transform_4(%arg0: i32) -> (i32, i32) {
    %c0_i32 = arith.constant 0 : i32
    %c0_i32_0 = arith.constant 0 : i32
    %c0_i32_1 = arith.constant 0 : i32
    return %c0_i32, %c0_i32_0 : i32, i32
  }
  func.func @transform_5(%arg0: i32) -> (i32, i32, i32) {
    %c0_i32 = arith.constant 0 : i32
    %c0_i32_0 = arith.constant 0 : i32
    %c0_i32_1 = arith.constant 0 : i32
    return %arg0, %c0_i32, %c0_i32_0 : i32, i32, i32
  }
}

</mosaic_0001>

<llo_original>
// kernel: tpu_custom_call.1
$region0: #{tpu_custom_call.1}
  #allocation0 [shape = 'u32[]', space=smem, size = 0x4, offset = 0x4, fixed_abs, tag = 'smem constant byte address 0x4 - core index']
  #allocation1 [shape = 'u32[144,128]{1,0:T(1,128)}', space=vmem, size = 0x12000, scoped, tag = 'internal scratch']
  %s0 = inlined_call_operand.vmem [shape: f32[2,52,52,4], index: 0, kind: input, shape index: {}]
  %s1 = inlined_call_operand.vmem [shape: f32[3,9,4,8], index: 1, kind: input, shape index: {}]
  %s2 = inlined_call_operand.vmem [shape: f32[3,1,8], index: 2, kind: input, shape index: {}]
  %s3 = inlined_call_operand.vmem [shape: f32[3,8,8], index: 3, kind: input, shape index: {}]
  %s4 = inlined_call_operand.vmem [shape: f32[1,8], index: 4, kind: input, shape index: {}]
  %s5 = inlined_call_operand.vmem [shape: f32[2,256,8], index: 5, kind: output, shape index: {}]
  %s6 = sld [smem:[#allocation0]]
  $region53: #{tpu_custom_call.1} parent=0
    _
  %s8 = ssub.s32 1, %s6
  %s9 = scalar_select 0, %s8, %s6
  loop: start=0, step=1, limit=4
  $region2: #{tpu_custom_call.1} parent=0 // loop_pre_header
    _
  $region3: #{tpu_custom_call.1} parent=0 // loop_header
    %s11 = sphi 0, %s15
    %p12 = scmp.ge.s32.totalorder %s11, 4
    %s21 = sphi 0, %s23
    %s24 = sphi 0, %s21
    %s25 = sphi 0, %s24
    %s41 = sphi 0, %s25
    %s45 = sphi 0, %s45
    %s47 = sphi 0, %s45
    %s48 = sphi 0, %s47
    %s62 = sphi 0, %s48
    %s66 = sphi 0, %s66
    %s68 = sphi 0, %s66
    %s69 = sphi 0, %s68
    %s83 = sphi 0, %s69
    %s87 = sphi 0, %s87
    %s89 = sphi 0, %s87
    %s90 = sphi 0, %s89
    %s104 = sphi 0, %s90
    %s108 = sphi 0, %s108
    %s110 = sphi 0, %s108
    %s111 = sphi 0, %s110
    %s125 = sphi 0, %s111
    %s131 = sphi 0, %s133
    %s134 = sphi 0, %s131
    %s135 = sphi 0, %s134
    %s151 = sphi 0, %s135
  $region4: #{tpu_custom_call.1} parent=0 // loop_header_branch
    %14 = sbr.rel (%p12) target = $region8
  $region5: #{tpu_custom_call.1} parent=0 // loop_body
    %s16 = ssub.s32 %s11, 1
    %s17 = ssub.s32 %s11, 2
    %s18 = sadd.s32 %s11, 1
    %s19 = ssub.s32 %s11, %s18
    %p20 = scmp.eq.s32.totalorder %s19, 0
    %s22 = sadd.s32 %s21, 1
    %s23 = scalar_select %p20, %s21, %s22
    %p26 = pneg %p20
    %p27 = scmp.eq.s32.totalorder %s11, 1
    %p28 = por %p26, %p27
    %p29 = scmp.ne.s32.totalorder %s21, %s24
    %p30 = scmp.eq.s32.totalorder %s11, 0
    %p31 = por %p29, %p30
    %p32 = scmp.ne.s32.totalorder %s21, %s24
    %p33 = scmp.eq.s32.totalorder %s16, 1
    %p34 = por %p32, %p33
    %p35 = scmp.ne.s32.totalorder %s24, %s25
    %p36 = scmp.eq.s32.totalorder %s16, 0
    %p37 = por %p35, %p36
    %p38 = scmp.ne.s32.totalorder %s24, %s25
    %p39 = scmp.eq.s32.totalorder %s17, 1
    %p40 = por %p38, %p39
    %p42 = scmp.ne.s32.totalorder %s25, %s41
    %p43 = scmp.eq.s32.totalorder %s17, 0
    %p44 = por %p42, %p43
    %s46 = sadd.s32 %s45, 1
    %p49 = scmp.eq.s32.totalorder %s11, 1
    %p50 = scmp.ne.s32.totalorder %s45, %s47
    %p51 = scmp.eq.s32.totalorder %s11, 0
    %p52 = por %p50, %p51
    %p53 = scmp.ne.s32.totalorder %s45, %s47
    %p54 = scmp.eq.s32.totalorder %s16, 1
    %p55 = por %p53, %p54
    %p56 = scmp.ne.s32.totalorder %s47, %s48
    %p57 = scmp.eq.s32.totalorder %s16, 0
    %p58 = por %p56, %p57
    %p59 = scmp.ne.s32.totalorder %s47, %s48
    %p60 = scmp.eq.s32.totalorder %s17, 1
    %p61 = por %p59, %p60
    %p63 = scmp.ne.s32.totalorder %s48, %s62
    %p64 = scmp.eq.s32.totalorder %s17, 0
    %p65 = por %p63, %p64
    %s67 = sadd.s32 %s66, 1
    %p70 = scmp.eq.s32.totalorder %s11, 1
    %p71 = scmp.ne.s32.totalorder %s66, %s68
    %p72 = scmp.eq.s32.totalorder %s11, 0
    %p73 = por %p71, %p72
    %p74 = scmp.ne.s32.totalorder %s66, %s68
    %p75 = scmp.eq.s32.totalorder %s16, 1
    %p76 = por %p74, %p75
    %p77 = scmp.ne.s32.totalorder %s68, %s69
    %p78 = scmp.eq.s32.totalorder %s16, 0
    %p79 = por %p77, %p78
    %p80 = scmp.ne.s32.totalorder %s68, %s69
    %p81 = scmp.eq.s32.totalorder %s17, 1
    %p82 = por %p80, %p81
    %p84 = scmp.ne.s32.totalorder %s69, %s83
    %p85 = scmp.eq.s32.totalorder %s17, 0
    %p86 = por %p84, %p85
    %s88 = sadd.s32 %s87, 1
    %p91 = scmp.eq.s32.totalorder %s11, 1
    %p92 = scmp.ne.s32.totalorder %s87, %s89
    %p93 = scmp.eq.s32.totalorder %s11, 0
    %p94 = por %p92, %p93
    %p95 = scmp.ne.s32.totalorder %s87, %s89
    %p96 = scmp.eq.s32.totalorder %s16, 1
    %p97 = por %p95, %p96
    %p98 = scmp.ne.s32.totalorder %s89, %s90
    %p99 = scmp.eq.s32.totalorder %s16, 0
    %p100 = por %p98, %p99
    %p101 = scmp.ne.s32.totalorder %s89, %s90
    %p102 = scmp.eq.s32.totalorder %s17, 1
    %p103 = por %p101, %p102
    %p105 = scmp.ne.s32.totalorder %s90, %s104
    %p106 = scmp.eq.s32.totalorder %s17, 0
    %p107 = por %p105, %p106
    %s109 = sadd.s32 %s108, 1
    %p112 = scmp.eq.s32.totalorder %s11, 1
    %p113 = scmp.ne.s32.totalorder %s108, %s110
    %p114 = scmp.eq.s32.totalorder %s11, 0
    %p115 = por %p113, %p114
    %p116 = scmp.ne.s32.totalorder %s108, %s110
    %p117 = scmp.eq.s32.totalorder %s16, 1
    %p118 = por %p116, %p117
    %p119 = scmp.ne.s32.totalorder %s110, %s111
    %p120 = scmp.eq.s32.totalorder %s16, 0
    %p121 = por %p119, %p120
    %p122 = scmp.ne.s32.totalorder %s110, %s111
    %p123 = scmp.eq.s32.totalorder %s17, 1
    %p124 = por %p122, %p123
    %p126 = scmp.ne.s32.totalorder %s111, %s125
    %p127 = scmp.eq.s32.totalorder %s17, 0
    %p128 = por %p126, %p127
    %s129 = ssub.s32 %s11, %s18
    %p130 = scmp.eq.s32.totalorder %s129, 0
    %s132 = sadd.s32 %s131, 1
    %s133 = scalar_select %p130, %s131, %s132
    %p136 = pneg %p130
    %p137 = scmp.eq.s32.totalorder %s11, 1
    %p138 = por %p136, %p137
    %p139 = scmp.ne.s32.totalorder %s131, %s134
    %p140 = scmp.eq.s32.totalorder %s11, 0
    %p141 = por %p139, %p140
    %p142 = scmp.ne.s32.totalorder %s131, %s134
    %p143 = scmp.eq.s32.totalorder %s16, 1
    %p144 = por %p142, %p143
    %p145 = scmp.ne.s32.totalorder %s134, %s135
    %p146 = scmp.eq.s32.totalorder %s16, 0
    %p147 = por %p145, %p146
    %p148 = scmp.ne.s32.totalorder %s134, %s135
    %p149 = scmp.eq.s32.totalorder %s17, 1
    %p150 = por %p148, %p149
    %p152 = scmp.ne.s32.totalorder %s135, %s151
    %p153 = scmp.eq.s32.totalorder %s17, 0
    %p154 = por %p152, %p153
    %p155 = scmp.le.s32.totalorder 1, %s11
    %p156 = scmp.lt.s32.totalorder %s11, 3
    %p157 = pnand %p155, %p156
    %p158 = pneg %p157
    // Predicated region
    $region9: #{tpu_custom_call.1} parent=5 // pred_check
      _
    $region10: #{tpu_custom_call.1} parent=5 // pred_check_branch
      %160 = sbr.rel (%p157) target = $region12
    $region11: #{tpu_custom_call.1} parent=5 // pred_region
      %s161 = ssub.s32 %s11, 1
      // Predicated region
      $region13: #{tpu_custom_call.1} parent=11 // pred_check
        %p162 = pneg %p58
      $region14: #{tpu_custom_call.1} parent=11 // pred_check_branch
        %164 = sbr.rel (%p162) target = $region16
      $region15: #{tpu_custom_call.1} parent=11 // pred_region
        _
      $region16: #{tpu_custom_call.1} parent=11 // pred_fallthru
        _
      // Predicated region
      $region17: #{tpu_custom_call.1} parent=11 // pred_check
        %p165 = pneg %p79
      $region18: #{tpu_custom_call.1} parent=11 // pred_check_branch
        %167 = sbr.rel (%p165) target = $region20
      $region19: #{tpu_custom_call.1} parent=11 // pred_region
        _
      $region20: #{tpu_custom_call.1} parent=11 // pred_fallthru
        _
      // Predicated region
      $region21: #{tpu_custom_call.1} parent=11 // pred_check
        %p168 = pneg %p100
      $region22: #{tpu_custom_call.1} parent=11 // pred_check_branch
        %170 = sbr.rel (%p168) target = $region24
      $region23: #{tpu_custom_call.1} parent=11 // pred_region
        _
      $region24: #{tpu_custom_call.1} parent=11 // pred_fallthru
        _
      // Predicated region
      $region25: #{tpu_custom_call.1} parent=11 // pred_check
        %p171 = pneg %p121
      $region26: #{tpu_custom_call.1} parent=11 // pred_check_branch
        %173 = sbr.rel (%p171) target = $region28
      $region27: #{tpu_custom_call.1} parent=11 // pred_region
        _
      $region28: #{tpu_custom_call.1} parent=11 // pred_fallthru
        _
    $region12: #{tpu_custom_call.1} parent=5 // pred_fallthru
      _
    %p174 = scmp.lt.s32.totalorder %s11, 2
    // Predicated region
    $region29: #{tpu_custom_call.1} parent=5 // pred_check
      %p175 = pneg %p174
    $region30: #{tpu_custom_call.1} parent=5 // pred_check_branch
      %177 = sbr.rel (%p175) target = $region32
    $region31: #{tpu_custom_call.1} parent=5 // pred_region
      // Predicated region
      $region33: #{tpu_custom_call.1} parent=31 // pred_check
        %p178 = pneg %p31
      $region34: #{tpu_custom_call.1} parent=31 // pred_check_branch
        %180 = sbr.rel (%p178) target = $region36
      $region35: #{tpu_custom_call.1} parent=31 // pred_region
        %p181 = scmp.lt.s32.totalorder %s11, 1
        %s182 = scalar_select %p181, %s11, 1
        %s183 = smul.addr %s182, 364
        %s184 = smul.addr %s183, 8
        %s185 = scalar_lea.vmem %s0, %s184
      $region36: #{tpu_custom_call.1} parent=31 // pred_fallthru
        _
    $region32: #{tpu_custom_call.1} parent=5 // pred_fallthru
      _
    %p186 = scmp.le.s32.totalorder 1, %s11
    %p187 = scmp.lt.s32.totalorder %s11, 3
    %p188 = pnand %p186, %p187
    %p189 = pneg %p188
    // Predicated region
    $region37: #{tpu_custom_call.1} parent=5 // pred_check
      _
    $region38: #{tpu_custom_call.1} parent=5 // pred_check_branch
      %191 = sbr.rel (%p188) target = $region40
    $region39: #{tpu_custom_call.1} parent=5 // pred_region
      %s192 = ssub.s32 %s11, 1
      %p193 = scmp.lt.s32.totalorder %s16, 1
      %s194 = scalar_select %p193, %s16, 1
      %s195 = smul.addr %s194, 364
      %s196 = smul.addr %s195, 8
      %s197 = scalar_lea.vmem %s0, %s196
      %p198 = pneg %p37
      %p199 = pneg %p34
      %p200 = pneg %p58
      %p201 = pneg %p55
      %p202 = pneg %p79
      %p203 = pneg %p76
      %p204 = pneg %p100
      %p205 = pneg %p97
      %p206 = pneg %p121
      %p207 = pneg %p118
      %p208 = pneg %p147
      %p209 = pneg %p144
      %p210 = scmp.lt.s32.totalorder %s16, 1
      %s211 = scalar_select %p210, %s16, 1
      %s212 = smul.addr %s211, 32
      %s213 = smul.addr %s212, 8
      %s214 = scalar_lea.vmem %s5, %s213
      %p215 = scmp.lt.s32.totalorder %s16, 1
      %s216 = scalar_select %p215, %s16, 1
      %s217 = smul.addr %s216, 364
      %s218 = smul.addr %s217, 8
      %s219 = scalar_lea.vmem %s0, %s218
      %p220 = scmp.lt.s32.totalorder %s16, 1
      %s221 = scalar_select %p220, %s16, 1
      %s222 = smul.addr %s221, 32
      %s223 = smul.addr %s222, 8
      %s224 = scalar_lea.vmem %s5, %s223
      %s225 = scalar_lea.vmem %s219, 672
      %v226 = vld [vmem:[%s225 + $0xc] sm:$0xff]
      %v227 = vld [vmem:[%s225 + $0x14] sm:$0xff]
      %v228 = vld [vmem:[%s225 + $0x44] sm:$0xff]
      %v229 = vld [vmem:[%s225 + $0x4c] sm:$0xff]
      %v230 = vld [vmem:[%s225 + $0x7c] sm:$0xff]
      %v231 = vld [vmem:[%s225 + $0x84] sm:$0xff]
      %v232 = vld [vmem:[%s225 + $0xb4] sm:$0xff]
      %v233 = vld [vmem:[%s225 + $0xbc] sm:$0xff]
      %v234 = vld [vmem:[%s225 + $0xec] sm:$0xff]
      %v235 = vld [vmem:[%s225 + $0xf4] sm:$0xff]
      %v236 = vld [vmem:[%s225 + $0x124] sm:$0xff]
      %v237 = vld [vmem:[%s225 + $0x12c] sm:$0xff]
      %v238 = vld [vmem:[%s225 + $0x15c] sm:$0xff]
      %v239 = vld [vmem:[%s225 + $0x164] sm:$0xff]
      %v240 = vld [vmem:[%s225 + $0x194] sm:$0xff]
      %v241 = vld [vmem:[%s225 + $0x19c] sm:$0xff]
      %v242 = vld [vmem:[%s225 + $0x1cc] sm:$0xff]
      %v243 = vld [vmem:[%s225 + $0x1d4] sm:$0xff]
      %v244 = vld [vmem:[%s225 + $0x204] sm:$0xff]
      %v245 = vld [vmem:[%s225 + $0x20c] sm:$0xff]
      %v246 = vld [vmem:[%s225 + $0x23c] sm:$0xff]
      %v247 = vld [vmem:[%s225 + $0x244] sm:$0xff]
      %v248 = vld [vmem:[%s225 + $0x274] sm:$0xff]
      %v249 = vld [vmem:[%s225 + $0x27c] sm:$0xff]
      %v250 = vld [vmem:[%s225 + $0x2ac] sm:$0xff]
      %v251 = vld [vmem:[%s225 + $0x2b4] sm:$0xff]
      %v252 = vld [vmem:[%s225 + $0x2e4] sm:$0xff]
      %v253 = vld [vmem:[%s225 + $0x2ec] sm:$0xff]
      %v254 = vld [vmem:[%s225 + $0x31c] sm:$0xff]
      %v255 = vld [vmem:[%s225 + $0x324] sm:$0xff]
      %v256 = vld [vmem:[%s225 + $0x354] sm:$0xff]
      %v257 = vld [vmem:[%s225 + $0x35c] sm:$0xff]
      %v258 = vld [vmem:[%s1] sm:$0xf]
      %v259 = vld [vmem:[%s225 + $0x12] sm:$0xff]
      %v260 = vld [vmem:[%s225 + $0x1a] sm:$0xff]
      %v261 = vld [vmem:[%s225 + $0x4a] sm:$0xff]
      %v262 = vld [vmem:[%s225 + $0x52] sm:$0xff]
      %v263 = vld [vmem:[%s225 + $0x82] sm:$0xff]
      %v264 = vld [vmem:[%s225 + $0x8a] sm:$0xff]
      %v265 = vld [vmem:[%s225 + $0xba] sm:$0xff]
      %v266 = vld [vmem:[%s225 + $0xc2] sm:$0xff]
      %v267 = vld [vmem:[%s225 + $0xf2] sm:$0xff]
      %v268 = vld [vmem:[%s225 + $0xfa] sm:$0xff]
      %v269 = vld [vmem:[%s225 + $0x12a] sm:$0xff]
      %v270 = vld [vmem:[%s225 + $0x132] sm:$0xff]
      %v271 = vld [vmem:[%s225 + $0x162] sm:$0xff]
      %v272 = vld [vmem:[%s225 + $0x16a] sm:$0xff]
      %v273 = vld [vmem:[%s225 + $0x19a] sm:$0xff]
      %v274 = vld [vmem:[%s225 + $0x1a2] sm:$0xff]
      %v275 = vld [vmem:[%s225 + $0x1d2] sm:$0xff]
      %v276 = vld [vmem:[%s225 + $0x1da] sm:$0xff]
      %v277 = vld [vmem:[%s225 + $0x20a] sm:$0xff]
      %v278 = vld [vmem:[%s225 + $0x212] sm:$0xff]
      %v279 = vld [vmem:[%s225 + $0x242] sm:$0xff]
      %v280 = vld [vmem:[%s225 + $0x24a] sm:$0xff]
      %v281 = vld [vmem:[%s225 + $0x27a] sm:$0xff]
      %v282 = vld [vmem:[%s225 + $0x282] sm:$0xff]
      %v283 = vld [vmem:[%s225 + $0x2b2] sm:$0xff]
      %v284 = vld [vmem:[%s225 + $0x2ba] sm:$0xff]
      %v285 = vld [vmem:[%s225 + $0x2ea] sm:$0xff]
      %v286 = vld [vmem:[%s225 + $0x2f2] sm:$0xff]
      %v287 = vld [vmem:[%s225 + $0x322] sm:$0xff]
      %v288 = vld [vmem:[%s225 + $0x32a] sm:$0xff]
      %v289 = vld [vmem:[%s225 + $0x35a] sm:$0xff]
      %v290 = vld [vmem:[%s225 + $0x362] sm:$0xff]
      %s291 = scalar_lea.vmem %s1, 4
      %v292 = vld [vmem:[%s291] sm:$0xf]
      %vm293 = vcmask 31744
      %v295 = vsel %vm293, %v259, 0
      %v298 = vsel %vm293, %v260, 0
      %v301 = vsel %vm293, %v261, 0
      %v304 = vsel %vm293, %v262, 0
      %v307 = vsel %vm293, %v263, 0
      %v310 = vsel %vm293, %v264, 0
      %v313 = vsel %vm293, %v265, 0
      %v316 = vsel %vm293, %v266, 0
      %v319 = vsel %vm293, %v267, 0
      %v322 = vsel %vm293, %v268, 0
      %v325 = vsel %vm293, %v269, 0
      %v328 = vsel %vm293, %v270, 0
      %v331 = vsel %vm293, %v271, 0
      %v334 = vsel %vm293, %v272, 0
      %v337 = vsel %vm293, %v273, 0
      %v340 = vsel %vm293, %v274, 0
      %v343 = vsel %vm293, %v275, 0
      %v346 = vsel %vm293, %v276, 0
      %v349 = vsel %vm293, %v277, 0
      %v352 = vsel %vm293, %v278, 0
      %v355 = vsel %vm293, %v279, 0
      %v358 = vsel %vm293, %v280, 0
      %v361 = vsel %vm293, %v281, 0
      %v364 = vsel %vm293, %v282, 0
      %v367 = vsel %vm293, %v283, 0
      %v370 = vsel %vm293, %v284, 0
      %v373 = vsel %vm293, %v285, 0
      %v376 = vsel %vm293, %v286, 0
      %v379 = vsel %vm293, %v287, 0
      %v382 = vsel %vm293, %v288, 0
      %v385 = vsel %vm293, %v289, 0
      %v388 = vsel %vm293, %v290, 0
      %vm390 = vcmask 1043456
      %v392 = vsel %vm390, %v292, 0
      %394 = vmatprep.subr.mxu0 0.0
      %395 = vmatpush1.msra.mxu0 %v392
      %396 = vmatprep.subr.mxu0 0.0
      %397 = vmatpush1.msra.mxu0 0.0
      %398 = vmatprep.subr.mxu0 0.0
      %399 = vmatpush1.msra.mxu0 0.0
      %400 = vmatprep.subr.mxu0 0.0
      %401 = vmatpush1.msra.mxu0 0.0
      %402 = vmatprep.subr.mxu0 0.0
      %403 = vmatpush1.msra.mxu0 0.0
      %404 = vmatprep.subr.mxu0 0.0
      %405 = vmatpush1.msra.mxu0 0.0
      %406 = vmatprep.subr.mxu0 0.0
      %407 = vmatpush1.msra.mxu0 0.0
      %408 = vmatprep.subr.mxu0 0.0
      %409 = vmatpush1.msra.mxu0 0.0
      %410 = vmatprep.subr.mxu0 0.0
      %411 = vmatpush1.msra.mxu0 0.0
      %412 = vmatprep.subr.mxu0 0.0
      %413 = vmatpush1.msra.mxu0 0.0
      %414 = vmatprep.subr.mxu0 0.0
      %415 = vmatpush1.msra.mxu0 0.0
      %416 = vmatprep.subr.mxu0 0.0
      %417 = vmatpush1.msra.mxu0 0.0
      %418 = vmatprep.subr.mxu0 0.0
      %419 = vmatpush1.msra.mxu0 0.0
      %420 = vmatprep.subr.mxu0 0.0
      %421 = vmatpush1.msra.mxu0 0.0
      %422 = vmatprep.subr.mxu0 0.0
      %423 = vmatpush1.msra.mxu0 0.0
      %424 = vmatprep.subr.mxu0 0.0
      %425 = vmatpush1.msra.mxu0 0.0
      %426 = vmatprep.subr.mxu0 0.0
      %427 = vmatpush1.msra.mxu0 0.0
      %428 = vmatprep.subr.mxu0 0.0
      %429 = vmatpush1.msra.mxu0 0.0
      %430 = vmatprep.subr.mxu0 0.0
      %431 = vmatpush1.msra.mxu0 0.0
      %432 = vmatprep.subr.mxu0 0.0
      %433 = vmatpush1.msra.mxu0 0.0
      %434 = vmatprep.subr.mxu0 0.0
      %435 = vmatpush1.msra.mxu0 0.0
      %436 = vmatprep.subr.mxu0 0.0
      %437 = vmatpush1.msra.mxu0 0.0
      %438 = vmatprep.subr.mxu0 0.0
      %439 = vmatpush1.msra.mxu0 0.0
      %440 = vmatprep.subr.mxu0 0.0
      %441 = vmatpush1.msra.mxu0 0.0
      %442 = vmatprep.subr.mxu0 0.0
      %443 = vmatpush1.msra.mxu0 0.0
      %444 = vmatprep.subr.mxu0 0.0
      %445 = vmatpush1.msra.mxu0 0.0
      %446 = vmatprep.subr.mxu0 0.0
      %447 = vmatpush1.msra.mxu0 0.0
      %448 = vmatprep.subr.mxu0 0.0
      %449 = vmatpush1.msra.mxu0 0.0
      %450 = vmatprep.subr.mxu0 0.0
      %451 = vmatpush1.msra.mxu0 0.0
      %452 = vmatprep.subr.mxu0 0.0
      %453 = vmatpush1.msra.mxu0 0.0
      %454 = vmatprep.subr.mxu0 0.0
      %455 = vmatpush1.msra.mxu0 0.0
      %456 = vmatprep.subr.mxu0 0.0
      %457 = vmatpush1.msra.mxu0 0.0
      %458 = vmatprep.mubr.f32.mxu0 0.0
      %459 = vmatmul.mubr.f32.gmra.mrb[0].mxu0 %v295
      %v460 = vpop.f32.mrb[0].mxu0
      %v461 = vadd.f32 0.0, %v460
      %v462 = vpop.f32.mrb[0].mxu0
      %463 = vmatprep.mubr.f32.mxu0 0.0
      %464 = vmatmul.mubr.f32.gmra.mrb[0].mxu0 %v298
      %v465 = vpop.f32.mrb[0].mxu0
      %v466 = vadd.f32 0.0, %v465
      %v467 = vpop.f32.mrb[0].mxu0
      %468 = vmatprep.mubr.f32.mxu0 0.0
      %469 = vmatmul.mubr.f32.gmra.mrb[0].mxu0 %v301
      %v470 = vpop.f32.mrb[0].mxu0
      %v471 = vadd.f32 0.0, %v470
      %v472 = vpop.f32.mrb[0].mxu0
      %473 = vmatprep.mubr.f32.mxu0 0.0
      %474 = vmatmul.mubr.f32.gmra.mrb[0].mxu0 %v304
      %v475 = vpop.f32.mrb[0].mxu0
      %v476 = vadd.f32 0.0, %v475
      %v477 = vpop.f32.mrb[0].mxu0
      %478 = vmatprep.mubr.f32.mxu0 0.0
      %479 = vmatmul.mubr.f32.gmra.mrb[0].mxu0 %v307
      %v480 = vpop.f32.mrb[0].mxu0
      %v481 = vadd.f32 0.0, %v480
      %v482 = vpop.f32.mrb[0].mxu0
      %483 = vmatprep.mubr.f32.mxu0 0.0
      %484 = vmatmul.mubr.f32.gmra.mrb[0].mxu0 %v310
      %v485 = vpop.f32.mrb[0].mxu0
      %v486 = vadd.f32 0.0, %v485
      %v487 = vpop.f32.mrb[0].mxu0
      %488 = vmatprep.mubr.f32.mxu0 0.0
      %489 = vmatmul.mubr.f32.gmra.mrb[0].mxu0 %v313
      %v490 = vpop.f32.mrb[0].mxu0
      %v491 = vadd.f32 0.0, %v490
      %v492 = vpop.f32.mrb[0].mxu0
      %493 = vmatprep.mubr.f32.mxu0 0.0
      %494 = vmatmul.mubr.f32.gmra.mrb[0].mxu0 %v316
      %v495 = vpop.f32.mrb[0].mxu0
      %v496 = vadd.f32 0.0, %v495
      %v497 = vpop.f32.mrb[0].mxu0
      %498 = vmatprep.mubr.f32.mxu0 0.0
      %499 = vmatmul.mubr.f32.gmra.mrb[0].mxu0 %v319
      %v500 = vpop.f32.mrb[0].mxu0
      %v501 = vadd.f32 0.0, %v500
      %v502 = vpop.f32.mrb[0].mxu0
      %503 = vmatprep.mubr.f32.mxu0 0.0
      %504 = vmatmul.mubr.f32.gmra.mrb[0].mxu0 %v322
      %v505 = vpop.f32.mrb[0].mxu0
      %v506 = vadd.f32 0.0, %v505
      %v507 = vpop.f32.mrb[0].mxu0
      %508 = vmatprep.mubr.f32.mxu0 0.0
      %509 = vmatmul.mubr.f32.gmra.mrb[0].mxu0 %v325
      %v510 = vpop.f32.mrb[0].mxu0
      %v511 = vadd.f32 0.0, %v510
      %v512 = vpop.f32.mrb[0].mxu0
      %513 = vmatprep.mubr.f32.mxu0 0.0
      %514 = vmatmul.mubr.f32.gmra.mrb[0].mxu0 %v328
      %v515 = vpop.f32.mrb[0].mxu0
      %v516 = vadd.f32 0.0, %v515
      %v517 = vpop.f32.mrb[0].mxu0
      %518 = vmatprep.mubr.f32.mxu0 0.0
      %519 = vmatmul.mubr.f32.gmra.mrb[0].mxu0 %v331
      %v520 = vpop.f32.mrb[0].mxu0
      %v521 = vadd.f32 0.0, %v520
      %v522 = vpop.f32.mrb[0].mxu0
      %523 = vmatprep.mubr.f32.mxu0 0.0
      %524 = vmatmul.mubr.f32.gmra.mrb[0].mxu0 %v334
      %v525 = vpop.f32.mrb[0].mxu0
      %v526 = vadd.f32 0.0, %v525
      %v527 = vpop.f32.mrb[0].mxu0
      %528 = vmatprep.mubr.f32.mxu0 0.0
      %529 = vmatmul.mubr.f32.gmra.mrb[0].mxu0 %v337
      %v530 = vpop.f32.mrb[0].mxu0
      %v531 = vadd.f32 0.0, %v530
      %v532 = vpop.f32.mrb[0].mxu0
      %533 = vmatprep.mubr.f32.mxu0 0.0
      %534 = vmatmul.mubr.f32.gmra.mrb[0].mxu0 %v340
      %v535 = vpop.f32.mrb[0].mxu0
      %v536 = vadd.f32 0.0, %v535
      %v537 = vpop.f32.mrb[0].mxu0
      %538 = vmatprep.mubr.f32.mxu0 0.0
      %539 = vmatmul.mubr.f32.gmra.mrb[0].mxu0 %v343
      %v540 = vpop.f32.mrb[0].mxu0
      %v541 = vadd.f32 0.0, %v540
      %v542 = vpop.f32.mrb[0].mxu0
      %543 = vmatprep.mubr.f32.mxu0 0.0
      %544 = vmatmul.mubr.f32.gmra.mrb[0].mxu0 %v346
      %v545 = vpop.f32.mrb[0].mxu0
      %v546 = vadd.f32 0.0, %v545
      %v547 = vpop.f32.mrb[0].mxu0
      %548 = vmatprep.mubr.f32.mxu0 0.0
      %549 = vmatmul.mubr.f32.gmra.mrb[0].mxu0 %v349
      %v550 = vpop.f32.mrb[0].mxu0
      %v551 = vadd.f32 0.0, %v550
      %v552 = vpop.f32.mrb[0].mxu0
      %553 = vmatprep.mubr.f32.mxu0 0.0
      %554 = vmatmul.mubr.f32.gmra.mrb[0].mxu0 %v352
      %v555 = vpop.f32.mrb[0].mxu0
      %v556 = vadd.f32 0.0, %v555
      %v557 = vpop.f32.mrb[0].mxu0
      %558 = vmatprep.mubr.f32.mxu0 0.0
      %559 = vmatmul.mubr.f32.gmra.mrb[0].mxu0 %v355
      %v560 = vpop.f32.mrb[0].mxu0
      %v561 = vadd.f32 0.0, %v560
      %v562 = vpop.f32.mrb[0].mxu0
      %563 = vmatprep.mubr.f32.mxu0 0.0
      %564 = vmatmul.mubr.f32.gmra.mrb[0].mxu0 %v358
      %v565 = vpop.f32.mrb[0].mxu0
      %v566 = vadd.f32 0.0, %v565
      %v567 = vpop.f32.mrb[0].mxu0
      %568 = vmatprep.mubr.f32.mxu0 0.0
      %569 = vmatmul.mubr.f32.gmra.mrb[0].mxu0 %v361
      %v570 = vpop.f32.mrb[0].mxu0
      %v571 = vadd.f32 0.0, %v570
      %v572 = vpop.f32.mrb[0].mxu0
      %573 = vmatprep.mubr.f32.mxu0 0.0
      %574 = vmatmul.mubr.f32.gmra.mrb[0].mxu0 %v364
      %v575 = vpop.f32.mrb[0].mxu0
      %v576 = vadd.f32 0.0, %v575
      %v577 = vpop.f32.mrb[0].mxu0
      %578 = vmatprep.mubr.f32.mxu0 0.0
      %579 = vmatmul.mubr.f32.gmra.mrb[0].mxu0 %v367
      %v580 = vpop.f32.mrb[0].mxu0
      %v581 = vadd.f32 0.0, %v580
      %v582 = vpop.f32.mrb[0].mxu0
      %583 = vmatprep.mubr.f32.mxu0 0.0
      %584 = vmatmul.mubr.f32.gmra.mrb[0].mxu0 %v370
      %v585 = vpop.f32.mrb[0].mxu0
      %v586 = vadd.f32 0.0, %v585
      %v587 = vpop.f32.mrb[0].mxu0
      %588 = vmatprep.mubr.f32.mxu0 0.0
      %589 = vmatmul.mubr.f32.gmra.mrb[0].mxu0 %v373
      %v590 = vpop.f32.mrb[0].mxu0
      %v591 = vadd.f32 0.0, %v590
      %v592 = vpop.f32.mrb[0].mxu0
      %593 = vmatprep.mubr.f32.mxu0 0.0
      %594 = vmatmul.mubr.f32.gmra.mrb[0].mxu0 %v376
      %v595 = vpop.f32.mrb[0].mxu0
      %v596 = vadd.f32 0.0, %v595
      %v597 = vpop.f32.mrb[0].mxu0
      %598 = vmatprep.mubr.f32.mxu0 0.0
      %599 = vmatmul.mubr.f32.gmra.mrb[0].mxu0 %v379
      %v600 = vpop.f32.mrb[0].mxu0
      %v601 = vadd.f32 0.0, %v600
      %v602 = vpop.f32.mrb[0].mxu0
      %603 = vmatprep.mubr.f32.mxu0 0.0
      %604 = vmatmul.mubr.f32.gmra.mrb[0].mxu0 %v382
      %v605 = vpop.f32.mrb[0].mxu0
      %v606 = vadd.f32 0.0, %v605
      %v607 = vpop.f32.mrb[0].mxu0
      %608 = vmatprep.mubr.f32.mxu0 0.0
      %609 = vmatmul.mubr.f32.gmra.mrb[0].mxu0 %v385
      %v610 = vpop.f32.mrb[0].mxu0
      %v611 = vadd.f32 0.0, %v610
      %v612 = vpop.f32.mrb[0].mxu0
      %613 = vmatprep.mubr.f32.mxu0 0.0
      %614 = vmatmul.mubr.f32.gmra.mrb[0].mxu0 %v388
      %v615 = vpop.f32.mrb[0].mxu0
      %v616 = vadd.f32 0.0, %v615
      %v617 = vpop.f32.mrb[0].mxu0
      %618 = vdwg.mxu0
      %v620 = vsel %vm293, %v226, 0
      %v623 = vsel %vm293, %v227, 0
      %v626 = vsel %vm293, %v228, 0
      %v629 = vsel %vm293, %v229, 0
      %v632 = vsel %vm293, %v230, 0
      %v635 = vsel %vm293, %v231, 0
      %v638 = vsel %vm293, %v232, 0
      %v641 = vsel %vm293, %v233, 0
      %v644 = vsel %vm293, %v234, 0
      %v647 = vsel %vm293, %v235, 0
      %v650 = vsel %vm293, %v236, 0
      %v653 = vsel %vm293, %v237, 0
      %v656 = vsel %vm293, %v238, 0
      %v659 = vsel %vm293, %v239, 0
      %v662 = vsel %vm293, %v240, 0
      %v665 = vsel %vm293, %v241, 0
      %v668 = vsel %vm293, %v242, 0
      %v671 = vsel %vm293, %v243, 0
      %v674 = vsel %vm293, %v244, 0
      %v677 = vsel %vm293, %v245, 0
      %v680 = vsel %vm293, %v246, 0
      %v683 = vsel %vm293, %v247, 0
      %v686 = vsel %vm293, %v248, 0
      %v689 = vsel %vm293, %v249, 0
      %v692 = vsel %vm293, %v250, 0
      %v695 = vsel %vm293, %v251, 0
      %v698 = vsel %vm293, %v252, 0
      %v701 = vsel %vm293, %v253, 0
      %v704 = vsel %vm293, %v254, 0
      %v707 = vsel %vm293, %v255, 0
      %v710 = vsel %vm293, %v256, 0
      %v713 = vsel %vm293, %v257, 0
      %v716 = vsel %vm390, %v258, 0
      %718 = vmatprep.subr.mxu0 0.0
      %719 = vmatpush1.msra.mxu0 %v716
      %720 = vmatprep.subr.mxu0 0.0
      %721 = vmatpush1.msra.mxu0 0.0
      %722 = vmatprep.subr.mxu0 0.0
      %723 = vmatpush1.msra.mxu0 0.0
      %724 = vmatprep.subr.mxu0 0.0
      %725 = vmatpush1.msra.mxu0 0.0
      %726 = vmatprep.subr.mxu0 0.0
      %727 = vmatpush1.msra.mxu0 0.0
      %728 = vmatprep.subr.mxu0 0.0
      %729 = vmatpush1.msra.mxu0 0.0
      %730 = vmatprep.subr.mxu0 0.0
      %731 = vmatpush1.msra.mxu0 0.0
      %732 = vmatprep.subr.mxu0 0.0
      %733 = vmatpush1.msra.mxu0 0.0
      %734 = vmatprep.subr.mxu0 0.0
      %735 = vmatpush1.msra.mxu0 0.0
      %736 = vmatprep.subr.mxu0 0.0
      %737 = vmatpush1.msra.mxu0 0.0
      %738 = vmatprep.subr.mxu0 0.0
      %739 = vmatpush1.msra.mxu0 0.0
      %740 = vmatprep.subr.mxu0 0.0
      %741 = vmatpush1.msra.mxu0 0.0
      %742 = vmatprep.subr.mxu0 0.0
      %743 = vmatpush1.msra.mxu0 0.0
      %744 = vmatprep.subr.mxu0 0.0
      %745 = vmatpush1.msra.mxu0 0.0
      %746 = vmatprep.subr.mxu0 0.0
      %747 = vmatpush1.msra.mxu0 0.0
      %748 = vmatprep.subr.mxu0 0.0
      %749 = vmatpush1.msra.mxu0 0.0
      %750 = vmatprep.subr.mxu0 0.0
      %751 = vmatpush1.msra.mxu0 0.0
      %752 = vmatprep.subr.mxu0 0.0
      %753 = vmatpush1.msra.mxu0 0.0
      %754 = vmatprep.subr.mxu0 0.0
      %755 = vmatpush1.msra.mxu0 0.0
      %756 = vmatprep.subr.mxu0 0.0
      %757 = vmatpush1.msra.mxu0 0.0
      %758 = vmatprep.subr.mxu0 0.0
      %759 = vmatpush1.msra.mxu0 0.0
      %760 = vmatprep.subr.mxu0 0.0
      %761 = vmatpush1.msra.mxu0 0.0
      %762 = vmatprep.subr.mxu0 0.0
      %763 = vmatpush1.msra.mxu0 0.0
      %764 = vmatprep.subr.mxu0 0.0
      %765 = vmatpush1.msra.mxu0 0.0
      %766 = vmatprep.subr.mxu0 0.0
      %767 = vmatpush1.msra.mxu0 0.0
      %768 = vmatprep.subr.mxu0 0.0
      %769 = vmatpush1.msra.mxu0 0.0
      %770 = vmatprep.subr.mxu0 0.0
      %771 = vmatpush1.msra.mxu0 0.0
      %772 = vmatprep.subr.mxu0 0.0
      %773 = vmatpush1.msra.mxu0 0.0
      %774 = vmatprep.subr.mxu0 0.0
      %775 = vmatpush1.msra.mxu0 0.0
      %776 = vmatprep.subr.mxu0 0.0
      %777 = vmatpush1.msra.mxu0 0.0
      %778 = vmatprep.subr.mxu0 0.0
      %779 = vmatpush1.msra.mxu0 0.0
      %780 = vmatprep.subr.mxu0 0.0
      %781 = vmatpush1.msra.mxu0 0.0
      %782 = vmatprep.mubr.f32.mxu0 0.0
      %783 = vmatmul.mubr.f32.gmra.mrb[0].mxu0 %v620
      %v784 = vpop.f32.mrb[0].mxu0
      %v785 = vadd.f32 %v461, %v784
      %v786 = vpop.f32.mrb[0].mxu0
      %787 = vmatprep.mubr.f32.mxu0 0.0
      %788 = vmatmul.mubr.f32.gmra.mrb[0].mxu0 %v623
      %v789 = vpop.f32.mrb[0].mxu0
      %v790 = vadd.f32 %v466, %v789
      %v791 = vpop.f32.mrb[0].mxu0
      %792 = vmatprep.mubr.f32.mxu0 0.0
      %793 = vmatmul.mubr.f32.gmra.mrb[0].mxu0 %v626
      %v794 = vpop.f32.mrb[0].mxu0
      %v795 = vadd.f32 %v471, %v794
      %v796 = vpop.f32.mrb[0].mxu0
      %797 = vmatprep.mubr.f32.mxu0 0.0
      %798 = vmatmul.mubr.f32.gmra.mrb[0].mxu0 %v629
      %v799 = vpop.f32.mrb[0].mxu0
      %v800 = vadd.f32 %v476, %v799
      %v801 = vpop.f32.mrb[0].mxu0
      %802 = vmatprep.mubr.f32.mxu0 0.0
      %803 = vmatmul.mubr.f32.gmra.mrb[0].mxu0 %v632
      %v804 = vpop.f32.mrb[0].mxu0
      %v805 = vadd.f32 %v481, %v804
      %v806 = vpop.f32.mrb[0].mxu0
      %807 = vmatprep.mubr.f32.mxu0 0.0
      %808 = vmatmul.mubr.f32.gmra.mrb[0].mxu0 %v635
      %v809 = vpop.f32.mrb[0].mxu0
      %v810 = vadd.f32 %v486, %v809
      %v811 = vpop.f32.mrb[0].mxu0
      %812 = vmatprep.mubr.f32.mxu0 0.0
      %813 = vmatmul.mubr.f32.gmra.mrb[0].mxu0 %v638
      %v814 = vpop.f32.mrb[0].mxu0
      %v815 = vadd.f32 %v491, %v814
      %v816 = vpop.f32.mrb[0].mxu0
      %817 = vmatprep.mubr.f32.mxu0 0.0
      %818 = vmatmul.mubr.f32.gmra.mrb[0].mxu0 %v641
      %v819 = vpop.f32.mrb[0].mxu0
      %v820 = vadd.f32 %v496, %v819
      %v821 = vpop.f32.mrb[0].mxu0
      %822 = vmatprep.mubr.f32.mxu0 0.0
      %823 = vmatmul.mubr.f32.gmra.mrb[0].mxu0 %v644
      %v824 = vpop.f32.mrb[0].mxu0
      %v825 = vadd.f32 %v501, %v824
      %v826 = vpop.f32.mrb[0].mxu0
      %827 = vmatprep.mubr.f32.mxu0 0.0
      %828 = vmatmul.mubr.f32.gmra.mrb[0].mxu0 %v647
      %v829 = vpop.f32.mrb[0].mxu0
      %v830 = vadd.f32 %v506, %v829
      %v831 = vpop.f32.mrb[0].mxu0
      %832 = vmatprep.mubr.f32.mxu0 0.0
      %833 = vmatmul.mubr.f32.gmra.mrb[0].mxu0 %v650
      %v834 = vpop.f32.mrb[0].mxu0
      %v835 = vadd.f32 %v511, %v834
      %v836 = vpop.f32.mrb[0].mxu0
      %837 = vmatprep.mubr.f32.mxu0 0.0
      %838 = vmatmul.mubr.f32.gmra.mrb[0].mxu0 %v653
      %v839 = vpop.f32.mrb[0].mxu0
      %v840 = vadd.f32 %v516, %v839
      %v841 = vpop.f32.mrb[0].mxu0
      %842 = vmatprep.mubr.f32.mxu0 0.0
      %843 = vmatmul.mubr.f32.gmra.mrb[0].mxu0 %v656
      %v844 = vpop.f32.mrb[0].mxu0
      %v845 = vadd.f32 %v521, %v844
      %v846 = vpop.f32.mrb[0].mxu0
      %847 = vmatprep.mubr.f32.mxu0 0.0
      %848 = vmatmul.mubr.f32.gmra.mrb[0].mxu0 %v659
      %v849 = vpop.f32.mrb[0].mxu0
      %v850 = vadd.f32 %v526, %v849
      %v851 = vpop.f32.mrb[0].mxu0
      %852 = vmatprep.mubr.f32.mxu0 0.0
      %853 = vmatmul.mubr.f32.gmra.mrb[0].mxu0 %v662
      %v854 = vpop.f32.mrb[0].mxu0
      %v855 = vadd.f32 %v531, %v854
      %v856 = vpop.f32.mrb[0].mxu0
      %857 = vmatprep.mubr.f32.mxu0 0.0
      %858 = vmatmul.mubr.f32.gmra.mrb[0].mxu0 %v665
      %v859 = vpop.f32.mrb[0].mxu0
      %v860 = vadd.f32 %v536, %v859
      %v861 = vpop.f32.mrb[0].mxu0
      %862 = vmatprep.mubr.f32.mxu0 0.0
      %863 = vmatmul.mubr.f32.gmra.mrb[0].mxu0 %v668
      %v864 = vpop.f32.mrb[0].mxu0
      %v865 = vadd.f32 %v541, %v864
      %v866 = vpop.f32.mrb[0].mxu0
      %867 = vmatprep.mubr.f32.mxu0 0.0
      %868 = vmatmul.mubr.f32.gmra.mrb[0].mxu0 %v671
      %v869 = vpop.f32.mrb[0].mxu0
      %v870 = vadd.f32 %v546, %v869
      %v871 = vpop.f32.mrb[0].mxu0
      %872 = vmatprep.mubr.f32.mxu0 0.0
      %873 = vmatmul.mubr.f32.gmra.mrb[0].mxu0 %v674
      %v874 = vpop.f32.mrb[0].mxu0
      %v875 = vadd.f32 %v551, %v874
      %v876 = vpop.f32.mrb[0].mxu0
      %877 = vmatprep.mubr.f32.mxu0 0.0
      %878 = vmatmul.mubr.f32.gmra.mrb[0].mxu0 %v677
      %v879 = vpop.f32.mrb[0].mxu0
      %v880 = vadd.f32 %v556, %v879
      %v881 = vpop.f32.mrb[0].mxu0
      %882 = vmatprep.mubr.f32.mxu0 0.0
      %883 = vmatmul.mubr.f32.gmra.mrb[0].mxu0 %v680
      %v884 = vpop.f32.mrb[0].mxu0
      %v885 = vadd.f32 %v561, %v884
      %v886 = vpop.f32.mrb[0].mxu0
      %887 = vmatprep.mubr.f32.mxu0 0.0
      %888 = vmatmul.mubr.f32.gmra.mrb[0].mxu0 %v683
      %v889 = vpop.f32.mrb[0].mxu0
      %v890 = vadd.f32 %v566, %v889
      %v891 = vpop.f32.mrb[0].mxu0
      %892 = vmatprep.mubr.f32.mxu0 0.0
      %893 = vmatmul.mubr.f32.gmra.mrb[0].mxu0 %v686
      %v894 = vpop.f32.mrb[0].mxu0
      %v895 = vadd.f32 %v571, %v894
      %v896 = vpop.f32.mrb[0].mxu0
      %897 = vmatprep.mubr.f32.mxu0 0.0
      %898 = vmatmul.mubr.f32.gmra.mrb[0].mxu0 %v689
      %v899 = vpop.f32.mrb[0].mxu0
      %v900 = vadd.f32 %v576, %v899
      %v901 = vpop.f32.mrb[0].mxu0
      %902 = vmatprep.mubr.f32.mxu0 0.0
      %903 = vmatmul.mubr.f32.gmra.mrb[0].mxu0 %v692
      %v904 = vpop.f32.mrb[0].mxu0
      %v905 = vadd.f32 %v581, %v904
      %v906 = vpop.f32.mrb[0].mxu0
      %907 = vmatprep.mubr.f32.mxu0 0.0
      %908 = vmatmul.mubr.f32.gmra.mrb[0].mxu0 %v695
      %v909 = vpop.f32.mrb[0].mxu0
      %v910 = vadd.f32 %v586, %v909
      %v911 = vpop.f32.mrb[0].mxu0
      %912 = vmatprep.mubr.f32.mxu0 0.0
      %913 = vmatmul.mubr.f32.gmra.mrb[0].mxu0 %v698
      %v914 = vpop.f32.mrb[0].mxu0
      %v915 = vadd.f32 %v591, %v914
      %v916 = vpop.f32.mrb[0].mxu0
      %917 = vmatprep.mubr.f32.mxu0 0.0
      %918 = vmatmul.mubr.f32.gmra.mrb[0].mxu0 %v701
      %v919 = vpop.f32.mrb[0].mxu0
      %v920 = vadd.f32 %v596, %v919
      %v921 = vpop.f32.mrb[0].mxu0
      %922 = vmatprep.mubr.f32.mxu0 0.0
      %923 = vmatmul.mubr.f32.gmra.mrb[0].mxu0 %v704
      %v924 = vpop.f32.mrb[0].mxu0
      %v925 = vadd.f32 %v601, %v924
      %v926 = vpop.f32.mrb[0].mxu0
      %927 = vmatprep.mubr.f32.mxu0 0.0
      %928 = vmatmul.mubr.f32.gmra.mrb[0].mxu0 %v707
      %v929 = vpop.f32.mrb[0].mxu0
      %v930 = vadd.f32 %v606, %v929
      %v931 = vpop.f32.mrb[0].mxu0
      %932 = vmatprep.mubr.f32.mxu0 0.0
      %933 = vmatmul.mubr.f32.gmra.mrb[0].mxu0 %v710
      %v934 = vpop.f32.mrb[0].mxu0
      %v935 = vadd.f32 %v611, %v934
      %v936 = vpop.f32.mrb[0].mxu0
      %937 = vmatprep.mubr.f32.mxu0 0.0
      %938 = vmatmul.mubr.f32.gmra.mrb[0].mxu0 %v713
      %v939 = vpop.f32.mrb[0].mxu0
      %v940 = vadd.f32 %v616, %v939
      %v941 = vpop.f32.mrb[0].mxu0
      %942 = vdwg.mxu0
      %v943 = vld [vmem:[%s225 + $0x18] sm:$0xff]
      %v944 = vld [vmem:[%s225 + $0x20] sm:$0xff]
      %v945 = vld [vmem:[%s225 + $0x50] sm:$0xff]
      %v946 = vld [vmem:[%s225 + $0x58] sm:$0xff]
      %v947 = vld [vmem:[%s225 + $0x88] sm:$0xff]
      %v948 = vld [vmem:[%s225 + $0x90] sm:$0xff]
      %v949 = vld [vmem:[%s225 + $0xc0] sm:$0xff]
      %v950 = vld [vmem:[%s225 + $0xc8] sm:$0xff]
      %v951 = vld [vmem:[%s225 + $0xf8] sm:$0xff]
      %v952 = vld [vmem:[%s225 + $0x100] sm:$0xff]
      %v953 = vld [vmem:[%s225 + $0x130] sm:$0xff]
      %v954 = vld [vmem:[%s225 + $0x138] sm:$0xff]
      %v955 = vld [vmem:[%s225 + $0x168] sm:$0xff]
      %v956 = vld [vmem:[%s225 + $0x170] sm:$0xff]
      %v957 = vld [vmem:[%s225 + $0x1a0] sm:$0xff]
      %v958 = vld [vmem:[%s225 + $0x1a8] sm:$0xff]
      %v959 = vld [vmem:[%s225 + $0x1d8] sm:$0xff]
      %v960 = vld [vmem:[%s225 + $0x1e0] sm:$0xff]
      %v961 = vld [vmem:[%s225 + $0x210] sm:$0xff]
      %v962 = vld [vmem:[%s225 + $0x218] sm:$0xff]
      %v963 = vld [vmem:[%s225 + $0x248] sm:$0xff]
      %v964 = vld [vmem:[%s225 + $0x250] sm:$0xff]
      %v965 = vld [vmem:[%s225 + $0x280] sm:$0xff]
      %v966 = vld [vmem:[%s225 + $0x288] sm:$0xff]
      %v967 = vld [vmem:[%s225 + $0x2b8] sm:$0xff]
      %v968 = vld [vmem:[%s225 + $0x2c0] sm:$0xff]
      %v969 = vld [vmem:[%s225 + $0x2f0] sm:$0xff]
      %v970 = vld [vmem:[%s225 + $0x2f8] sm:$0xff]
      %v971 = vld [vmem:[%s225 + $0x328] sm:$0xff]
      %v972 = vld [vmem:[%s225 + $0x330] sm:$0xff]
      %v973 = vld [vmem:[%s225 + $0x360] sm:$0xff]
      %v974 = vld [vmem:[%s225 + $0x368] sm:$0xff]
      %s975 = scalar_lea.vmem %s1, 8
      %v976 = vld [vmem:[%s975] sm:$0xf]
      %v978 = vsel %vm293, %v943, 0
      %v981 = vsel %vm293, %v944, 0
      %v984 = vsel %vm293, %v945, 0
      %v987 = vsel %vm293, %v946, 0
      %v990 = vsel %vm293, %v947, 0
      %v993 = vsel %vm293, %v948, 0
      %v996 = vsel %vm293, %v949, 0
      %v999 = vsel %vm293, %v950, 0
      %v1002 = vsel %vm293, %v951, 0
      %v1005 = vsel %vm293, %v952, 0
      %v1008 = vsel %vm293, %v953, 0
      %v1011 = vsel %vm293, %v954, 0
      %v1014 = vsel %vm293, %v955, 0
      %v1017 = vsel %vm293, %v956, 0
      %v1020 = vsel %vm293, %v957, 0
      %v1023 = vsel %vm293, %v958, 0
      %v1026 = vsel %vm293, %v959, 0
      %v1029 = vsel %vm293, %v960, 0
      %v1032 = vsel %vm293, %v961, 0
      %v1035 = vsel %vm293, %v962, 0
      %v1038 = vsel %vm293, %v963, 0
      %v1041 = vsel %vm293, %v964, 0
      %v1044 = vsel %vm293, %v965, 0
      %v1047 = vsel %vm293, %v966, 0
      %v1050 = vsel %vm293, %v967, 0
      %v1053 = vsel %vm293, %v968, 0
      %v1056 = vsel %vm293, %v969, 0
      %v1059 = vsel %vm293, %v970, 0
      %v1062 = vsel %vm293, %v971, 0
      %v1065 = vsel %vm293, %v972, 0
      %v1068 = vsel %vm293, %v973, 0
      %v1071 = vsel %vm293, %v974, 0
      %v1074 = vsel %vm390, %v976, 0
      %1076 = vmatprep.subr.mxu0 0.0
      %1077 = vmatpush1.msra.mxu0 %v1074
      %1078 = vmatprep.subr.mxu0 0.0
      %1079 = vmatpush1.msra.mxu0 0.0
      %1080 = vmatprep.subr.mxu0 0.0
      %1081 = vmatpush1.msra.mxu0 0.0
      %1082 = vmatprep.subr.mxu0 0.0
      %1083 = vmatpush1.msra.mxu0 0.0
      %1084 = vmatprep.subr.mxu0 0.0
      %1085 = vmatpush1.msra.mxu0 0.0
      %1086 = vmatprep.subr.mxu0 0.0
      %1087 = vmatpush1.msra.mxu0 0.0
      %1088 = vmatprep.subr.mxu0 0.0
      %1089 = vmatpush1.msra.mxu0 0.0
      %1090 = vmatprep.subr.mxu0 0.0
      %1091 = vmatpush1.msra.mxu0 0.0
      %1092 = vmatprep.subr.mxu0 0.0
      %1093 = vmatpush1.msra.mxu0 0.0
      %1094 = vmatprep.subr.mxu0 0.0
      %1095 = vmatpush1.msra.mxu0 0.0
      %1096 = vmatprep.subr.mxu0 0.0
      %1097 = vmatpush1.msra.mxu0 0.0
      %1098 = vmatprep.subr.mxu0 0.0
      %1099 = vmatpush1.msra.mxu0 0.0
      %1100 = vmatprep.subr.mxu0 0.0
      %1101 = vmatpush1.msra.mxu0 0.0
      %1102 = vmatprep.subr.mxu0 0.0
      %1103 = vmatpush1.msra.mxu0 0.0
      %1104 = vmatprep.subr.mxu0 0.0
      %1105 = vmatpush1.msra.mxu0 0.0
      %1106 = vmatprep.subr.mxu0 0.0
      %1107 = vmatpush1.msra.mxu0 0.0
      %1108 = vmatprep.subr.mxu0 0.0
      %1109 = vmatpush1.msra.mxu0 0.0
      %1110 = vmatprep.subr.mxu0 0.0
      %1111 = vmatpush1.msra.mxu0 0.0
      %1112 = vmatprep.subr.mxu0 0.0
      %1113 = vmatpush1.msra.mxu0 0.0
      %1114 = vmatprep.subr.mxu0 0.0
      %1115 = vmatpush1.msra.mxu0 0.0
      %1116 = vmatprep.subr.mxu0 0.0
      %1117 = vmatpush1.msra.mxu0 0.0
      %1118 = vmatprep.subr.mxu0 0.0
      %1119 = vmatpush1.msra.mxu0 0.0
      %1120 = vmatprep.subr.mxu0 0.0
      %1121 = vmatpush1.msra.mxu0 0.0
      %1122 = vmatprep.subr.mxu0 0.0
      %1123 = vmatpush1.msra.mxu0 0.0
      %1124 = vmatprep.subr.mxu0 0.0
      %1125 = vmatpush1.msra.mxu0 0.0
      %1126 = vmatprep.subr.mxu0 0.0
      %1127 = vmatpush1.msra.mxu0 0.0
      %1128 = vmatprep.subr.mxu0 0.0
      %1129 = vmatpush1.msra.mxu0 0.0
      %1130 = vmatprep.subr.mxu0 0.0
      %1131 = vmatpush1.msra.mxu0 0.0
      %1132 = vmatprep.subr.mxu0 0.0
      %1133 = vmatpush1.msra.mxu0 0.0
      %1134 = vmatprep.subr.mxu0 0.0
      %1135 = vmatpush1.msra.mxu0 0.0
      %1136 = vmatprep.subr.mxu0 0.0
      %1137 = vmatpush1.msra.mxu0 0.0
      %1138 = vmatprep.subr.mxu0 0.0
      %1139 = vmatpush1.msra.mxu0 0.0
      %1140 = vmatprep.mubr.f32.mxu0 0.0
      %1141 = vmatmul.mubr.f32.gmra.mrb[0].mxu0 %v978
      %v1142 = vpop.f32.mrb[0].mxu0
      %v1143 = vadd.f32 0.0, %v1142
      %v1144 = vpop.f32.mrb[0].mxu0
      %1145 = vmatprep.mubr.f32.mxu0 0.0
      %1146 = vmatmul.mubr.f32.gmra.mrb[0].mxu0 %v981
      %v1147 = vpop.f32.mrb[0].mxu0
      %v1148 = vadd.f32 0.0, %v1147
      %v1149 = vpop.f32.mrb[0].mxu0
      %1150 = vmatprep.mubr.f32.mxu0 0.0
      %1151 = vmatmul.mubr.f32.gmra.mrb[0].mxu0 %v984
      %v1152 = vpop.f32.mrb[0].mxu0
      %v1153 = vadd.f32 0.0, %v1152
      %v1154 = vpop.f32.mrb[0].mxu0
      %1155 = vmatprep.mubr.f32.mxu0 0.0
      %1156 = vmatmul.mubr.f32.gmra.mrb[0].mxu0 %v987
      %v1157 = vpop.f32.mrb[0].mxu0
      %v1158 = vadd.f32 0.0, %v1157
      %v1159 = vpop.f32.mrb[0].mxu0
      %1160 = vmatprep.mubr.f32.mxu0 0.0
      %1161 = vmatmul.mubr.f32.gmra.mrb[0].mxu0 %v990
      %v1162 = vpop.f32.mrb[0].mxu0
      %v1163 = vadd.f32 0.0, %v1162
      %v1164 = vpop.f32.mrb[0].mxu0
      %1165 = vmatprep.mubr.f32.mxu0 0.0
      %1166 = vmatmul.mubr.f32.gmra.mrb[0].mxu0 %v993
      %v1167 = vpop.f32.mrb[0].mxu0
      %v1168 = vadd.f32 0.0, %v1167
      %v1169 = vpop.f32.mrb[0].mxu0
      %1170 = vmatprep.mubr.f32.mxu0 0.0
      %1171 = vmatmul.mubr.f32.gmra.mrb[0].mxu0 %v996
      %v1172 = vpop.f32.mrb[0].mxu0
      %v1173 = vadd.f32 0.0, %v1172
      %v1174 = vpop.f32.mrb[0].mxu0
      %1175 = vmatprep.mubr.f32.mxu0 0.0
      %1176 = vmatmul.mubr.f32.gmra.mrb[0].mxu0 %v999
      %v1177 = vpop.f32.mrb[0].mxu0
      %v1178 = vadd.f32 0.0, %v1177
      %v1179 = vpop.f32.mrb[0].mxu0
      %1180 = vmatprep.mubr.f32.mxu0 0.0
      %1181 = vmatmul.mubr.f32.gmra.mrb[0].mxu0 %v1002
      %v1182 = vpop.f32.mrb[0].mxu0
      %v1183 = vadd.f32 0.0, %v1182
      %v1184 = vpop.f32.mrb[0].mxu0
      %1185 = vmatprep.mubr.f32.mxu0 0.0
      %1186 = vmatmul.mubr.f32.gmra.mrb[0].mxu0 %v1005
      %v1187 = vpop.f32.mrb[0].mxu0
      %v1188 = vadd.f32 0.0, %v1187
      %v1189 = vpop.f32.mrb[0].mxu0
      %1190 = vmatprep.mubr.f32.mxu0 0.0
      %1191 = vmatmul.mubr.f32.gmra.mrb[0].mxu0 %v1008
      %v1192 = vpop.f32.mrb[0].mxu0
      %v1193 = vadd.f32 0.0, %v1192
      %v1194 = vpop.f32.mrb[0].mxu0
      %1195 = vmatprep.mubr.f32.mxu0 0.0
      %1196 = vmatmul.mubr.f32.gmra.mrb[0].mxu0 %v1011
      %v1197 = vpop.f32.mrb[0].mxu0
      %v1198 = vadd.f32 0.0, %v1197
      %v1199 = vpop.f32.mrb[0].mxu0
      %1200 = vmatprep.mubr.f32.mxu0 0.0
      %1201 = vmatmul.mubr.f32.gmra.mrb[0].mxu0 %v1014
      %v1202 = vpop.f32.mrb[0].mxu0
      %v1203 = vadd.f32 0.0, %v1202
      %v1204 = vpop.f32.mrb[0].mxu0
      %1205 = vmatprep.mubr.f32.mxu0 0.0
      %1206 = vmatmul.mubr.f32.gmra.mrb[0].mxu0 %v1017
      %v1207 = vpop.f32.mrb[0].mxu0
      %v1208 = vadd.f32 0.0, %v1207
      %v1209 = vpop.f32.mrb[0].mxu0
      %1210 = vmatprep.mubr.f32.mxu0 0.0
      %1211 = vmatmul.mubr.f32.gmra.mrb[0].mxu0 %v1020
      %v1212 = vpop.f32.mrb[0].mxu0
      %v1213 = vadd.f32 0.0, %v1212
      %v1214 = vpop.f32.mrb[0].mxu0
      %1215 = vmatprep.mubr.f32.mxu0 0.0
      %1216 = vmatmul.mubr.f32.gmra.mrb[0].mxu0 %v1023
      %v1217 = vpop.f32.mrb[0].mxu0
      %v1218 = vadd.f32 0.0, %v1217
      %v1219 = vpop.f32.mrb[0].mxu0
      %1220 = vmatprep.mubr.f32.mxu0 0.0
      %1221 = vmatmul.mubr.f32.gmra.mrb[0].mxu0 %v1026
      %v1222 = vpop.f32.mrb[0].mxu0
      %v1223 = vadd.f32 0.0, %v1222
      %v1224 = vpop.f32.mrb[0].mxu0
      %1225 = vmatprep.mubr.f32.mxu0 0.0
      %1226 = vmatmul.mubr.f32.gmra.mrb[0].mxu0 %v1029
      %v1227 = vpop.f32.mrb[0].mxu0
      %v1228 = vadd.f32 0.0, %v1227
      %v1229 = vpop.f32.mrb[0].mxu0
      %1230 = vmatprep.mubr.f32.mxu0 0.0
      %1231 = vmatmul.mubr.f32.gmra.mrb[0].mxu0 %v1032
      %v1232 = vpop.f32.mrb[0].mxu0
      %v1233 = vadd.f32 0.0, %v1232
      %v1234 = vpop.f32.mrb[0].mxu0
      %1235 = vmatprep.mubr.f32.mxu0 0.0
      %1236 = vmatmul.mubr.f32.gmra.mrb[0].mxu0 %v1035
      %v1237 = vpop.f32.mrb[0].mxu0
      %v1238 = vadd.f32 0.0, %v1237
      %v1239 = vpop.f32.mrb[0].mxu0
      %1240 = vmatprep.mubr.f32.mxu0 0.0
      %1241 = vmatmul.mubr.f32.gmra.mrb[0].mxu0 %v1038
      %v1242 = vpop.f32.mrb[0].mxu0
      %v1243 = vadd.f32 0.0, %v1242
      %v1244 = vpop.f32.mrb[0].mxu0
      %1245 = vmatprep.mubr.f32.mxu0 0.0
      %1246 = vmatmul.mubr.f32.gmra.mrb[0].mxu0 %v1041
      %v1247 = vpop.f32.mrb[0].mxu0
      %v1248 = vadd.f32 0.0, %v1247
      %v1249 = vpop.f32.mrb[0].mxu0
      %1250 = vmatprep.mubr.f32.mxu0 0.0
      %1251 = vmatmul.mubr.f32.gmra.mrb[0].mxu0 %v1044
      %v1252 = vpop.f32.mrb[0].mxu0
      %v1253 = vadd.f32 0.0, %v1252
      %v1254 = vpop.f32.mrb[0].mxu0
      %1255 = vmatprep.mubr.f32.mxu0 0.0
      %1256 = vmatmul.mubr.f32.gmra.mrb[0].mxu0 %v1047
      %v1257 = vpop.f32.mrb[0].mxu0
      %v1258 = vadd.f32 0.0, %v1257
      %v1259 = vpop.f32.mrb[0].mxu0
      %1260 = vmatprep.mubr.f32.mxu0 0.0
      %1261 = vmatmul.mubr.f32.gmra.mrb[0].mxu0 %v1050
      %v1262 = vpop.f32.mrb[0].mxu0
      %v1263 = vadd.f32 0.0, %v1262
      %v1264 = vpop.f32.mrb[0].mxu0
      %1265 = vmatprep.mubr.f32.mxu0 0.0
      %1266 = vmatmul.mubr.f32.gmra.mrb[0].mxu0 %v1053
      %v1267 = vpop.f32.mrb[0].mxu0
      %v1268 = vadd.f32 0.0, %v1267
      %v1269 = vpop.f32.mrb[0].mxu0
      %1270 = vmatprep.mubr.f32.mxu0 0.0
      %1271 = vmatmul.mubr.f32.gmra.mrb[0].mxu0 %v1056
      %v1272 = vpop.f32.mrb[0].mxu0
      %v1273 = vadd.f32 0.0, %v1272
      %v1274 = vpop.f32.mrb[0].mxu0
      %1275 = vmatprep.mubr.f32.mxu0 0.0
      %1276 = vmatmul.mubr.f32.gmra.mrb[0].mxu0 %v1059
      %v1277 = vpop.f32.mrb[0].mxu0
      %v1278 = vadd.f32 0.0, %v1277
      %v1279 = vpop.f32.mrb[0].mxu0
      %1280 = vmatprep.mubr.f32.mxu0 0.0
      %1281 = vmatmul.mubr.f32.gmra.mrb[0].mxu0 %v1062
      %v1282 = vpop.f32.mrb[0].mxu0
      %v1283 = vadd.f32 0.0, %v1282
      %v1284 = vpop.f32.mrb[0].mxu0
      %1285 = vmatprep.mubr.f32.mxu0 0.0
      %1286 = vmatmul.mubr.f32.gmra.mrb[0].mxu0 %v1065
      %v1287 = vpop.f32.mrb[0].mxu0
      %v1288 = vadd.f32 0.0, %v1287
      %v1289 = vpop.f32.mrb[0].mxu0
      %1290 = vmatprep.mubr.f32.mxu0 0.0
      %1291 = vmatmul.mubr.f32.gmra.mrb[0].mxu0 %v1068
      %v1292 = vpop.f32.mrb[0].mxu0
      %v1293 = vadd.f32 0.0, %v1292
      %v1294 = vpop.f32.mrb[0].mxu0
      %1295 = vmatprep.mubr.f32.mxu0 0.0
      %1296 = vmatmul.mubr.f32.gmra.mrb[0].mxu0 %v1071
      %v1297 = vpop.f32.mrb[0].mxu0
      %v1298 = vadd.f32 0.0, %v1297
      %v1299 = vpop.f32.mrb[0].mxu0
      %1300 = vdwg.mxu0
      %v1301 = vadd.f32 %v785, %v1143
      %v1302 = vadd.f32 %v790, %v1148
      %v1303 = vadd.f32 %v795, %v1153
      %v1304 = vadd.f32 %v800, %v1158
      %v1305 = vadd.f32 %v805, %v1163
      %v1306 = vadd.f32 %v810, %v1168
      %v1307 = vadd.f32 %v815, %v1173
      %v1308 = vadd.f32 %v820, %v1178
      %v1309 = vadd.f32 %v825, %v1183
      %v1310 = vadd.f32 %v830, %v1188
      %v1311 = vadd.f32 %v835, %v1193
      %v1312 = vadd.f32 %v840, %v1198
      %v1313 = vadd.f32 %v845, %v1203
      %v1314 = vadd.f32 %v850, %v1208
      %v1315 = vadd.f32 %v855, %v1213
      %v1316 = vadd.f32 %v860, %v1218
      %v1317 = vadd.f32 %v865, %v1223
      %v1318 = vadd.f32 %v870, %v1228
      %v1319 = vadd.f32 %v875, %v1233
      %v1320 = vadd.f32 %v880, %v1238
      %v1321 = vadd.f32 %v885, %v1243
      %v1322 = vadd.f32 %v890, %v1248
      %v1323 = vadd.f32 %v895, %v1253
      %v1324 = vadd.f32 %v900, %v1258
      %v1325 = vadd.f32 %v905, %v1263
      %v1326 = vadd.f32 %v910, %v1268
      %v1327 = vadd.f32 %v915, %v1273
      %v1328 = vadd.f32 %v920, %v1278
      %v1329 = vadd.f32 %v925, %v1283
      %v1330 = vadd.f32 %v930, %v1288
      %v1331 = vadd.f32 %v935, %v1293
      %v1332 = vadd.f32 %v940, %v1298
      %s1333 = scalar_lea.vmem %s219, 1008
      %v1334 = vld [vmem:[%s1333 + $0xc] sm:$0xff]
      %v1335 = vld [vmem:[%s1333 + $0x14] sm:$0xff]
      %v1336 = vld [vmem:[%s1333 + $0x44] sm:$0xff]
      %v1337 = vld [vmem:[%s1333 + $0x4c] sm:$0xff]
      %v1338 = vld [vmem:[%s1333 + $0x7c] sm:$0xff]
      %v1339 = vld [vmem:[%s1333 + $0x84] sm:$0xff]
      %v1340 = vld [vmem:[%s1333 + $0xb4] sm:$0xff]
      %v1341 = vld [vmem:[%s1333 + $0xbc] sm:$0xff]
      %v1342 = vld [vmem:[%s1333 + $0xec] sm:$0xff]
      %v1343 = vld [vmem:[%s1333 + $0xf4] sm:$0xff]
      %v1344 = vld [vmem:[%s1333 + $0x124] sm:$0xff]
      %v1345 = vld [vmem:[%s1333 + $0x12c] sm:$0xff]
      %v1346 = vld [vmem:[%s1333 + $0x15c] sm:$0xff]
      %v1347 = vld [vmem:[%s1333 + $0x164] sm:$0xff]
      %v1348 = vld [vmem:[%s1333 + $0x194] sm:$0xff]
      %v1349 = vld [vmem:[%s1333 + $0x19c] sm:$0xff]
      %v1350 = vld [vmem:[%s1333 + $0x1cc] sm:$0xff]
      %v1351 = vld [vmem:[%s1333 + $0x1d4] sm:$0xff]
      %v1352 = vld [vmem:[%s1333 + $0x204] sm:$0xff]
      %v1353 = vld [vmem:[%s1333 + $0x20c] sm:$0xff]
      %v1354 = vld [vmem:[%s1333 + $0x23c] sm:$0xff]
      %v1355 = vld [vmem:[%s1333 + $0x244] sm:$0xff]
      %v1356 = vld [vmem:[%s1333 + $0x274] sm:$0xff]
      %v1357 = vld [vmem:[%s1333 + $0x27c] sm:$0xff]
      %v1358 = vld [vmem:[%s1333 + $0x2ac] sm:$0xff]
      %v1359 = vld [vmem:[%s1333 + $0x2b4] sm:$0xff]
      %v1360 = vld [vmem:[%s1333 + $0x2e4] sm:$0xff]
      %v1361 = vld [vmem:[%s1333 + $0x2ec] sm:$0xff]
      %v1362 = vld [vmem:[%s1333 + $0x31c] sm:$0xff]
      %v1363 = vld [vmem:[%s1333 + $0x324] sm:$0xff]
      %v1364 = vld [vmem:[%s1333 + $0x354] sm:$0xff]
      %v1365 = vld [vmem:[%s1333 + $0x35c] sm:$0xff]
      %s1366 = scalar_lea.vmem %s1, 12
      %v1367 = vld [vmem:[%s1366] sm:$0xf]
      %v1369 = vsel %vm293, %v1334, 0
      %v1372 = vsel %vm293, %v1335, 0
      %v1375 = vsel %vm293, %v1336, 0
      %v1378 = vsel %vm293, %v1337, 0
      %v1381 = vsel %vm293, %v1338, 0
      %v1384 = vsel %vm293, %v1339, 0
      %v1387 = vsel %vm293, %v1340, 0
      %v1390 = vsel %vm293, %v1341, 0
      %v1393 = vsel %vm293, %v1342, 0
      %v1396 = vsel %vm293, %v1343, 0
      %v1399 = vsel %vm293, %v1344, 0
      %v1402 = vsel %vm293, %v1345, 0
      %v1405 = vsel %vm293, %v1346, 0
      %v1408 = vsel %vm293, %v1347, 0
      %v1411 = vsel %vm293, %v1348, 0
      %v1414 = vsel %vm293, %v1349, 0
      %v1417 = vsel %vm293, %v1350, 0
      %v1420 = vsel %vm293, %v1351, 0
      %v1423 = vsel %vm293, %v1352, 0
      %v1426 = vsel %vm293, %v1353, 0
      %v1429 = vsel %vm293, %v1354, 0
      %v1432 = vsel %vm293, %v1355, 0
      %v1435 = vsel %vm293, %v1356, 0
      %v1438 = vsel %vm293, %v1357, 0
      %v1441 = vsel %vm293, %v1358, 0
      %v1444 = vsel %vm293, %v1359, 0
      %v1447 = vsel %vm293, %v1360, 0
      %v1450 = vsel %vm293, %v1361, 0
      %v1453 = vsel %vm293, %v1362, 0
      %v1456 = vsel %vm293, %v1363, 0
      %v1459 = vsel %vm293, %v1364, 0
      %v1462 = vsel %vm293, %v1365, 0
      %v1465 = vsel %vm390, %v1367, 0
      %1467 = vmatprep.subr.mxu0 0.0
      %1468 = vmatpush1.msra.mxu0 %v1465
      %1469 = vmatprep.subr.mxu0 0.0
      %1470 = vmatpush1.msra.mxu0 0.0
      %1471 = vmatprep.subr.mxu0 0.0
      %1472 = vmatpush1.msra.mxu0 0.0
      %1473 = vmatprep.subr.mxu0 0.0
      %1474 = vmatpush1.msra.mxu0 0.0
      %1475 = vmatprep.subr.mxu0 0.0
      %1476 = vmatpush1.msra.mxu0 0.0
      %1477 = vmatprep.subr.mxu0 0.0
      %1478 = vmatpush1.msra.mxu0 0.0
      %1479 = vmatprep.subr.mxu0 0.0
      %1480 = vmatpush1.msra.mxu0 0.0
      %1481 = vmatprep.subr.mxu0 0.0
      %1482 = vmatpush1.msra.mxu0 0.0
      %1483 = vmatprep.subr.mxu0 0.0
      %1484 = vmatpush1.msra.mxu0 0.0
      %1485 = vmatprep.subr.mxu0 0.0
      %1486 = vmatpush1.msra.mxu0 0.0
      %1487 = vmatprep.subr.mxu0 0.0
      %1488 = vmatpush1.msra.mxu0 0.0
      %1489 = vmatprep.subr.mxu0 0.0
      %1490 = vmatpush1.msra.mxu0 0.0
      %1491 = vmatprep.subr.mxu0 0.0
      %1492 = vmatpush1.msra.mxu0 0.0
      %1493 = vmatprep.subr.mxu0 0.0
      %1494 = vmatpush1.msra.mxu0 0.0
      %1495 = vmatprep.subr.mxu0 0.0
      %1496 = vmatpush1.msra.mxu0 0.0
      %1497 = vmatprep.subr.mxu0 0.0
      %1498 = vmatpush1.msra.mxu0 0.0
      %1499 = vmatprep.subr.mxu0 0.0
      %1500 = vmatpush1.msra.mxu0 0.0
      %1501 = vmatprep.subr.mxu0 0.0
      %1502 = vmatpush1.msra.mxu0 0.0
      %1503 = vmatprep.subr.mxu0 0.0
      %1504 = vmatpush1.msra.mxu0 0.0
      %1505 = vmatprep.subr.mxu0 0.0
      %1506 = vmatpush1.msra.mxu0 0.0
      %1507 = vmatprep.subr.mxu0 0.0
      %1508 = vmatpush1.msra.mxu0 0.0
      %1509 = vmatprep.subr.mxu0 0.0
      %1510 = vmatpush1.msra.mxu0 0.0
      %1511 = vmatprep.subr.mxu0 0.0
      %1512 = vmatpush1.msra.mxu0 0.0
      %1513 = vmatprep.subr.mxu0 0.0
      %1514 = vmatpush1.msra.mxu0 0.0
      %1515 = vmatprep.subr.mxu0 0.0
      %1516 = vmatpush1.msra.mxu0 0.0
      %1517 = vmatprep.subr.mxu0 0.0
      %1518 = vmatpush1.msra.mxu0 0.0
      %1519 = vmatprep.subr.mxu0 0.0
      %1520 = vmatpush1.msra.mxu0 0.0
      %1521 = vmatprep.subr.mxu0 0.0
      %1522 = vmatpush1.msra.mxu0 0.0
      %1523 = vmatprep.subr.mxu0 0.0
      %1524 = vmatpush1.msra.mxu0 0.0
      %1525 = vmatprep.subr.mxu0 0.0
      %1526 = vmatpush1.msra.mxu0 0.0
      %1527 = vmatprep.subr.mxu0 0.0
      %1528 = vmatpush1.msra.mxu0 0.0
      %1529 = vmatprep.subr.mxu0 0.0
      %1530 = vmatpush1.msra.mxu0 0.0
      %1531 = vmatprep.mubr.f32.mxu0 0.0
      %1532 = vmatmul.mubr.f32.gmra.mrb[0].mxu0 %v1369
      %v1533 = vpop.f32.mrb[0].mxu0
      %v1534 = vadd.f32 0.0, %v1533
      %v1535 = vpop.f32.mrb[0].mxu0
      %1536 = vmatprep.mubr.f32.mxu0 0.0
      %1537 = vmatmul.mubr.f32.gmra.mrb[0].mxu0 %v1372
      %v1538 = vpop.f32.mrb[0].mxu0
      %v1539 = vadd.f32 0.0, %v1538
      %v1540 = vpop.f32.mrb[0].mxu0
      %1541 = vmatprep.mubr.f32.mxu0 0.0
      %1542 = vmatmul.mubr.f32.gmra.mrb[0].mxu0 %v1375
      %v1543 = vpop.f32.mrb[0].mxu0
      %v1544 = vadd.f32 0.0, %v1543
      %v1545 = vpop.f32.mrb[0].mxu0
      %1546 = vmatprep.mubr.f32.mxu0 0.0
      %1547 = vmatmul.mubr.f32.gmra.mrb[0].mxu0 %v1378
      %v1548 = vpop.f32.mrb[0].mxu0
      %v1549 = vadd.f32 0.0, %v1548
      %v1550 = vpop.f32.mrb[0].mxu0
      %1551 = vmatprep.mubr.f32.mxu0 0.0
      %1552 = vmatmul.mubr.f32.gmra.mrb[0].mxu0 %v1381
      %v1553 = vpop.f32.mrb[0].mxu0
      %v1554 = vadd.f32 0.0, %v1553
      %v1555 = vpop.f32.mrb[0].mxu0
      %1556 = vmatprep.mubr.f32.mxu0 0.0
      %1557 = vmatmul.mubr.f32.gmra.mrb[0].mxu0 %v1384
      %v1558 = vpop.f32.mrb[0].mxu0
      %v1559 = vadd.f32 0.0, %v1558
      %v1560 = vpop.f32.mrb[0].mxu0
      %1561 = vmatprep.mubr.f32.mxu0 0.0
      %1562 = vmatmul.mubr.f32.gmra.mrb[0].mxu0 %v1387
      %v1563 = vpop.f32.mrb[0].mxu0
      %v1564 = vadd.f32 0.0, %v1563
      %v1565 = vpop.f32.mrb[0].mxu0
      %1566 = vmatprep.mubr.f32.mxu0 0.0
      %1567 = vmatmul.mubr.f32.gmra.mrb[0].mxu0 %v1390
      %v1568 = vpop.f32.mrb[0].mxu0
      %v1569 = vadd.f32 0.0, %v1568
      %v1570 = vpop.f32.mrb[0].mxu0
      %1571 = vmatprep.mubr.f32.mxu0 0.0
      %1572 = vmatmul.mubr.f32.gmra.mrb[0].mxu0 %v1393
      %v1573 = vpop.f32.mrb[0].mxu0
      %v1574 = vadd.f32 0.0, %v1573
      %v1575 = vpop.f32.mrb[0].mxu0
      %1576 = vmatprep.mubr.f32.mxu0 0.0
      %1577 = vmatmul.mubr.f32.gmra.mrb[0].mxu0 %v1396
      %v1578 = vpop.f32.mrb[0].mxu0
      %v1579 = vadd.f32 0.0, %v1578
      %v1580 = vpop.f32.mrb[0].mxu0
      %1581 = vmatprep.mubr.f32.mxu0 0.0
      %1582 = vmatmul.mubr.f32.gmra.mrb[0].mxu0 %v1399
      %v1583 = vpop.f32.mrb[0].mxu0
      %v1584 = vadd.f32 0.0, %v1583
      %v1585 = vpop.f32.mrb[0].mxu0
      %1586 = vmatprep.mubr.f32.mxu0 0.0
      %1587 = vmatmul.mubr.f32.gmra.mrb[0].mxu0 %v1402
      %v1588 = vpop.f32.mrb[0].mxu0
      %v1589 = vadd.f32 0.0, %v1588
      %v1590 = vpop.f32.mrb[0].mxu0
      %1591 = vmatprep.mubr.f32.mxu0 0.0
      %1592 = vmatmul.mubr.f32.gmra.mrb[0].mxu0 %v1405
      %v1593 = vpop.f32.mrb[0].mxu0
      %v1594 = vadd.f32 0.0, %v1593
      %v1595 = vpop.f32.mrb[0].mxu0
      %1596 = vmatprep.mubr.f32.mxu0 0.0
      %1597 = vmatmul.mubr.f32.gmra.mrb[0].mxu0 %v1408
      %v1598 = vpop.f32.mrb[0].mxu0
      %v1599 = vadd.f32 0.0, %v1598
      %v1600 = vpop.f32.mrb[0].mxu0
      %1601 = vmatprep.mubr.f32.mxu0 0.0
      %1602 = vmatmul.mubr.f32.gmra.mrb[0].mxu0 %v1411
      %v1603 = vpop.f32.mrb[0].mxu0
      %v1604 = vadd.f32 0.0, %v1603
      %v1605 = vpop.f32.mrb[0].mxu0
      %1606 = vmatprep.mubr.f32.mxu0 0.0
      %1607 = vmatmul.mubr.f32.gmra.mrb[0].mxu0 %v1414
      %v1608 = vpop.f32.mrb[0].mxu0
      %v1609 = vadd.f32 0.0, %v1608
      %v1610 = vpop.f32.mrb[0].mxu0
      %1611 = vmatprep.mubr.f32.mxu0 0.0
      %1612 = vmatmul.mubr.f32.gmra.mrb[0].mxu0 %v1417
      %v1613 = vpop.f32.mrb[0].mxu0
      %v1614 = vadd.f32 0.0, %v1613
      %v1615 = vpop.f32.mrb[0].mxu0
      %1616 = vmatprep.mubr.f32.mxu0 0.0
      %1617 = vmatmul.mubr.f32.gmra.mrb[0].mxu0 %v1420
      %v1618 = vpop.f32.mrb[0].mxu0
      %v1619 = vadd.f32 0.0, %v1618
      %v1620 = vpop.f32.mrb[0].mxu0
      %1621 = vmatprep.mubr.f32.mxu0 0.0
      %1622 = vmatmul.mubr.f32.gmra.mrb[0].mxu0 %v1423
      %v1623 = vpop.f32.mrb[0].mxu0
      %v1624 = vadd.f32 0.0, %v1623
      %v1625 = vpop.f32.mrb[0].mxu0
      %1626 = vmatprep.mubr.f32.mxu0 0.0
      %1627 = vmatmul.mubr.f32.gmra.mrb[0].mxu0 %v1426
      %v1628 = vpop.f32.mrb[0].mxu0
      %v1629 = vadd.f32 0.0, %v1628
      %v1630 = vpop.f32.mrb[0].mxu0
      %1631 = vmatprep.mubr.f32.mxu0 0.0
      %1632 = vmatmul.mubr.f32.gmra.mrb[0].mxu0 %v1429
      %v1633 = vpop.f32.mrb[0].mxu0
      %v1634 = vadd.f32 0.0, %v1633
      %v1635 = vpop.f32.mrb[0].mxu0
      %1636 = vmatprep.mubr.f32.mxu0 0.0
      %1637 = vmatmul.mubr.f32.gmra.mrb[0].mxu0 %v1432
      %v1638 = vpop.f32.mrb[0].mxu0
      %v1639 = vadd.f32 0.0, %v1638
      %v1640 = vpop.f32.mrb[0].mxu0
      %1641 = vmatprep.mubr.f32.mxu0 0.0
      %1642 = vmatmul.mubr.f32.gmra.mrb[0].mxu0 %v1435
      %v1643 = vpop.f32.mrb[0].mxu0
      %v1644 = vadd.f32 0.0, %v1643
      %v1645 = vpop.f32.mrb[0].mxu0
      %1646 = vmatprep.mubr.f32.mxu0 0.0
      %1647 = vmatmul.mubr.f32.gmra.mrb[0].mxu0 %v1438
      %v1648 = vpop.f32.mrb[0].mxu0
      %v1649 = vadd.f32 0.0, %v1648
      %v1650 = vpop.f32.mrb[0].mxu0
      %1651 = vmatprep.mubr.f32.mxu0 0.0
      %1652 = vmatmul.mubr.f32.gmra.mrb[0].mxu0 %v1441
      %v1653 = vpop.f32.mrb[0].mxu0
      %v1654 = vadd.f32 0.0, %v1653
      %v1655 = vpop.f32.mrb[0].mxu0
      %1656 = vmatprep.mubr.f32.mxu0 0.0
      %1657 = vmatmul.mubr.f32.gmra.mrb[0].mxu0 %v1444
      %v1658 = vpop.f32.mrb[0].mxu0
      %v1659 = vadd.f32 0.0, %v1658
      %v1660 = vpop.f32.mrb[0].mxu0
      %1661 = vmatprep.mubr.f32.mxu0 0.0
      %1662 = vmatmul.mubr.f32.gmra.mrb[0].mxu0 %v1447
      %v1663 = vpop.f32.mrb[0].mxu0
      %v1664 = vadd.f32 0.0, %v1663
      %v1665 = vpop.f32.mrb[0].mxu0
      %1666 = vmatprep.mubr.f32.mxu0 0.0
      %1667 = vmatmul.mubr.f32.gmra.mrb[0].mxu0 %v1450
      %v1668 = vpop.f32.mrb[0].mxu0
      %v1669 = vadd.f32 0.0, %v1668
      %v1670 = vpop.f32.mrb[0].mxu0
      %1671 = vmatprep.mubr.f32.mxu0 0.0
      %1672 = vmatmul.mubr.f32.gmra.mrb[0].mxu0 %v1453
      %v1673 = vpop.f32.mrb[0].mxu0
      %v1674 = vadd.f32 0.0, %v1673
      %v1675 = vpop.f32.mrb[0].mxu0
      %1676 = vmatprep.mubr.f32.mxu0 0.0
      %1677 = vmatmul.mubr.f32.gmra.mrb[0].mxu0 %v1456
      %v1678 = vpop.f32.mrb[0].mxu0
      %v1679 = vadd.f32 0.0, %v1678
      %v1680 = vpop.f32.mrb[0].mxu0
      %1681 = vmatprep.mubr.f32.mxu0 0.0
      %1682 = vmatmul.mubr.f32.gmra.mrb[0].mxu0 %v1459
      %v1683 = vpop.f32.mrb[0].mxu0
      %v1684 = vadd.f32 0.0, %v1683
      %v1685 = vpop.f32.mrb[0].mxu0
      %1686 = vmatprep.mubr.f32.mxu0 0.0
      %1687 = vmatmul.mubr.f32.gmra.mrb[0].mxu0 %v1462
      %v1688 = vpop.f32.mrb[0].mxu0
      %v1689 = vadd.f32 0.0, %v1688
      %v1690 = vpop.f32.mrb[0].mxu0
      %1691 = vdwg.mxu0
      %v1692 = vadd.f32 %v1301, %v1534
      %v1693 = vadd.f32 %v1302, %v1539
      %v1694 = vadd.f32 %v1303, %v1544
      %v1695 = vadd.f32 %v1304, %v1549
      %v1696 = vadd.f32 %v1305, %v1554
      %v1697 = vadd.f32 %v1306, %v1559
      %v1698 = vadd.f32 %v1307, %v1564
      %v1699 = vadd.f32 %v1308, %v1569
      %v1700 = vadd.f32 %v1309, %v1574
      %v1701 = vadd.f32 %v1310, %v1579
      %v1702 = vadd.f32 %v1311, %v1584
      %v1703 = vadd.f32 %v1312, %v1589
      %v1704 = vadd.f32 %v1313, %v1594
      %v1705 = vadd.f32 %v1314, %v1599
      %v1706 = vadd.f32 %v1315, %v1604
      %v1707 = vadd.f32 %v1316, %v1609
      %v1708 = vadd.f32 %v1317, %v1614
      %v1709 = vadd.f32 %v1318, %v1619
      %v1710 = vadd.f32 %v1319, %v1624
      %v1711 = vadd.f32 %v1320, %v1629
      %v1712 = vadd.f32 %v1321, %v1634
      %v1713 = vadd.f32 %v1322, %v1639
      %v1714 = vadd.f32 %v1323, %v1644
      %v1715 = vadd.f32 %v1324, %v1649
      %v1716 = vadd.f32 %v1325, %v1654
      %v1717 = vadd.f32 %v1326, %v1659
      %v1718 = vadd.f32 %v1327, %v1664
      %v1719 = vadd.f32 %v1328, %v1669
      %v1720 = vadd.f32 %v1329, %v1674
      %v1721 = vadd.f32 %v1330, %v1679
      %v1722 = vadd.f32 %v1331, %v1684
      %v1723 = vadd.f32 %v1332, %v1689
      %v1724 = vld [vmem:[%s1333 + $0x12] sm:$0xff]
      %v1725 = vld [vmem:[%s1333 + $0x1a] sm:$0xff]
      %v1726 = vld [vmem:[%s1333 + $0x4a] sm:$0xff]
      %v1727 = vld [vmem:[%s1333 + $0x52] sm:$0xff]
      %v1728 = vld [vmem:[%s1333 + $0x82] sm:$0xff]
      %v1729 = vld [vmem:[%s1333 + $0x8a] sm:$0xff]
      %v1730 = vld [vmem:[%s1333 + $0xba] sm:$0xff]
      %v1731 = vld [vmem:[%s1333 + $0xc2] sm:$0xff]
      %v1732 = vld [vmem:[%s1333 + $0xf2] sm:$0xff]
      %v1733 = vld [vmem:[%s1333 + $0xfa] sm:$0xff]
      %v1734 = vld [vmem:[%s1333 + $0x12a] sm:$0xff]
      %v1735 = vld [vmem:[%s1333 + $0x132] sm:$0xff]
      %v1736 = vld [vmem:[%s1333 + $0x162] sm:$0xff]
      %v1737 = vld [vmem:[%s1333 + $0x16a] sm:$0xff]
      %v1738 = vld [vmem:[%s1333 + $0x19a] sm:$0xff]
      %v1739 = vld [vmem:[%s1333 + $0x1a2] sm:$0xff]
      %v1740 = vld [vmem:[%s1333 + $0x1d2] sm:$0xff]
      %v1741 = vld [vmem:[%s1333 + $0x1da] sm:$0xff]
      %v1742 = vld [vmem:[%s1333 + $0x20a] sm:$0xff]
      %v1743 = vld [vmem:[%s1333 + $0x212] sm:$0xff]
      %v1744 = vld [vmem:[%s1333 + $0x242] sm:$0xff]
      %v1745 = vld [vmem:[%s1333 + $0x24a] sm:$0xff]
      %v1746 = vld [vmem:[%s1333 + $0x27a] sm:$0xff]
      %v1747 = vld [vmem:[%s1333 + $0x282] sm:$0xff]
      %v1748 = vld [vmem:[%s1333 + $0x2b2] sm:$0xff]
      %v1749 = vld [vmem:[%s1333 + $0x2ba] sm:$0xff]
      %v1750 = vld [vmem:[%s1333 + $0x2ea] sm:$0xff]
      %v1751 = vld [vmem:[%s1333 + $0x2f2] sm:$0xff]
      %v1752 = vld [vmem:[%s1333 + $0x322] sm:$0xff]
      %v1753 = vld [vmem:[%s1333 + $0x32a] sm:$0xff]
      %v1754 = vld [vmem:[%s1333 + $0x35a] sm:$0xff]
      %v1755 = vld [vmem:[%s1333 + $0x362] sm:$0xff]
      %s1756 = scalar_lea.vmem %s1, 16
      %v1757 = vld [vmem:[%s1756] sm:$0xf]
      %v1759 = vsel %vm293, %v1724, 0
      %v1762 = vsel %vm293, %v1725, 0
      %v1765 = vsel %vm293, %v1726, 0
      %v1768 = vsel %vm293, %v1727, 0
      %v1771 = vsel %vm293, %v1728, 0
      %v1774 = vsel %vm293, %v1729, 0
      %v1777 = vsel %vm293, %v1730, 0
      %v1780 = vsel %vm293, %v1731, 0
      %v1783 = vsel %vm293, %v1732, 0
      %v1786 = vsel %vm293, %v1733, 0
      %v1789 = vsel %vm293, %v1734, 0
      %v1792 = vsel %vm293, %v1735, 0
      %v1795 = vsel %vm293, %v1736, 0
      %v1798 = vsel %vm293, %v1737, 0
      %v1801 = vsel %vm293, %v1738, 0
      %v1804 = vsel %vm293, %v1739, 0
      %v1807 = vsel %vm293, %v1740, 0
      %v1810 = vsel %vm293, %v1741, 0
      %v1813 = vsel %vm293, %v1742, 0
      %v1816 = vsel %vm293, %v1743, 0
      %v1819 = vsel %vm293, %v1744, 0
      %v1822 = vsel %vm293, %v1745, 0
      %v1825 = vsel %vm293, %v1746, 0
      %v1828 = vsel %vm293, %v1747, 0
      %v1831 = vsel %vm293, %v1748, 0
      %v1834 = vsel %vm293, %v1749, 0
      %v1837 = vsel %vm293, %v1750, 0
      %v1840 = vsel %vm293, %v1751, 0
      %v1843 = vsel %vm293, %v1752, 0
      %v1846 = vsel %vm293, %v1753, 0
      %v1849 = vsel %vm293, %v1754, 0
      %v1852 = vsel %vm293, %v1755, 0
      %v1855 = vsel %vm390, %v1757, 0
      %1857 = vmatprep.subr.mxu0 0.0
      %1858 = vmatpush1.msra.mxu0 %v1855
      %1859 = vmatprep.subr.mxu0 0.0
      %1860 = vmatpush1.msra.mxu0 0.0
      %1861 = vmatprep.subr.mxu0 0.0
      %1862 = vmatpush1.msra.mxu0 0.0
      %1863 = vmatprep.subr.mxu0 0.0
      %1864 = vmatpush1.msra.mxu0 0.0
      %1865 = vmatprep.subr.mxu0 0.0
      %1866 = vmatpush1.msra.mxu0 0.0
      %1867 = vmatprep.subr.mxu0 0.0
      %1868 = vmatpush1.msra.mxu0 0.0
      %1869 = vmatprep.subr.mxu0 0.0
      %1870 = vmatpush1.msra.mxu0 0.0
      %1871 = vmatprep.subr.mxu0 0.0
      %1872 = vmatpush1.msra.mxu0 0.0
      %1873 = vmatprep.subr.mxu0 0.0
      %1874 = vmatpush1.msra.mxu0 0.0
      %1875 = vmatprep.subr.mxu0 0.0
      %1876 = vmatpush1.msra.mxu0 0.0
      %1877 = vmatprep.subr.mxu0 0.0
      %1878 = vmatpush1.msra.mxu0 0.0
      %1879 = vmatprep.subr.mxu0 0.0
      %1880 = vmatpush1.msra.mxu0 0.0
      %1881 = vmatprep.subr.mxu0 0.0
      %1882 = vmatpush1.msra.mxu0 0.0
      %1883 = vmatprep.subr.mxu0 0.0
      %1884 = vmatpush1.msra.mxu0 0.0
      %1885 = vmatprep.subr.mxu0 0.0
      %1886 = vmatpush1.msra.mxu0 0.0
      %1887 = vmatprep.subr.mxu0 0.0
      %1888 = vmatpush1.msra.mxu0 0.0
      %1889 = vmatprep.subr.mxu0 0.0
      %1890 = vmatpush1.msra.mxu0 0.0
      %1891 = vmatprep.subr.mxu0 0.0
      %1892 = vmatpush1.msra.mxu0 0.0
      %1893 = vmatprep.subr.mxu0 0.0
      %1894 = vmatpush1.msra.mxu0 0.0
      %1895 = vmatprep.subr.mxu0 0.0
      %1896 = vmatpush1.msra.mxu0 0.0
      %1897 = vmatprep.subr.mxu0 0.0
      %1898 = vmatpush1.msra.mxu0 0.0
      %1899 = vmatprep.subr.mxu0 0.0
      %1900 = vmatpush1.msra.mxu0 0.0
      %1901 = vmatprep.subr.mxu0 0.0
      %1902 = vmatpush1.msra.mxu0 0.0
      %1903 = vmatprep.subr.mxu0 0.0
      %1904 = vmatpush1.msra.mxu0 0.0
      %1905 = vmatprep.subr.mxu0 0.0
      %1906 = vmatpush1.msra.mxu0 0.0
      %1907 = vmatprep.subr.mxu0 0.0
      %1908 = vmatpush1.msra.mxu0 0.0
      %1909 = vmatprep.subr.mxu0 0.0
      %1910 = vmatpush1.msra.mxu0 0.0
      %1911 = vmatprep.subr.mxu0 0.0
      %1912 = vmatpush1.msra.mxu0 0.0
      %1913 = vmatprep.subr.mxu0 0.0
      %1914 = vmatpush1.msra.mxu0 0.0
      %1915 = vmatprep.subr.mxu0 0.0
      %1916 = vmatpush1.msra.mxu0 0.0
      %1917 = vmatprep.subr.mxu0 0.0
      %1918 = vmatpush1.msra.mxu0 0.0
      %1919 = vmatprep.subr.mxu0 0.0
      %1920 = vmatpush1.msra.mxu0 0.0
      %1921 = vmatprep.mubr.f32.mxu0 0.0
      %1922 = vmatmul.mubr.f32.gmra.mrb[0].mxu0 %v1759
      %v1923 = vpop.f32.mrb[0].mxu0
      %v1924 = vadd.f32 0.0, %v1923
      %v1925 = vpop.f32.mrb[0].mxu0
      %1926 = vmatprep.mubr.f32.mxu0 0.0
      %1927 = vmatmul.mubr.f32.gmra.mrb[0].mxu0 %v1762
      %v1928 = vpop.f32.mrb[0].mxu0
      %v1929 = vadd.f32 0.0, %v1928
      %v1930 = vpop.f32.mrb[0].mxu0
      %1931 = vmatprep.mubr.f32.mxu0 0.0
      %1932 = vmatmul.mubr.f32.gmra.mrb[0].mxu0 %v1765
      %v1933 = vpop.f32.mrb[0].mxu0
      %v1934 = vadd.f32 0.0, %v1933
      %v1935 = vpop.f32.mrb[0].mxu0
      %1936 = vmatprep.mubr.f32.mxu0 0.0
      %1937 = vmatmul.mubr.f32.gmra.mrb[0].mxu0 %v1768
      %v1938 = vpop.f32.mrb[0].mxu0
      %v1939 = vadd.f32 0.0, %v1938
      %v1940 = vpop.f32.mrb[0].mxu0
      %1941 = vmatprep.mubr.f32.mxu0 0.0
      %1942 = vmatmul.mubr.f32.gmra.mrb[0].mxu0 %v1771
      %v1943 = vpop.f32.mrb[0].mxu0
      %v1944 = vadd.f32 0.0, %v1943
      %v1945 = vpop.f32.mrb[0].mxu0
      %1946 = vmatprep.mubr.f32.mxu0 0.0
      %1947 = vmatmul.mubr.f32.gmra.mrb[0].mxu0 %v1774
      %v1948 = vpop.f32.mrb[0].mxu0
      %v1949 = vadd.f32 0.0, %v1948
      %v1950 = vpop.f32.mrb[0].mxu0
      %1951 = vmatprep.mubr.f32.mxu0 0.0
      %1952 = vmatmul.mubr.f32.gmra.mrb[0].mxu0 %v1777
      %v1953 = vpop.f32.mrb[0].mxu0
      %v1954 = vadd.f32 0.0, %v1953
      %v1955 = vpop.f32.mrb[0].mxu0
      %1956 = vmatprep.mubr.f32.mxu0 0.0
      %1957 = vmatmul.mubr.f32.gmra.mrb[0].mxu0 %v1780
      %v1958 = vpop.f32.mrb[0].mxu0
      %v1959 = vadd.f32 0.0, %v1958
      %v1960 = vpop.f32.mrb[0].mxu0
      %1961 = vmatprep.mubr.f32.mxu0 0.0
      %1962 = vmatmul.mubr.f32.gmra.mrb[0].mxu0 %v1783
      %v1963 = vpop.f32.mrb[0].mxu0
      %v1964 = vadd.f32 0.0, %v1963
      %v1965 = vpop.f32.mrb[0].mxu0
      %1966 = vmatprep.mubr.f32.mxu0 0.0
      %1967 = vmatmul.mubr.f32.gmra.mrb[0].mxu0 %v1786
      %v1968 = vpop.f32.mrb[0].mxu0
      %v1969 = vadd.f32 0.0, %v1968
      %v1970 = vpop.f32.mrb[0].mxu0
      %1971 = vmatprep.mubr.f32.mxu0 0.0
      %1972 = vmatmul.mubr.f32.gmra.mrb[0].mxu0 %v1789
      %v1973 = vpop.f32.mrb[0].mxu0
      %v1974 = vadd.f32 0.0, %v1973
      %v1975 = vpop.f32.mrb[0].mxu0
      %1976 = vmatprep.mubr.f32.mxu0 0.0
      %1977 = vmatmul.mubr.f32.gmra.mrb[0].mxu0 %v1792
      %v1978 = vpop.f32.mrb[0].mxu0
      %v1979 = vadd.f32 0.0, %v1978
      %v1980 = vpop.f32.mrb[0].mxu0
      %1981 = vmatprep.mubr.f32.mxu0 0.0
      %1982 = vmatmul.mubr.f32.gmra.mrb[0].mxu0 %v1795
      %v1983 = vpop.f32.mrb[0].mxu0
      %v1984 = vadd.f32 0.0, %v1983
      %v1985 = vpop.f32.mrb[0].mxu0
      %1986 = vmatprep.mubr.f32.mxu0 0.0
      %1987 = vmatmul.mubr.f32.gmra.mrb[0].mxu0 %v1798
      %v1988 = vpop.f32.mrb[0].mxu0
      %v1989 = vadd.f32 0.0, %v1988
      %v1990 = vpop.f32.mrb[0].mxu0
      %1991 = vmatprep.mubr.f32.mxu0 0.0
      %1992 = vmatmul.mubr.f32.gmra.mrb[0].mxu0 %v1801
      %v1993 = vpop.f32.mrb[0].mxu0
      %v1994 = vadd.f32 0.0, %v1993
      %v1995 = vpop.f32.mrb[0].mxu0
      %1996 = vmatprep.mubr.f32.mxu0 0.0
      %1997 = vmatmul.mubr.f32.gmra.mrb[0].mxu0 %v1804
      %v1998 = vpop.f32.mrb[0].mxu0
      %v1999 = vadd.f32 0.0, %v1998
      %v2000 = vpop.f32.mrb[0].mxu0
      %2001 = vmatprep.mubr.f32.mxu0 0.0
      %2002 = vmatmul.mubr.f32.gmra.mrb[0].mxu0 %v1807
      %v2003 = vpop.f32.mrb[0].mxu0
      %v2004 = vadd.f32 0.0, %v2003
      %v2005 = vpop.f32.mrb[0].mxu0
      %2006 = vmatprep.mubr.f32.mxu0 0.0
      %2007 = vmatmul.mubr.f32.gmra.mrb[0].mxu0 %v1810
      %v2008 = vpop.f32.mrb[0].mxu0
      %v2009 = vadd.f32 0.0, %v2008
      %v2010 = vpop.f32.mrb[0].mxu0
      %2011 = vmatprep.mubr.f32.mxu0 0.0
      %2012 = vmatmul.mubr.f32.gmra.mrb[0].mxu0 %v1813
      %v2013 = vpop.f32.mrb[0].mxu0
      %v2014 = vadd.f32 0.0, %v2013
      %v2015 = vpop.f32.mrb[0].mxu0
      %2016 = vmatprep.mubr.f32.mxu0 0.0
      %2017 = vmatmul.mubr.f32.gmra.mrb[0].mxu0 %v1816
      %v2018 = vpop.f32.mrb[0].mxu0
      %v2019 = vadd.f32 0.0, %v2018
      %v2020 = vpop.f32.mrb[0].mxu0
      %2021 = vmatprep.mubr.f32.mxu0 0.0
      %2022 = vmatmul.mubr.f32.gmra.mrb[0].mxu0 %v1819
      %v2023 = vpop.f32.mrb[0].mxu0
      %v2024 = vadd.f32 0.0, %v2023
      %v2025 = vpop.f32.mrb[0].mxu0
      %2026 = vmatprep.mubr.f32.mxu0 0.0
      %2027 = vmatmul.mubr.f32.gmra.mrb[0].mxu0 %v1822
      %v2028 = vpop.f32.mrb[0].mxu0
      %v2029 = vadd.f32 0.0, %v2028
      %v2030 = vpop.f32.mrb[0].mxu0
      %2031 = vmatprep.mubr.f32.mxu0 0.0
      %2032 = vmatmul.mubr.f32.gmra.mrb[0].mxu0 %v1825
      %v2033 = vpop.f32.mrb[0].mxu0
      %v2034 = vadd.f32 0.0, %v2033
      %v2035 = vpop.f32.mrb[0].mxu0
      %2036 = vmatprep.mubr.f32.mxu0 0.0
      %2037 = vmatmul.mubr.f32.gmra.mrb[0].mxu0 %v1828
      %v2038 = vpop.f32.mrb[0].mxu0
      %v2039 = vadd.f32 0.0, %v2038
      %v2040 = vpop.f32.mrb[0].mxu0
      %2041 = vmatprep.mubr.f32.mxu0 0.0
      %2042 = vmatmul.mubr.f32.gmra.mrb[0].mxu0 %v1831
      %v2043 = vpop.f32.mrb[0].mxu0
      %v2044 = vadd.f32 0.0, %v2043
      %v2045 = vpop.f32.mrb[0].mxu0
      %2046 = vmatprep.mubr.f32.mxu0 0.0
      %2047 = vmatmul.mubr.f32.gmra.mrb[0].mxu0 %v1834
      %v2048 = vpop.f32.mrb[0].mxu0
      %v2049 = vadd.f32 0.0, %v2048
      %v2050 = vpop.f32.mrb[0].mxu0
      %2051 = vmatprep.mubr.f32.mxu0 0.0
      %2052 = vmatmul.mubr.f32.gmra.mrb[0].mxu0 %v1837
      %v2053 = vpop.f32.mrb[0].mxu0
      %v2054 = vadd.f32 0.0, %v2053
      %v2055 = vpop.f32.mrb[0].mxu0
      %2056 = vmatprep.mubr.f32.mxu0 0.0
      %2057 = vmatmul.mubr.f32.gmra.mrb[0].mxu0 %v1840
      %v2058 = vpop.f32.mrb[0].mxu0
      %v2059 = vadd.f32 0.0, %v2058
      %v2060 = vpop.f32.mrb[0].mxu0
      %2061 = vmatprep.mubr.f32.mxu0 0.0
      %2062 = vmatmul.mubr.f32.gmra.mrb[0].mxu0 %v1843
      %v2063 = vpop.f32.mrb[0].mxu0
      %v2064 = vadd.f32 0.0, %v2063
      %v2065 = vpop.f32.mrb[0].mxu0
      %2066 = vmatprep.mubr.f32.mxu0 0.0
      %2067 = vmatmul.mubr.f32.gmra.mrb[0].mxu0 %v1846
      %v2068 = vpop.f32.mrb[0].mxu0
      %v2069 = vadd.f32 0.0, %v2068
      %v2070 = vpop.f32.mrb[0].mxu0
      %2071 = vmatprep.mubr.f32.mxu0 0.0
      %2072 = vmatmul.mubr.f32.gmra.mrb[0].mxu0 %v1849
      %v2073 = vpop.f32.mrb[0].mxu0
      %v2074 = vadd.f32 0.0, %v2073
      %v2075 = vpop.f32.mrb[0].mxu0
      %2076 = vmatprep.mubr.f32.mxu0 0.0
      %2077 = vmatmul.mubr.f32.gmra.mrb[0].mxu0 %v1852
      %v2078 = vpop.f32.mrb[0].mxu0
      %v2079 = vadd.f32 0.0, %v2078
      %v2080 = vpop.f32.mrb[0].mxu0
      %2081 = vdwg.mxu0
      %v2082 = vadd.f32 %v1692, %v1924
      %v2083 = vadd.f32 %v1693, %v1929
      %v2084 = vadd.f32 %v1694, %v1934
      %v2085 = vadd.f32 %v1695, %v1939
      %v2086 = vadd.f32 %v1696, %v1944
      %v2087 = vadd.f32 %v1697, %v1949
      %v2088 = vadd.f32 %v1698, %v1954
      %v2089 = vadd.f32 %v1699, %v1959
      %v2090 = vadd.f32 %v1700, %v1964
      %v2091 = vadd.f32 %v1701, %v1969
      %v2092 = vadd.f32 %v1702, %v1974
      %v2093 = vadd.f32 %v1703, %v1979
      %v2094 = vadd.f32 %v1704, %v1984
      %v2095 = vadd.f32 %v1705, %v1989
      %v2096 = vadd.f32 %v1706, %v1994
      %v2097 = vadd.f32 %v1707, %v1999
      %v2098 = vadd.f32 %v1708, %v2004
      %v2099 = vadd.f32 %v1709, %v2009
      %v2100 = vadd.f32 %v1710, %v2014
      %v2101 = vadd.f32 %v1711, %v2019
      %v2102 = vadd.f32 %v1712, %v2024
      %v2103 = vadd.f32 %v1713, %v2029
      %v2104 = vadd.f32 %v1714, %v2034
      %v2105 = vadd.f32 %v1715, %v2039
      %v2106 = vadd.f32 %v1716, %v2044
      %v2107 = vadd.f32 %v1717, %v2049
      %v2108 = vadd.f32 %v1718, %v2054
      %v2109 = vadd.f32 %v1719, %v2059
      %v2110 = vadd.f32 %v1720, %v2064
      %v2111 = vadd.f32 %v1721, %v2069
      %v2112 = vadd.f32 %v1722, %v2074
      %v2113 = vadd.f32 %v1723, %v2079
      %v2114 = vld [vmem:[%s1333 + $0x18] sm:$0xff]
      %v2115 = vld [vmem:[%s1333 + $0x20] sm:$0xff]
      %v2116 = vld [vmem:[%s1333 + $0x50] sm:$0xff]
      %v2117 = vld [vmem:[%s1333 + $0x58] sm:$0xff]
      %v2118 = vld [vmem:[%s1333 + $0x88] sm:$0xff]
      %v2119 = vld [vmem:[%s1333 + $0x90] sm:$0xff]
      %v2120 = vld [vmem:[%s1333 + $0xc0] sm:$0xff]
      %v2121 = vld [vmem:[%s1333 + $0xc8] sm:$0xff]
      %v2122 = vld [vmem:[%s1333 + $0xf8] sm:$0xff]
      %v2123 = vld [vmem:[%s1333 + $0x100] sm:$0xff]
      %v2124 = vld [vmem:[%s1333 + $0x130] sm:$0xff]
      %v2125 = vld [vmem:[%s1333 + $0x138] sm:$0xff]
      %v2126 = vld [vmem:[%s1333 + $0x168] sm:$0xff]
      %v2127 = vld [vmem:[%s1333 + $0x170] sm:$0xff]
      %v2128 = vld [vmem:[%s1333 + $0x1a0] sm:$0xff]
      %v2129 = vld [vmem:[%s1333 + $0x1a8] sm:$0xff]
      %v2130 = vld [vmem:[%s1333 + $0x1d8] sm:$0xff]
      %v2131 = vld [vmem:[%s1333 + $0x1e0] sm:$0xff]
      %v2132 = vld [vmem:[%s1333 + $0x210] sm:$0xff]
      %v2133 = vld [vmem:[%s1333 + $0x218] sm:$0xff]
      %v2134 = vld [vmem:[%s1333 + $0x248] sm:$0xff]
      %v2135 = vld [vmem:[%s1333 + $0x250] sm:$0xff]
      %v2136 = vld [vmem:[%s1333 + $0x280] sm:$0xff]
      %v2137 = vld [vmem:[%s1333 + $0x288] sm:$0xff]
      %v2138 = vld [vmem:[%s1333 + $0x2b8] sm:$0xff]
      %v2139 = vld [vmem:[%s1333 + $0x2c0] sm:$0xff]
      %v2140 = vld [vmem:[%s1333 + $0x2f0] sm:$0xff]
      %v2141 = vld [vmem:[%s1333 + $0x2f8] sm:$0xff]
      %v2142 = vld [vmem:[%s1333 + $0x328] sm:$0xff]
      %v2143 = vld [vmem:[%s1333 + $0x330] sm:$0xff]
      %v2144 = vld [vmem:[%s1333 + $0x360] sm:$0xff]
      %v2145 = vld [vmem:[%s1333 + $0x368] sm:$0xff]
      %s2146 = scalar_lea.vmem %s1, 20
      %v2147 = vld [vmem:[%s2146] sm:$0xf]
      %v2149 = vsel %vm293, %v2114, 0
      %v2152 = vsel %vm293, %v2115, 0
      %v2155 = vsel %vm293, %v2116, 0
      %v2158 = vsel %vm293, %v2117, 0
      %v2161 = vsel %vm293, %v2118, 0
      %v2164 = vsel %vm293, %v2119, 0
      %v2167 = vsel %vm293, %v2120, 0
      %v2170 = vsel %vm293, %v2121, 0
      %v2173 = vsel %vm293, %v2122, 0
      %v2176 = vsel %vm293, %v2123, 0
      %v2179 = vsel %vm293, %v2124, 0
      %v2182 = vsel %vm293, %v2125, 0
      %v2185 = vsel %vm293, %v2126, 0
      %v2188 = vsel %vm293, %v2127, 0
      %v2191 = vsel %vm293, %v2128, 0
      %v2194 = vsel %vm293, %v2129, 0
      %v2197 = vsel %vm293, %v2130, 0
      %v2200 = vsel %vm293, %v2131, 0
      %v2203 = vsel %vm293, %v2132, 0
      %v2206 = vsel %vm293, %v2133, 0
      %v2209 = vsel %vm293, %v2134, 0
      %v2212 = vsel %vm293, %v2135, 0
      %v2215 = vsel %vm293, %v2136, 0
      %v2218 = vsel %vm293, %v2137, 0
      %v2221 = vsel %vm293, %v2138, 0
      %v2224 = vsel %vm293, %v2139, 0
      %v2227 = vsel %vm293, %v2140, 0
      %v2230 = vsel %vm293, %v2141, 0
      %v2233 = vsel %vm293, %v2142, 0
      %v2236 = vsel %vm293, %v2143, 0
      %v2239 = vsel %vm293, %v2144, 0
      %v2242 = vsel %vm293, %v2145, 0
      %v2245 = vsel %vm390, %v2147, 0
      %2247 = vmatprep.subr.mxu0 0.0
      %2248 = vmatpush1.msra.mxu0 %v2245
      %2249 = vmatprep.subr.mxu0 0.0
      %2250 = vmatpush1.msra.mxu0 0.0
      %2251 = vmatprep.subr.mxu0 0.0
      %2252 = vmatpush1.msra.mxu0 0.0
      %2253 = vmatprep.subr.mxu0 0.0
      %2254 = vmatpush1.msra.mxu0 0.0
      %2255 = vmatprep.subr.mxu0 0.0
      %2256 = vmatpush1.msra.mxu0 0.0
      %2257 = vmatprep.subr.mxu0 0.0
      %2258 = vmatpush1.msra.mxu0 0.0
      %2259 = vmatprep.subr.mxu0 0.0
      %2260 = vmatpush1.msra.mxu0 0.0
      %2261 = vmatprep.subr.mxu0 0.0
      %2262 = vmatpush1.msra.mxu0 0.0
      %2263 = vmatprep.subr.mxu0 0.0
      %2264 = vmatpush1.msra.mxu0 0.0
      %2265 = vmatprep.subr.mxu0 0.0
      %2266 = vmatpush1.msra.mxu0 0.0
      %2267 = vmatprep.subr.mxu0 0.0
      %2268 = vmatpush1.msra.mxu0 0.0
      %2269 = vmatprep.subr.mxu0 0.0
      %2270 = vmatpush1.msra.mxu0 0.0
      %2271 = vmatprep.subr.mxu0 0.0
      %2272 = vmatpush1.msra.mxu0 0.0
      %2273 = vmatprep.subr.mxu0 0.0
      %2274 = vmatpush1.msra.mxu0 0.0
      %2275 = vmatprep.subr.mxu0 0.0
      %2276 = vmatpush1.msra.mxu0 0.0
      %2277 = vmatprep.subr.mxu0 0.0
      %2278 = vmatpush1.msra.mxu0 0.0
      %2279 = vmatprep.subr.mxu0 0.0
      %2280 = vmatpush1.msra.mxu0 0.0
      %2281 = vmatprep.subr.mxu0 0.0
      %2282 = vmatpush1.msra.mxu0 0.0
      %2283 = vmatprep.subr.mxu0 0.0
      %2284 = vmatpush1.msra.mxu0 0.0
      %2285 = vmatprep.subr.mxu0 0.0
      %2286 = vmatpush1.msra.mxu0 0.0
      %2287 = vmatprep.subr.mxu0 0.0
      %2288 = vmatpush1.msra.mxu0 0.0
      %2289 = vmatprep.subr.mxu0 0.0
      %2290 = vmatpush1.msra.mxu0 0.0
      %2291 = vmatprep.subr.mxu0 0.0
      %2292 = vmatpush1.msra.mxu0 0.0
      %2293 = vmatprep.subr.mxu0 0.0
      %2294 = vmatpush1.msra.mxu0 0.0
      %2295 = vmatprep.subr.mxu0 0.0
      %2296 = vmatpush1.msra.mxu0 0.0
      %2297 = vmatprep.subr.mxu0 0.0
      %2298 = vmatpush1.msra.mxu0 0.0
      %2299 = vmatprep.subr.mxu0 0.0
      %2300 = vmatpush1.msra.mxu0 0.0
      %2301 = vmatprep.subr.mxu0 0.0
      %2302 = vmatpush1.msra.mxu0 0.0
      %2303 = vmatprep.subr.mxu0 0.0
      %2304 = vmatpush1.msra.mxu0 0.0
      %2305 = vmatprep.subr.mxu0 0.0
      %2306 = vmatpush1.msra.mxu0 0.0
      %2307 = vmatprep.subr.mxu0 0.0
      %2308 = vmatpush1.msra.mxu0 0.0
      %2309 = vmatprep.subr.mxu0 0.0
      %2310 = vmatpush1.msra.mxu0 0.0
      %2311 = vmatprep.mubr.f32.mxu0 0.0
      %2312 = vmatmul.mubr.f32.gmra.mrb[0].mxu0 %v2149
      %v2313 = vpop.f32.mrb[0].mxu0
      %v2314 = vadd.f32 0.0, %v2313
      %v2315 = vpop.f32.mrb[0].mxu0
      %2316 = vmatprep.mubr.f32.mxu0 0.0
      %2317 = vmatmul.mubr.f32.gmra.mrb[0].mxu0 %v2152
      %v2318 = vpop.f32.mrb[0].mxu0
      %v2319 = vadd.f32 0.0, %v2318
      %v2320 = vpop.f32.mrb[0].mxu0
      %2321 = vmatprep.mubr.f32.mxu0 0.0
      %2322 = vmatmul.mubr.f32.gmra.mrb[0].mxu0 %v2155
      %v2323 = vpop.f32.mrb[0].mxu0
      %v2324 = vadd.f32 0.0, %v2323
      %v2325 = vpop.f32.mrb[0].mxu0
      %2326 = vmatprep.mubr.f32.mxu0 0.0
      %2327 = vmatmul.mubr.f32.gmra.mrb[0].mxu0 %v2158
      %v2328 = vpop.f32.mrb[0].mxu0
      %v2329 = vadd.f32 0.0, %v2328
      %v2330 = vpop.f32.mrb[0].mxu0
      %2331 = vmatprep.mubr.f32.mxu0 0.0
      %2332 = vmatmul.mubr.f32.gmra.mrb[0].mxu0 %v2161
      %v2333 = vpop.f32.mrb[0].mxu0
      %v2334 = vadd.f32 0.0, %v2333
      %v2335 = vpop.f32.mrb[0].mxu0
      %2336 = vmatprep.mubr.f32.mxu0 0.0
      %2337 = vmatmul.mubr.f32.gmra.mrb[0].mxu0 %v2164
      %v2338 = vpop.f32.mrb[0].mxu0
      %v2339 = vadd.f32 0.0, %v2338
      %v2340 = vpop.f32.mrb[0].mxu0
      %2341 = vmatprep.mubr.f32.mxu0 0.0
      %2342 = vmatmul.mubr.f32.gmra.mrb[0].mxu0 %v2167
      %v2343 = vpop.f32.mrb[0].mxu0
      %v2344 = vadd.f32 0.0, %v2343
      %v2345 = vpop.f32.mrb[0].mxu0
      %2346 = vmatprep.mubr.f32.mxu0 0.0
      %2347 = vmatmul.mubr.f32.gmra.mrb[0].mxu0 %v2170
      %v2348 = vpop.f32.mrb[0].mxu0
      %v2349 = vadd.f32 0.0, %v2348
      %v2350 = vpop.f32.mrb[0].mxu0
      %2351 = vmatprep.mubr.f32.mxu0 0.0
      %2352 = vmatmul.mubr.f32.gmra.mrb[0].mxu0 %v2173
      %v2353 = vpop.f32.mrb[0].mxu0
      %v2354 = vadd.f32 0.0, %v2353
      %v2355 = vpop.f32.mrb[0].mxu0
      %2356 = vmatprep.mubr.f32.mxu0 0.0
      %2357 = vmatmul.mubr.f32.gmra.mrb[0].mxu0 %v2176
      %v2358 = vpop.f32.mrb[0].mxu0
      %v2359 = vadd.f32 0.0, %v2358
      %v2360 = vpop.f32.mrb[0].mxu0
      %2361 = vmatprep.mubr.f32.mxu0 0.0
      %2362 = vmatmul.mubr.f32.gmra.mrb[0].mxu0 %v2179
      %v2363 = vpop.f32.mrb[0].mxu0
      %v2364 = vadd.f32 0.0, %v2363
      %v2365 = vpop.f32.mrb[0].mxu0
      %2366 = vmatprep.mubr.f32.mxu0 0.0
      %2367 = vmatmul.mubr.f32.gmra.mrb[0].mxu0 %v2182
      %v2368 = vpop.f32.mrb[0].mxu0
      %v2369 = vadd.f32 0.0, %v2368
      %v2370 = vpop.f32.mrb[0].mxu0
      %2371 = vmatprep.mubr.f32.mxu0 0.0
      %2372 = vmatmul.mubr.f32.gmra.mrb[0].mxu0 %v2185
      %v2373 = vpop.f32.mrb[0].mxu0
      %v2374 = vadd.f32 0.0, %v2373
      %v2375 = vpop.f32.mrb[0].mxu0
      %2376 = vmatprep.mubr.f32.mxu0 0.0
      %2377 = vmatmul.mubr.f32.gmra.mrb[0].mxu0 %v2188
      %v2378 = vpop.f32.mrb[0].mxu0
      %v2379 = vadd.f32 0.0, %v2378
      %v2380 = vpop.f32.mrb[0].mxu0
      %2381 = vmatprep.mubr.f32.mxu0 0.0
      %2382 = vmatmul.mubr.f32.gmra.mrb[0].mxu0 %v2191
      %v2383 = vpop.f32.mrb[0].mxu0
      %v2384 = vadd.f32 0.0, %v2383
      %v2385 = vpop.f32.mrb[0].mxu0
      %2386 = vmatprep.mubr.f32.mxu0 0.0
      %2387 = vmatmul.mubr.f32.gmra.mrb[0].mxu0 %v2194
      %v2388 = vpop.f32.mrb[0].mxu0
      %v2389 = vadd.f32 0.0, %v2388
      %v2390 = vpop.f32.mrb[0].mxu0
      %2391 = vmatprep.mubr.f32.mxu0 0.0
      %2392 = vmatmul.mubr.f32.gmra.mrb[0].mxu0 %v2197
      %v2393 = vpop.f32.mrb[0].mxu0
      %v2394 = vadd.f32 0.0, %v2393
      %v2395 = vpop.f32.mrb[0].mxu0
      %2396 = vmatprep.mubr.f32.mxu0 0.0
      %2397 = vmatmul.mubr.f32.gmra.mrb[0].mxu0 %v2200
      %v2398 = vpop.f32.mrb[0].mxu0
      %v2399 = vadd.f32 0.0, %v2398
      %v2400 = vpop.f32.mrb[0].mxu0
      %2401 = vmatprep.mubr.f32.mxu0 0.0
      %2402 = vmatmul.mubr.f32.gmra.mrb[0].mxu0 %v2203
      %v2403 = vpop.f32.mrb[0].mxu0
      %v2404 = vadd.f32 0.0, %v2403
      %v2405 = vpop.f32.mrb[0].mxu0
      %2406 = vmatprep.mubr.f32.mxu0 0.0
      %2407 = vmatmul.mubr.f32.gmra.mrb[0].mxu0 %v2206
      %v2408 = vpop.f32.mrb[0].mxu0
      %v2409 = vadd.f32 0.0, %v2408
      %v2410 = vpop.f32.mrb[0].mxu0
      %2411 = vmatprep.mubr.f32.mxu0 0.0
      %2412 = vmatmul.mubr.f32.gmra.mrb[0].mxu0 %v2209
      %v2413 = vpop.f32.mrb[0].mxu0
      %v2414 = vadd.f32 0.0, %v2413
      %v2415 = vpop.f32.mrb[0].mxu0
      %2416 = vmatprep.mubr.f32.mxu0 0.0
      %2417 = vmatmul.mubr.f32.gmra.mrb[0].mxu0 %v2212
      %v2418 = vpop.f32.mrb[0].mxu0
      %v2419 = vadd.f32 0.0, %v2418
      %v2420 = vpop.f32.mrb[0].mxu0
      %2421 = vmatprep.mubr.f32.mxu0 0.0
      %2422 = vmatmul.mubr.f32.gmra.mrb[0].mxu0 %v2215
      %v2423 = vpop.f32.mrb[0].mxu0
      %v2424 = vadd.f32 0.0, %v2423
      %v2425 = vpop.f32.mrb[0].mxu0
      %2426 = vmatprep.mubr.f32.mxu0 0.0
      %2427 = vmatmul.mubr.f32.gmra.mrb[0].mxu0 %v2218
      %v2428 = vpop.f32.mrb[0].mxu0
      %v2429 = vadd.f32 0.0, %v2428
      %v2430 = vpop.f32.mrb[0].mxu0
      %2431 = vmatprep.mubr.f32.mxu0 0.0
      %2432 = vmatmul.mubr.f32.gmra.mrb[0].mxu0 %v2221
      %v2433 = vpop.f32.mrb[0].mxu0
      %v2434 = vadd.f32 0.0, %v2433
      %v2435 = vpop.f32.mrb[0].mxu0
      %2436 = vmatprep.mubr.f32.mxu0 0.0
      %2437 = vmatmul.mubr.f32.gmra.mrb[0].mxu0 %v2224
      %v2438 = vpop.f32.mrb[0].mxu0
      %v2439 = vadd.f32 0.0, %v2438
      %v2440 = vpop.f32.mrb[0].mxu0
      %2441 = vmatprep.mubr.f32.mxu0 0.0
      %2442 = vmatmul.mubr.f32.gmra.mrb[0].mxu0 %v2227
      %v2443 = vpop.f32.mrb[0].mxu0
      %v2444 = vadd.f32 0.0, %v2443
      %v2445 = vpop.f32.mrb[0].mxu0
      %2446 = vmatprep.mubr.f32.mxu0 0.0
      %2447 = vmatmul.mubr.f32.gmra.mrb[0].mxu0 %v2230
      %v2448 = vpop.f32.mrb[0].mxu0
      %v2449 = vadd.f32 0.0, %v2448
      %v2450 = vpop.f32.mrb[0].mxu0
      %2451 = vmatprep.mubr.f32.mxu0 0.0
      %2452 = vmatmul.mubr.f32.gmra.mrb[0].mxu0 %v2233
      %v2453 = vpop.f32.mrb[0].mxu0
      %v2454 = vadd.f32 0.0, %v2453
      %v2455 = vpop.f32.mrb[0].mxu0
      %2456 = vmatprep.mubr.f32.mxu0 0.0
      %2457 = vmatmul.mubr.f32.gmra.mrb[0].mxu0 %v2236
      %v2458 = vpop.f32.mrb[0].mxu0
      %v2459 = vadd.f32 0.0, %v2458
      %v2460 = vpop.f32.mrb[0].mxu0
      %2461 = vmatprep.mubr.f32.mxu0 0.0
      %2462 = vmatmul.mubr.f32.gmra.mrb[0].mxu0 %v2239
      %v2463 = vpop.f32.mrb[0].mxu0
      %v2464 = vadd.f32 0.0, %v2463
      %v2465 = vpop.f32.mrb[0].mxu0
      %2466 = vmatprep.mubr.f32.mxu0 0.0
      %2467 = vmatmul.mubr.f32.gmra.mrb[0].mxu0 %v2242
      %v2468 = vpop.f32.mrb[0].mxu0
      %v2469 = vadd.f32 0.0, %v2468
      %v2470 = vpop.f32.mrb[0].mxu0
      %2471 = vdwg.mxu0
      %v2472 = vadd.f32 %v2082, %v2314
      %v2473 = vadd.f32 %v2083, %v2319
      %v2474 = vadd.f32 %v2084, %v2324
      %v2475 = vadd.f32 %v2085, %v2329
      %v2476 = vadd.f32 %v2086, %v2334
      %v2477 = vadd.f32 %v2087, %v2339
      %v2478 = vadd.f32 %v2088, %v2344
      %v2479 = vadd.f32 %v2089, %v2349
      %v2480 = vadd.f32 %v2090, %v2354
      %v2481 = vadd.f32 %v2091, %v2359
      %v2482 = vadd.f32 %v2092, %v2364
      %v2483 = vadd.f32 %v2093, %v2369
      %v2484 = vadd.f32 %v2094, %v2374
      %v2485 = vadd.f32 %v2095, %v2379
      %v2486 = vadd.f32 %v2096, %v2384
      %v2487 = vadd.f32 %v2097, %v2389
      %v2488 = vadd.f32 %v2098, %v2394
      %v2489 = vadd.f32 %v2099, %v2399
      %v2490 = vadd.f32 %v2100, %v2404
      %v2491 = vadd.f32 %v2101, %v2409
      %v2492 = vadd.f32 %v2102, %v2414
      %v2493 = vadd.f32 %v2103, %v2419
      %v2494 = vadd.f32 %v2104, %v2424
      %v2495 = vadd.f32 %v2105, %v2429
      %v2496 = vadd.f32 %v2106, %v2434
      %v2497 = vadd.f32 %v2107, %v2439
      %v2498 = vadd.f32 %v2108, %v2444
      %v2499 = vadd.f32 %v2109, %v2449
      %v2500 = vadd.f32 %v2110, %v2454
      %v2501 = vadd.f32 %v2111, %v2459
      %v2502 = vadd.f32 %v2112, %v2464
      %v2503 = vadd.f32 %v2113, %v2469
      %s2504 = scalar_lea.vmem %s219, 1344
      %v2505 = vld [vmem:[%s2504 + $0xc] sm:$0xff]
      %v2506 = vld [vmem:[%s2504 + $0x14] sm:$0xff]
      %v2507 = vld [vmem:[%s2504 + $0x44] sm:$0xff]
      %v2508 = vld [vmem:[%s2504 + $0x4c] sm:$0xff]
      %v2509 = vld [vmem:[%s2504 + $0x7c] sm:$0xff]
      %v2510 = vld [vmem:[%s2504 + $0x84] sm:$0xff]
      %v2511 = vld [vmem:[%s2504 + $0xb4] sm:$0xff]
      %v2512 = vld [vmem:[%s2504 + $0xbc] sm:$0xff]
      %v2513 = vld [vmem:[%s2504 + $0xec] sm:$0xff]
      %v2514 = vld [vmem:[%s2504 + $0xf4] sm:$0xff]
      %v2515 = vld [vmem:[%s2504 + $0x124] sm:$0xff]
      %v2516 = vld [vmem:[%s2504 + $0x12c] sm:$0xff]
      %v2517 = vld [vmem:[%s2504 + $0x15c] sm:$0xff]
      %v2518 = vld [vmem:[%s2504 + $0x164] sm:$0xff]
      %v2519 = vld [vmem:[%s2504 + $0x194] sm:$0xff]
      %v2520 = vld [vmem:[%s2504 + $0x19c] sm:$0xff]
      %v2521 = vld [vmem:[%s2504 + $0x1cc] sm:$0xff]
      %v2522 = vld [vmem:[%s2504 + $0x1d4] sm:$0xff]
      %v2523 = vld [vmem:[%s2504 + $0x204] sm:$0xff]
      %v2524 = vld [vmem:[%s2504 + $0x20c] sm:$0xff]
      %v2525 = vld [vmem:[%s2504 + $0x23c] sm:$0xff]
      %v2526 = vld [vmem:[%s2504 + $0x244] sm:$0xff]
      %v2527 = vld [vmem:[%s2504 + $0x274] sm:$0xff]
      %v2528 = vld [vmem:[%s2504 + $0x27c] sm:$0xff]
      %v2529 = vld [vmem:[%s2504 + $0x2ac] sm:$0xff]
      %v2530 = vld [vmem:[%s2504 + $0x2b4] sm:$0xff]
      %v2531 = vld [vmem:[%s2504 + $0x2e4] sm:$0xff]
      %v2532 = vld [vmem:[%s2504 + $0x2ec] sm:$0xff]
      %v2533 = vld [vmem:[%s2504 + $0x31c] sm:$0xff]
      %v2534 = vld [vmem:[%s2504 + $0x324] sm:$0xff]
      %v2535 = vld [vmem:[%s2504 + $0x354] sm:$0xff]
      %v2536 = vld [vmem:[%s2504 + $0x35c] sm:$0xff]
      %s2537 = scalar_lea.vmem %s1, 24
      %v2538 = vld [vmem:[%s2537] sm:$0xf]
      %v2540 = vsel %vm293, %v2505, 0
      %v2543 = vsel %vm293, %v2506, 0
      %v2546 = vsel %vm293, %v2507, 0
      %v2549 = vsel %vm293, %v2508, 0
      %v2552 = vsel %vm293, %v2509, 0
      %v2555 = vsel %vm293, %v2510, 0
      %v2558 = vsel %vm293, %v2511, 0
      %v2561 = vsel %vm293, %v2512, 0
      %v2564 = vsel %vm293, %v2513, 0
      %v2567 = vsel %vm293, %v2514, 0
      %v2570 = vsel %vm293, %v2515, 0
      %v2573 = vsel %vm293, %v2516, 0
      %v2576 = vsel %vm293, %v2517, 0
      %v2579 = vsel %vm293, %v2518, 0
      %v2582 = vsel %vm293, %v2519, 0
      %v2585 = vsel %vm293, %v2520, 0
      %v2588 = vsel %vm293, %v2521, 0
      %v2591 = vsel %vm293, %v2522, 0
      %v2594 = vsel %vm293, %v2523, 0
      %v2597 = vsel %vm293, %v2524, 0
      %v2600 = vsel %vm293, %v2525, 0
      %v2603 = vsel %vm293, %v2526, 0
      %v2606 = vsel %vm293, %v2527, 0
      %v2609 = vsel %vm293, %v2528, 0
      %v2612 = vsel %vm293, %v2529, 0
      %v2615 = vsel %vm293, %v2530, 0
      %v2618 = vsel %vm293, %v2531, 0
      %v2621 = vsel %vm293, %v2532, 0
      %v2624 = vsel %vm293, %v2533, 0
      %v2627 = vsel %vm293, %v2534, 0
      %v2630 = vsel %vm293, %v2535, 0
      %v2633 = vsel %vm293, %v2536, 0
      %v2636 = vsel %vm390, %v2538, 0
      %2638 = vmatprep.subr.mxu0 0.0
      %2639 = vmatpush1.msra.mxu0 %v2636
      %2640 = vmatprep.subr.mxu0 0.0
      %2641 = vmatpush1.msra.mxu0 0.0
      %2642 = vmatprep.subr.mxu0 0.0
      %2643 = vmatpush1.msra.mxu0 0.0
      %2644 = vmatprep.subr.mxu0 0.0
      %2645 = vmatpush1.msra.mxu0 0.0
      %2646 = vmatprep.subr.mxu0 0.0
      %2647 = vmatpush1.msra.mxu0 0.0
      %2648 = vmatprep.subr.mxu0 0.0
      %2649 = vmatpush1.msra.mxu0 0.0
      %2650 = vmatprep.subr.mxu0 0.0
      %2651 = vmatpush1.msra.mxu0 0.0
      %2652 = vmatprep.subr.mxu0 0.0
      %2653 = vmatpush1.msra.mxu0 0.0
      %2654 = vmatprep.subr.mxu0 0.0
      %2655 = vmatpush1.msra.mxu0 0.0
      %2656 = vmatprep.subr.mxu0 0.0
      %2657 = vmatpush1.msra.mxu0 0.0
      %2658 = vmatprep.subr.mxu0 0.0
      %2659 = vmatpush1.msra.mxu0 0.0
      %2660 = vmatprep.subr.mxu0 0.0
      %2661 = vmatpush1.msra.mxu0 0.0
      %2662 = vmatprep.subr.mxu0 0.0
      %2663 = vmatpush1.msra.mxu0 0.0
      %2664 = vmatprep.subr.mxu0 0.0
      %2665 = vmatpush1.msra.mxu0 0.0
      %2666 = vmatprep.subr.mxu0 0.0
      %2667 = vmatpush1.msra.mxu0 0.0
      %2668 = vmatprep.subr.mxu0 0.0
      %2669 = vmatpush1.msra.mxu0 0.0
      %2670 = vmatprep.subr.mxu0 0.0
      %2671 = vmatpush1.msra.mxu0 0.0
      %2672 = vmatprep.subr.mxu0 0.0
      %2673 = vmatpush1.msra.mxu0 0.0
      %2674 = vmatprep.subr.mxu0 0.0
      %2675 = vmatpush1.msra.mxu0 0.0
      %2676 = vmatprep.subr.mxu0 0.0
      %2677 = vmatpush1.msra.mxu0 0.0
      %2678 = vmatprep.subr.mxu0 0.0
      %2679 = vmatpush1.msra.mxu0 0.0
      %2680 = vmatprep.subr.mxu0 0.0
      %2681 = vmatpush1.msra.mxu0 0.0
      %2682 = vmatprep.subr.mxu0 0.0
      %2683 = vmatpush1.msra.mxu0 0.0
      %2684 = vmatprep.subr.mxu0 0.0
      %2685 = vmatpush1.msra.mxu0 0.0
      %2686 = vmatprep.subr.mxu0 0.0
      %2687 = vmatpush1.msra.mxu0 0.0
      %2688 = vmatprep.subr.mxu0 0.0
      %2689 = vmatpush1.msra.mxu0 0.0
      %2690 = vmatprep.subr.mxu0 0.0
      %2691 = vmatpush1.msra.mxu0 0.0
      %2692 = vmatprep.subr.mxu0 0.0
      %2693 = vmatpush1.msra.mxu0 0.0
      %2694 = vmatprep.subr.mxu0 0.0
      %2695 = vmatpush1.msra.mxu0 0.0
      %2696 = vmatprep.subr.mxu0 0.0
      %2697 = vmatpush1.msra.mxu0 0.0
      %2698 = vmatprep.subr.mxu0 0.0
      %2699 = vmatpush1.msra.mxu0 0.0
      %2700 = vmatprep.subr.mxu0 0.0
      %2701 = vmatpush1.msra.mxu0 0.0
      %2702 = vmatprep.mubr.f32.mxu0 0.0
      %2703 = vmatmul.mubr.f32.gmra.mrb[0].mxu0 %v2540
      %v2704 = vpop.f32.mrb[0].mxu0
      %v2705 = vadd.f32 0.0, %v2704
      %v2706 = vpop.f32.mrb[0].mxu0
      %2707 = vmatprep.mubr.f32.mxu0 0.0
      %2708 = vmatmul.mubr.f32.gmra.mrb[0].mxu0 %v2543
      %v2709 = vpop.f32.mrb[0].mxu0
      %v2710 = vadd.f32 0.0, %v2709
      %v2711 = vpop.f32.mrb[0].mxu0
      %2712 = vmatprep.mubr.f32.mxu0 0.0
      %2713 = vmatmul.mubr.f32.gmra.mrb[0].mxu0 %v2546
      %v2714 = vpop.f32.mrb[0].mxu0
      %v2715 = vadd.f32 0.0, %v2714
      %v2716 = vpop.f32.mrb[0].mxu0
      %2717 = vmatprep.mubr.f32.mxu0 0.0
      %2718 = vmatmul.mubr.f32.gmra.mrb[0].mxu0 %v2549
      %v2719 = vpop.f32.mrb[0].mxu0
      %v2720 = vadd.f32 0.0, %v2719
      %v2721 = vpop.f32.mrb[0].mxu0
      %2722 = vmatprep.mubr.f32.mxu0 0.0
      %2723 = vmatmul.mubr.f32.gmra.mrb[0].mxu0 %v2552
      %v2724 = vpop.f32.mrb[0].mxu0
      %v2725 = vadd.f32 0.0, %v2724
      %v2726 = vpop.f32.mrb[0].mxu0
      %2727 = vmatprep.mubr.f32.mxu0 0.0
      %2728 = vmatmul.mubr.f32.gmra.mrb[0].mxu0 %v2555
      %v2729 = vpop.f32.mrb[0].mxu0
      %v2730 = vadd.f32 0.0, %v2729
      %v2731 = vpop.f32.mrb[0].mxu0
      %2732 = vmatprep.mubr.f32.mxu0 0.0
      %2733 = vmatmul.mubr.f32.gmra.mrb[0].mxu0 %v2558
      %v2734 = vpop.f32.mrb[0].mxu0
      %v2735 = vadd.f32 0.0, %v2734
      %v2736 = vpop.f32.mrb[0].mxu0
      %2737 = vmatprep.mubr.f32.mxu0 0.0
      %2738 = vmatmul.mubr.f32.gmra.mrb[0].mxu0 %v2561
      %v2739 = vpop.f32.mrb[0].mxu0
      %v2740 = vadd.f32 0.0, %v2739
      %v2741 = vpop.f32.mrb[0].mxu0
      %2742 = vmatprep.mubr.f32.mxu0 0.0
      %2743 = vmatmul.mubr.f32.gmra.mrb[0].mxu0 %v2564
      %v2744 = vpop.f32.mrb[0].mxu0
      %v2745 = vadd.f32 0.0, %v2744
      %v2746 = vpop.f32.mrb[0].mxu0
      %2747 = vmatprep.mubr.f32.mxu0 0.0
      %2748 = vmatmul.mubr.f32.gmra.mrb[0].mxu0 %v2567
      %v2749 = vpop.f32.mrb[0].mxu0
      %v2750 = vadd.f32 0.0, %v2749
      %v2751 = vpop.f32.mrb[0].mxu0
      %2752 = vmatprep.mubr.f32.mxu0 0.0
      %2753 = vmatmul.mubr.f32.gmra.mrb[0].mxu0 %v2570
      %v2754 = vpop.f32.mrb[0].mxu0
      %v2755 = vadd.f32 0.0, %v2754
      %v2756 = vpop.f32.mrb[0].mxu0
      %2757 = vmatprep.mubr.f32.mxu0 0.0
      %2758 = vmatmul.mubr.f32.gmra.mrb[0].mxu0 %v2573
      %v2759 = vpop.f32.mrb[0].mxu0
      %v2760 = vadd.f32 0.0, %v2759
      %v2761 = vpop.f32.mrb[0].mxu0
      %2762 = vmatprep.mubr.f32.mxu0 0.0
      %2763 = vmatmul.mubr.f32.gmra.mrb[0].mxu0 %v2576
      %v2764 = vpop.f32.mrb[0].mxu0
      %v2765 = vadd.f32 0.0, %v2764
      %v2766 = vpop.f32.mrb[0].mxu0
      %2767 = vmatprep.mubr.f32.mxu0 0.0
      %2768 = vmatmul.mubr.f32.gmra.mrb[0].mxu0 %v2579
      %v2769 = vpop.f32.mrb[0].mxu0
      %v2770 = vadd.f32 0.0, %v2769
      %v2771 = vpop.f32.mrb[0].mxu0
      %2772 = vmatprep.mubr.f32.mxu0 0.0
      %2773 = vmatmul.mubr.f32.gmra.mrb[0].mxu0 %v2582
      %v2774 = vpop.f32.mrb[0].mxu0
      %v2775 = vadd.f32 0.0, %v2774
      %v2776 = vpop.f32.mrb[0].mxu0
      %2777 = vmatprep.mubr.f32.mxu0 0.0
      %2778 = vmatmul.mubr.f32.gmra.mrb[0].mxu0 %v2585
      %v2779 = vpop.f32.mrb[0].mxu0
      %v2780 = vadd.f32 0.0, %v2779
      %v2781 = vpop.f32.mrb[0].mxu0
      %2782 = vmatprep.mubr.f32.mxu0 0.0
      %2783 = vmatmul.mubr.f32.gmra.mrb[0].mxu0 %v2588
      %v2784 = vpop.f32.mrb[0].mxu0
      %v2785 = vadd.f32 0.0, %v2784
      %v2786 = vpop.f32.mrb[0].mxu0
      %2787 = vmatprep.mubr.f32.mxu0 0.0
      %2788 = vmatmul.mubr.f32.gmra.mrb[0].mxu0 %v2591
      %v2789 = vpop.f32.mrb[0].mxu0
      %v2790 = vadd.f32 0.0, %v2789
      %v2791 = vpop.f32.mrb[0].mxu0
      %2792 = vmatprep.mubr.f32.mxu0 0.0
      %2793 = vmatmul.mubr.f32.gmra.mrb[0].mxu0 %v2594
      %v2794 = vpop.f32.mrb[0].mxu0
      %v2795 = vadd.f32 0.0, %v2794
      %v2796 = vpop.f32.mrb[0].mxu0
      %2797 = vmatprep.mubr.f32.mxu0 0.0
      %2798 = vmatmul.mubr.f32.gmra.mrb[0].mxu0 %v2597
      %v2799 = vpop.f32.mrb[0].mxu0
      %v2800 = vadd.f32 0.0, %v2799
      %v2801 = vpop.f32.mrb[0].mxu0
      %2802 = vmatprep.mubr.f32.mxu0 0.0
      %2803 = vmatmul.mubr.f32.gmra.mrb[0].mxu0 %v2600
      %v2804 = vpop.f32.mrb[0].mxu0
      %v2805 = vadd.f32 0.0, %v2804
      %v2806 = vpop.f32.mrb[0].mxu0
      %2807 = vmatprep.mubr.f32.mxu0 0.0
      %2808 = vmatmul.mubr.f32.gmra.mrb[0].mxu0 %v2603
      %v2809 = vpop.f32.mrb[0].mxu0
      %v2810 = vadd.f32 0.0, %v2809
      %v2811 = vpop.f32.mrb[0].mxu0
      %2812 = vmatprep.mubr.f32.mxu0 0.0
      %2813 = vmatmul.mubr.f32.gmra.mrb[0].mxu0 %v2606
      %v2814 = vpop.f32.mrb[0].mxu0
      %v2815 = vadd.f32 0.0, %v2814
      %v2816 = vpop.f32.mrb[0].mxu0
      %2817 = vmatprep.mubr.f32.mxu0 0.0
      %2818 = vmatmul.mubr.f32.gmra.mrb[0].mxu0 %v2609
      %v2819 = vpop.f32.mrb[0].mxu0
      %v2820 = vadd.f32 0.0, %v2819
      %v2821 = vpop.f32.mrb[0].mxu0
      %2822 = vmatprep.mubr.f32.mxu0 0.0
      %2823 = vmatmul.mubr.f32.gmra.mrb[0].mxu0 %v2612
      %v2824 = vpop.f32.mrb[0].mxu0
      %v2825 = vadd.f32 0.0, %v2824
      %v2826 = vpop.f32.mrb[0].mxu0
      %2827 = vmatprep.mubr.f32.mxu0 0.0
      %2828 = vmatmul.mubr.f32.gmra.mrb[0].mxu0 %v2615
      %v2829 = vpop.f32.mrb[0].mxu0
      %v2830 = vadd.f32 0.0, %v2829
      %v2831 = vpop.f32.mrb[0].mxu0
      %2832 = vmatprep.mubr.f32.mxu0 0.0
      %2833 = vmatmul.mubr.f32.gmra.mrb[0].mxu0 %v2618
      %v2834 = vpop.f32.mrb[0].mxu0
      %v2835 = vadd.f32 0.0, %v2834
      %v2836 = vpop.f32.mrb[0].mxu0
      %2837 = vmatprep.mubr.f32.mxu0 0.0
      %2838 = vmatmul.mubr.f32.gmra.mrb[0].mxu0 %v2621
      %v2839 = vpop.f32.mrb[0].mxu0
      %v2840 = vadd.f32 0.0, %v2839
      %v2841 = vpop.f32.mrb[0].mxu0
      %2842 = vmatprep.mubr.f32.mxu0 0.0
      %2843 = vmatmul.mubr.f32.gmra.mrb[0].mxu0 %v2624
      %v2844 = vpop.f32.mrb[0].mxu0
      %v2845 = vadd.f32 0.0, %v2844
      %v2846 = vpop.f32.mrb[0].mxu0
      %2847 = vmatprep.mubr.f32.mxu0 0.0
      %2848 = vmatmul.mubr.f32.gmra.mrb[0].mxu0 %v2627
      %v2849 = vpop.f32.mrb[0].mxu0
      %v2850 = vadd.f32 0.0, %v2849
      %v2851 = vpop.f32.mrb[0].mxu0
      %2852 = vmatprep.mubr.f32.mxu0 0.0
      %2853 = vmatmul.mubr.f32.gmra.mrb[0].mxu0 %v2630
      %v2854 = vpop.f32.mrb[0].mxu0
      %v2855 = vadd.f32 0.0, %v2854
      %v2856 = vpop.f32.mrb[0].mxu0
      %2857 = vmatprep.mubr.f32.mxu0 0.0
      %2858 = vmatmul.mubr.f32.gmra.mrb[0].mxu0 %v2633
      %v2859 = vpop.f32.mrb[0].mxu0
      %v2860 = vadd.f32 0.0, %v2859
      %v2861 = vpop.f32.mrb[0].mxu0
      %2862 = vdwg.mxu0
      %v2863 = vadd.f32 %v2472, %v2705
      %v2864 = vadd.f32 %v2473, %v2710
      %v2865 = vadd.f32 %v2474, %v2715
      %v2866 = vadd.f32 %v2475, %v2720
      %v2867 = vadd.f32 %v2476, %v2725
      %v2868 = vadd.f32 %v2477, %v2730
      %v2869 = vadd.f32 %v2478, %v2735
      %v2870 = vadd.f32 %v2479, %v2740
      %v2871 = vadd.f32 %v2480, %v2745
      %v2872 = vadd.f32 %v2481, %v2750
      %v2873 = vadd.f32 %v2482, %v2755
      %v2874 = vadd.f32 %v2483, %v2760
      %v2875 = vadd.f32 %v2484, %v2765
      %v2876 = vadd.f32 %v2485, %v2770
      %v2877 = vadd.f32 %v2486, %v2775
      %v2878 = vadd.f32 %v2487, %v2780
      %v2879 = vadd.f32 %v2488, %v2785
      %v2880 = vadd.f32 %v2489, %v2790
      %v2881 = vadd.f32 %v2490, %v2795
      %v2882 = vadd.f32 %v2491, %v2800
      %v2883 = vadd.f32 %v2492, %v2805
      %v2884 = vadd.f32 %v2493, %v2810
      %v2885 = vadd.f32 %v2494, %v2815
      %v2886 = vadd.f32 %v2495, %v2820
      %v2887 = vadd.f32 %v2496, %v2825
      %v2888 = vadd.f32 %v2497, %v2830
      %v2889 = vadd.f32 %v2498, %v2835
      %v2890 = vadd.f32 %v2499, %v2840
      %v2891 = vadd.f32 %v2500, %v2845
      %v2892 = vadd.f32 %v2501, %v2850
      %v2893 = vadd.f32 %v2502, %v2855
      %v2894 = vadd.f32 %v2503, %v2860
      %v2895 = vld [vmem:[%s2504 + $0x12] sm:$0xff]
      %v2896 = vld [vmem:[%s2504 + $0x1a] sm:$0xff]
      %v2897 = vld [vmem:[%s2504 + $0x4a] sm:$0xff]
      %v2898 = vld [vmem:[%s2504 + $0x52] sm:$0xff]
      %v2899 = vld [vmem:[%s2504 + $0x82] sm:$0xff]
      %v2900 = vld [vmem:[%s2504 + $0x8a] sm:$0xff]
      %v2901 = vld [vmem:[%s2504 + $0xba] sm:$0xff]
      %v2902 = vld [vmem:[%s2504 + $0xc2] sm:$0xff]
      %v2903 = vld [vmem:[%s2504 + $0xf2] sm:$0xff]
      %v2904 = vld [vmem:[%s2504 + $0xfa] sm:$0xff]
      %v2905 = vld [vmem:[%s2504 + $0x12a] sm:$0xff]
      %v2906 = vld [vmem:[%s2504 + $0x132] sm:$0xff]
      %v2907 = vld [vmem:[%s2504 + $0x162] sm:$0xff]
      %v2908 = vld [vmem:[%s2504 + $0x16a] sm:$0xff]
      %v2909 = vld [vmem:[%s2504 + $0x19a] sm:$0xff]
      %v2910 = vld [vmem:[%s2504 + $0x1a2] sm:$0xff]
      %v2911 = vld [vmem:[%s2504 + $0x1d2] sm:$0xff]
      %v2912 = vld [vmem:[%s2504 + $0x1da] sm:$0xff]
      %v2913 = vld [vmem:[%s2504 + $0x20a] sm:$0xff]
      %v2914 = vld [vmem:[%s2504 + $0x212] sm:$0xff]
      %v2915 = vld [vmem:[%s2504 + $0x242] sm:$0xff]
      %v2916 = vld [vmem:[%s2504 + $0x24a] sm:$0xff]
      %v2917 = vld [vmem:[%s2504 + $0x27a] sm:$0xff]
      %v2918 = vld [vmem:[%s2504 + $0x282] sm:$0xff]
      %v2919 = vld [vmem:[%s2504 + $0x2b2] sm:$0xff]
      %v2920 = vld [vmem:[%s2504 + $0x2ba] sm:$0xff]
      %v2921 = vld [vmem:[%s2504 + $0x2ea] sm:$0xff]
      %v2922 = vld [vmem:[%s2504 + $0x2f2] sm:$0xff]
      %v2923 = vld [vmem:[%s2504 + $0x322] sm:$0xff]
      %v2924 = vld [vmem:[%s2504 + $0x32a] sm:$0xff]
      %v2925 = vld [vmem:[%s2504 + $0x35a] sm:$0xff]
      %v2926 = vld [vmem:[%s2504 + $0x362] sm:$0xff]
      %s2927 = scalar_lea.vmem %s1, 28
      %v2928 = vld [vmem:[%s2927] sm:$0xf]
      %v2930 = vsel %vm293, %v2895, 0
      %v2933 = vsel %vm293, %v2896, 0
      %v2936 = vsel %vm293, %v2897, 0
      %v2939 = vsel %vm293, %v2898, 0
      %v2942 = vsel %vm293, %v2899, 0
      %v2945 = vsel %vm293, %v2900, 0
      %v2948 = vsel %vm293, %v2901, 0
      %v2951 = vsel %vm293, %v2902, 0
      %v2954 = vsel %vm293, %v2903, 0
      %v2957 = vsel %vm293, %v2904, 0
      %v2960 = vsel %vm293, %v2905, 0
      %v2963 = vsel %vm293, %v2906, 0
      %v2966 = vsel %vm293, %v2907, 0
      %v2969 = vsel %vm293, %v2908, 0
      %v2972 = vsel %vm293, %v2909, 0
      %v2975 = vsel %vm293, %v2910, 0
      %v2978 = vsel %vm293, %v2911, 0
      %v2981 = vsel %vm293, %v2912, 0
      %v2984 = vsel %vm293, %v2913, 0
      %v2987 = vsel %vm293, %v2914, 0
      %v2990 = vsel %vm293, %v2915, 0
      %v2993 = vsel %vm293, %v2916, 0
      %v2996 = vsel %vm293, %v2917, 0
      %v2999 = vsel %vm293, %v2918, 0
      %v3002 = vsel %vm293, %v2919, 0
      %v3005 = vsel %vm293, %v2920, 0
      %v3008 = vsel %vm293, %v2921, 0
      %v3011 = vsel %vm293, %v2922, 0
      %v3014 = vsel %vm293, %v2923, 0
      %v3017 = vsel %vm293, %v2924, 0
      %v3020 = vsel %vm293, %v2925, 0
      %v3023 = vsel %vm293, %v2926, 0
      %v3026 = vsel %vm390, %v2928, 0
      %3028 = vmatprep.subr.mxu0 0.0
      %3029 = vmatpush1.msra.mxu0 %v3026
      %3030 = vmatprep.subr.mxu0 0.0
      %3031 = vmatpush1.msra.mxu0 0.0
      %3032 = vmatprep.subr.mxu0 0.0
      %3033 = vmatpush1.msra.mxu0 0.0
      %3034 = vmatprep.subr.mxu0 0.0
      %3035 = vmatpush1.msra.mxu0 0.0
      %3036 = vmatprep.subr.mxu0 0.0
      %3037 = vmatpush1.msra.mxu0 0.0
      %3038 = vmatprep.subr.mxu0 0.0
      %3039 = vmatpush1.msra.mxu0 0.0
      %3040 = vmatprep.subr.mxu0 0.0
      %3041 = vmatpush1.msra.mxu0 0.0
      %3042 = vmatprep.subr.mxu0 0.0
      %3043 = vmatpush1.msra.mxu0 0.0
      %3044 = vmatprep.subr.mxu0 0.0
      %3045 = vmatpush1.msra.mxu0 0.0
      %3046 = vmatprep.subr.mxu0 0.0
      %3047 = vmatpush1.msra.mxu0 0.0
      %3048 = vmatprep.subr.mxu0 0.0
      %3049 = vmatpush1.msra.mxu0 0.0
      %3050 = vmatprep.subr.mxu0 0.0
      %3051 = vmatpush1.msra.mxu0 0.0
      %3052 = vmatprep.subr.mxu0 0.0
      %3053 = vmatpush1.msra.mxu0 0.0
      %3054 = vmatprep.subr.mxu0 0.0
      %3055 = vmatpush1.msra.mxu0 0.0
      %3056 = vmatprep.subr.mxu0 0.0
      %3057 = vmatpush1.msra.mxu0 0.0
      %3058 = vmatprep.subr.mxu0 0.0
      %3059 = vmatpush1.msra.mxu0 0.0
      %3060 = vmatprep.subr.mxu0 0.0
      %3061 = vmatpush1.msra.mxu0 0.0
      %3062 = vmatprep.subr.mxu0 0.0
      %3063 = vmatpush1.msra.mxu0 0.0
      %3064 = vmatprep.subr.mxu0 0.0
      %3065 = vmatpush1.msra.mxu0 0.0
      %3066 = vmatprep.subr.mxu0 0.0
      %3067 = vmatpush1.msra.mxu0 0.0
      %3068 = vmatprep.subr.mxu0 0.0
      %3069 = vmatpush1.msra.mxu0 0.0
      %3070 = vmatprep.subr.mxu0 0.0
      %3071 = vmatpush1.msra.mxu0 0.0
      %3072 = vmatprep.subr.mxu0 0.0
      %3073 = vmatpush1.msra.mxu0 0.0
      %3074 = vmatprep.subr.mxu0 0.0
      %3075 = vmatpush1.msra.mxu0 0.0
      %3076 = vmatprep.subr.mxu0 0.0
      %3077 = vmatpush1.msra.mxu0 0.0
      %3078 = vmatprep.subr.mxu0 0.0
      %3079 = vmatpush1.msra.mxu0 0.0
      %3080 = vmatprep.subr.mxu0 0.0
      %3081 = vmatpush1.msra.mxu0 0.0
      %3082 = vmatprep.subr.mxu0 0.0
      %3083 = vmatpush1.msra.mxu0 0.0
      %3084 = vmatprep.subr.mxu0 0.0
      %3085 = vmatpush1.msra.mxu0 0.0
      %3086 = vmatprep.subr.mxu0 0.0
      %3087 = vmatpush1.msra.mxu0 0.0
      %3088 = vmatprep.subr.mxu0 0.0
      %3089 = vmatpush1.msra.mxu0 0.0
      %3090 = vmatprep.subr.mxu0 0.0
      %3091 = vmatpush1.msra.mxu0 0.0
      %3092 = vmatprep.mubr.f32.mxu0 0.0
      %3093 = vmatmul.mubr.f32.gmra.mrb[0].mxu0 %v2930
      %v3094 = vpop.f32.mrb[0].mxu0
      %v3095 = vadd.f32 0.0, %v3094
      %v3096 = vpop.f32.mrb[0].mxu0
      %3097 = vmatprep.mubr.f32.mxu0 0.0
      %3098 = vmatmul.mubr.f32.gmra.mrb[0].mxu0 %v2933
      %v3099 = vpop.f32.mrb[0].mxu0
      %v3100 = vadd.f32 0.0, %v3099
      %v3101 = vpop.f32.mrb[0].mxu0
      %3102 = vmatprep.mubr.f32.mxu0 0.0
      %3103 = vmatmul.mubr.f32.gmra.mrb[0].mxu0 %v2936
      %v3104 = vpop.f32.mrb[0].mxu0
      %v3105 = vadd.f32 0.0, %v3104
      %v3106 = vpop.f32.mrb[0].mxu0
      %3107 = vmatprep.mubr.f32.mxu0 0.0
      %3108 = vmatmul.mubr.f32.gmra.mrb[0].mxu0 %v2939
      %v3109 = vpop.f32.mrb[0].mxu0
      %v3110 = vadd.f32 0.0, %v3109
      %v3111 = vpop.f32.mrb[0].mxu0
      %3112 = vmatprep.mubr.f32.mxu0 0.0
      %3113 = vmatmul.mubr.f32.gmra.mrb[0].mxu0 %v2942
      %v3114 = vpop.f32.mrb[0].mxu0
      %v3115 = vadd.f32 0.0, %v3114
      %v3116 = vpop.f32.mrb[0].mxu0
      %3117 = vmatprep.mubr.f32.mxu0 0.0
      %3118 = vmatmul.mubr.f32.gmra.mrb[0].mxu0 %v2945
      %v3119 = vpop.f32.mrb[0].mxu0
      %v3120 = vadd.f32 0.0, %v3119
      %v3121 = vpop.f32.mrb[0].mxu0
      %3122 = vmatprep.mubr.f32.mxu0 0.0
      %3123 = vmatmul.mubr.f32.gmra.mrb[0].mxu0 %v2948
      %v3124 = vpop.f32.mrb[0].mxu0
      %v3125 = vadd.f32 0.0, %v3124
      %v3126 = vpop.f32.mrb[0].mxu0
      %3127 = vmatprep.mubr.f32.mxu0 0.0
      %3128 = vmatmul.mubr.f32.gmra.mrb[0].mxu0 %v2951
      %v3129 = vpop.f32.mrb[0].mxu0
      %v3130 = vadd.f32 0.0, %v3129
      %v3131 = vpop.f32.mrb[0].mxu0
      %3132 = vmatprep.mubr.f32.mxu0 0.0
      %3133 = vmatmul.mubr.f32.gmra.mrb[0].mxu0 %v2954
      %v3134 = vpop.f32.mrb[0].mxu0
      %v3135 = vadd.f32 0.0, %v3134
      %v3136 = vpop.f32.mrb[0].mxu0
      %3137 = vmatprep.mubr.f32.mxu0 0.0
      %3138 = vmatmul.mubr.f32.gmra.mrb[0].mxu0 %v2957
      %v3139 = vpop.f32.mrb[0].mxu0
      %v3140 = vadd.f32 0.0, %v3139
      %v3141 = vpop.f32.mrb[0].mxu0
      %3142 = vmatprep.mubr.f32.mxu0 0.0
      %3143 = vmatmul.mubr.f32.gmra.mrb[0].mxu0 %v2960
      %v3144 = vpop.f32.mrb[0].mxu0
      %v3145 = vadd.f32 0.0, %v3144
      %v3146 = vpop.f32.mrb[0].mxu0
      %3147 = vmatprep.mubr.f32.mxu0 0.0
      %3148 = vmatmul.mubr.f32.gmra.mrb[0].mxu0 %v2963
      %v3149 = vpop.f32.mrb[0].mxu0
      %v3150 = vadd.f32 0.0, %v3149
      %v3151 = vpop.f32.mrb[0].mxu0
      %3152 = vmatprep.mubr.f32.mxu0 0.0
      %3153 = vmatmul.mubr.f32.gmra.mrb[0].mxu0 %v2966
      %v3154 = vpop.f32.mrb[0].mxu0
      %v3155 = vadd.f32 0.0, %v3154
      %v3156 = vpop.f32.mrb[0].mxu0
      %3157 = vmatprep.mubr.f32.mxu0 0.0
      %3158 = vmatmul.mubr.f32.gmra.mrb[0].mxu0 %v2969
      %v3159 = vpop.f32.mrb[0].mxu0
      %v3160 = vadd.f32 0.0, %v3159
      %v3161 = vpop.f32.mrb[0].mxu0
      %3162 = vmatprep.mubr.f32.mxu0 0.0
      %3163 = vmatmul.mubr.f32.gmra.mrb[0].mxu0 %v2972
      %v3164 = vpop.f32.mrb[0].mxu0
      %v3165 = vadd.f32 0.0, %v3164
      %v3166 = vpop.f32.mrb[0].mxu0
      %3167 = vmatprep.mubr.f32.mxu0 0.0
      %3168 = vmatmul.mubr.f32.gmra.mrb[0].mxu0 %v2975
      %v3169 = vpop.f32.mrb[0].mxu0
      %v3170 = vadd.f32 0.0, %v3169
      %v3171 = vpop.f32.mrb[0].mxu0
      %3172 = vmatprep.mubr.f32.mxu0 0.0
      %3173 = vmatmul.mubr.f32.gmra.mrb[0].mxu0 %v2978
      %v3174 = vpop.f32.mrb[0].mxu0
      %v3175 = vadd.f32 0.0, %v3174
      %v3176 = vpop.f32.mrb[0].mxu0
      %3177 = vmatprep.mubr.f32.mxu0 0.0
      %3178 = vmatmul.mubr.f32.gmra.mrb[0].mxu0 %v2981
      %v3179 = vpop.f32.mrb[0].mxu0
      %v3180 = vadd.f32 0.0, %v3179
      %v3181 = vpop.f32.mrb[0].mxu0
      %3182 = vmatprep.mubr.f32.mxu0 0.0
      %3183 = vmatmul.mubr.f32.gmra.mrb[0].mxu0 %v2984
      %v3184 = vpop.f32.mrb[0].mxu0
      %v3185 = vadd.f32 0.0, %v3184
      %v3186 = vpop.f32.mrb[0].mxu0
      %3187 = vmatprep.mubr.f32.mxu0 0.0
      %3188 = vmatmul.mubr.f32.gmra.mrb[0].mxu0 %v2987
      %v3189 = vpop.f32.mrb[0].mxu0
      %v3190 = vadd.f32 0.0, %v3189
      %v3191 = vpop.f32.mrb[0].mxu0
      %3192 = vmatprep.mubr.f32.mxu0 0.0
      %3193 = vmatmul.mubr.f32.gmra.mrb[0].mxu0 %v2990
      %v3194 = vpop.f32.mrb[0].mxu0
      %v3195 = vadd.f32 0.0, %v3194
      %v3196 = vpop.f32.mrb[0].mxu0
      %3197 = vmatprep.mubr.f32.mxu0 0.0
      %3198 = vmatmul.mubr.f32.gmra.mrb[0].mxu0 %v2993
      %v3199 = vpop.f32.mrb[0].mxu0
      %v3200 = vadd.f32 0.0, %v3199
      %v3201 = vpop.f32.mrb[0].mxu0
      %3202 = vmatprep.mubr.f32.mxu0 0.0
      %3203 = vmatmul.mubr.f32.gmra.mrb[0].mxu0 %v2996
      %v3204 = vpop.f32.mrb[0].mxu0
      %v3205 = vadd.f32 0.0, %v3204
      %v3206 = vpop.f32.mrb[0].mxu0
      %3207 = vmatprep.mubr.f32.mxu0 0.0
      %3208 = vmatmul.mubr.f32.gmra.mrb[0].mxu0 %v2999
      %v3209 = vpop.f32.mrb[0].mxu0
      %v3210 = vadd.f32 0.0, %v3209
      %v3211 = vpop.f32.mrb[0].mxu0
      %3212 = vmatprep.mubr.f32.mxu0 0.0
      %3213 = vmatmul.mubr.f32.gmra.mrb[0].mxu0 %v3002
      %v3214 = vpop.f32.mrb[0].mxu0
      %v3215 = vadd.f32 0.0, %v3214
      %v3216 = vpop.f32.mrb[0].mxu0
      %3217 = vmatprep.mubr.f32.mxu0 0.0
      %3218 = vmatmul.mubr.f32.gmra.mrb[0].mxu0 %v3005
      %v3219 = vpop.f32.mrb[0].mxu0
      %v3220 = vadd.f32 0.0, %v3219
      %v3221 = vpop.f32.mrb[0].mxu0
      %3222 = vmatprep.mubr.f32.mxu0 0.0
      %3223 = vmatmul.mubr.f32.gmra.mrb[0].mxu0 %v3008
      %v3224 = vpop.f32.mrb[0].mxu0
      %v3225 = vadd.f32 0.0, %v3224
      %v3226 = vpop.f32.mrb[0].mxu0
      %3227 = vmatprep.mubr.f32.mxu0 0.0
      %3228 = vmatmul.mubr.f32.gmra.mrb[0].mxu0 %v3011
      %v3229 = vpop.f32.mrb[0].mxu0
      %v3230 = vadd.f32 0.0, %v3229
      %v3231 = vpop.f32.mrb[0].mxu0
      %3232 = vmatprep.mubr.f32.mxu0 0.0
      %3233 = vmatmul.mubr.f32.gmra.mrb[0].mxu0 %v3014
      %v3234 = vpop.f32.mrb[0].mxu0
      %v3235 = vadd.f32 0.0, %v3234
      %v3236 = vpop.f32.mrb[0].mxu0
      %3237 = vmatprep.mubr.f32.mxu0 0.0
      %3238 = vmatmul.mubr.f32.gmra.mrb[0].mxu0 %v3017
      %v3239 = vpop.f32.mrb[0].mxu0
      %v3240 = vadd.f32 0.0, %v3239
      %v3241 = vpop.f32.mrb[0].mxu0
      %3242 = vmatprep.mubr.f32.mxu0 0.0
      %3243 = vmatmul.mubr.f32.gmra.mrb[0].mxu0 %v3020
      %v3244 = vpop.f32.mrb[0].mxu0
      %v3245 = vadd.f32 0.0, %v3244
      %v3246 = vpop.f32.mrb[0].mxu0
      %3247 = vmatprep.mubr.f32.mxu0 0.0
      %3248 = vmatmul.mubr.f32.gmra.mrb[0].mxu0 %v3023
      %v3249 = vpop.f32.mrb[0].mxu0
      %v3250 = vadd.f32 0.0, %v3249
      %v3251 = vpop.f32.mrb[0].mxu0
      %3252 = vdwg.mxu0
      %v3253 = vadd.f32 %v2863, %v3095
      %v3254 = vadd.f32 %v2864, %v3100
      %v3255 = vadd.f32 %v2865, %v3105
      %v3256 = vadd.f32 %v2866, %v3110
      %v3257 = vadd.f32 %v2867, %v3115
      %v3258 = vadd.f32 %v2868, %v3120
      %v3259 = vadd.f32 %v2869, %v3125
      %v3260 = vadd.f32 %v2870, %v3130
      %v3261 = vadd.f32 %v2871, %v3135
      %v3262 = vadd.f32 %v2872, %v3140
      %v3263 = vadd.f32 %v2873, %v3145
      %v3264 = vadd.f32 %v2874, %v3150
      %v3265 = vadd.f32 %v2875, %v3155
      %v3266 = vadd.f32 %v2876, %v3160
      %v3267 = vadd.f32 %v2877, %v3165
      %v3268 = vadd.f32 %v2878, %v3170
      %v3269 = vadd.f32 %v2879, %v3175
      %v3270 = vadd.f32 %v2880, %v3180
      %v3271 = vadd.f32 %v2881, %v3185
      %v3272 = vadd.f32 %v2882, %v3190
      %v3273 = vadd.f32 %v2883, %v3195
      %v3274 = vadd.f32 %v2884, %v3200
      %v3275 = vadd.f32 %v2885, %v3205
      %v3276 = vadd.f32 %v2886, %v3210
      %v3277 = vadd.f32 %v2887, %v3215
      %v3278 = vadd.f32 %v2888, %v3220
      %v3279 = vadd.f32 %v2889, %v3225
      %v3280 = vadd.f32 %v2890, %v3230
      %v3281 = vadd.f32 %v2891, %v3235
      %v3282 = vadd.f32 %v2892, %v3240
      %v3283 = vadd.f32 %v2893, %v3245
      %v3284 = vadd.f32 %v2894, %v3250
      %v3285 = vld [vmem:[%s2504 + $0x18] sm:$0xff]
      %v3286 = vld [vmem:[%s2504 + $0x20] sm:$0xff]
      %v3287 = vld [vmem:[%s2504 + $0x50] sm:$0xff]
      %v3288 = vld [vmem:[%s2504 + $0x58] sm:$0xff]
      %v3289 = vld [vmem:[%s2504 + $0x88] sm:$0xff]
      %v3290 = vld [vmem:[%s2504 + $0x90] sm:$0xff]
      %v3291 = vld [vmem:[%s2504 + $0xc0] sm:$0xff]
      %v3292 = vld [vmem:[%s2504 + $0xc8] sm:$0xff]
      %v3293 = vld [vmem:[%s2504 + $0xf8] sm:$0xff]
      %v3294 = vld [vmem:[%s2504 + $0x100] sm:$0xff]
      %v3295 = vld [vmem:[%s2504 + $0x130] sm:$0xff]
      %v3296 = vld [vmem:[%s2504 + $0x138] sm:$0xff]
      %v3297 = vld [vmem:[%s2504 + $0x168] sm:$0xff]
      %v3298 = vld [vmem:[%s2504 + $0x170] sm:$0xff]
      %v3299 = vld [vmem:[%s2504 + $0x1a0] sm:$0xff]
      %v3300 = vld [vmem:[%s2504 + $0x1a8] sm:$0xff]
      %v3301 = vld [vmem:[%s2504 + $0x1d8] sm:$0xff]
      %v3302 = vld [vmem:[%s2504 + $0x1e0] sm:$0xff]
      %v3303 = vld [vmem:[%s2504 + $0x210] sm:$0xff]
      %v3304 = vld [vmem:[%s2504 + $0x218] sm:$0xff]
      %v3305 = vld [vmem:[%s2504 + $0x248] sm:$0xff]
      %v3306 = vld [vmem:[%s2504 + $0x250] sm:$0xff]
      %v3307 = vld [vmem:[%s2504 + $0x280] sm:$0xff]
      %v3308 = vld [vmem:[%s2504 + $0x288] sm:$0xff]
      %v3309 = vld [vmem:[%s2504 + $0x2b8] sm:$0xff]
      %v3310 = vld [vmem:[%s2504 + $0x2c0] sm:$0xff]
      %v3311 = vld [vmem:[%s2504 + $0x2f0] sm:$0xff]
      %v3312 = vld [vmem:[%s2504 + $0x2f8] sm:$0xff]
      %v3313 = vld [vmem:[%s2504 + $0x328] sm:$0xff]
      %v3314 = vld [vmem:[%s2504 + $0x330] sm:$0xff]
      %v3315 = vld [vmem:[%s2504 + $0x360] sm:$0xff]
      %v3316 = vld [vmem:[%s2504 + $0x368] sm:$0xff]
      %s3317 = scalar_lea.vmem %s1, 32
      %v3318 = vld [vmem:[%s3317] sm:$0xf]
      %v3320 = vsel %vm293, %v3285, 0
      %v3323 = vsel %vm293, %v3286, 0
      %v3326 = vsel %vm293, %v3287, 0
      %v3329 = vsel %vm293, %v3288, 0
      %v3332 = vsel %vm293, %v3289, 0
      %v3335 = vsel %vm293, %v3290, 0
      %v3338 = vsel %vm293, %v3291, 0
      %v3341 = vsel %vm293, %v3292, 0
      %v3344 = vsel %vm293, %v3293, 0
      %v3347 = vsel %vm293, %v3294, 0
      %v3350 = vsel %vm293, %v3295, 0
      %v3353 = vsel %vm293, %v3296, 0
      %v3356 = vsel %vm293, %v3297, 0
      %v3359 = vsel %vm293, %v3298, 0
      %v3362 = vsel %vm293, %v3299, 0
      %v3365 = vsel %vm293, %v3300, 0
      %v3368 = vsel %vm293, %v3301, 0
      %v3371 = vsel %vm293, %v3302, 0
      %v3374 = vsel %vm293, %v3303, 0
      %v3377 = vsel %vm293, %v3304, 0
      %v3380 = vsel %vm293, %v3305, 0
      %v3383 = vsel %vm293, %v3306, 0
      %v3386 = vsel %vm293, %v3307, 0
      %v3389 = vsel %vm293, %v3308, 0
      %v3392 = vsel %vm293, %v3309, 0
      %v3395 = vsel %vm293, %v3310, 0
      %v3398 = vsel %vm293, %v3311, 0
      %v3401 = vsel %vm293, %v3312, 0
      %v3404 = vsel %vm293, %v3313, 0
      %v3407 = vsel %vm293, %v3314, 0
      %v3410 = vsel %vm293, %v3315, 0
      %v3413 = vsel %vm293, %v3316, 0
      %v3416 = vsel %vm390, %v3318, 0
      %3418 = vmatprep.subr.mxu0 0.0
      %3419 = vmatpush1.msra.mxu0 %v3416
      %3420 = vmatprep.subr.mxu0 0.0
      %3421 = vmatpush1.msra.mxu0 0.0
      %3422 = vmatprep.subr.mxu0 0.0
      %3423 = vmatpush1.msra.mxu0 0.0
      %3424 = vmatprep.subr.mxu0 0.0
      %3425 = vmatpush1.msra.mxu0 0.0
      %3426 = vmatprep.subr.mxu0 0.0
      %3427 = vmatpush1.msra.mxu0 0.0
      %3428 = vmatprep.subr.mxu0 0.0
      %3429 = vmatpush1.msra.mxu0 0.0
      %3430 = vmatprep.subr.mxu0 0.0
      %3431 = vmatpush1.msra.mxu0 0.0
      %3432 = vmatprep.subr.mxu0 0.0
      %3433 = vmatpush1.msra.mxu0 0.0
      %3434 = vmatprep.subr.mxu0 0.0
      %3435 = vmatpush1.msra.mxu0 0.0
      %3436 = vmatprep.subr.mxu0 0.0
      %3437 = vmatpush1.msra.mxu0 0.0
      %3438 = vmatprep.subr.mxu0 0.0
      %3439 = vmatpush1.msra.mxu0 0.0
      %3440 = vmatprep.subr.mxu0 0.0
      %3441 = vmatpush1.msra.mxu0 0.0
      %3442 = vmatprep.subr.mxu0 0.0
      %3443 = vmatpush1.msra.mxu0 0.0
      %3444 = vmatprep.subr.mxu0 0.0
      %3445 = vmatpush1.msra.mxu0 0.0
      %3446 = vmatprep.subr.mxu0 0.0
      %3447 = vmatpush1.msra.mxu0 0.0
      %3448 = vmatprep.subr.mxu0 0.0
      %3449 = vmatpush1.msra.mxu0 0.0
      %3450 = vmatprep.subr.mxu0 0.0
      %3451 = vmatpush1.msra.mxu0 0.0
      %3452 = vmatprep.subr.mxu0 0.0
      %3453 = vmatpush1.msra.mxu0 0.0
      %3454 = vmatprep.subr.mxu0 0.0
      %3455 = vmatpush1.msra.mxu0 0.0
      %3456 = vmatprep.subr.mxu0 0.0
      %3457 = vmatpush1.msra.mxu0 0.0
      %3458 = vmatprep.subr.mxu0 0.0
      %3459 = vmatpush1.msra.mxu0 0.0
      %3460 = vmatprep.subr.mxu0 0.0
      %3461 = vmatpush1.msra.mxu0 0.0
      %3462 = vmatprep.subr.mxu0 0.0
      %3463 = vmatpush1.msra.mxu0 0.0
      %3464 = vmatprep.subr.mxu0 0.0
      %3465 = vmatpush1.msra.mxu0 0.0
      %3466 = vmatprep.subr.mxu0 0.0
      %3467 = vmatpush1.msra.mxu0 0.0
      %3468 = vmatprep.subr.mxu0 0.0
      %3469 = vmatpush1.msra.mxu0 0.0
      %3470 = vmatprep.subr.mxu0 0.0
      %3471 = vmatpush1.msra.mxu0 0.0
      %3472 = vmatprep.subr.mxu0 0.0
      %3473 = vmatpush1.msra.mxu0 0.0
      %3474 = vmatprep.subr.mxu0 0.0
      %3475 = vmatpush1.msra.mxu0 0.0
      %3476 = vmatprep.subr.mxu0 0.0
      %3477 = vmatpush1.msra.mxu0 0.0
      %3478 = vmatprep.subr.mxu0 0.0
      %3479 = vmatpush1.msra.mxu0 0.0
      %3480 = vmatprep.subr.mxu0 0.0
      %3481 = vmatpush1.msra.mxu0 0.0
      %3482 = vmatprep.mubr.f32.mxu0 0.0
      %3483 = vmatmul.mubr.f32.gmra.mrb[0].mxu0 %v3320
      %v3484 = vpop.f32.mrb[0].mxu0
      %v3485 = vadd.f32 0.0, %v3484
      %v3486 = vpop.f32.mrb[0].mxu0
      %3487 = vmatprep.mubr.f32.mxu0 0.0
      %3488 = vmatmul.mubr.f32.gmra.mrb[0].mxu0 %v3323
      %v3489 = vpop.f32.mrb[0].mxu0
      %v3490 = vadd.f32 0.0, %v3489
      %v3491 = vpop.f32.mrb[0].mxu0
      %3492 = vmatprep.mubr.f32.mxu0 0.0
      %3493 = vmatmul.mubr.f32.gmra.mrb[0].mxu0 %v3326
      %v3494 = vpop.f32.mrb[0].mxu0
      %v3495 = vadd.f32 0.0, %v3494
      %v3496 = vpop.f32.mrb[0].mxu0
      %3497 = vmatprep.mubr.f32.mxu0 0.0
      %3498 = vmatmul.mubr.f32.gmra.mrb[0].mxu0 %v3329
      %v3499 = vpop.f32.mrb[0].mxu0
      %v3500 = vadd.f32 0.0, %v3499
      %v3501 = vpop.f32.mrb[0].mxu0
      %3502 = vmatprep.mubr.f32.mxu0 0.0
      %3503 = vmatmul.mubr.f32.gmra.mrb[0].mxu0 %v3332
      %v3504 = vpop.f32.mrb[0].mxu0
      %v3505 = vadd.f32 0.0, %v3504
      %v3506 = vpop.f32.mrb[0].mxu0
      %3507 = vmatprep.mubr.f32.mxu0 0.0
      %3508 = vmatmul.mubr.f32.gmra.mrb[0].mxu0 %v3335
      %v3509 = vpop.f32.mrb[0].mxu0
      %v3510 = vadd.f32 0.0, %v3509
      %v3511 = vpop.f32.mrb[0].mxu0
      %3512 = vmatprep.mubr.f32.mxu0 0.0
      %3513 = vmatmul.mubr.f32.gmra.mrb[0].mxu0 %v3338
      %v3514 = vpop.f32.mrb[0].mxu0
      %v3515 = vadd.f32 0.0, %v3514
      %v3516 = vpop.f32.mrb[0].mxu0
      %3517 = vmatprep.mubr.f32.mxu0 0.0
      %3518 = vmatmul.mubr.f32.gmra.mrb[0].mxu0 %v3341
      %v3519 = vpop.f32.mrb[0].mxu0
      %v3520 = vadd.f32 0.0, %v3519
      %v3521 = vpop.f32.mrb[0].mxu0
      %3522 = vmatprep.mubr.f32.mxu0 0.0
      %3523 = vmatmul.mubr.f32.gmra.mrb[0].mxu0 %v3344
      %v3524 = vpop.f32.mrb[0].mxu0
      %v3525 = vadd.f32 0.0, %v3524
      %v3526 = vpop.f32.mrb[0].mxu0
      %3527 = vmatprep.mubr.f32.mxu0 0.0
      %3528 = vmatmul.mubr.f32.gmra.mrb[0].mxu0 %v3347
      %v3529 = vpop.f32.mrb[0].mxu0
      %v3530 = vadd.f32 0.0, %v3529
      %v3531 = vpop.f32.mrb[0].mxu0
      %3532 = vmatprep.mubr.f32.mxu0 0.0
      %3533 = vmatmul.mubr.f32.gmra.mrb[0].mxu0 %v3350
      %v3534 = vpop.f32.mrb[0].mxu0
      %v3535 = vadd.f32 0.0, %v3534
      %v3536 = vpop.f32.mrb[0].mxu0
      %3537 = vmatprep.mubr.f32.mxu0 0.0
      %3538 = vmatmul.mubr.f32.gmra.mrb[0].mxu0 %v3353
      %v3539 = vpop.f32.mrb[0].mxu0
      %v3540 = vadd.f32 0.0, %v3539
      %v3541 = vpop.f32.mrb[0].mxu0
      %3542 = vmatprep.mubr.f32.mxu0 0.0
      %3543 = vmatmul.mubr.f32.gmra.mrb[0].mxu0 %v3356
      %v3544 = vpop.f32.mrb[0].mxu0
      %v3545 = vadd.f32 0.0, %v3544
      %v3546 = vpop.f32.mrb[0].mxu0
      %3547 = vmatprep.mubr.f32.mxu0 0.0
      %3548 = vmatmul.mubr.f32.gmra.mrb[0].mxu0 %v3359
      %v3549 = vpop.f32.mrb[0].mxu0
      %v3550 = vadd.f32 0.0, %v3549
      %v3551 = vpop.f32.mrb[0].mxu0
      %3552 = vmatprep.mubr.f32.mxu0 0.0
      %3553 = vmatmul.mubr.f32.gmra.mrb[0].mxu0 %v3362
      %v3554 = vpop.f32.mrb[0].mxu0
      %v3555 = vadd.f32 0.0, %v3554
      %v3556 = vpop.f32.mrb[0].mxu0
      %3557 = vmatprep.mubr.f32.mxu0 0.0
      %3558 = vmatmul.mubr.f32.gmra.mrb[0].mxu0 %v3365
      %v3559 = vpop.f32.mrb[0].mxu0
      %v3560 = vadd.f32 0.0, %v3559
      %v3561 = vpop.f32.mrb[0].mxu0
      %3562 = vmatprep.mubr.f32.mxu0 0.0
      %3563 = vmatmul.mubr.f32.gmra.mrb[0].mxu0 %v3368
      %v3564 = vpop.f32.mrb[0].mxu0
      %v3565 = vadd.f32 0.0, %v3564
      %v3566 = vpop.f32.mrb[0].mxu0
      %3567 = vmatprep.mubr.f32.mxu0 0.0
      %3568 = vmatmul.mubr.f32.gmra.mrb[0].mxu0 %v3371
      %v3569 = vpop.f32.mrb[0].mxu0
      %v3570 = vadd.f32 0.0, %v3569
      %v3571 = vpop.f32.mrb[0].mxu0
      %3572 = vmatprep.mubr.f32.mxu0 0.0
      %3573 = vmatmul.mubr.f32.gmra.mrb[0].mxu0 %v3374
      %v3574 = vpop.f32.mrb[0].mxu0
      %v3575 = vadd.f32 0.0, %v3574
      %v3576 = vpop.f32.mrb[0].mxu0
      %3577 = vmatprep.mubr.f32.mxu0 0.0
      %3578 = vmatmul.mubr.f32.gmra.mrb[0].mxu0 %v3377
      %v3579 = vpop.f32.mrb[0].mxu0
      %v3580 = vadd.f32 0.0, %v3579
      %v3581 = vpop.f32.mrb[0].mxu0
      %3582 = vmatprep.mubr.f32.mxu0 0.0
      %3583 = vmatmul.mubr.f32.gmra.mrb[0].mxu0 %v3380
      %v3584 = vpop.f32.mrb[0].mxu0
      %v3585 = vadd.f32 0.0, %v3584
      %v3586 = vpop.f32.mrb[0].mxu0
      %3587 = vmatprep.mubr.f32.mxu0 0.0
      %3588 = vmatmul.mubr.f32.gmra.mrb[0].mxu0 %v3383
      %v3589 = vpop.f32.mrb[0].mxu0
      %v3590 = vadd.f32 0.0, %v3589
      %v3591 = vpop.f32.mrb[0].mxu0
      %3592 = vmatprep.mubr.f32.mxu0 0.0
      %3593 = vmatmul.mubr.f32.gmra.mrb[0].mxu0 %v3386
      %v3594 = vpop.f32.mrb[0].mxu0
      %v3595 = vadd.f32 0.0, %v3594
      %v3596 = vpop.f32.mrb[0].mxu0
      %3597 = vmatprep.mubr.f32.mxu0 0.0
      %3598 = vmatmul.mubr.f32.gmra.mrb[0].mxu0 %v3389
      %v3599 = vpop.f32.mrb[0].mxu0
      %v3600 = vadd.f32 0.0, %v3599
      %v3601 = vpop.f32.mrb[0].mxu0
      %3602 = vmatprep.mubr.f32.mxu0 0.0
      %3603 = vmatmul.mubr.f32.gmra.mrb[0].mxu0 %v3392
      %v3604 = vpop.f32.mrb[0].mxu0
      %v3605 = vadd.f32 0.0, %v3604
      %v3606 = vpop.f32.mrb[0].mxu0
      %3607 = vmatprep.mubr.f32.mxu0 0.0
      %3608 = vmatmul.mubr.f32.gmra.mrb[0].mxu0 %v3395
      %v3609 = vpop.f32.mrb[0].mxu0
      %v3610 = vadd.f32 0.0, %v3609
      %v3611 = vpop.f32.mrb[0].mxu0
      %3612 = vmatprep.mubr.f32.mxu0 0.0
      %3613 = vmatmul.mubr.f32.gmra.mrb[0].mxu0 %v3398
      %v3614 = vpop.f32.mrb[0].mxu0
      %v3615 = vadd.f32 0.0, %v3614
      %v3616 = vpop.f32.mrb[0].mxu0
      %3617 = vmatprep.mubr.f32.mxu0 0.0
      %3618 = vmatmul.mubr.f32.gmra.mrb[0].mxu0 %v3401
      %v3619 = vpop.f32.mrb[0].mxu0
      %v3620 = vadd.f32 0.0, %v3619
      %v3621 = vpop.f32.mrb[0].mxu0
      %3622 = vmatprep.mubr.f32.mxu0 0.0
      %3623 = vmatmul.mubr.f32.gmra.mrb[0].mxu0 %v3404
      %v3624 = vpop.f32.mrb[0].mxu0
      %v3625 = vadd.f32 0.0, %v3624
      %v3626 = vpop.f32.mrb[0].mxu0
      %3627 = vmatprep.mubr.f32.mxu0 0.0
      %3628 = vmatmul.mubr.f32.gmra.mrb[0].mxu0 %v3407
      %v3629 = vpop.f32.mrb[0].mxu0
      %v3630 = vadd.f32 0.0, %v3629
      %v3631 = vpop.f32.mrb[0].mxu0
      %3632 = vmatprep.mubr.f32.mxu0 0.0
      %3633 = vmatmul.mubr.f32.gmra.mrb[0].mxu0 %v3410
      %v3634 = vpop.f32.mrb[0].mxu0
      %v3635 = vadd.f32 0.0, %v3634
      %v3636 = vpop.f32.mrb[0].mxu0
      %3637 = vmatprep.mubr.f32.mxu0 0.0
      %3638 = vmatmul.mubr.f32.gmra.mrb[0].mxu0 %v3413
      %v3639 = vpop.f32.mrb[0].mxu0
      %v3640 = vadd.f32 0.0, %v3639
      %v3641 = vpop.f32.mrb[0].mxu0
      %3642 = vdwg.mxu0
      %v3643 = vadd.f32 %v3253, %v3485
      %v3644 = vadd.f32 %v3254, %v3490
      %v3645 = vadd.f32 %v3255, %v3495
      %v3646 = vadd.f32 %v3256, %v3500
      %v3647 = vadd.f32 %v3257, %v3505
      %v3648 = vadd.f32 %v3258, %v3510
      %v3649 = vadd.f32 %v3259, %v3515
      %v3650 = vadd.f32 %v3260, %v3520
      %v3651 = vadd.f32 %v3261, %v3525
      %v3652 = vadd.f32 %v3262, %v3530
      %v3653 = vadd.f32 %v3263, %v3535
      %v3654 = vadd.f32 %v3264, %v3540
      %v3655 = vadd.f32 %v3265, %v3545
      %v3656 = vadd.f32 %v3266, %v3550
      %v3657 = vadd.f32 %v3267, %v3555
      %v3658 = vadd.f32 %v3268, %v3560
      %v3659 = vadd.f32 %v3269, %v3565
      %v3660 = vadd.f32 %v3270, %v3570
      %v3661 = vadd.f32 %v3271, %v3575
      %v3662 = vadd.f32 %v3272, %v3580
      %v3663 = vadd.f32 %v3273, %v3585
      %v3664 = vadd.f32 %v3274, %v3590
      %v3665 = vadd.f32 %v3275, %v3595
      %v3666 = vadd.f32 %v3276, %v3600
      %v3667 = vadd.f32 %v3277, %v3605
      %v3668 = vadd.f32 %v3278, %v3610
      %v3669 = vadd.f32 %v3279, %v3615
      %v3670 = vadd.f32 %v3280, %v3620
      %v3671 = vadd.f32 %v3281, %v3625
      %v3672 = vadd.f32 %v3282, %v3630
      %v3673 = vadd.f32 %v3283, %v3635
      %v3674 = vadd.f32 %v3284, %v3640
      %v3675 = vld [vmem:[%s2] sm:$0x1]
      %v3677 = vlaneseq
      %v3678 = vshrl.u32 %v3677, 7
      %v3679 = vsub.s32 0, %v3678
      %v3680 = vrot.slane %v3675, %v3679
      %v3682 = vadd.f32 %v3643, %v3680
      %v3683 = vadd.f32 %v3644, %v3680
      %v3684 = vadd.f32 %v3645, %v3680
      %v3685 = vadd.f32 %v3646, %v3680
      %v3686 = vadd.f32 %v3647, %v3680
      %v3687 = vadd.f32 %v3648, %v3680
      %v3688 = vadd.f32 %v3649, %v3680
      %v3689 = vadd.f32 %v3650, %v3680
      %v3690 = vadd.f32 %v3651, %v3680
      %v3691 = vadd.f32 %v3652, %v3680
      %v3692 = vadd.f32 %v3653, %v3680
      %v3693 = vadd.f32 %v3654, %v3680
      %v3694 = vadd.f32 %v3655, %v3680
      %v3695 = vadd.f32 %v3656, %v3680
      %v3696 = vadd.f32 %v3657, %v3680
      %v3697 = vadd.f32 %v3658, %v3680
      %v3698 = vadd.f32 %v3659, %v3680
      %v3699 = vadd.f32 %v3660, %v3680
      %v3700 = vadd.f32 %v3661, %v3680
      %v3701 = vadd.f32 %v3662, %v3680
      %v3702 = vadd.f32 %v3663, %v3680
      %v3703 = vadd.f32 %v3664, %v3680
      %v3704 = vadd.f32 %v3665, %v3680
      %v3705 = vadd.f32 %v3666, %v3680
      %v3706 = vadd.f32 %v3667, %v3680
      %v3707 = vadd.f32 %v3668, %v3680
      %v3708 = vadd.f32 %v3669, %v3680
      %v3709 = vadd.f32 %v3670, %v3680
      %v3710 = vadd.f32 %v3671, %v3680
      %v3711 = vadd.f32 %v3672, %v3680
      %v3712 = vadd.f32 %v3673, %v3680
      %v3713 = vadd.f32 %v3674, %v3680
      %v3714 = vmax.f32 %v3682, 0.0
      %v3715 = vmax.f32 %v3683, 0.0
      %v3716 = vmax.f32 %v3684, 0.0
      %v3717 = vmax.f32 %v3685, 0.0
      %v3718 = vmax.f32 %v3686, 0.0
      %v3719 = vmax.f32 %v3687, 0.0
      %v3720 = vmax.f32 %v3688, 0.0
      %v3721 = vmax.f32 %v3689, 0.0
      %v3722 = vmax.f32 %v3690, 0.0
      %v3723 = vmax.f32 %v3691, 0.0
      %v3724 = vmax.f32 %v3692, 0.0
      %v3725 = vmax.f32 %v3693, 0.0
      %v3726 = vmax.f32 %v3694, 0.0
      %v3727 = vmax.f32 %v3695, 0.0
      %v3728 = vmax.f32 %v3696, 0.0
      %v3729 = vmax.f32 %v3697, 0.0
      %v3730 = vmax.f32 %v3698, 0.0
      %v3731 = vmax.f32 %v3699, 0.0
      %v3732 = vmax.f32 %v3700, 0.0
      %v3733 = vmax.f32 %v3701, 0.0
      %v3734 = vmax.f32 %v3702, 0.0
      %v3735 = vmax.f32 %v3703, 0.0
      %v3736 = vmax.f32 %v3704, 0.0
      %v3737 = vmax.f32 %v3705, 0.0
      %v3738 = vmax.f32 %v3706, 0.0
      %v3739 = vmax.f32 %v3707, 0.0
      %v3740 = vmax.f32 %v3708, 0.0
      %v3741 = vmax.f32 %v3709, 0.0
      %v3742 = vmax.f32 %v3710, 0.0
      %v3743 = vmax.f32 %v3711, 0.0
      %v3744 = vmax.f32 %v3712, 0.0
      %v3745 = vmax.f32 %v3713, 0.0
      %v3746 = vld [vmem:[%s3] sm:$0xff]
      %s3747 = scalar_lea.vmem %s219, 336
      %v3748 = vld [vmem:[%s3747 + $0x6] sm:$0xff]
      %v3749 = vld [vmem:[%s3747 + $0xe] sm:$0xff]
      %v3750 = vld [vmem:[%s3747 + $0x3e] sm:$0xff]
      %v3751 = vld [vmem:[%s3747 + $0x46] sm:$0xff]
      %v3752 = vld [vmem:[%s3747 + $0x76] sm:$0xff]
      %v3753 = vld [vmem:[%s3747 + $0x7e] sm:$0xff]
      %v3754 = vld [vmem:[%s3747 + $0xae] sm:$0xff]
      %v3755 = vld [vmem:[%s3747 + $0xb6] sm:$0xff]
      %v3756 = vld [vmem:[%s3747 + $0xe6] sm:$0xff]
      %v3757 = vld [vmem:[%s3747 + $0xee] sm:$0xff]
      %v3758 = vld [vmem:[%s3747 + $0x11e] sm:$0xff]
      %v3759 = vld [vmem:[%s3747 + $0x126] sm:$0xff]
      %v3760 = vld [vmem:[%s3747 + $0x156] sm:$0xff]
      %v3761 = vld [vmem:[%s3747 + $0x15e] sm:$0xff]
      %v3762 = vld [vmem:[%s3747 + $0x18e] sm:$0xff]
      %v3763 = vld [vmem:[%s3747 + $0x196] sm:$0xff]
      %v3764 = vld [vmem:[%s3747 + $0x1c6] sm:$0xff]
      %v3765 = vld [vmem:[%s3747 + $0x1ce] sm:$0xff]
      %v3766 = vld [vmem:[%s3747 + $0x1fe] sm:$0xff]
      %v3767 = vld [vmem:[%s3747 + $0x206] sm:$0xff]
      %v3768 = vld [vmem:[%s3747 + $0x236] sm:$0xff]
      %v3769 = vld [vmem:[%s3747 + $0x23e] sm:$0xff]
      %v3770 = vld [vmem:[%s3747 + $0x26e] sm:$0xff]
      %v3771 = vld [vmem:[%s3747 + $0x276] sm:$0xff]
      %v3772 = vld [vmem:[%s3747 + $0x2a6] sm:$0xff]
      %v3773 = vld [vmem:[%s3747 + $0x2ae] sm:$0xff]
      %v3774 = vld [vmem:[%s3747 + $0x2de] sm:$0xff]
      %v3775 = vld [vmem:[%s3747 + $0x2e6] sm:$0xff]
      %v3776 = vld [vmem:[%s3747 + $0x316] sm:$0xff]
      %v3777 = vld [vmem:[%s3747 + $0x31e] sm:$0xff]
      %v3778 = vld [vmem:[%s3747 + $0x34e] sm:$0xff]
      %v3779 = vld [vmem:[%s3747 + $0x356] sm:$0xff]
      %s3780 = scalar_lea.vmem %s1, 36
      %v3781 = vld [vmem:[%s3780] sm:$0xf]
      %v3782 = vld [vmem:[%s3747 + $0x12] sm:$0xff]
      %v3783 = vld [vmem:[%s3747 + $0x1a] sm:$0xff]
      %v3784 = vld [vmem:[%s3747 + $0x4a] sm:$0xff]
      %v3785 = vld [vmem:[%s3747 + $0x52] sm:$0xff]
      %v3786 = vld [vmem:[%s3747 + $0x82] sm:$0xff]
      %v3787 = vld [vmem:[%s3747 + $0x8a] sm:$0xff]
      %v3788 = vld [vmem:[%s3747 + $0xba] sm:$0xff]
      %v3789 = vld [vmem:[%s3747 + $0xc2] sm:$0xff]
      %v3790 = vld [vmem:[%s3747 + $0xf2] sm:$0xff]
      %v3791 = vld [vmem:[%s3747 + $0xfa] sm:$0xff]
      %v3792 = vld [vmem:[%s3747 + $0x12a] sm:$0xff]
      %v3793 = vld [vmem:[%s3747 + $0x132] sm:$0xff]
      %v3794 = vld [vmem:[%s3747 + $0x162] sm:$0xff]
      %v3795 = vld [vmem:[%s3747 + $0x16a] sm:$0xff]
      %v3796 = vld [vmem:[%s3747 + $0x19a] sm:$0xff]
      %v3797 = vld [vmem:[%s3747 + $0x1a2] sm:$0xff]
      %v3798 = vld [vmem:[%s3747 + $0x1d2] sm:$0xff]
      %v3799 = vld [vmem:[%s3747 + $0x1da] sm:$0xff]
      %v3800 = vld [vmem:[%s3747 + $0x20a] sm:$0xff]
      %v3801 = vld [vmem:[%s3747 + $0x212] sm:$0xff]
      %v3802 = vld [vmem:[%s3747 + $0x242] sm:$0xff]
      %v3803 = vld [vmem:[%s3747 + $0x24a] sm:$0xff]
      %v3804 = vld [vmem:[%s3747 + $0x27a] sm:$0xff]
      %v3805 = vld [vmem:[%s3747 + $0x282] sm:$0xff]
      %v3806 = vld [vmem:[%s3747 + $0x2b2] sm:$0xff]
      %v3807 = vld [vmem:[%s3747 + $0x2ba] sm:$0xff]
      %v3808 = vld [vmem:[%s3747 + $0x2ea] sm:$0xff]
      %v3809 = vld [vmem:[%s3747 + $0x2f2] sm:$0xff]
      %v3810 = vld [vmem:[%s3747 + $0x322] sm:$0xff]
      %v3811 = vld [vmem:[%s3747 + $0x32a] sm:$0xff]
      %v3812 = vld [vmem:[%s3747 + $0x35a] sm:$0xff]
      %v3813 = vld [vmem:[%s3747 + $0x362] sm:$0xff]
      %s3814 = scalar_lea.vmem %s1, 40
      %v3815 = vld [vmem:[%s3814] sm:$0xf]
      %v3817 = vsel %vm293, %v3782, 0
      %v3820 = vsel %vm293, %v3783, 0
      %v3823 = vsel %vm293, %v3784, 0
      %v3826 = vsel %vm293, %v3785, 0
      %v3829 = vsel %vm293, %v3786, 0
      %v3832 = vsel %vm293, %v3787, 0
      %v3835 = vsel %vm293, %v3788, 0
      %v3838 = vsel %vm293, %v3789, 0
      %v3841 = vsel %vm293, %v3790, 0
      %v3844 = vsel %vm293, %v3791, 0
      %v3847 = vsel %vm293, %v3792, 0
      %v3850 = vsel %vm293, %v3793, 0
      %v3853 = vsel %vm293, %v3794, 0
      %v3856 = vsel %vm293, %v3795, 0
      %v3859 = vsel %vm293, %v3796, 0
      %v3862 = vsel %vm293, %v3797, 0
      %v3865 = vsel %vm293, %v3798, 0
      %v3868 = vsel %vm293, %v3799, 0
      %v3871 = vsel %vm293, %v3800, 0
      %v3874 = vsel %vm293, %v3801, 0
      %v3877 = vsel %vm293, %v3802, 0
      %v3880 = vsel %vm293, %v3803, 0
      %v3883 = vsel %vm293, %v3804, 0
      %v3886 = vsel %vm293, %v3805, 0
      %v3889 = vsel %vm293, %v3806, 0
      %v3892 = vsel %vm293, %v3807, 0
      %v3895 = vsel %vm293, %v3808, 0
      %v3898 = vsel %vm293, %v3809, 0
      %v3901 = vsel %vm293, %v3810, 0
      %v3904 = vsel %vm293, %v3811, 0
      %v3907 = vsel %vm293, %v3812, 0
      %v3910 = vsel %vm293, %v3813, 0
      %v3913 = vsel %vm390, %v3815, 0
      %3915 = vmatprep.subr.mxu0 0.0
      %3916 = vmatpush1.msra.mxu0 %v3913
      %3917 = vmatprep.subr.mxu0 0.0
      %3918 = vmatpush1.msra.mxu0 0.0
      %3919 = vmatprep.subr.mxu0 0.0
      %3920 = vmatpush1.msra.mxu0 0.0
      %3921 = vmatprep.subr.mxu0 0.0
      %3922 = vmatpush1.msra.mxu0 0.0
      %3923 = vmatprep.subr.mxu0 0.0
      %3924 = vmatpush1.msra.mxu0 0.0
      %3925 = vmatprep.subr.mxu0 0.0
      %3926 = vmatpush1.msra.mxu0 0.0
      %3927 = vmatprep.subr.mxu0 0.0
      %3928 = vmatpush1.msra.mxu0 0.0
      %3929 = vmatprep.subr.mxu0 0.0
      %3930 = vmatpush1.msra.mxu0 0.0
      %3931 = vmatprep.subr.mxu0 0.0
      %3932 = vmatpush1.msra.mxu0 0.0
      %3933 = vmatprep.subr.mxu0 0.0
      %3934 = vmatpush1.msra.mxu0 0.0
      %3935 = vmatprep.subr.mxu0 0.0
      %3936 = vmatpush1.msra.mxu0 0.0
      %3937 = vmatprep.subr.mxu0 0.0
      %3938 = vmatpush1.msra.mxu0 0.0
      %3939 = vmatprep.subr.mxu0 0.0
      %3940 = vmatpush1.msra.mxu0 0.0
      %3941 = vmatprep.subr.mxu0 0.0
      %3942 = vmatpush1.msra.mxu0 0.0
      %3943 = vmatprep.subr.mxu0 0.0
      %3944 = vmatpush1.msra.mxu0 0.0
      %3945 = vmatprep.subr.mxu0 0.0
      %3946 = vmatpush1.msra.mxu0 0.0
      %3947 = vmatprep.subr.mxu0 0.0
      %3948 = vmatpush1.msra.mxu0 0.0
      %3949 = vmatprep.subr.mxu0 0.0
      %3950 = vmatpush1.msra.mxu0 0.0
      %3951 = vmatprep.subr.mxu0 0.0
      %3952 = vmatpush1.msra.mxu0 0.0
      %3953 = vmatprep.subr.mxu0 0.0
      %3954 = vmatpush1.msra.mxu0 0.0
      %3955 = vmatprep.subr.mxu0 0.0
      %3956 = vmatpush1.msra.mxu0 0.0
      %3957 = vmatprep.subr.mxu0 0.0
      %3958 = vmatpush1.msra.mxu0 0.0
      %3959 = vmatprep.subr.mxu0 0.0
      %3960 = vmatpush1.msra.mxu0 0.0
      %3961 = vmatprep.subr.mxu0 0.0
      %3962 = vmatpush1.msra.mxu0 0.0
      %3963 = vmatprep.subr.mxu0 0.0
      %3964 = vmatpush1.msra.mxu0 0.0
      %3965 = vmatprep.subr.mxu0 0.0
      %3966 = vmatpush1.msra.mxu0 0.0
      %3967 = vmatprep.subr.mxu0 0.0
      %3968 = vmatpush1.msra.mxu0 0.0
      %3969 = vmatprep.subr.mxu0 0.0
      %3970 = vmatpush1.msra.mxu0 0.0
      %3971 = vmatprep.subr.mxu0 0.0
      %3972 = vmatpush1.msra.mxu0 0.0
      %3973 = vmatprep.subr.mxu0 0.0
      %3974 = vmatpush1.msra.mxu0 0.0
      %3975 = vmatprep.subr.mxu0 0.0
      %3976 = vmatpush1.msra.mxu0 0.0
      %3977 = vmatprep.subr.mxu0 0.0
      %3978 = vmatpush1.msra.mxu0 0.0
      %3979 = vmatprep.mubr.f32.mxu0 0.0
      %3980 = vmatmul.mubr.f32.gmra.mrb[0].mxu0 %v3817
      %v3981 = vpop.f32.mrb[0].mxu0
      %v3982 = vadd.f32 0.0, %v3981
      %v3983 = vpop.f32.mrb[0].mxu0
      %3984 = vmatprep.mubr.f32.mxu0 0.0
      %3985 = vmatmul.mubr.f32.gmra.mrb[0].mxu0 %v3820
      %v3986 = vpop.f32.mrb[0].mxu0
      %v3987 = vadd.f32 0.0, %v3986
      %v3988 = vpop.f32.mrb[0].mxu0
      %3989 = vmatprep.mubr.f32.mxu0 0.0
      %3990 = vmatmul.mubr.f32.gmra.mrb[0].mxu0 %v3823
      %v3991 = vpop.f32.mrb[0].mxu0
      %v3992 = vadd.f32 0.0, %v3991
      %v3993 = vpop.f32.mrb[0].mxu0
      %3994 = vmatprep.mubr.f32.mxu0 0.0
      %3995 = vmatmul.mubr.f32.gmra.mrb[0].mxu0 %v3826
      %v3996 = vpop.f32.mrb[0].mxu0
      %v3997 = vadd.f32 0.0, %v3996
      %v3998 = vpop.f32.mrb[0].mxu0
      %3999 = vmatprep.mubr.f32.mxu0 0.0
      %4000 = vmatmul.mubr.f32.gmra.mrb[0].mxu0 %v3829
      %v4001 = vpop.f32.mrb[0].mxu0
      %v4002 = vadd.f32 0.0, %v4001
      %v4003 = vpop.f32.mrb[0].mxu0
      %4004 = vmatprep.mubr.f32.mxu0 0.0
      %4005 = vmatmul.mubr.f32.gmra.mrb[0].mxu0 %v3832
      %v4006 = vpop.f32.mrb[0].mxu0
      %v4007 = vadd.f32 0.0, %v4006
      %v4008 = vpop.f32.mrb[0].mxu0
      %4009 = vmatprep.mubr.f32.mxu0 0.0
      %4010 = vmatmul.mubr.f32.gmra.mrb[0].mxu0 %v3835
      %v4011 = vpop.f32.mrb[0].mxu0
      %v4012 = vadd.f32 0.0, %v4011
      %v4013 = vpop.f32.mrb[0].mxu0
      %4014 = vmatprep.mubr.f32.mxu0 0.0
      %4015 = vmatmul.mubr.f32.gmra.mrb[0].mxu0 %v3838
      %v4016 = vpop.f32.mrb[0].mxu0
      %v4017 = vadd.f32 0.0, %v4016
      %v4018 = vpop.f32.mrb[0].mxu0
      %4019 = vmatprep.mubr.f32.mxu0 0.0
      %4020 = vmatmul.mubr.f32.gmra.mrb[0].mxu0 %v3841
      %v4021 = vpop.f32.mrb[0].mxu0
      %v4022 = vadd.f32 0.0, %v4021
      %v4023 = vpop.f32.mrb[0].mxu0
      %4024 = vmatprep.mubr.f32.mxu0 0.0
      %4025 = vmatmul.mubr.f32.gmra.mrb[0].mxu0 %v3844
      %v4026 = vpop.f32.mrb[0].mxu0
      %v4027 = vadd.f32 0.0, %v4026
      %v4028 = vpop.f32.mrb[0].mxu0
      %4029 = vmatprep.mubr.f32.mxu0 0.0
      %4030 = vmatmul.mubr.f32.gmra.mrb[0].mxu0 %v3847
      %v4031 = vpop.f32.mrb[0].mxu0
      %v4032 = vadd.f32 0.0, %v4031
      %v4033 = vpop.f32.mrb[0].mxu0
      %4034 = vmatprep.mubr.f32.mxu0 0.0
      %4035 = vmatmul.mubr.f32.gmra.mrb[0].mxu0 %v3850
      %v4036 = vpop.f32.mrb[0].mxu0
      %v4037 = vadd.f32 0.0, %v4036
      %v4038 = vpop.f32.mrb[0].mxu0
      %4039 = vmatprep.mubr.f32.mxu0 0.0
      %4040 = vmatmul.mubr.f32.gmra.mrb[0].mxu0 %v3853
      %v4041 = vpop.f32.mrb[0].mxu0
      %v4042 = vadd.f32 0.0, %v4041
      %v4043 = vpop.f32.mrb[0].mxu0
      %4044 = vmatprep.mubr.f32.mxu0 0.0
      %4045 = vmatmul.mubr.f32.gmra.mrb[0].mxu0 %v3856
      %v4046 = vpop.f32.mrb[0].mxu0
      %v4047 = vadd.f32 0.0, %v4046
      %v4048 = vpop.f32.mrb[0].mxu0
      %4049 = vmatprep.mubr.f32.mxu0 0.0
      %4050 = vmatmul.mubr.f32.gmra.mrb[0].mxu0 %v3859
      %v4051 = vpop.f32.mrb[0].mxu0
      %v4052 = vadd.f32 0.0, %v4051
      %v4053 = vpop.f32.mrb[0].mxu0
      %4054 = vmatprep.mubr.f32.mxu0 0.0
      %4055 = vmatmul.mubr.f32.gmra.mrb[0].mxu0 %v3862
      %v4056 = vpop.f32.mrb[0].mxu0
      %v4057 = vadd.f32 0.0, %v4056
      %v4058 = vpop.f32.mrb[0].mxu0
      %4059 = vmatprep.mubr.f32.mxu0 0.0
      %4060 = vmatmul.mubr.f32.gmra.mrb[0].mxu0 %v3865
      %v4061 = vpop.f32.mrb[0].mxu0
      %v4062 = vadd.f32 0.0, %v4061
      %v4063 = vpop.f32.mrb[0].mxu0
      %4064 = vmatprep.mubr.f32.mxu0 0.0
      %4065 = vmatmul.mubr.f32.gmra.mrb[0].mxu0 %v3868
      %v4066 = vpop.f32.mrb[0].mxu0
      %v4067 = vadd.f32 0.0, %v4066
      %v4068 = vpop.f32.mrb[0].mxu0
      %4069 = vmatprep.mubr.f32.mxu0 0.0
      %4070 = vmatmul.mubr.f32.gmra.mrb[0].mxu0 %v3871
      %v4071 = vpop.f32.mrb[0].mxu0
      %v4072 = vadd.f32 0.0, %v4071
      %v4073 = vpop.f32.mrb[0].mxu0
      %4074 = vmatprep.mubr.f32.mxu0 0.0
      %4075 = vmatmul.mubr.f32.gmra.mrb[0].mxu0 %v3874
      %v4076 = vpop.f32.mrb[0].mxu0
      %v4077 = vadd.f32 0.0, %v4076
      %v4078 = vpop.f32.mrb[0].mxu0
      %4079 = vmatprep.mubr.f32.mxu0 0.0
      %4080 = vmatmul.mubr.f32.gmra.mrb[0].mxu0 %v3877
      %v4081 = vpop.f32.mrb[0].mxu0
      %v4082 = vadd.f32 0.0, %v4081
      %v4083 = vpop.f32.mrb[0].mxu0
      %4084 = vmatprep.mubr.f32.mxu0 0.0
      %4085 = vmatmul.mubr.f32.gmra.mrb[0].mxu0 %v3880
      %v4086 = vpop.f32.mrb[0].mxu0
      %v4087 = vadd.f32 0.0, %v4086
      %v4088 = vpop.f32.mrb[0].mxu0
      %4089 = vmatprep.mubr.f32.mxu0 0.0
      %4090 = vmatmul.mubr.f32.gmra.mrb[0].mxu0 %v3883
      %v4091 = vpop.f32.mrb[0].mxu0
      %v4092 = vadd.f32 0.0, %v4091
      %v4093 = vpop.f32.mrb[0].mxu0
      %4094 = vmatprep.mubr.f32.mxu0 0.0
      %4095 = vmatmul.mubr.f32.gmra.mrb[0].mxu0 %v3886
      %v4096 = vpop.f32.mrb[0].mxu0
      %v4097 = vadd.f32 0.0, %v4096
      %v4098 = vpop.f32.mrb[0].mxu0
      %4099 = vmatprep.mubr.f32.mxu0 0.0
      %4100 = vmatmul.mubr.f32.gmra.mrb[0].mxu0 %v3889
      %v4101 = vpop.f32.mrb[0].mxu0
      %v4102 = vadd.f32 0.0, %v4101
      %v4103 = vpop.f32.mrb[0].mxu0
      %4104 = vmatprep.mubr.f32.mxu0 0.0
      %4105 = vmatmul.mubr.f32.gmra.mrb[0].mxu0 %v3892
      %v4106 = vpop.f32.mrb[0].mxu0
      %v4107 = vadd.f32 0.0, %v4106
      %v4108 = vpop.f32.mrb[0].mxu0
      %4109 = vmatprep.mubr.f32.mxu0 0.0
      %4110 = vmatmul.mubr.f32.gmra.mrb[0].mxu0 %v3895
      %v4111 = vpop.f32.mrb[0].mxu0
      %v4112 = vadd.f32 0.0, %v4111
      %v4113 = vpop.f32.mrb[0].mxu0
      %4114 = vmatprep.mubr.f32.mxu0 0.0
      %4115 = vmatmul.mubr.f32.gmra.mrb[0].mxu0 %v3898
      %v4116 = vpop.f32.mrb[0].mxu0
      %v4117 = vadd.f32 0.0, %v4116
      %v4118 = vpop.f32.mrb[0].mxu0
      %4119 = vmatprep.mubr.f32.mxu0 0.0
      %4120 = vmatmul.mubr.f32.gmra.mrb[0].mxu0 %v3901
      %v4121 = vpop.f32.mrb[0].mxu0
      %v4122 = vadd.f32 0.0, %v4121
      %v4123 = vpop.f32.mrb[0].mxu0
      %4124 = vmatprep.mubr.f32.mxu0 0.0
      %4125 = vmatmul.mubr.f32.gmra.mrb[0].mxu0 %v3904
      %v4126 = vpop.f32.mrb[0].mxu0
      %v4127 = vadd.f32 0.0, %v4126
      %v4128 = vpop.f32.mrb[0].mxu0
      %4129 = vmatprep.mubr.f32.mxu0 0.0
      %4130 = vmatmul.mubr.f32.gmra.mrb[0].mxu0 %v3907
      %v4131 = vpop.f32.mrb[0].mxu0
      %v4132 = vadd.f32 0.0, %v4131
      %v4133 = vpop.f32.mrb[0].mxu0
      %4134 = vmatprep.mubr.f32.mxu0 0.0
      %4135 = vmatmul.mubr.f32.gmra.mrb[0].mxu0 %v3910
      %v4136 = vpop.f32.mrb[0].mxu0
      %v4137 = vadd.f32 0.0, %v4136
      %v4138 = vpop.f32.mrb[0].mxu0
      %4139 = vdwg.mxu0
      %v4141 = vsel %vm293, %v3748, 0
      %v4144 = vsel %vm293, %v3749, 0
      %v4147 = vsel %vm293, %v3750, 0
      %v4150 = vsel %vm293, %v3751, 0
      %v4153 = vsel %vm293, %v3752, 0
      %v4156 = vsel %vm293, %v3753, 0
      %v4159 = vsel %vm293, %v3754, 0
      %v4162 = vsel %vm293, %v3755, 0
      %v4165 = vsel %vm293, %v3756, 0
      %v4168 = vsel %vm293, %v3757, 0
      %v4171 = vsel %vm293, %v3758, 0
      %v4174 = vsel %vm293, %v3759, 0
      %v4177 = vsel %vm293, %v3760, 0
      %v4180 = vsel %vm293, %v3761, 0
      %v4183 = vsel %vm293, %v3762, 0
      %v4186 = vsel %vm293, %v3763, 0
      %v4189 = vsel %vm293, %v3764, 0
      %v4192 = vsel %vm293, %v3765, 0
      %v4195 = vsel %vm293, %v3766, 0
      %v4198 = vsel %vm293, %v3767, 0
      %v4201 = vsel %vm293, %v3768, 0
      %v4204 = vsel %vm293, %v3769, 0
      %v4207 = vsel %vm293, %v3770, 0
      %v4210 = vsel %vm293, %v3771, 0
      %v4213 = vsel %vm293, %v3772, 0
      %v4216 = vsel %vm293, %v3773, 0
      %v4219 = vsel %vm293, %v3774, 0
      %v4222 = vsel %vm293, %v3775, 0
      %v4225 = vsel %vm293, %v3776, 0
      %v4228 = vsel %vm293, %v3777, 0
      %v4231 = vsel %vm293, %v3778, 0
      %v4234 = vsel %vm293, %v3779, 0
      %v4237 = vsel %vm390, %v3781, 0
      %4239 = vmatprep.subr.mxu0 0.0
      %4240 = vmatpush1.msra.mxu0 %v4237
      %4241 = vmatprep.subr.mxu0 0.0
      %4242 = vmatpush1.msra.mxu0 0.0
      %4243 = vmatprep.subr.mxu0 0.0
      %4244 = vmatpush1.msra.mxu0 0.0
      %4245 = vmatprep.subr.mxu0 0.0
      %4246 = vmatpush1.msra.mxu0 0.0
      %4247 = vmatprep.subr.mxu0 0.0
      %4248 = vmatpush1.msra.mxu0 0.0
      %4249 = vmatprep.subr.mxu0 0.0
      %4250 = vmatpush1.msra.mxu0 0.0
      %4251 = vmatprep.subr.mxu0 0.0
      %4252 = vmatpush1.msra.mxu0 0.0
      %4253 = vmatprep.subr.mxu0 0.0
      %4254 = vmatpush1.msra.mxu0 0.0
      %4255 = vmatprep.subr.mxu0 0.0
      %4256 = vmatpush1.msra.mxu0 0.0
      %4257 = vmatprep.subr.mxu0 0.0
      %4258 = vmatpush1.msra.mxu0 0.0
      %4259 = vmatprep.subr.mxu0 0.0
      %4260 = vmatpush1.msra.mxu0 0.0
      %4261 = vmatprep.subr.mxu0 0.0
      %4262 = vmatpush1.msra.mxu0 0.0
      %4263 = vmatprep.subr.mxu0 0.0
      %4264 = vmatpush1.msra.mxu0 0.0
      %4265 = vmatprep.subr.mxu0 0.0
      %4266 = vmatpush1.msra.mxu0 0.0
      %4267 = vmatprep.subr.mxu0 0.0
      %4268 = vmatpush1.msra.mxu0 0.0
      %4269 = vmatprep.subr.mxu0 0.0
      %4270 = vmatpush1.msra.mxu0 0.0
      %4271 = vmatprep.subr.mxu0 0.0
      %4272 = vmatpush1.msra.mxu0 0.0
      %4273 = vmatprep.subr.mxu0 0.0
      %4274 = vmatpush1.msra.mxu0 0.0
      %4275 = vmatprep.subr.mxu0 0.0
      %4276 = vmatpush1.msra.mxu0 0.0
      %4277 = vmatprep.subr.mxu0 0.0
      %4278 = vmatpush1.msra.mxu0 0.0
      %4279 = vmatprep.subr.mxu0 0.0
      %4280 = vmatpush1.msra.mxu0 0.0
      %4281 = vmatprep.subr.mxu0 0.0
      %4282 = vmatpush1.msra.mxu0 0.0
      %4283 = vmatprep.subr.mxu0 0.0
      %4284 = vmatpush1.msra.mxu0 0.0
      %4285 = vmatprep.subr.mxu0 0.0
      %4286 = vmatpush1.msra.mxu0 0.0
      %4287 = vmatprep.subr.mxu0 0.0
      %4288 = vmatpush1.msra.mxu0 0.0
      %4289 = vmatprep.subr.mxu0 0.0
      %4290 = vmatpush1.msra.mxu0 0.0
      %4291 = vmatprep.subr.mxu0 0.0
      %4292 = vmatpush1.msra.mxu0 0.0
      %4293 = vmatprep.subr.mxu0 0.0
      %4294 = vmatpush1.msra.mxu0 0.0
      %4295 = vmatprep.subr.mxu0 0.0
      %4296 = vmatpush1.msra.mxu0 0.0
      %4297 = vmatprep.subr.mxu0 0.0
      %4298 = vmatpush1.msra.mxu0 0.0
      %4299 = vmatprep.subr.mxu0 0.0
      %4300 = vmatpush1.msra.mxu0 0.0
      %4301 = vmatprep.subr.mxu0 0.0
      %4302 = vmatpush1.msra.mxu0 0.0
      %4303 = vmatprep.mubr.f32.mxu0 0.0
      %4304 = vmatmul.mubr.f32.gmra.mrb[0].mxu0 %v4141
      %v4305 = vpop.f32.mrb[0].mxu0
      %v4306 = vadd.f32 %v3982, %v4305
      %v4307 = vpop.f32.mrb[0].mxu0
      %4308 = vmatprep.mubr.f32.mxu0 0.0
      %4309 = vmatmul.mubr.f32.gmra.mrb[0].mxu0 %v4144
      %v4310 = vpop.f32.mrb[0].mxu0
      %v4311 = vadd.f32 %v3987, %v4310
      %v4312 = vpop.f32.mrb[0].mxu0
      %4313 = vmatprep.mubr.f32.mxu0 0.0
      %4314 = vmatmul.mubr.f32.gmra.mrb[0].mxu0 %v4147
      %v4315 = vpop.f32.mrb[0].mxu0
      %v4316 = vadd.f32 %v3992, %v4315
      %v4317 = vpop.f32.mrb[0].mxu0
      %4318 = vmatprep.mubr.f32.mxu0 0.0
      %4319 = vmatmul.mubr.f32.gmra.mrb[0].mxu0 %v4150
      %v4320 = vpop.f32.mrb[0].mxu0
      %v4321 = vadd.f32 %v3997, %v4320
      %v4322 = vpop.f32.mrb[0].mxu0
      %4323 = vmatprep.mubr.f32.mxu0 0.0
      %4324 = vmatmul.mubr.f32.gmra.mrb[0].mxu0 %v4153
      %v4325 = vpop.f32.mrb[0].mxu0
      %v4326 = vadd.f32 %v4002, %v4325
      %v4327 = vpop.f32.mrb[0].mxu0
      %4328 = vmatprep.mubr.f32.mxu0 0.0
      %4329 = vmatmul.mubr.f32.gmra.mrb[0].mxu0 %v4156
      %v4330 = vpop.f32.mrb[0].mxu0
      %v4331 = vadd.f32 %v4007, %v4330
      %v4332 = vpop.f32.mrb[0].mxu0
      %4333 = vmatprep.mubr.f32.mxu0 0.0
      %4334 = vmatmul.mubr.f32.gmra.mrb[0].mxu0 %v4159
      %v4335 = vpop.f32.mrb[0].mxu0
      %v4336 = vadd.f32 %v4012, %v4335
      %v4337 = vpop.f32.mrb[0].mxu0
      %4338 = vmatprep.mubr.f32.mxu0 0.0
      %4339 = vmatmul.mubr.f32.gmra.mrb[0].mxu0 %v4162
      %v4340 = vpop.f32.mrb[0].mxu0
      %v4341 = vadd.f32 %v4017, %v4340
      %v4342 = vpop.f32.mrb[0].mxu0
      %4343 = vmatprep.mubr.f32.mxu0 0.0
      %4344 = vmatmul.mubr.f32.gmra.mrb[0].mxu0 %v4165
      %v4345 = vpop.f32.mrb[0].mxu0
      %v4346 = vadd.f32 %v4022, %v4345
      %v4347 = vpop.f32.mrb[0].mxu0
      %4348 = vmatprep.mubr.f32.mxu0 0.0
      %4349 = vmatmul.mubr.f32.gmra.mrb[0].mxu0 %v4168
      %v4350 = vpop.f32.mrb[0].mxu0
      %v4351 = vadd.f32 %v4027, %v4350
      %v4352 = vpop.f32.mrb[0].mxu0
      %4353 = vmatprep.mubr.f32.mxu0 0.0
      %4354 = vmatmul.mubr.f32.gmra.mrb[0].mxu0 %v4171
      %v4355 = vpop.f32.mrb[0].mxu0
      %v4356 = vadd.f32 %v4032, %v4355
      %v4357 = vpop.f32.mrb[0].mxu0
      %4358 = vmatprep.mubr.f32.mxu0 0.0
      %4359 = vmatmul.mubr.f32.gmra.mrb[0].mxu0 %v4174
      %v4360 = vpop.f32.mrb[0].mxu0
      %v4361 = vadd.f32 %v4037, %v4360
      %v4362 = vpop.f32.mrb[0].mxu0
      %4363 = vmatprep.mubr.f32.mxu0 0.0
      %4364 = vmatmul.mubr.f32.gmra.mrb[0].mxu0 %v4177
      %v4365 = vpop.f32.mrb[0].mxu0
      %v4366 = vadd.f32 %v4042, %v4365
      %v4367 = vpop.f32.mrb[0].mxu0
      %4368 = vmatprep.mubr.f32.mxu0 0.0
      %4369 = vmatmul.mubr.f32.gmra.mrb[0].mxu0 %v4180
      %v4370 = vpop.f32.mrb[0].mxu0
      %v4371 = vadd.f32 %v4047, %v4370
      %v4372 = vpop.f32.mrb[0].mxu0
      %4373 = vmatprep.mubr.f32.mxu0 0.0
      %4374 = vmatmul.mubr.f32.gmra.mrb[0].mxu0 %v4183
      %v4375 = vpop.f32.mrb[0].mxu0
      %v4376 = vadd.f32 %v4052, %v4375
      %v4377 = vpop.f32.mrb[0].mxu0
      %4378 = vmatprep.mubr.f32.mxu0 0.0
      %4379 = vmatmul.mubr.f32.gmra.mrb[0].mxu0 %v4186
      %v4380 = vpop.f32.mrb[0].mxu0
      %v4381 = vadd.f32 %v4057, %v4380
      %v4382 = vpop.f32.mrb[0].mxu0
      %4383 = vmatprep.mubr.f32.mxu0 0.0
      %4384 = vmatmul.mubr.f32.gmra.mrb[0].mxu0 %v4189
      %v4385 = vpop.f32.mrb[0].mxu0
      %v4386 = vadd.f32 %v4062, %v4385
      %v4387 = vpop.f32.mrb[0].mxu0
      %4388 = vmatprep.mubr.f32.mxu0 0.0
      %4389 = vmatmul.mubr.f32.gmra.mrb[0].mxu0 %v4192
      %v4390 = vpop.f32.mrb[0].mxu0
      %v4391 = vadd.f32 %v4067, %v4390
      %v4392 = vpop.f32.mrb[0].mxu0
      %4393 = vmatprep.mubr.f32.mxu0 0.0
      %4394 = vmatmul.mubr.f32.gmra.mrb[0].mxu0 %v4195
      %v4395 = vpop.f32.mrb[0].mxu0
      %v4396 = vadd.f32 %v4072, %v4395
      %v4397 = vpop.f32.mrb[0].mxu0
      %4398 = vmatprep.mubr.f32.mxu0 0.0
      %4399 = vmatmul.mubr.f32.gmra.mrb[0].mxu0 %v4198
      %v4400 = vpop.f32.mrb[0].mxu0
      %v4401 = vadd.f32 %v4077, %v4400
      %v4402 = vpop.f32.mrb[0].mxu0
      %4403 = vmatprep.mubr.f32.mxu0 0.0
      %4404 = vmatmul.mubr.f32.gmra.mrb[0].mxu0 %v4201
      %v4405 = vpop.f32.mrb[0].mxu0
      %v4406 = vadd.f32 %v4082, %v4405
      %v4407 = vpop.f32.mrb[0].mxu0
      %4408 = vmatprep.mubr.f32.mxu0 0.0
      %4409 = vmatmul.mubr.f32.gmra.mrb[0].mxu0 %v4204
      %v4410 = vpop.f32.mrb[0].mxu0
      %v4411 = vadd.f32 %v4087, %v4410
      %v4412 = vpop.f32.mrb[0].mxu0
      %4413 = vmatprep.mubr.f32.mxu0 0.0
      %4414 = vmatmul.mubr.f32.gmra.mrb[0].mxu0 %v4207
      %v4415 = vpop.f32.mrb[0].mxu0
      %v4416 = vadd.f32 %v4092, %v4415
      %v4417 = vpop.f32.mrb[0].mxu0
      %4418 = vmatprep.mubr.f32.mxu0 0.0
      %4419 = vmatmul.mubr.f32.gmra.mrb[0].mxu0 %v4210
      %v4420 = vpop.f32.mrb[0].mxu0
      %v4421 = vadd.f32 %v4097, %v4420
      %v4422 = vpop.f32.mrb[0].mxu0
      %4423 = vmatprep.mubr.f32.mxu0 0.0
      %4424 = vmatmul.mubr.f32.gmra.mrb[0].mxu0 %v4213
      %v4425 = vpop.f32.mrb[0].mxu0
      %v4426 = vadd.f32 %v4102, %v4425
      %v4427 = vpop.f32.mrb[0].mxu0
      %4428 = vmatprep.mubr.f32.mxu0 0.0
      %4429 = vmatmul.mubr.f32.gmra.mrb[0].mxu0 %v4216
      %v4430 = vpop.f32.mrb[0].mxu0
      %v4431 = vadd.f32 %v4107, %v4430
      %v4432 = vpop.f32.mrb[0].mxu0
      %4433 = vmatprep.mubr.f32.mxu0 0.0
      %4434 = vmatmul.mubr.f32.gmra.mrb[0].mxu0 %v4219
      %v4435 = vpop.f32.mrb[0].mxu0
      %v4436 = vadd.f32 %v4112, %v4435
      %v4437 = vpop.f32.mrb[0].mxu0
      %4438 = vmatprep.mubr.f32.mxu0 0.0
      %4439 = vmatmul.mubr.f32.gmra.mrb[0].mxu0 %v4222
      %v4440 = vpop.f32.mrb[0].mxu0
      %v4441 = vadd.f32 %v4117, %v4440
      %v4442 = vpop.f32.mrb[0].mxu0
      %4443 = vmatprep.mubr.f32.mxu0 0.0
      %4444 = vmatmul.mubr.f32.gmra.mrb[0].mxu0 %v4225
      %v4445 = vpop.f32.mrb[0].mxu0
      %v4446 = vadd.f32 %v4122, %v4445
      %v4447 = vpop.f32.mrb[0].mxu0
      %4448 = vmatprep.mubr.f32.mxu0 0.0
      %4449 = vmatmul.mubr.f32.gmra.mrb[0].mxu0 %v4228
      %v4450 = vpop.f32.mrb[0].mxu0
      %v4451 = vadd.f32 %v4127, %v4450
      %v4452 = vpop.f32.mrb[0].mxu0
      %4453 = vmatprep.mubr.f32.mxu0 0.0
      %4454 = vmatmul.mubr.f32.gmra.mrb[0].mxu0 %v4231
      %v4455 = vpop.f32.mrb[0].mxu0
      %v4456 = vadd.f32 %v4132, %v4455
      %v4457 = vpop.f32.mrb[0].mxu0
      %4458 = vmatprep.mubr.f32.mxu0 0.0
      %4459 = vmatmul.mubr.f32.gmra.mrb[0].mxu0 %v4234
      %v4460 = vpop.f32.mrb[0].mxu0
      %v4461 = vadd.f32 %v4137, %v4460
      %v4462 = vpop.f32.mrb[0].mxu0
      %4463 = vdwg.mxu0
      %v4464 = vld [vmem:[%s3747 + $0x1e] sm:$0xff]
      %v4465 = vld [vmem:[%s3747 + $0x26] sm:$0xff]
      %v4466 = vld [vmem:[%s3747 + $0x56] sm:$0xff]
      %v4467 = vld [vmem:[%s3747 + $0x5e] sm:$0xff]
      %v4468 = vld [vmem:[%s3747 + $0x8e] sm:$0xff]
      %v4469 = vld [vmem:[%s3747 + $0x96] sm:$0xff]
      %v4470 = vld [vmem:[%s3747 + $0xc6] sm:$0xff]
      %v4471 = vld [vmem:[%s3747 + $0xce] sm:$0xff]
      %v4472 = vld [vmem:[%s3747 + $0xfe] sm:$0xff]
      %v4473 = vld [vmem:[%s3747 + $0x106] sm:$0xff]
      %v4474 = vld [vmem:[%s3747 + $0x136] sm:$0xff]
      %v4475 = vld [vmem:[%s3747 + $0x13e] sm:$0xff]
      %v4476 = vld [vmem:[%s3747 + $0x16e] sm:$0xff]
      %v4477 = vld [vmem:[%s3747 + $0x176] sm:$0xff]
      %v4478 = vld [vmem:[%s3747 + $0x1a6] sm:$0xff]
      %v4479 = vld [vmem:[%s3747 + $0x1ae] sm:$0xff]
      %v4480 = vld [vmem:[%s3747 + $0x1de] sm:$0xff]
      %v4481 = vld [vmem:[%s3747 + $0x1e6] sm:$0xff]
      %v4482 = vld [vmem:[%s3747 + $0x216] sm:$0xff]
      %v4483 = vld [vmem:[%s3747 + $0x21e] sm:$0xff]
      %v4484 = vld [vmem:[%s3747 + $0x24e] sm:$0xff]
      %v4485 = vld [vmem:[%s3747 + $0x256] sm:$0xff]
      %v4486 = vld [vmem:[%s3747 + $0x286] sm:$0xff]
      %v4487 = vld [vmem:[%s3747 + $0x28e] sm:$0xff]
      %v4488 = vld [vmem:[%s3747 + $0x2be] sm:$0xff]
      %v4489 = vld [vmem:[%s3747 + $0x2c6] sm:$0xff]
      %v4490 = vld [vmem:[%s3747 + $0x2f6] sm:$0xff]
      %v4491 = vld [vmem:[%s3747 + $0x2fe] sm:$0xff]
      %v4492 = vld [vmem:[%s3747 + $0x32e] sm:$0xff]
      %v4493 = vld [vmem:[%s3747 + $0x336] sm:$0xff]
      %v4494 = vld [vmem:[%s3747 + $0x366] sm:$0xff]
      %v4495 = vld [vmem:[%s3747 + $0x36e] sm:$0xff]
      %s4496 = scalar_lea.vmem %s1, 44
      %v4497 = vld [vmem:[%s4496] sm:$0xf]
      %v4499 = vsel %vm293, %v4464, 0
      %v4502 = vsel %vm293, %v4465, 0
      %v4505 = vsel %vm293, %v4466, 0
      %v4508 = vsel %vm293, %v4467, 0
      %v4511 = vsel %vm293, %v4468, 0
      %v4514 = vsel %vm293, %v4469, 0
      %v4517 = vsel %vm293, %v4470, 0
      %v4520 = vsel %vm293, %v4471, 0
      %v4523 = vsel %vm293, %v4472, 0
      %v4526 = vsel %vm293, %v4473, 0
      %v4529 = vsel %vm293, %v4474, 0
      %v4532 = vsel %vm293, %v4475, 0
      %v4535 = vsel %vm293, %v4476, 0
      %v4538 = vsel %vm293, %v4477, 0
      %v4541 = vsel %vm293, %v4478, 0
      %v4544 = vsel %vm293, %v4479, 0
      %v4547 = vsel %vm293, %v4480, 0
      %v4550 = vsel %vm293, %v4481, 0
      %v4553 = vsel %vm293, %v4482, 0
      %v4556 = vsel %vm293, %v4483, 0
      %v4559 = vsel %vm293, %v4484, 0
      %v4562 = vsel %vm293, %v4485, 0
      %v4565 = vsel %vm293, %v4486, 0
      %v4568 = vsel %vm293, %v4487, 0
      %v4571 = vsel %vm293, %v4488, 0
      %v4574 = vsel %vm293, %v4489, 0
      %v4577 = vsel %vm293, %v4490, 0
      %v4580 = vsel %vm293, %v4491, 0
      %v4583 = vsel %vm293, %v4492, 0
      %v4586 = vsel %vm293, %v4493, 0
      %v4589 = vsel %vm293, %v4494, 0
      %v4592 = vsel %vm293, %v4495, 0
      %v4595 = vsel %vm390, %v4497, 0
      %4597 = vmatprep.subr.mxu0 0.0
      %4598 = vmatpush1.msra.mxu0 %v4595
      %4599 = vmatprep.subr.mxu0 0.0
      %4600 = vmatpush1.msra.mxu0 0.0
      %4601 = vmatprep.subr.mxu0 0.0
      %4602 = vmatpush1.msra.mxu0 0.0
      %4603 = vmatprep.subr.mxu0 0.0
      %4604 = vmatpush1.msra.mxu0 0.0
      %4605 = vmatprep.subr.mxu0 0.0
      %4606 = vmatpush1.msra.mxu0 0.0
      %4607 = vmatprep.subr.mxu0 0.0
      %4608 = vmatpush1.msra.mxu0 0.0
      %4609 = vmatprep.subr.mxu0 0.0
      %4610 = vmatpush1.msra.mxu0 0.0
      %4611 = vmatprep.subr.mxu0 0.0
      %4612 = vmatpush1.msra.mxu0 0.0
      %4613 = vmatprep.subr.mxu0 0.0
      %4614 = vmatpush1.msra.mxu0 0.0
      %4615 = vmatprep.subr.mxu0 0.0
      %4616 = vmatpush1.msra.mxu0 0.0
      %4617 = vmatprep.subr.mxu0 0.0
      %4618 = vmatpush1.msra.mxu0 0.0
      %4619 = vmatprep.subr.mxu0 0.0
      %4620 = vmatpush1.msra.mxu0 0.0
      %4621 = vmatprep.subr.mxu0 0.0
      %4622 = vmatpush1.msra.mxu0 0.0
      %4623 = vmatprep.subr.mxu0 0.0
      %4624 = vmatpush1.msra.mxu0 0.0
      %4625 = vmatprep.subr.mxu0 0.0
      %4626 = vmatpush1.msra.mxu0 0.0
      %4627 = vmatprep.subr.mxu0 0.0
      %4628 = vmatpush1.msra.mxu0 0.0
      %4629 = vmatprep.subr.mxu0 0.0
      %4630 = vmatpush1.msra.mxu0 0.0
      %4631 = vmatprep.subr.mxu0 0.0
      %4632 = vmatpush1.msra.mxu0 0.0
      %4633 = vmatprep.subr.mxu0 0.0
      %4634 = vmatpush1.msra.mxu0 0.0
      %4635 = vmatprep.subr.mxu0 0.0
      %4636 = vmatpush1.msra.mxu0 0.0
      %4637 = vmatprep.subr.mxu0 0.0
      %4638 = vmatpush1.msra.mxu0 0.0
      %4639 = vmatprep.subr.mxu0 0.0
      %4640 = vmatpush1.msra.mxu0 0.0
      %4641 = vmatprep.subr.mxu0 0.0
      %4642 = vmatpush1.msra.mxu0 0.0
      %4643 = vmatprep.subr.mxu0 0.0
      %4644 = vmatpush1.msra.mxu0 0.0
      %4645 = vmatprep.subr.mxu0 0.0
      %4646 = vmatpush1.msra.mxu0 0.0
      %4647 = vmatprep.subr.mxu0 0.0
      %4648 = vmatpush1.msra.mxu0 0.0
      %4649 = vmatprep.subr.mxu0 0.0
      %4650 = vmatpush1.msra.mxu0 0.0
      %4651 = vmatprep.subr.mxu0 0.0
      %4652 = vmatpush1.msra.mxu0 0.0
      %4653 = vmatprep.subr.mxu0 0.0
      %4654 = vmatpush1.msra.mxu0 0.0
      %4655 = vmatprep.subr.mxu0 0.0
      %4656 = vmatpush1.msra.mxu0 0.0
      %4657 = vmatprep.subr.mxu0 0.0
      %4658 = vmatpush1.msra.mxu0 0.0
      %4659 = vmatprep.subr.mxu0 0.0
      %4660 = vmatpush1.msra.mxu0 0.0
      %4661 = vmatprep.mubr.f32.mxu0 0.0
      %4662 = vmatmul.mubr.f32.gmra.mrb[0].mxu0 %v4499
      %v4663 = vpop.f32.mrb[0].mxu0
      %v4664 = vadd.f32 0.0, %v4663
      %v4665 = vpop.f32.mrb[0].mxu0
      %4666 = vmatprep.mubr.f32.mxu0 0.0
      %4667 = vmatmul.mubr.f32.gmra.mrb[0].mxu0 %v4502
      %v4668 = vpop.f32.mrb[0].mxu0
      %v4669 = vadd.f32 0.0, %v4668
      %v4670 = vpop.f32.mrb[0].mxu0
      %4671 = vmatprep.mubr.f32.mxu0 0.0
      %4672 = vmatmul.mubr.f32.gmra.mrb[0].mxu0 %v4505
      %v4673 = vpop.f32.mrb[0].mxu0
      %v4674 = vadd.f32 0.0, %v4673
      %v4675 = vpop.f32.mrb[0].mxu0
      %4676 = vmatprep.mubr.f32.mxu0 0.0
      %4677 = vmatmul.mubr.f32.gmra.mrb[0].mxu0 %v4508
      %v4678 = vpop.f32.mrb[0].mxu0
      %v4679 = vadd.f32 0.0, %v4678
      %v4680 = vpop.f32.mrb[0].mxu0
      %4681 = vmatprep.mubr.f32.mxu0 0.0
      %4682 = vmatmul.mubr.f32.gmra.mrb[0].mxu0 %v4511
      %v4683 = vpop.f32.mrb[0].mxu0
      %v4684 = vadd.f32 0.0, %v4683
      %v4685 = vpop.f32.mrb[0].mxu0
      %4686 = vmatprep.mubr.f32.mxu0 0.0
      %4687 = vmatmul.mubr.f32.gmra.mrb[0].mxu0 %v4514
      %v4688 = vpop.f32.mrb[0].mxu0
      %v4689 = vadd.f32 0.0, %v4688
      %v4690 = vpop.f32.mrb[0].mxu0
      %4691 = vmatprep.mubr.f32.mxu0 0.0
      %4692 = vmatmul.mubr.f32.gmra.mrb[0].mxu0 %v4517
      %v4693 = vpop.f32.mrb[0].mxu0
      %v4694 = vadd.f32 0.0, %v4693
      %v4695 = vpop.f32.mrb[0].mxu0
      %4696 = vmatprep.mubr.f32.mxu0 0.0
      %4697 = vmatmul.mubr.f32.gmra.mrb[0].mxu0 %v4520
      %v4698 = vpop.f32.mrb[0].mxu0
      %v4699 = vadd.f32 0.0, %v4698
      %v4700 = vpop.f32.mrb[0].mxu0
      %4701 = vmatprep.mubr.f32.mxu0 0.0
      %4702 = vmatmul.mubr.f32.gmra.mrb[0].mxu0 %v4523
      %v4703 = vpop.f32.mrb[0].mxu0
      %v4704 = vadd.f32 0.0, %v4703
      %v4705 = vpop.f32.mrb[0].mxu0
      %4706 = vmatprep.mubr.f32.mxu0 0.0
      %4707 = vmatmul.mubr.f32.gmra.mrb[0].mxu0 %v4526
      %v4708 = vpop.f32.mrb[0].mxu0
      %v4709 = vadd.f32 0.0, %v4708
      %v4710 = vpop.f32.mrb[0].mxu0
      %4711 = vmatprep.mubr.f32.mxu0 0.0
      %4712 = vmatmul.mubr.f32.gmra.mrb[0].mxu0 %v4529
      %v4713 = vpop.f32.mrb[0].mxu0
      %v4714 = vadd.f32 0.0, %v4713
      %v4715 = vpop.f32.mrb[0].mxu0
      %4716 = vmatprep.mubr.f32.mxu0 0.0
      %4717 = vmatmul.mubr.f32.gmra.mrb[0].mxu0 %v4532
      %v4718 = vpop.f32.mrb[0].mxu0
      %v4719 = vadd.f32 0.0, %v4718
      %v4720 = vpop.f32.mrb[0].mxu0
      %4721 = vmatprep.mubr.f32.mxu0 0.0
      %4722 = vmatmul.mubr.f32.gmra.mrb[0].mxu0 %v4535
      %v4723 = vpop.f32.mrb[0].mxu0
      %v4724 = vadd.f32 0.0, %v4723
      %v4725 = vpop.f32.mrb[0].mxu0
      %4726 = vmatprep.mubr.f32.mxu0 0.0
      %4727 = vmatmul.mubr.f32.gmra.mrb[0].mxu0 %v4538
      %v4728 = vpop.f32.mrb[0].mxu0
      %v4729 = vadd.f32 0.0, %v4728
      %v4730 = vpop.f32.mrb[0].mxu0
      %4731 = vmatprep.mubr.f32.mxu0 0.0
      %4732 = vmatmul.mubr.f32.gmra.mrb[0].mxu0 %v4541
      %v4733 = vpop.f32.mrb[0].mxu0
      %v4734 = vadd.f32 0.0, %v4733
      %v4735 = vpop.f32.mrb[0].mxu0
      %4736 = vmatprep.mubr.f32.mxu0 0.0
      %4737 = vmatmul.mubr.f32.gmra.mrb[0].mxu0 %v4544
      %v4738 = vpop.f32.mrb[0].mxu0
      %v4739 = vadd.f32 0.0, %v4738
      %v4740 = vpop.f32.mrb[0].mxu0
      %4741 = vmatprep.mubr.f32.mxu0 0.0
      %4742 = vmatmul.mubr.f32.gmra.mrb[0].mxu0 %v4547
      %v4743 = vpop.f32.mrb[0].mxu0
      %v4744 = vadd.f32 0.0, %v4743
      %v4745 = vpop.f32.mrb[0].mxu0
      %4746 = vmatprep.mubr.f32.mxu0 0.0
      %4747 = vmatmul.mubr.f32.gmra.mrb[0].mxu0 %v4550
      %v4748 = vpop.f32.mrb[0].mxu0
      %v4749 = vadd.f32 0.0, %v4748
      %v4750 = vpop.f32.mrb[0].mxu0
      %4751 = vmatprep.mubr.f32.mxu0 0.0
      %4752 = vmatmul.mubr.f32.gmra.mrb[0].mxu0 %v4553
      %v4753 = vpop.f32.mrb[0].mxu0
      %v4754 = vadd.f32 0.0, %v4753
      %v4755 = vpop.f32.mrb[0].mxu0
      %4756 = vmatprep.mubr.f32.mxu0 0.0
      %4757 = vmatmul.mubr.f32.gmra.mrb[0].mxu0 %v4556
      %v4758 = vpop.f32.mrb[0].mxu0
      %v4759 = vadd.f32 0.0, %v4758
      %v4760 = vpop.f32.mrb[0].mxu0
      %4761 = vmatprep.mubr.f32.mxu0 0.0
      %4762 = vmatmul.mubr.f32.gmra.mrb[0].mxu0 %v4559
      %v4763 = vpop.f32.mrb[0].mxu0
      %v4764 = vadd.f32 0.0, %v4763
      %v4765 = vpop.f32.mrb[0].mxu0
      %4766 = vmatprep.mubr.f32.mxu0 0.0
      %4767 = vmatmul.mubr.f32.gmra.mrb[0].mxu0 %v4562
      %v4768 = vpop.f32.mrb[0].mxu0
      %v4769 = vadd.f32 0.0, %v4768
      %v4770 = vpop.f32.mrb[0].mxu0
      %4771 = vmatprep.mubr.f32.mxu0 0.0
      %4772 = vmatmul.mubr.f32.gmra.mrb[0].mxu0 %v4565
      %v4773 = vpop.f32.mrb[0].mxu0
      %v4774 = vadd.f32 0.0, %v4773
      %v4775 = vpop.f32.mrb[0].mxu0
      %4776 = vmatprep.mubr.f32.mxu0 0.0
      %4777 = vmatmul.mubr.f32.gmra.mrb[0].mxu0 %v4568
      %v4778 = vpop.f32.mrb[0].mxu0
      %v4779 = vadd.f32 0.0, %v4778
      %v4780 = vpop.f32.mrb[0].mxu0
      %4781 = vmatprep.mubr.f32.mxu0 0.0
      %4782 = vmatmul.mubr.f32.gmra.mrb[0].mxu0 %v4571
      %v4783 = vpop.f32.mrb[0].mxu0
      %v4784 = vadd.f32 0.0, %v4783
      %v4785 = vpop.f32.mrb[0].mxu0
      %4786 = vmatprep.mubr.f32.mxu0 0.0
      %4787 = vmatmul.mubr.f32.gmra.mrb[0].mxu0 %v4574
      %v4788 = vpop.f32.mrb[0].mxu0
      %v4789 = vadd.f32 0.0, %v4788
      %v4790 = vpop.f32.mrb[0].mxu0
      %4791 = vmatprep.mubr.f32.mxu0 0.0
      %4792 = vmatmul.mubr.f32.gmra.mrb[0].mxu0 %v4577
      %v4793 = vpop.f32.mrb[0].mxu0
      %v4794 = vadd.f32 0.0, %v4793
      %v4795 = vpop.f32.mrb[0].mxu0
      %4796 = vmatprep.mubr.f32.mxu0 0.0
      %4797 = vmatmul.mubr.f32.gmra.mrb[0].mxu0 %v4580
      %v4798 = vpop.f32.mrb[0].mxu0
      %v4799 = vadd.f32 0.0, %v4798
      %v4800 = vpop.f32.mrb[0].mxu0
      %4801 = vmatprep.mubr.f32.mxu0 0.0
      %4802 = vmatmul.mubr.f32.gmra.mrb[0].mxu0 %v4583
      %v4803 = vpop.f32.mrb[0].mxu0
      %v4804 = vadd.f32 0.0, %v4803
      %v4805 = vpop.f32.mrb[0].mxu0
      %4806 = vmatprep.mubr.f32.mxu0 0.0
      %4807 = vmatmul.mubr.f32.gmra.mrb[0].mxu0 %v4586
      %v4808 = vpop.f32.mrb[0].mxu0
      %v4809 = vadd.f32 0.0, %v4808
      %v4810 = vpop.f32.mrb[0].mxu0
      %4811 = vmatprep.mubr.f32.mxu0 0.0
      %4812 = vmatmul.mubr.f32.gmra.mrb[0].mxu0 %v4589
      %v4813 = vpop.f32.mrb[0].mxu0
      %v4814 = vadd.f32 0.0, %v4813
      %v4815 = vpop.f32.mrb[0].mxu0
      %4816 = vmatprep.mubr.f32.mxu0 0.0
      %4817 = vmatmul.mubr.f32.gmra.mrb[0].mxu0 %v4592
      %v4818 = vpop.f32.mrb[0].mxu0
      %v4819 = vadd.f32 0.0, %v4818
      %v4820 = vpop.f32.mrb[0].mxu0
      %4821 = vdwg.mxu0
      %v4822 = vadd.f32 %v4306, %v4664
      %v4823 = vadd.f32 %v4311, %v4669
      %v4824 = vadd.f32 %v4316, %v4674
      %v4825 = vadd.f32 %v4321, %v4679
      %v4826 = vadd.f32 %v4326, %v4684
      %v4827 = vadd.f32 %v4331, %v4689
      %v4828 = vadd.f32 %v4336, %v4694
      %v4829 = vadd.f32 %v4341, %v4699
      %v4830 = vadd.f32 %v4346, %v4704
      %v4831 = vadd.f32 %v4351, %v4709
      %v4832 = vadd.f32 %v4356, %v4714
      %v4833 = vadd.f32 %v4361, %v4719
      %v4834 = vadd.f32 %v4366, %v4724
      %v4835 = vadd.f32 %v4371, %v4729
      %v4836 = vadd.f32 %v4376, %v4734
      %v4837 = vadd.f32 %v4381, %v4739
      %v4838 = vadd.f32 %v4386, %v4744
      %v4839 = vadd.f32 %v4391, %v4749
      %v4840 = vadd.f32 %v4396, %v4754
      %v4841 = vadd.f32 %v4401, %v4759
      %v4842 = vadd.f32 %v4406, %v4764
      %v4843 = vadd.f32 %v4411, %v4769
      %v4844 = vadd.f32 %v4416, %v4774
      %v4845 = vadd.f32 %v4421, %v4779
      %v4846 = vadd.f32 %v4426, %v4784
      %v4847 = vadd.f32 %v4431, %v4789
      %v4848 = vadd.f32 %v4436, %v4794
      %v4849 = vadd.f32 %v4441, %v4799
      %v4850 = vadd.f32 %v4446, %v4804
      %v4851 = vadd.f32 %v4451, %v4809
      %v4852 = vadd.f32 %v4456, %v4814
      %v4853 = vadd.f32 %v4461, %v4819
      %v4854 = vld [vmem:[%s1333 + $0x6] sm:$0xff]
      %v4855 = vld [vmem:[%s1333 + $0xe] sm:$0xff]
      %v4856 = vld [vmem:[%s1333 + $0x3e] sm:$0xff]
      %v4857 = vld [vmem:[%s1333 + $0x46] sm:$0xff]
      %v4858 = vld [vmem:[%s1333 + $0x76] sm:$0xff]
      %v4859 = vld [vmem:[%s1333 + $0x7e] sm:$0xff]
      %v4860 = vld [vmem:[%s1333 + $0xae] sm:$0xff]
      %v4861 = vld [vmem:[%s1333 + $0xb6] sm:$0xff]
      %v4862 = vld [vmem:[%s1333 + $0xe6] sm:$0xff]
      %v4863 = vld [vmem:[%s1333 + $0xee] sm:$0xff]
      %v4864 = vld [vmem:[%s1333 + $0x11e] sm:$0xff]
      %v4865 = vld [vmem:[%s1333 + $0x126] sm:$0xff]
      %v4866 = vld [vmem:[%s1333 + $0x156] sm:$0xff]
      %v4867 = vld [vmem:[%s1333 + $0x15e] sm:$0xff]
      %v4868 = vld [vmem:[%s1333 + $0x18e] sm:$0xff]
      %v4869 = vld [vmem:[%s1333 + $0x196] sm:$0xff]
      %v4870 = vld [vmem:[%s1333 + $0x1c6] sm:$0xff]
      %v4871 = vld [vmem:[%s1333 + $0x1ce] sm:$0xff]
      %v4872 = vld [vmem:[%s1333 + $0x1fe] sm:$0xff]
      %v4873 = vld [vmem:[%s1333 + $0x206] sm:$0xff]
      %v4874 = vld [vmem:[%s1333 + $0x236] sm:$0xff]
      %v4875 = vld [vmem:[%s1333 + $0x23e] sm:$0xff]
      %v4876 = vld [vmem:[%s1333 + $0x26e] sm:$0xff]
      %v4877 = vld [vmem:[%s1333 + $0x276] sm:$0xff]
      %v4878 = vld [vmem:[%s1333 + $0x2a6] sm:$0xff]
      %v4879 = vld [vmem:[%s1333 + $0x2ae] sm:$0xff]
      %v4880 = vld [vmem:[%s1333 + $0x2de] sm:$0xff]
      %v4881 = vld [vmem:[%s1333 + $0x2e6] sm:$0xff]
      %v4882 = vld [vmem:[%s1333 + $0x316] sm:$0xff]
      %v4883 = vld [vmem:[%s1333 + $0x31e] sm:$0xff]
      %v4884 = vld [vmem:[%s1333 + $0x34e] sm:$0xff]
      %v4885 = vld [vmem:[%s1333 + $0x356] sm:$0xff]
      %s4886 = scalar_lea.vmem %s1, 48
      %v4887 = vld [vmem:[%s4886] sm:$0xf]
      %v4889 = vsel %vm293, %v4854, 0
      %v4892 = vsel %vm293, %v4855, 0
      %v4895 = vsel %vm293, %v4856, 0
      %v4898 = vsel %vm293, %v4857, 0
      %v4901 = vsel %vm293, %v4858, 0
      %v4904 = vsel %vm293, %v4859, 0
      %v4907 = vsel %vm293, %v4860, 0
      %v4910 = vsel %vm293, %v4861, 0
      %v4913 = vsel %vm293, %v4862, 0
      %v4916 = vsel %vm293, %v4863, 0
      %v4919 = vsel %vm293, %v4864, 0
      %v4922 = vsel %vm293, %v4865, 0
      %v4925 = vsel %vm293, %v4866, 0
      %v4928 = vsel %vm293, %v4867, 0
      %v4931 = vsel %vm293, %v4868, 0
      %v4934 = vsel %vm293, %v4869, 0
      %v4937 = vsel %vm293, %v4870, 0
      %v4940 = vsel %vm293, %v4871, 0
      %v4943 = vsel %vm293, %v4872, 0
      %v4946 = vsel %vm293, %v4873, 0
      %v4949 = vsel %vm293, %v4874, 0
      %v4952 = vsel %vm293, %v4875, 0
      %v4955 = vsel %vm293, %v4876, 0
      %v4958 = vsel %vm293, %v4877, 0
      %v4961 = vsel %vm293, %v4878, 0
      %v4964 = vsel %vm293, %v4879, 0
      %v4967 = vsel %vm293, %v4880, 0
      %v4970 = vsel %vm293, %v4881, 0
      %v4973 = vsel %vm293, %v4882, 0
      %v4976 = vsel %vm293, %v4883, 0
      %v4979 = vsel %vm293, %v4884, 0
      %v4982 = vsel %vm293, %v4885, 0
      %v4985 = vsel %vm390, %v4887, 0
      %4987 = vmatprep.subr.mxu0 0.0
      %4988 = vmatpush1.msra.mxu0 %v4985
      %4989 = vmatprep.subr.mxu0 0.0
      %4990 = vmatpush1.msra.mxu0 0.0
      %4991 = vmatprep.subr.mxu0 0.0
      %4992 = vmatpush1.msra.mxu0 0.0
      %4993 = vmatprep.subr.mxu0 0.0
      %4994 = vmatpush1.msra.mxu0 0.0
      %4995 = vmatprep.subr.mxu0 0.0
      %4996 = vmatpush1.msra.mxu0 0.0
      %4997 = vmatprep.subr.mxu0 0.0
      %4998 = vmatpush1.msra.mxu0 0.0
      %4999 = vmatprep.subr.mxu0 0.0
      %5000 = vmatpush1.msra.mxu0 0.0
      %5001 = vmatprep.subr.mxu0 0.0
      %5002 = vmatpush1.msra.mxu0 0.0
      %5003 = vmatprep.subr.mxu0 0.0
      %5004 = vmatpush1.msra.mxu0 0.0
      %5005 = vmatprep.subr.mxu0 0.0
      %5006 = vmatpush1.msra.mxu0 0.0
      %5007 = vmatprep.subr.mxu0 0.0
      %5008 = vmatpush1.msra.mxu0 0.0
      %5009 = vmatprep.subr.mxu0 0.0
      %5010 = vmatpush1.msra.mxu0 0.0
      %5011 = vmatprep.subr.mxu0 0.0
      %5012 = vmatpush1.msra.mxu0 0.0
      %5013 = vmatprep.subr.mxu0 0.0
      %5014 = vmatpush1.msra.mxu0 0.0
      %5015 = vmatprep.subr.mxu0 0.0
      %5016 = vmatpush1.msra.mxu0 0.0
      %5017 = vmatprep.subr.mxu0 0.0
      %5018 = vmatpush1.msra.mxu0 0.0
      %5019 = vmatprep.subr.mxu0 0.0
      %5020 = vmatpush1.msra.mxu0 0.0
      %5021 = vmatprep.subr.mxu0 0.0
      %5022 = vmatpush1.msra.mxu0 0.0
      %5023 = vmatprep.subr.mxu0 0.0
      %5024 = vmatpush1.msra.mxu0 0.0
      %5025 = vmatprep.subr.mxu0 0.0
      %5026 = vmatpush1.msra.mxu0 0.0
      %5027 = vmatprep.subr.mxu0 0.0
      %5028 = vmatpush1.msra.mxu0 0.0
      %5029 = vmatprep.subr.mxu0 0.0
      %5030 = vmatpush1.msra.mxu0 0.0
      %5031 = vmatprep.subr.mxu0 0.0
      %5032 = vmatpush1.msra.mxu0 0.0
      %5033 = vmatprep.subr.mxu0 0.0
      %5034 = vmatpush1.msra.mxu0 0.0
      %5035 = vmatprep.subr.mxu0 0.0
      %5036 = vmatpush1.msra.mxu0 0.0
      %5037 = vmatprep.subr.mxu0 0.0
      %5038 = vmatpush1.msra.mxu0 0.0
      %5039 = vmatprep.subr.mxu0 0.0
      %5040 = vmatpush1.msra.mxu0 0.0
      %5041 = vmatprep.subr.mxu0 0.0
      %5042 = vmatpush1.msra.mxu0 0.0
      %5043 = vmatprep.subr.mxu0 0.0
      %5044 = vmatpush1.msra.mxu0 0.0
      %5045 = vmatprep.subr.mxu0 0.0
      %5046 = vmatpush1.msra.mxu0 0.0
      %5047 = vmatprep.subr.mxu0 0.0
      %5048 = vmatpush1.msra.mxu0 0.0
      %5049 = vmatprep.subr.mxu0 0.0
      %5050 = vmatpush1.msra.mxu0 0.0
      %5051 = vmatprep.mubr.f32.mxu0 0.0
      %5052 = vmatmul.mubr.f32.gmra.mrb[0].mxu0 %v4889
      %v5053 = vpop.f32.mrb[0].mxu0
      %v5054 = vadd.f32 0.0, %v5053
      %v5055 = vpop.f32.mrb[0].mxu0
      %5056 = vmatprep.mubr.f32.mxu0 0.0
      %5057 = vmatmul.mubr.f32.gmra.mrb[0].mxu0 %v4892
      %v5058 = vpop.f32.mrb[0].mxu0
      %v5059 = vadd.f32 0.0, %v5058
      %v5060 = vpop.f32.mrb[0].mxu0
      %5061 = vmatprep.mubr.f32.mxu0 0.0
      %5062 = vmatmul.mubr.f32.gmra.mrb[0].mxu0 %v4895
      %v5063 = vpop.f32.mrb[0].mxu0
      %v5064 = vadd.f32 0.0, %v5063
      %v5065 = vpop.f32.mrb[0].mxu0
      %5066 = vmatprep.mubr.f32.mxu0 0.0
      %5067 = vmatmul.mubr.f32.gmra.mrb[0].mxu0 %v4898
      %v5068 = vpop.f32.mrb[0].mxu0
      %v5069 = vadd.f32 0.0, %v5068
      %v5070 = vpop.f32.mrb[0].mxu0
      %5071 = vmatprep.mubr.f32.mxu0 0.0
      %5072 = vmatmul.mubr.f32.gmra.mrb[0].mxu0 %v4901
      %v5073 = vpop.f32.mrb[0].mxu0
      %v5074 = vadd.f32 0.0, %v5073
      %v5075 = vpop.f32.mrb[0].mxu0
      %5076 = vmatprep.mubr.f32.mxu0 0.0
      %5077 = vmatmul.mubr.f32.gmra.mrb[0].mxu0 %v4904
      %v5078 = vpop.f32.mrb[0].mxu0
      %v5079 = vadd.f32 0.0, %v5078
      %v5080 = vpop.f32.mrb[0].mxu0
      %5081 = vmatprep.mubr.f32.mxu0 0.0
      %5082 = vmatmul.mubr.f32.gmra.mrb[0].mxu0 %v4907
      %v5083 = vpop.f32.mrb[0].mxu0
      %v5084 = vadd.f32 0.0, %v5083
      %v5085 = vpop.f32.mrb[0].mxu0
      %5086 = vmatprep.mubr.f32.mxu0 0.0
      %5087 = vmatmul.mubr.f32.gmra.mrb[0].mxu0 %v4910
      %v5088 = vpop.f32.mrb[0].mxu0
      %v5089 = vadd.f32 0.0, %v5088
      %v5090 = vpop.f32.mrb[0].mxu0
      %5091 = vmatprep.mubr.f32.mxu0 0.0
      %5092 = vmatmul.mubr.f32.gmra.mrb[0].mxu0 %v4913
      %v5093 = vpop.f32.mrb[0].mxu0
      %v5094 = vadd.f32 0.0, %v5093
      %v5095 = vpop.f32.mrb[0].mxu0
      %5096 = vmatprep.mubr.f32.mxu0 0.0
      %5097 = vmatmul.mubr.f32.gmra.mrb[0].mxu0 %v4916
      %v5098 = vpop.f32.mrb[0].mxu0
      %v5099 = vadd.f32 0.0, %v5098
      %v5100 = vpop.f32.mrb[0].mxu0
      %5101 = vmatprep.mubr.f32.mxu0 0.0
      %5102 = vmatmul.mubr.f32.gmra.mrb[0].mxu0 %v4919
      %v5103 = vpop.f32.mrb[0].mxu0
      %v5104 = vadd.f32 0.0, %v5103
      %v5105 = vpop.f32.mrb[0].mxu0
      %5106 = vmatprep.mubr.f32.mxu0 0.0
      %5107 = vmatmul.mubr.f32.gmra.mrb[0].mxu0 %v4922
      %v5108 = vpop.f32.mrb[0].mxu0
      %v5109 = vadd.f32 0.0, %v5108
      %v5110 = vpop.f32.mrb[0].mxu0
      %5111 = vmatprep.mubr.f32.mxu0 0.0
      %5112 = vmatmul.mubr.f32.gmra.mrb[0].mxu0 %v4925
      %v5113 = vpop.f32.mrb[0].mxu0
      %v5114 = vadd.f32 0.0, %v5113
      %v5115 = vpop.f32.mrb[0].mxu0
      %5116 = vmatprep.mubr.f32.mxu0 0.0
      %5117 = vmatmul.mubr.f32.gmra.mrb[0].mxu0 %v4928
      %v5118 = vpop.f32.mrb[0].mxu0
      %v5119 = vadd.f32 0.0, %v5118
      %v5120 = vpop.f32.mrb[0].mxu0
      %5121 = vmatprep.mubr.f32.mxu0 0.0
      %5122 = vmatmul.mubr.f32.gmra.mrb[0].mxu0 %v4931
      %v5123 = vpop.f32.mrb[0].mxu0
      %v5124 = vadd.f32 0.0, %v5123
      %v5125 = vpop.f32.mrb[0].mxu0
      %5126 = vmatprep.mubr.f32.mxu0 0.0
      %5127 = vmatmul.mubr.f32.gmra.mrb[0].mxu0 %v4934
      %v5128 = vpop.f32.mrb[0].mxu0
      %v5129 = vadd.f32 0.0, %v5128
      %v5130 = vpop.f32.mrb[0].mxu0
      %5131 = vmatprep.mubr.f32.mxu0 0.0
      %5132 = vmatmul.mubr.f32.gmra.mrb[0].mxu0 %v4937
      %v5133 = vpop.f32.mrb[0].mxu0
      %v5134 = vadd.f32 0.0, %v5133
      %v5135 = vpop.f32.mrb[0].mxu0
      %5136 = vmatprep.mubr.f32.mxu0 0.0
      %5137 = vmatmul.mubr.f32.gmra.mrb[0].mxu0 %v4940
      %v5138 = vpop.f32.mrb[0].mxu0
      %v5139 = vadd.f32 0.0, %v5138
      %v5140 = vpop.f32.mrb[0].mxu0
      %5141 = vmatprep.mubr.f32.mxu0 0.0
      %5142 = vmatmul.mubr.f32.gmra.mrb[0].mxu0 %v4943
      %v5143 = vpop.f32.mrb[0].mxu0
      %v5144 = vadd.f32 0.0, %v5143
      %v5145 = vpop.f32.mrb[0].mxu0
      %5146 = vmatprep.mubr.f32.mxu0 0.0
      %5147 = vmatmul.mubr.f32.gmra.mrb[0].mxu0 %v4946
      %v5148 = vpop.f32.mrb[0].mxu0
      %v5149 = vadd.f32 0.0, %v5148
      %v5150 = vpop.f32.mrb[0].mxu0
      %5151 = vmatprep.mubr.f32.mxu0 0.0
      %5152 = vmatmul.mubr.f32.gmra.mrb[0].mxu0 %v4949
      %v5153 = vpop.f32.mrb[0].mxu0
      %v5154 = vadd.f32 0.0, %v5153
      %v5155 = vpop.f32.mrb[0].mxu0
      %5156 = vmatprep.mubr.f32.mxu0 0.0
      %5157 = vmatmul.mubr.f32.gmra.mrb[0].mxu0 %v4952
      %v5158 = vpop.f32.mrb[0].mxu0
      %v5159 = vadd.f32 0.0, %v5158
      %v5160 = vpop.f32.mrb[0].mxu0
      %5161 = vmatprep.mubr.f32.mxu0 0.0
      %5162 = vmatmul.mubr.f32.gmra.mrb[0].mxu0 %v4955
      %v5163 = vpop.f32.mrb[0].mxu0
      %v5164 = vadd.f32 0.0, %v5163
      %v5165 = vpop.f32.mrb[0].mxu0
      %5166 = vmatprep.mubr.f32.mxu0 0.0
      %5167 = vmatmul.mubr.f32.gmra.mrb[0].mxu0 %v4958
      %v5168 = vpop.f32.mrb[0].mxu0
      %v5169 = vadd.f32 0.0, %v5168
      %v5170 = vpop.f32.mrb[0].mxu0
      %5171 = vmatprep.mubr.f32.mxu0 0.0
      %5172 = vmatmul.mubr.f32.gmra.mrb[0].mxu0 %v4961
      %v5173 = vpop.f32.mrb[0].mxu0
      %v5174 = vadd.f32 0.0, %v5173
      %v5175 = vpop.f32.mrb[0].mxu0
      %5176 = vmatprep.mubr.f32.mxu0 0.0
      %5177 = vmatmul.mubr.f32.gmra.mrb[0].mxu0 %v4964
      %v5178 = vpop.f32.mrb[0].mxu0
      %v5179 = vadd.f32 0.0, %v5178
      %v5180 = vpop.f32.mrb[0].mxu0
      %5181 = vmatprep.mubr.f32.mxu0 0.0
      %5182 = vmatmul.mubr.f32.gmra.mrb[0].mxu0 %v4967
      %v5183 = vpop.f32.mrb[0].mxu0
      %v5184 = vadd.f32 0.0, %v5183
      %v5185 = vpop.f32.mrb[0].mxu0
      %5186 = vmatprep.mubr.f32.mxu0 0.0
      %5187 = vmatmul.mubr.f32.gmra.mrb[0].mxu0 %v4970
      %v5188 = vpop.f32.mrb[0].mxu0
      %v5189 = vadd.f32 0.0, %v5188
      %v5190 = vpop.f32.mrb[0].mxu0
      %5191 = vmatprep.mubr.f32.mxu0 0.0
      %5192 = vmatmul.mubr.f32.gmra.mrb[0].mxu0 %v4973
      %v5193 = vpop.f32.mrb[0].mxu0
      %v5194 = vadd.f32 0.0, %v5193
      %v5195 = vpop.f32.mrb[0].mxu0
      %5196 = vmatprep.mubr.f32.mxu0 0.0
      %5197 = vmatmul.mubr.f32.gmra.mrb[0].mxu0 %v4976
      %v5198 = vpop.f32.mrb[0].mxu0
      %v5199 = vadd.f32 0.0, %v5198
      %v5200 = vpop.f32.mrb[0].mxu0
      %5201 = vmatprep.mubr.f32.mxu0 0.0
      %5202 = vmatmul.mubr.f32.gmra.mrb[0].mxu0 %v4979
      %v5203 = vpop.f32.mrb[0].mxu0
      %v5204 = vadd.f32 0.0, %v5203
      %v5205 = vpop.f32.mrb[0].mxu0
      %5206 = vmatprep.mubr.f32.mxu0 0.0
      %5207 = vmatmul.mubr.f32.gmra.mrb[0].mxu0 %v4982
      %v5208 = vpop.f32.mrb[0].mxu0
      %v5209 = vadd.f32 0.0, %v5208
      %v5210 = vpop.f32.mrb[0].mxu0
      %5211 = vdwg.mxu0
      %v5212 = vadd.f32 %v4822, %v5054
      %v5213 = vadd.f32 %v4823, %v5059
      %v5214 = vadd.f32 %v4824, %v5064
      %v5215 = vadd.f32 %v4825, %v5069
      %v5216 = vadd.f32 %v4826, %v5074
      %v5217 = vadd.f32 %v4827, %v5079
      %v5218 = vadd.f32 %v4828, %v5084
      %v5219 = vadd.f32 %v4829, %v5089
      %v5220 = vadd.f32 %v4830, %v5094
      %v5221 = vadd.f32 %v4831, %v5099
      %v5222 = vadd.f32 %v4832, %v5104
      %v5223 = vadd.f32 %v4833, %v5109
      %v5224 = vadd.f32 %v4834, %v5114
      %v5225 = vadd.f32 %v4835, %v5119
      %v5226 = vadd.f32 %v4836, %v5124
      %v5227 = vadd.f32 %v4837, %v5129
      %v5228 = vadd.f32 %v4838, %v5134
      %v5229 = vadd.f32 %v4839, %v5139
      %v5230 = vadd.f32 %v4840, %v5144
      %v5231 = vadd.f32 %v4841, %v5149
      %v5232 = vadd.f32 %v4842, %v5154
      %v5233 = vadd.f32 %v4843, %v5159
      %v5234 = vadd.f32 %v4844, %v5164
      %v5235 = vadd.f32 %v4845, %v5169
      %v5236 = vadd.f32 %v4846, %v5174
      %v5237 = vadd.f32 %v4847, %v5179
      %v5238 = vadd.f32 %v4848, %v5184
      %v5239 = vadd.f32 %v4849, %v5189
      %v5240 = vadd.f32 %v4850, %v5194
      %v5241 = vadd.f32 %v4851, %v5199
      %v5242 = vadd.f32 %v4852, %v5204
      %v5243 = vadd.f32 %v4853, %v5209
      %s5244 = scalar_lea.vmem %s1, 52
      %v5245 = vld [vmem:[%s5244] sm:$0xf]
      %v5247 = vsel %vm390, %v5245, 0
      %5249 = vmatprep.subr.mxu0 0.0
      %5250 = vmatpush1.msra.mxu0 %v5247
      %5251 = vmatprep.subr.mxu0 0.0
      %5252 = vmatpush1.msra.mxu0 0.0
      %5253 = vmatprep.subr.mxu0 0.0
      %5254 = vmatpush1.msra.mxu0 0.0
      %5255 = vmatprep.subr.mxu0 0.0
      %5256 = vmatpush1.msra.mxu0 0.0
      %5257 = vmatprep.subr.mxu0 0.0
      %5258 = vmatpush1.msra.mxu0 0.0
      %5259 = vmatprep.subr.mxu0 0.0
      %5260 = vmatpush1.msra.mxu0 0.0
      %5261 = vmatprep.subr.mxu0 0.0
      %5262 = vmatpush1.msra.mxu0 0.0
      %5263 = vmatprep.subr.mxu0 0.0
      %5264 = vmatpush1.msra.mxu0 0.0
      %5265 = vmatprep.subr.mxu0 0.0
      %5266 = vmatpush1.msra.mxu0 0.0
      %5267 = vmatprep.subr.mxu0 0.0
      %5268 = vmatpush1.msra.mxu0 0.0
      %5269 = vmatprep.subr.mxu0 0.0
      %5270 = vmatpush1.msra.mxu0 0.0
      %5271 = vmatprep.subr.mxu0 0.0
      %5272 = vmatpush1.msra.mxu0 0.0
      %5273 = vmatprep.subr.mxu0 0.0
      %5274 = vmatpush1.msra.mxu0 0.0
      %5275 = vmatprep.subr.mxu0 0.0
      %5276 = vmatpush1.msra.mxu0 0.0
      %5277 = vmatprep.subr.mxu0 0.0
      %5278 = vmatpush1.msra.mxu0 0.0
      %5279 = vmatprep.subr.mxu0 0.0
      %5280 = vmatpush1.msra.mxu0 0.0
      %5281 = vmatprep.subr.mxu0 0.0
      %5282 = vmatpush1.msra.mxu0 0.0
      %5283 = vmatprep.subr.mxu0 0.0
      %5284 = vmatpush1.msra.mxu0 0.0
      %5285 = vmatprep.subr.mxu0 0.0
      %5286 = vmatpush1.msra.mxu0 0.0
      %5287 = vmatprep.subr.mxu0 0.0
      %5288 = vmatpush1.msra.mxu0 0.0
      %5289 = vmatprep.subr.mxu0 0.0
      %5290 = vmatpush1.msra.mxu0 0.0
      %5291 = vmatprep.subr.mxu0 0.0
      %5292 = vmatpush1.msra.mxu0 0.0
      %5293 = vmatprep.subr.mxu0 0.0
      %5294 = vmatpush1.msra.mxu0 0.0
      %5295 = vmatprep.subr.mxu0 0.0
      %5296 = vmatpush1.msra.mxu0 0.0
      %5297 = vmatprep.subr.mxu0 0.0
      %5298 = vmatpush1.msra.mxu0 0.0
      %5299 = vmatprep.subr.mxu0 0.0
      %5300 = vmatpush1.msra.mxu0 0.0
      %5301 = vmatprep.subr.mxu0 0.0
      %5302 = vmatpush1.msra.mxu0 0.0
      %5303 = vmatprep.subr.mxu0 0.0
      %5304 = vmatpush1.msra.mxu0 0.0
      %5305 = vmatprep.subr.mxu0 0.0
      %5306 = vmatpush1.msra.mxu0 0.0
      %5307 = vmatprep.subr.mxu0 0.0
      %5308 = vmatpush1.msra.mxu0 0.0
      %5309 = vmatprep.subr.mxu0 0.0
      %5310 = vmatpush1.msra.mxu0 0.0
      %5311 = vmatprep.subr.mxu0 0.0
      %5312 = vmatpush1.msra.mxu0 0.0
      %5313 = vmatprep.mubr.f32.mxu0 0.0
      %5314 = vmatmul.mubr.f32.gmra.mrb[0].mxu0 %v1759
      %v5315 = vpop.f32.mrb[0].mxu0
      %v5316 = vadd.f32 0.0, %v5315
      %v5317 = vpop.f32.mrb[0].mxu0
      %5318 = vmatprep.mubr.f32.mxu0 0.0
      %5319 = vmatmul.mubr.f32.gmra.mrb[0].mxu0 %v1762
      %v5320 = vpop.f32.mrb[0].mxu0
      %v5321 = vadd.f32 0.0, %v5320
      %v5322 = vpop.f32.mrb[0].mxu0
      %5323 = vmatprep.mubr.f32.mxu0 0.0
      %5324 = vmatmul.mubr.f32.gmra.mrb[0].mxu0 %v1765
      %v5325 = vpop.f32.mrb[0].mxu0
      %v5326 = vadd.f32 0.0, %v5325
      %v5327 = vpop.f32.mrb[0].mxu0
      %5328 = vmatprep.mubr.f32.mxu0 0.0
      %5329 = vmatmul.mubr.f32.gmra.mrb[0].mxu0 %v1768
      %v5330 = vpop.f32.mrb[0].mxu0
      %v5331 = vadd.f32 0.0, %v5330
      %v5332 = vpop.f32.mrb[0].mxu0
      %5333 = vmatprep.mubr.f32.mxu0 0.0
      %5334 = vmatmul.mubr.f32.gmra.mrb[0].mxu0 %v1771
      %v5335 = vpop.f32.mrb[0].mxu0
      %v5336 = vadd.f32 0.0, %v5335
      %v5337 = vpop.f32.mrb[0].mxu0
      %5338 = vmatprep.mubr.f32.mxu0 0.0
      %5339 = vmatmul.mubr.f32.gmra.mrb[0].mxu0 %v1774
      %v5340 = vpop.f32.mrb[0].mxu0
      %v5341 = vadd.f32 0.0, %v5340
      %v5342 = vpop.f32.mrb[0].mxu0
      %5343 = vmatprep.mubr.f32.mxu0 0.0
      %5344 = vmatmul.mubr.f32.gmra.mrb[0].mxu0 %v1777
      %v5345 = vpop.f32.mrb[0].mxu0
      %v5346 = vadd.f32 0.0, %v5345
      %v5347 = vpop.f32.mrb[0].mxu0
      %5348 = vmatprep.mubr.f32.mxu0 0.0
      %5349 = vmatmul.mubr.f32.gmra.mrb[0].mxu0 %v1780
      %v5350 = vpop.f32.mrb[0].mxu0
      %v5351 = vadd.f32 0.0, %v5350
      %v5352 = vpop.f32.mrb[0].mxu0
      %5353 = vmatprep.mubr.f32.mxu0 0.0
      %5354 = vmatmul.mubr.f32.gmra.mrb[0].mxu0 %v1783
      %v5355 = vpop.f32.mrb[0].mxu0
      %v5356 = vadd.f32 0.0, %v5355
      %v5357 = vpop.f32.mrb[0].mxu0
      %5358 = vmatprep.mubr.f32.mxu0 0.0
      %5359 = vmatmul.mubr.f32.gmra.mrb[0].mxu0 %v1786
      %v5360 = vpop.f32.mrb[0].mxu0
      %v5361 = vadd.f32 0.0, %v5360
      %v5362 = vpop.f32.mrb[0].mxu0
      %5363 = vmatprep.mubr.f32.mxu0 0.0
      %5364 = vmatmul.mubr.f32.gmra.mrb[0].mxu0 %v1789
      %v5365 = vpop.f32.mrb[0].mxu0
      %v5366 = vadd.f32 0.0, %v5365
      %v5367 = vpop.f32.mrb[0].mxu0
      %5368 = vmatprep.mubr.f32.mxu0 0.0
      %5369 = vmatmul.mubr.f32.gmra.mrb[0].mxu0 %v1792
      %v5370 = vpop.f32.mrb[0].mxu0
      %v5371 = vadd.f32 0.0, %v5370
      %v5372 = vpop.f32.mrb[0].mxu0
      %5373 = vmatprep.mubr.f32.mxu0 0.0
      %5374 = vmatmul.mubr.f32.gmra.mrb[0].mxu0 %v1795
      %v5375 = vpop.f32.mrb[0].mxu0
      %v5376 = vadd.f32 0.0, %v5375
      %v5377 = vpop.f32.mrb[0].mxu0
      %5378 = vmatprep.mubr.f32.mxu0 0.0
      %5379 = vmatmul.mubr.f32.gmra.mrb[0].mxu0 %v1798
      %v5380 = vpop.f32.mrb[0].mxu0
      %v5381 = vadd.f32 0.0, %v5380
      %v5382 = vpop.f32.mrb[0].mxu0
      %5383 = vmatprep.mubr.f32.mxu0 0.0
      %5384 = vmatmul.mubr.f32.gmra.mrb[0].mxu0 %v1801
      %v5385 = vpop.f32.mrb[0].mxu0
      %v5386 = vadd.f32 0.0, %v5385
      %v5387 = vpop.f32.mrb[0].mxu0
      %5388 = vmatprep.mubr.f32.mxu0 0.0
      %5389 = vmatmul.mubr.f32.gmra.mrb[0].mxu0 %v1804
      %v5390 = vpop.f32.mrb[0].mxu0
      %v5391 = vadd.f32 0.0, %v5390
      %v5392 = vpop.f32.mrb[0].mxu0
      %5393 = vmatprep.mubr.f32.mxu0 0.0
      %5394 = vmatmul.mubr.f32.gmra.mrb[0].mxu0 %v1807
      %v5395 = vpop.f32.mrb[0].mxu0
      %v5396 = vadd.f32 0.0, %v5395
      %v5397 = vpop.f32.mrb[0].mxu0
      %5398 = vmatprep.mubr.f32.mxu0 0.0
      %5399 = vmatmul.mubr.f32.gmra.mrb[0].mxu0 %v1810
      %v5400 = vpop.f32.mrb[0].mxu0
      %v5401 = vadd.f32 0.0, %v5400
      %v5402 = vpop.f32.mrb[0].mxu0
      %5403 = vmatprep.mubr.f32.mxu0 0.0
      %5404 = vmatmul.mubr.f32.gmra.mrb[0].mxu0 %v1813
      %v5405 = vpop.f32.mrb[0].mxu0
      %v5406 = vadd.f32 0.0, %v5405
      %v5407 = vpop.f32.mrb[0].mxu0
      %5408 = vmatprep.mubr.f32.mxu0 0.0
      %5409 = vmatmul.mubr.f32.gmra.mrb[0].mxu0 %v1816
      %v5410 = vpop.f32.mrb[0].mxu0
      %v5411 = vadd.f32 0.0, %v5410
      %v5412 = vpop.f32.mrb[0].mxu0
      %5413 = vmatprep.mubr.f32.mxu0 0.0
      %5414 = vmatmul.mubr.f32.gmra.mrb[0].mxu0 %v1819
      %v5415 = vpop.f32.mrb[0].mxu0
      %v5416 = vadd.f32 0.0, %v5415
      %v5417 = vpop.f32.mrb[0].mxu0
      %5418 = vmatprep.mubr.f32.mxu0 0.0
      %5419 = vmatmul.mubr.f32.gmra.mrb[0].mxu0 %v1822
      %v5420 = vpop.f32.mrb[0].mxu0
      %v5421 = vadd.f32 0.0, %v5420
      %v5422 = vpop.f32.mrb[0].mxu0
      %5423 = vmatprep.mubr.f32.mxu0 0.0
      %5424 = vmatmul.mubr.f32.gmra.mrb[0].mxu0 %v1825
      %v5425 = vpop.f32.mrb[0].mxu0
      %v5426 = vadd.f32 0.0, %v5425
      %v5427 = vpop.f32.mrb[0].mxu0
      %5428 = vmatprep.mubr.f32.mxu0 0.0
      %5429 = vmatmul.mubr.f32.gmra.mrb[0].mxu0 %v1828
      %v5430 = vpop.f32.mrb[0].mxu0
      %v5431 = vadd.f32 0.0, %v5430
      %v5432 = vpop.f32.mrb[0].mxu0
      %5433 = vmatprep.mubr.f32.mxu0 0.0
      %5434 = vmatmul.mubr.f32.gmra.mrb[0].mxu0 %v1831
      %v5435 = vpop.f32.mrb[0].mxu0
      %v5436 = vadd.f32 0.0, %v5435
      %v5437 = vpop.f32.mrb[0].mxu0
      %5438 = vmatprep.mubr.f32.mxu0 0.0
      %5439 = vmatmul.mubr.f32.gmra.mrb[0].mxu0 %v1834
      %v5440 = vpop.f32.mrb[0].mxu0
      %v5441 = vadd.f32 0.0, %v5440
      %v5442 = vpop.f32.mrb[0].mxu0
      %5443 = vmatprep.mubr.f32.mxu0 0.0
      %5444 = vmatmul.mubr.f32.gmra.mrb[0].mxu0 %v1837
      %v5445 = vpop.f32.mrb[0].mxu0
      %v5446 = vadd.f32 0.0, %v5445
      %v5447 = vpop.f32.mrb[0].mxu0
      %5448 = vmatprep.mubr.f32.mxu0 0.0
      %5449 = vmatmul.mubr.f32.gmra.mrb[0].mxu0 %v1840
      %v5450 = vpop.f32.mrb[0].mxu0
      %v5451 = vadd.f32 0.0, %v5450
      %v5452 = vpop.f32.mrb[0].mxu0
      %5453 = vmatprep.mubr.f32.mxu0 0.0
      %5454 = vmatmul.mubr.f32.gmra.mrb[0].mxu0 %v1843
      %v5455 = vpop.f32.mrb[0].mxu0
      %v5456 = vadd.f32 0.0, %v5455
      %v5457 = vpop.f32.mrb[0].mxu0
      %5458 = vmatprep.mubr.f32.mxu0 0.0
      %5459 = vmatmul.mubr.f32.gmra.mrb[0].mxu0 %v1846
      %v5460 = vpop.f32.mrb[0].mxu0
      %v5461 = vadd.f32 0.0, %v5460
      %v5462 = vpop.f32.mrb[0].mxu0
      %5463 = vmatprep.mubr.f32.mxu0 0.0
      %5464 = vmatmul.mubr.f32.gmra.mrb[0].mxu0 %v1849
      %v5465 = vpop.f32.mrb[0].mxu0
      %v5466 = vadd.f32 0.0, %v5465
      %v5467 = vpop.f32.mrb[0].mxu0
      %5468 = vmatprep.mubr.f32.mxu0 0.0
      %5469 = vmatmul.mubr.f32.gmra.mrb[0].mxu0 %v1852
      %v5470 = vpop.f32.mrb[0].mxu0
      %v5471 = vadd.f32 0.0, %v5470
      %v5472 = vpop.f32.mrb[0].mxu0
      %5473 = vdwg.mxu0
      %v5474 = vadd.f32 %v5212, %v5316
      %v5475 = vadd.f32 %v5213, %v5321
      %v5476 = vadd.f32 %v5214, %v5326
      %v5477 = vadd.f32 %v5215, %v5331
      %v5478 = vadd.f32 %v5216, %v5336
      %v5479 = vadd.f32 %v5217, %v5341
      %v5480 = vadd.f32 %v5218, %v5346
      %v5481 = vadd.f32 %v5219, %v5351
      %v5482 = vadd.f32 %v5220, %v5356
      %v5483 = vadd.f32 %v5221, %v5361
      %v5484 = vadd.f32 %v5222, %v5366
      %v5485 = vadd.f32 %v5223, %v5371
      %v5486 = vadd.f32 %v5224, %v5376
      %v5487 = vadd.f32 %v5225, %v5381
      %v5488 = vadd.f32 %v5226, %v5386
      %v5489 = vadd.f32 %v5227, %v5391
      %v5490 = vadd.f32 %v5228, %v5396
      %v5491 = vadd.f32 %v5229, %v5401
      %v5492 = vadd.f32 %v5230, %v5406
      %v5493 = vadd.f32 %v5231, %v5411
      %v5494 = vadd.f32 %v5232, %v5416
      %v5495 = vadd.f32 %v5233, %v5421
      %v5496 = vadd.f32 %v5234, %v5426
      %v5497 = vadd.f32 %v5235, %v5431
      %v5498 = vadd.f32 %v5236, %v5436
      %v5499 = vadd.f32 %v5237, %v5441
      %v5500 = vadd.f32 %v5238, %v5446
      %v5501 = vadd.f32 %v5239, %v5451
      %v5502 = vadd.f32 %v5240, %v5456
      %v5503 = vadd.f32 %v5241, %v5461
      %v5504 = vadd.f32 %v5242, %v5466
      %v5505 = vadd.f32 %v5243, %v5471
      %v5506 = vld [vmem:[%s1333 + $0x1e] sm:$0xff]
      %v5507 = vld [vmem:[%s1333 + $0x26] sm:$0xff]
      %v5508 = vld [vmem:[%s1333 + $0x56] sm:$0xff]
      %v5509 = vld [vmem:[%s1333 + $0x5e] sm:$0xff]
      %v5510 = vld [vmem:[%s1333 + $0x8e] sm:$0xff]
      %v5511 = vld [vmem:[%s1333 + $0x96] sm:$0xff]
      %v5512 = vld [vmem:[%s1333 + $0xc6] sm:$0xff]
      %v5513 = vld [vmem:[%s1333 + $0xce] sm:$0xff]
      %v5514 = vld [vmem:[%s1333 + $0xfe] sm:$0xff]
      %v5515 = vld [vmem:[%s1333 + $0x106] sm:$0xff]
      %v5516 = vld [vmem:[%s1333 + $0x136] sm:$0xff]
      %v5517 = vld [vmem:[%s1333 + $0x13e] sm:$0xff]
      %v5518 = vld [vmem:[%s1333 + $0x16e] sm:$0xff]
      %v5519 = vld [vmem:[%s1333 + $0x176] sm:$0xff]
      %v5520 = vld [vmem:[%s1333 + $0x1a6] sm:$0xff]
      %v5521 = vld [vmem:[%s1333 + $0x1ae] sm:$0xff]
      %v5522 = vld [vmem:[%s1333 + $0x1de] sm:$0xff]
      %v5523 = vld [vmem:[%s1333 + $0x1e6] sm:$0xff]
      %v5524 = vld [vmem:[%s1333 + $0x216] sm:$0xff]
      %v5525 = vld [vmem:[%s1333 + $0x21e] sm:$0xff]
      %v5526 = vld [vmem:[%s1333 + $0x24e] sm:$0xff]
      %v5527 = vld [vmem:[%s1333 + $0x256] sm:$0xff]
      %v5528 = vld [vmem:[%s1333 + $0x286] sm:$0xff]
      %v5529 = vld [vmem:[%s1333 + $0x28e] sm:$0xff]
      %v5530 = vld [vmem:[%s1333 + $0x2be] sm:$0xff]
      %v5531 = vld [vmem:[%s1333 + $0x2c6] sm:$0xff]
      %v5532 = vld [vmem:[%s1333 + $0x2f6] sm:$0xff]
      %v5533 = vld [vmem:[%s1333 + $0x2fe] sm:$0xff]
      %v5534 = vld [vmem:[%s1333 + $0x32e] sm:$0xff]
      %v5535 = vld [vmem:[%s1333 + $0x336] sm:$0xff]
      %v5536 = vld [vmem:[%s1333 + $0x366] sm:$0xff]
      %v5537 = vld [vmem:[%s1333 + $0x36e] sm:$0xff]
      %s5538 = scalar_lea.vmem %s1, 56
      %v5539 = vld [vmem:[%s5538] sm:$0xf]
      %v5541 = vsel %vm293, %v5506, 0
      %v5544 = vsel %vm293, %v5507, 0
      %v5547 = vsel %vm293, %v5508, 0
      %v5550 = vsel %vm293, %v5509, 0
      %v5553 = vsel %vm293, %v5510, 0
      %v5556 = vsel %vm293, %v5511, 0
      %v5559 = vsel %vm293, %v5512, 0
      %v5562 = vsel %vm293, %v5513, 0
      %v5565 = vsel %vm293, %v5514, 0
      %v5568 = vsel %vm293, %v5515, 0
      %v5571 = vsel %vm293, %v5516, 0
      %v5574 = vsel %vm293, %v5517, 0
      %v5577 = vsel %vm293, %v5518, 0
      %v5580 = vsel %vm293, %v5519, 0
      %v5583 = vsel %vm293, %v5520, 0
      %v5586 = vsel %vm293, %v5521, 0
      %v5589 = vsel %vm293, %v5522, 0
      %v5592 = vsel %vm293, %v5523, 0
      %v5595 = vsel %vm293, %v5524, 0
      %v5598 = vsel %vm293, %v5525, 0
      %v5601 = vsel %vm293, %v5526, 0
      %v5604 = vsel %vm293, %v5527, 0
      %v5607 = vsel %vm293, %v5528, 0
      %v5610 = vsel %vm293, %v5529, 0
      %v5613 = vsel %vm293, %v5530, 0
      %v5616 = vsel %vm293, %v5531, 0
      %v5619 = vsel %vm293, %v5532, 0
      %v5622 = vsel %vm293, %v5533, 0
      %v5625 = vsel %vm293, %v5534, 0
      %v5628 = vsel %vm293, %v5535, 0
      %v5631 = vsel %vm293, %v5536, 0
      %v5634 = vsel %vm293, %v5537, 0
      %v5637 = vsel %vm390, %v5539, 0
      %5639 = vmatprep.subr.mxu0 0.0
      %5640 = vmatpush1.msra.mxu0 %v5637
      %5641 = vmatprep.subr.mxu0 0.0
      %5642 = vmatpush1.msra.mxu0 0.0
      %5643 = vmatprep.subr.mxu0 0.0
      %5644 = vmatpush1.msra.mxu0 0.0
      %5645 = vmatprep.subr.mxu0 0.0
      %5646 = vmatpush1.msra.mxu0 0.0
      %5647 = vmatprep.subr.mxu0 0.0
      %5648 = vmatpush1.msra.mxu0 0.0
      %5649 = vmatprep.subr.mxu0 0.0
      %5650 = vmatpush1.msra.mxu0 0.0
      %5651 = vmatprep.subr.mxu0 0.0
      %5652 = vmatpush1.msra.mxu0 0.0
      %5653 = vmatprep.subr.mxu0 0.0
      %5654 = vmatpush1.msra.mxu0 0.0
      %5655 = vmatprep.subr.mxu0 0.0
      %5656 = vmatpush1.msra.mxu0 0.0
      %5657 = vmatprep.subr.mxu0 0.0
      %5658 = vmatpush1.msra.mxu0 0.0
      %5659 = vmatprep.subr.mxu0 0.0
      %5660 = vmatpush1.msra.mxu0 0.0
      %5661 = vmatprep.subr.mxu0 0.0
      %5662 = vmatpush1.msra.mxu0 0.0
      %5663 = vmatprep.subr.mxu0 0.0
      %5664 = vmatpush1.msra.mxu0 0.0
      %5665 = vmatprep.subr.mxu0 0.0
      %5666 = vmatpush1.msra.mxu0 0.0
      %5667 = vmatprep.subr.mxu0 0.0
      %5668 = vmatpush1.msra.mxu0 0.0
      %5669 = vmatprep.subr.mxu0 0.0
      %5670 = vmatpush1.msra.mxu0 0.0
      %5671 = vmatprep.subr.mxu0 0.0
      %5672 = vmatpush1.msra.mxu0 0.0
      %5673 = vmatprep.subr.mxu0 0.0
      %5674 = vmatpush1.msra.mxu0 0.0
      %5675 = vmatprep.subr.mxu0 0.0
      %5676 = vmatpush1.msra.mxu0 0.0
      %5677 = vmatprep.subr.mxu0 0.0
      %5678 = vmatpush1.msra.mxu0 0.0
      %5679 = vmatprep.subr.mxu0 0.0
      %5680 = vmatpush1.msra.mxu0 0.0
      %5681 = vmatprep.subr.mxu0 0.0
      %5682 = vmatpush1.msra.mxu0 0.0
      %5683 = vmatprep.subr.mxu0 0.0
      %5684 = vmatpush1.msra.mxu0 0.0
      %5685 = vmatprep.subr.mxu0 0.0
      %5686 = vmatpush1.msra.mxu0 0.0
      %5687 = vmatprep.subr.mxu0 0.0
      %5688 = vmatpush1.msra.mxu0 0.0
      %5689 = vmatprep.subr.mxu0 0.0
      %5690 = vmatpush1.msra.mxu0 0.0
      %5691 = vmatprep.subr.mxu0 0.0
      %5692 = vmatpush1.msra.mxu0 0.0
      %5693 = vmatprep.subr.mxu0 0.0
      %5694 = vmatpush1.msra.mxu0 0.0
      %5695 = vmatprep.subr.mxu0 0.0
      %5696 = vmatpush1.msra.mxu0 0.0
      %5697 = vmatprep.subr.mxu0 0.0
      %5698 = vmatpush1.msra.mxu0 0.0
      %5699 = vmatprep.subr.mxu0 0.0
      %5700 = vmatpush1.msra.mxu0 0.0
      %5701 = vmatprep.subr.mxu0 0.0
      %5702 = vmatpush1.msra.mxu0 0.0
      %5703 = vmatprep.mubr.f32.mxu0 0.0
      %5704 = vmatmul.mubr.f32.gmra.mrb[0].mxu0 %v5541
      %v5705 = vpop.f32.mrb[0].mxu0
      %v5706 = vadd.f32 0.0, %v5705
      %v5707 = vpop.f32.mrb[0].mxu0
      %5708 = vmatprep.mubr.f32.mxu0 0.0
      %5709 = vmatmul.mubr.f32.gmra.mrb[0].mxu0 %v5544
      %v5710 = vpop.f32.mrb[0].mxu0
      %v5711 = vadd.f32 0.0, %v5710
      %v5712 = vpop.f32.mrb[0].mxu0
      %5713 = vmatprep.mubr.f32.mxu0 0.0
      %5714 = vmatmul.mubr.f32.gmra.mrb[0].mxu0 %v5547
      %v5715 = vpop.f32.mrb[0].mxu0
      %v5716 = vadd.f32 0.0, %v5715
      %v5717 = vpop.f32.mrb[0].mxu0
      %5718 = vmatprep.mubr.f32.mxu0 0.0
      %5719 = vmatmul.mubr.f32.gmra.mrb[0].mxu0 %v5550
      %v5720 = vpop.f32.mrb[0].mxu0
      %v5721 = vadd.f32 0.0, %v5720
      %v5722 = vpop.f32.mrb[0].mxu0
      %5723 = vmatprep.mubr.f32.mxu0 0.0
      %5724 = vmatmul.mubr.f32.gmra.mrb[0].mxu0 %v5553
      %v5725 = vpop.f32.mrb[0].mxu0
      %v5726 = vadd.f32 0.0, %v5725
      %v5727 = vpop.f32.mrb[0].mxu0
      %5728 = vmatprep.mubr.f32.mxu0 0.0
      %5729 = vmatmul.mubr.f32.gmra.mrb[0].mxu0 %v5556
      %v5730 = vpop.f32.mrb[0].mxu0
      %v5731 = vadd.f32 0.0, %v5730
      %v5732 = vpop.f32.mrb[0].mxu0
      %5733 = vmatprep.mubr.f32.mxu0 0.0
      %5734 = vmatmul.mubr.f32.gmra.mrb[0].mxu0 %v5559
      %v5735 = vpop.f32.mrb[0].mxu0
      %v5736 = vadd.f32 0.0, %v5735
      %v5737 = vpop.f32.mrb[0].mxu0
      %5738 = vmatprep.mubr.f32.mxu0 0.0
      %5739 = vmatmul.mubr.f32.gmra.mrb[0].mxu0 %v5562
      %v5740 = vpop.f32.mrb[0].mxu0
      %v5741 = vadd.f32 0.0, %v5740
      %v5742 = vpop.f32.mrb[0].mxu0
      %5743 = vmatprep.mubr.f32.mxu0 0.0
      %5744 = vmatmul.mubr.f32.gmra.mrb[0].mxu0 %v5565
      %v5745 = vpop.f32.mrb[0].mxu0
      %v5746 = vadd.f32 0.0, %v5745
      %v5747 = vpop.f32.mrb[0].mxu0
      %5748 = vmatprep.mubr.f32.mxu0 0.0
      %5749 = vmatmul.mubr.f32.gmra.mrb[0].mxu0 %v5568
      %v5750 = vpop.f32.mrb[0].mxu0
      %v5751 = vadd.f32 0.0, %v5750
      %v5752 = vpop.f32.mrb[0].mxu0
      %5753 = vmatprep.mubr.f32.mxu0 0.0
      %5754 = vmatmul.mubr.f32.gmra.mrb[0].mxu0 %v5571
      %v5755 = vpop.f32.mrb[0].mxu0
      %v5756 = vadd.f32 0.0, %v5755
      %v5757 = vpop.f32.mrb[0].mxu0
      %5758 = vmatprep.mubr.f32.mxu0 0.0
      %5759 = vmatmul.mubr.f32.gmra.mrb[0].mxu0 %v5574
      %v5760 = vpop.f32.mrb[0].mxu0
      %v5761 = vadd.f32 0.0, %v5760
      %v5762 = vpop.f32.mrb[0].mxu0
      %5763 = vmatprep.mubr.f32.mxu0 0.0
      %5764 = vmatmul.mubr.f32.gmra.mrb[0].mxu0 %v5577
      %v5765 = vpop.f32.mrb[0].mxu0
      %v5766 = vadd.f32 0.0, %v5765
      %v5767 = vpop.f32.mrb[0].mxu0
      %5768 = vmatprep.mubr.f32.mxu0 0.0
      %5769 = vmatmul.mubr.f32.gmra.mrb[0].mxu0 %v5580
      %v5770 = vpop.f32.mrb[0].mxu0
      %v5771 = vadd.f32 0.0, %v5770
      %v5772 = vpop.f32.mrb[0].mxu0
      %5773 = vmatprep.mubr.f32.mxu0 0.0
      %5774 = vmatmul.mubr.f32.gmra.mrb[0].mxu0 %v5583
      %v5775 = vpop.f32.mrb[0].mxu0
      %v5776 = vadd.f32 0.0, %v5775
      %v5777 = vpop.f32.mrb[0].mxu0
      %5778 = vmatprep.mubr.f32.mxu0 0.0
      %5779 = vmatmul.mubr.f32.gmra.mrb[0].mxu0 %v5586
      %v5780 = vpop.f32.mrb[0].mxu0
      %v5781 = vadd.f32 0.0, %v5780
      %v5782 = vpop.f32.mrb[0].mxu0
      %5783 = vmatprep.mubr.f32.mxu0 0.0
      %5784 = vmatmul.mubr.f32.gmra.mrb[0].mxu0 %v5589
      %v5785 = vpop.f32.mrb[0].mxu0
      %v5786 = vadd.f32 0.0, %v5785
      %v5787 = vpop.f32.mrb[0].mxu0
      %5788 = vmatprep.mubr.f32.mxu0 0.0
      %5789 = vmatmul.mubr.f32.gmra.mrb[0].mxu0 %v5592
      %v5790 = vpop.f32.mrb[0].mxu0
      %v5791 = vadd.f32 0.0, %v5790
      %v5792 = vpop.f32.mrb[0].mxu0
      %5793 = vmatprep.mubr.f32.mxu0 0.0
      %5794 = vmatmul.mubr.f32.gmra.mrb[0].mxu0 %v5595
      %v5795 = vpop.f32.mrb[0].mxu0
      %v5796 = vadd.f32 0.0, %v5795
      %v5797 = vpop.f32.mrb[0].mxu0
      %5798 = vmatprep.mubr.f32.mxu0 0.0
      %5799 = vmatmul.mubr.f32.gmra.mrb[0].mxu0 %v5598
      %v5800 = vpop.f32.mrb[0].mxu0
      %v5801 = vadd.f32 0.0, %v5800
      %v5802 = vpop.f32.mrb[0].mxu0
      %5803 = vmatprep.mubr.f32.mxu0 0.0
      %5804 = vmatmul.mubr.f32.gmra.mrb[0].mxu0 %v5601
      %v5805 = vpop.f32.mrb[0].mxu0
      %v5806 = vadd.f32 0.0, %v5805
      %v5807 = vpop.f32.mrb[0].mxu0
      %5808 = vmatprep.mubr.f32.mxu0 0.0
      %5809 = vmatmul.mubr.f32.gmra.mrb[0].mxu0 %v5604
      %v5810 = vpop.f32.mrb[0].mxu0
      %v5811 = vadd.f32 0.0, %v5810
      %v5812 = vpop.f32.mrb[0].mxu0
      %5813 = vmatprep.mubr.f32.mxu0 0.0
      %5814 = vmatmul.mubr.f32.gmra.mrb[0].mxu0 %v5607
      %v5815 = vpop.f32.mrb[0].mxu0
      %v5816 = vadd.f32 0.0, %v5815
      %v5817 = vpop.f32.mrb[0].mxu0
      %5818 = vmatprep.mubr.f32.mxu0 0.0
      %5819 = vmatmul.mubr.f32.gmra.mrb[0].mxu0 %v5610
      %v5820 = vpop.f32.mrb[0].mxu0
      %v5821 = vadd.f32 0.0, %v5820
      %v5822 = vpop.f32.mrb[0].mxu0
      %5823 = vmatprep.mubr.f32.mxu0 0.0
      %5824 = vmatmul.mubr.f32.gmra.mrb[0].mxu0 %v5613
      %v5825 = vpop.f32.mrb[0].mxu0
      %v5826 = vadd.f32 0.0, %v5825
      %v5827 = vpop.f32.mrb[0].mxu0
      %5828 = vmatprep.mubr.f32.mxu0 0.0
      %5829 = vmatmul.mubr.f32.gmra.mrb[0].mxu0 %v5616
      %v5830 = vpop.f32.mrb[0].mxu0
      %v5831 = vadd.f32 0.0, %v5830
      %v5832 = vpop.f32.mrb[0].mxu0
      %5833 = vmatprep.mubr.f32.mxu0 0.0
      %5834 = vmatmul.mubr.f32.gmra.mrb[0].mxu0 %v5619
      %v5835 = vpop.f32.mrb[0].mxu0
      %v5836 = vadd.f32 0.0, %v5835
      %v5837 = vpop.f32.mrb[0].mxu0
      %5838 = vmatprep.mubr.f32.mxu0 0.0
      %5839 = vmatmul.mubr.f32.gmra.mrb[0].mxu0 %v5622
      %v5840 = vpop.f32.mrb[0].mxu0
      %v5841 = vadd.f32 0.0, %v5840
      %v5842 = vpop.f32.mrb[0].mxu0
      %5843 = vmatprep.mubr.f32.mxu0 0.0
      %5844 = vmatmul.mubr.f32.gmra.mrb[0].mxu0 %v5625
      %v5845 = vpop.f32.mrb[0].mxu0
      %v5846 = vadd.f32 0.0, %v5845
      %v5847 = vpop.f32.mrb[0].mxu0
      %5848 = vmatprep.mubr.f32.mxu0 0.0
      %5849 = vmatmul.mubr.f32.gmra.mrb[0].mxu0 %v5628
      %v5850 = vpop.f32.mrb[0].mxu0
      %v5851 = vadd.f32 0.0, %v5850
      %v5852 = vpop.f32.mrb[0].mxu0
      %5853 = vmatprep.mubr.f32.mxu0 0.0
      %5854 = vmatmul.mubr.f32.gmra.mrb[0].mxu0 %v5631
      %v5855 = vpop.f32.mrb[0].mxu0
      %v5856 = vadd.f32 0.0, %v5855
      %v5857 = vpop.f32.mrb[0].mxu0
      %5858 = vmatprep.mubr.f32.mxu0 0.0
      %5859 = vmatmul.mubr.f32.gmra.mrb[0].mxu0 %v5634
      %v5860 = vpop.f32.mrb[0].mxu0
      %v5861 = vadd.f32 0.0, %v5860
      %v5862 = vpop.f32.mrb[0].mxu0
      %5863 = vdwg.mxu0
      %v5864 = vadd.f32 %v5474, %v5706
      %v5865 = vadd.f32 %v5475, %v5711
      %v5866 = vadd.f32 %v5476, %v5716
      %v5867 = vadd.f32 %v5477, %v5721
      %v5868 = vadd.f32 %v5478, %v5726
      %v5869 = vadd.f32 %v5479, %v5731
      %v5870 = vadd.f32 %v5480, %v5736
      %v5871 = vadd.f32 %v5481, %v5741
      %v5872 = vadd.f32 %v5482, %v5746
      %v5873 = vadd.f32 %v5483, %v5751
      %v5874 = vadd.f32 %v5484, %v5756
      %v5875 = vadd.f32 %v5485, %v5761
      %v5876 = vadd.f32 %v5486, %v5766
      %v5877 = vadd.f32 %v5487, %v5771
      %v5878 = vadd.f32 %v5488, %v5776
      %v5879 = vadd.f32 %v5489, %v5781
      %v5880 = vadd.f32 %v5490, %v5786
      %v5881 = vadd.f32 %v5491, %v5791
      %v5882 = vadd.f32 %v5492, %v5796
      %v5883 = vadd.f32 %v5493, %v5801
      %v5884 = vadd.f32 %v5494, %v5806
      %v5885 = vadd.f32 %v5495, %v5811
      %v5886 = vadd.f32 %v5496, %v5816
      %v5887 = vadd.f32 %v5497, %v5821
      %v5888 = vadd.f32 %v5498, %v5826
      %v5889 = vadd.f32 %v5499, %v5831
      %v5890 = vadd.f32 %v5500, %v5836
      %v5891 = vadd.f32 %v5501, %v5841
      %v5892 = vadd.f32 %v5502, %v5846
      %v5893 = vadd.f32 %v5503, %v5851
      %v5894 = vadd.f32 %v5504, %v5856
      %v5895 = vadd.f32 %v5505, %v5861
      %s5896 = scalar_lea.vmem %s219, 1680
      %v5897 = vld [vmem:[%s5896 + $0x6] sm:$0xff]
      %v5898 = vld [vmem:[%s5896 + $0xe] sm:$0xff]
      %v5899 = vld [vmem:[%s5896 + $0x3e] sm:$0xff]
      %v5900 = vld [vmem:[%s5896 + $0x46] sm:$0xff]
      %v5901 = vld [vmem:[%s5896 + $0x76] sm:$0xff]
      %v5902 = vld [vmem:[%s5896 + $0x7e] sm:$0xff]
      %v5903 = vld [vmem:[%s5896 + $0xae] sm:$0xff]
      %v5904 = vld [vmem:[%s5896 + $0xb6] sm:$0xff]
      %v5905 = vld [vmem:[%s5896 + $0xe6] sm:$0xff]
      %v5906 = vld [vmem:[%s5896 + $0xee] sm:$0xff]
      %v5907 = vld [vmem:[%s5896 + $0x11e] sm:$0xff]
      %v5908 = vld [vmem:[%s5896 + $0x126] sm:$0xff]
      %v5909 = vld [vmem:[%s5896 + $0x156] sm:$0xff]
      %v5910 = vld [vmem:[%s5896 + $0x15e] sm:$0xff]
      %v5911 = vld [vmem:[%s5896 + $0x18e] sm:$0xff]
      %v5912 = vld [vmem:[%s5896 + $0x196] sm:$0xff]
      %v5913 = vld [vmem:[%s5896 + $0x1c6] sm:$0xff]
      %v5914 = vld [vmem:[%s5896 + $0x1ce] sm:$0xff]
      %v5915 = vld [vmem:[%s5896 + $0x1fe] sm:$0xff]
      %v5916 = vld [vmem:[%s5896 + $0x206] sm:$0xff]
      %v5917 = vld [vmem:[%s5896 + $0x236] sm:$0xff]
      %v5918 = vld [vmem:[%s5896 + $0x23e] sm:$0xff]
      %v5919 = vld [vmem:[%s5896 + $0x26e] sm:$0xff]
      %v5920 = vld [vmem:[%s5896 + $0x276] sm:$0xff]
      %v5921 = vld [vmem:[%s5896 + $0x2a6] sm:$0xff]
      %v5922 = vld [vmem:[%s5896 + $0x2ae] sm:$0xff]
      %v5923 = vld [vmem:[%s5896 + $0x2de] sm:$0xff]
      %v5924 = vld [vmem:[%s5896 + $0x2e6] sm:$0xff]
      %v5925 = vld [vmem:[%s5896 + $0x316] sm:$0xff]
      %v5926 = vld [vmem:[%s5896 + $0x31e] sm:$0xff]
      %v5927 = vld [vmem:[%s5896 + $0x34e] sm:$0xff]
      %v5928 = vld [vmem:[%s5896 + $0x356] sm:$0xff]
      %s5929 = scalar_lea.vmem %s1, 60
      %v5930 = vld [vmem:[%s5929] sm:$0xf]
      %v5932 = vsel %vm293, %v5897, 0
      %v5935 = vsel %vm293, %v5898, 0
      %v5938 = vsel %vm293, %v5899, 0
      %v5941 = vsel %vm293, %v5900, 0
      %v5944 = vsel %vm293, %v5901, 0
      %v5947 = vsel %vm293, %v5902, 0
      %v5950 = vsel %vm293, %v5903, 0
      %v5953 = vsel %vm293, %v5904, 0
      %v5956 = vsel %vm293, %v5905, 0
      %v5959 = vsel %vm293, %v5906, 0
      %v5962 = vsel %vm293, %v5907, 0
      %v5965 = vsel %vm293, %v5908, 0
      %v5968 = vsel %vm293, %v5909, 0
      %v5971 = vsel %vm293, %v5910, 0
      %v5974 = vsel %vm293, %v5911, 0
      %v5977 = vsel %vm293, %v5912, 0
      %v5980 = vsel %vm293, %v5913, 0
      %v5983 = vsel %vm293, %v5914, 0
      %v5986 = vsel %vm293, %v5915, 0
      %v5989 = vsel %vm293, %v5916, 0
      %v5992 = vsel %vm293, %v5917, 0
      %v5995 = vsel %vm293, %v5918, 0
      %v5998 = vsel %vm293, %v5919, 0
      %v6001 = vsel %vm293, %v5920, 0
      %v6004 = vsel %vm293, %v5921, 0
      %v6007 = vsel %vm293, %v5922, 0
      %v6010 = vsel %vm293, %v5923, 0
      %v6013 = vsel %vm293, %v5924, 0
      %v6016 = vsel %vm293, %v5925, 0
      %v6019 = vsel %vm293, %v5926, 0
      %v6022 = vsel %vm293, %v5927, 0
      %v6025 = vsel %vm293, %v5928, 0
      %v6028 = vsel %vm390, %v5930, 0
      %6030 = vmatprep.subr.mxu0 0.0
      %6031 = vmatpush1.msra.mxu0 %v6028
      %6032 = vmatprep.subr.mxu0 0.0
      %6033 = vmatpush1.msra.mxu0 0.0
      %6034 = vmatprep.subr.mxu0 0.0
      %6035 = vmatpush1.msra.mxu0 0.0
      %6036 = vmatprep.subr.mxu0 0.0
      %6037 = vmatpush1.msra.mxu0 0.0
      %6038 = vmatprep.subr.mxu0 0.0
      %6039 = vmatpush1.msra.mxu0 0.0
      %6040 = vmatprep.subr.mxu0 0.0
      %6041 = vmatpush1.msra.mxu0 0.0
      %6042 = vmatprep.subr.mxu0 0.0
      %6043 = vmatpush1.msra.mxu0 0.0
      %6044 = vmatprep.subr.mxu0 0.0
      %6045 = vmatpush1.msra.mxu0 0.0
      %6046 = vmatprep.subr.mxu0 0.0
      %6047 = vmatpush1.msra.mxu0 0.0
      %6048 = vmatprep.subr.mxu0 0.0
      %6049 = vmatpush1.msra.mxu0 0.0
      %6050 = vmatprep.subr.mxu0 0.0
      %6051 = vmatpush1.msra.mxu0 0.0
      %6052 = vmatprep.subr.mxu0 0.0
      %6053 = vmatpush1.msra.mxu0 0.0
      %6054 = vmatprep.subr.mxu0 0.0
      %6055 = vmatpush1.msra.mxu0 0.0
      %6056 = vmatprep.subr.mxu0 0.0
      %6057 = vmatpush1.msra.mxu0 0.0
      %6058 = vmatprep.subr.mxu0 0.0
      %6059 = vmatpush1.msra.mxu0 0.0
      %6060 = vmatprep.subr.mxu0 0.0
      %6061 = vmatpush1.msra.mxu0 0.0
      %6062 = vmatprep.subr.mxu0 0.0
      %6063 = vmatpush1.msra.mxu0 0.0
      %6064 = vmatprep.subr.mxu0 0.0
      %6065 = vmatpush1.msra.mxu0 0.0
      %6066 = vmatprep.subr.mxu0 0.0
      %6067 = vmatpush1.msra.mxu0 0.0
      %6068 = vmatprep.subr.mxu0 0.0
      %6069 = vmatpush1.msra.mxu0 0.0
      %6070 = vmatprep.subr.mxu0 0.0
      %6071 = vmatpush1.msra.mxu0 0.0
      %6072 = vmatprep.subr.mxu0 0.0
      %6073 = vmatpush1.msra.mxu0 0.0
      %6074 = vmatprep.subr.mxu0 0.0
      %6075 = vmatpush1.msra.mxu0 0.0
      %6076 = vmatprep.subr.mxu0 0.0
      %6077 = vmatpush1.msra.mxu0 0.0
      %6078 = vmatprep.subr.mxu0 0.0
      %6079 = vmatpush1.msra.mxu0 0.0
      %6080 = vmatprep.subr.mxu0 0.0
      %6081 = vmatpush1.msra.mxu0 0.0
      %6082 = vmatprep.subr.mxu0 0.0
      %6083 = vmatpush1.msra.mxu0 0.0
      %6084 = vmatprep.subr.mxu0 0.0
      %6085 = vmatpush1.msra.mxu0 0.0
      %6086 = vmatprep.subr.mxu0 0.0
      %6087 = vmatpush1.msra.mxu0 0.0
      %6088 = vmatprep.subr.mxu0 0.0
      %6089 = vmatpush1.msra.mxu0 0.0
      %6090 = vmatprep.subr.mxu0 0.0
      %6091 = vmatpush1.msra.mxu0 0.0
      %6092 = vmatprep.subr.mxu0 0.0
      %6093 = vmatpush1.msra.mxu0 0.0
      %6094 = vmatprep.mubr.f32.mxu0 0.0
      %6095 = vmatmul.mubr.f32.gmra.mrb[0].mxu0 %v5932
      %v6096 = vpop.f32.mrb[0].mxu0
      %v6097 = vadd.f32 0.0, %v6096
      %v6098 = vpop.f32.mrb[0].mxu0
      %6099 = vmatprep.mubr.f32.mxu0 0.0
      %6100 = vmatmul.mubr.f32.gmra.mrb[0].mxu0 %v5935
      %v6101 = vpop.f32.mrb[0].mxu0
      %v6102 = vadd.f32 0.0, %v6101
      %v6103 = vpop.f32.mrb[0].mxu0
      %6104 = vmatprep.mubr.f32.mxu0 0.0
      %6105 = vmatmul.mubr.f32.gmra.mrb[0].mxu0 %v5938
      %v6106 = vpop.f32.mrb[0].mxu0
      %v6107 = vadd.f32 0.0, %v6106
      %v6108 = vpop.f32.mrb[0].mxu0
      %6109 = vmatprep.mubr.f32.mxu0 0.0
      %6110 = vmatmul.mubr.f32.gmra.mrb[0].mxu0 %v5941
      %v6111 = vpop.f32.mrb[0].mxu0
      %v6112 = vadd.f32 0.0, %v6111
      %v6113 = vpop.f32.mrb[0].mxu0
      %6114 = vmatprep.mubr.f32.mxu0 0.0
      %6115 = vmatmul.mubr.f32.gmra.mrb[0].mxu0 %v5944
      %v6116 = vpop.f32.mrb[0].mxu0
      %v6117 = vadd.f32 0.0, %v6116
      %v6118 = vpop.f32.mrb[0].mxu0
      %6119 = vmatprep.mubr.f32.mxu0 0.0
      %6120 = vmatmul.mubr.f32.gmra.mrb[0].mxu0 %v5947
      %v6121 = vpop.f32.mrb[0].mxu0
      %v6122 = vadd.f32 0.0, %v6121
      %v6123 = vpop.f32.mrb[0].mxu0
      %6124 = vmatprep.mubr.f32.mxu0 0.0
      %6125 = vmatmul.mubr.f32.gmra.mrb[0].mxu0 %v5950
      %v6126 = vpop.f32.mrb[0].mxu0
      %v6127 = vadd.f32 0.0, %v6126
      %v6128 = vpop.f32.mrb[0].mxu0
      %6129 = vmatprep.mubr.f32.mxu0 0.0
      %6130 = vmatmul.mubr.f32.gmra.mrb[0].mxu0 %v5953
      %v6131 = vpop.f32.mrb[0].mxu0
      %v6132 = vadd.f32 0.0, %v6131
      %v6133 = vpop.f32.mrb[0].mxu0
      %6134 = vmatprep.mubr.f32.mxu0 0.0
      %6135 = vmatmul.mubr.f32.gmra.mrb[0].mxu0 %v5956
      %v6136 = vpop.f32.mrb[0].mxu0
      %v6137 = vadd.f32 0.0, %v6136
      %v6138 = vpop.f32.mrb[0].mxu0
      %6139 = vmatprep.mubr.f32.mxu0 0.0
      %6140 = vmatmul.mubr.f32.gmra.mrb[0].mxu0 %v5959
      %v6141 = vpop.f32.mrb[0].mxu0
      %v6142 = vadd.f32 0.0, %v6141
      %v6143 = vpop.f32.mrb[0].mxu0
      %6144 = vmatprep.mubr.f32.mxu0 0.0
      %6145 = vmatmul.mubr.f32.gmra.mrb[0].mxu0 %v5962
      %v6146 = vpop.f32.mrb[0].mxu0
      %v6147 = vadd.f32 0.0, %v6146
      %v6148 = vpop.f32.mrb[0].mxu0
      %6149 = vmatprep.mubr.f32.mxu0 0.0
      %6150 = vmatmul.mubr.f32.gmra.mrb[0].mxu0 %v5965
      %v6151 = vpop.f32.mrb[0].mxu0
      %v6152 = vadd.f32 0.0, %v6151
      %v6153 = vpop.f32.mrb[0].mxu0
      %6154 = vmatprep.mubr.f32.mxu0 0.0
      %6155 = vmatmul.mubr.f32.gmra.mrb[0].mxu0 %v5968
      %v6156 = vpop.f32.mrb[0].mxu0
      %v6157 = vadd.f32 0.0, %v6156
      %v6158 = vpop.f32.mrb[0].mxu0
      %6159 = vmatprep.mubr.f32.mxu0 0.0
      %6160 = vmatmul.mubr.f32.gmra.mrb[0].mxu0 %v5971
      %v6161 = vpop.f32.mrb[0].mxu0
      %v6162 = vadd.f32 0.0, %v6161
      %v6163 = vpop.f32.mrb[0].mxu0
      %6164 = vmatprep.mubr.f32.mxu0 0.0
      %6165 = vmatmul.mubr.f32.gmra.mrb[0].mxu0 %v5974
      %v6166 = vpop.f32.mrb[0].mxu0
      %v6167 = vadd.f32 0.0, %v6166
      %v6168 = vpop.f32.mrb[0].mxu0
      %6169 = vmatprep.mubr.f32.mxu0 0.0
      %6170 = vmatmul.mubr.f32.gmra.mrb[0].mxu0 %v5977
      %v6171 = vpop.f32.mrb[0].mxu0
      %v6172 = vadd.f32 0.0, %v6171
      %v6173 = vpop.f32.mrb[0].mxu0
      %6174 = vmatprep.mubr.f32.mxu0 0.0
      %6175 = vmatmul.mubr.f32.gmra.mrb[0].mxu0 %v5980
      %v6176 = vpop.f32.mrb[0].mxu0
      %v6177 = vadd.f32 0.0, %v6176
      %v6178 = vpop.f32.mrb[0].mxu0
      %6179 = vmatprep.mubr.f32.mxu0 0.0
      %6180 = vmatmul.mubr.f32.gmra.mrb[0].mxu0 %v5983
      %v6181 = vpop.f32.mrb[0].mxu0
      %v6182 = vadd.f32 0.0, %v6181
      %v6183 = vpop.f32.mrb[0].mxu0
      %6184 = vmatprep.mubr.f32.mxu0 0.0
      %6185 = vmatmul.mubr.f32.gmra.mrb[0].mxu0 %v5986
      %v6186 = vpop.f32.mrb[0].mxu0
      %v6187 = vadd.f32 0.0, %v6186
      %v6188 = vpop.f32.mrb[0].mxu0
      %6189 = vmatprep.mubr.f32.mxu0 0.0
      %6190 = vmatmul.mubr.f32.gmra.mrb[0].mxu0 %v5989
      %v6191 = vpop.f32.mrb[0].mxu0
      %v6192 = vadd.f32 0.0, %v6191
      %v6193 = vpop.f32.mrb[0].mxu0
      %6194 = vmatprep.mubr.f32.mxu0 0.0
      %6195 = vmatmul.mubr.f32.gmra.mrb[0].mxu0 %v5992
      %v6196 = vpop.f32.mrb[0].mxu0
      %v6197 = vadd.f32 0.0, %v6196
      %v6198 = vpop.f32.mrb[0].mxu0
      %6199 = vmatprep.mubr.f32.mxu0 0.0
      %6200 = vmatmul.mubr.f32.gmra.mrb[0].mxu0 %v5995
      %v6201 = vpop.f32.mrb[0].mxu0
      %v6202 = vadd.f32 0.0, %v6201
      %v6203 = vpop.f32.mrb[0].mxu0
      %6204 = vmatprep.mubr.f32.mxu0 0.0
      %6205 = vmatmul.mubr.f32.gmra.mrb[0].mxu0 %v5998
      %v6206 = vpop.f32.mrb[0].mxu0
      %v6207 = vadd.f32 0.0, %v6206
      %v6208 = vpop.f32.mrb[0].mxu0
      %6209 = vmatprep.mubr.f32.mxu0 0.0
      %6210 = vmatmul.mubr.f32.gmra.mrb[0].mxu0 %v6001
      %v6211 = vpop.f32.mrb[0].mxu0
      %v6212 = vadd.f32 0.0, %v6211
      %v6213 = vpop.f32.mrb[0].mxu0
      %6214 = vmatprep.mubr.f32.mxu0 0.0
      %6215 = vmatmul.mubr.f32.gmra.mrb[0].mxu0 %v6004
      %v6216 = vpop.f32.mrb[0].mxu0
      %v6217 = vadd.f32 0.0, %v6216
      %v6218 = vpop.f32.mrb[0].mxu0
      %6219 = vmatprep.mubr.f32.mxu0 0.0
      %6220 = vmatmul.mubr.f32.gmra.mrb[0].mxu0 %v6007
      %v6221 = vpop.f32.mrb[0].mxu0
      %v6222 = vadd.f32 0.0, %v6221
      %v6223 = vpop.f32.mrb[0].mxu0
      %6224 = vmatprep.mubr.f32.mxu0 0.0
      %6225 = vmatmul.mubr.f32.gmra.mrb[0].mxu0 %v6010
      %v6226 = vpop.f32.mrb[0].mxu0
      %v6227 = vadd.f32 0.0, %v6226
      %v6228 = vpop.f32.mrb[0].mxu0
      %6229 = vmatprep.mubr.f32.mxu0 0.0
      %6230 = vmatmul.mubr.f32.gmra.mrb[0].mxu0 %v6013
      %v6231 = vpop.f32.mrb[0].mxu0
      %v6232 = vadd.f32 0.0, %v6231
      %v6233 = vpop.f32.mrb[0].mxu0
      %6234 = vmatprep.mubr.f32.mxu0 0.0
      %6235 = vmatmul.mubr.f32.gmra.mrb[0].mxu0 %v6016
      %v6236 = vpop.f32.mrb[0].mxu0
      %v6237 = vadd.f32 0.0, %v6236
      %v6238 = vpop.f32.mrb[0].mxu0
      %6239 = vmatprep.mubr.f32.mxu0 0.0
      %6240 = vmatmul.mubr.f32.gmra.mrb[0].mxu0 %v6019
      %v6241 = vpop.f32.mrb[0].mxu0
      %v6242 = vadd.f32 0.0, %v6241
      %v6243 = vpop.f32.mrb[0].mxu0
      %6244 = vmatprep.mubr.f32.mxu0 0.0
      %6245 = vmatmul.mubr.f32.gmra.mrb[0].mxu0 %v6022
      %v6246 = vpop.f32.mrb[0].mxu0
      %v6247 = vadd.f32 0.0, %v6246
      %v6248 = vpop.f32.mrb[0].mxu0
      %6249 = vmatprep.mubr.f32.mxu0 0.0
      %6250 = vmatmul.mubr.f32.gmra.mrb[0].mxu0 %v6025
      %v6251 = vpop.f32.mrb[0].mxu0
      %v6252 = vadd.f32 0.0, %v6251
      %v6253 = vpop.f32.mrb[0].mxu0
      %6254 = vdwg.mxu0
      %v6255 = vadd.f32 %v5864, %v6097
      %v6256 = vadd.f32 %v5865, %v6102
      %v6257 = vadd.f32 %v5866, %v6107
      %v6258 = vadd.f32 %v5867, %v6112
      %v6259 = vadd.f32 %v5868, %v6117
      %v6260 = vadd.f32 %v5869, %v6122
      %v6261 = vadd.f32 %v5870, %v6127
      %v6262 = vadd.f32 %v5871, %v6132
      %v6263 = vadd.f32 %v5872, %v6137
      %v6264 = vadd.f32 %v5873, %v6142
      %v6265 = vadd.f32 %v5874, %v6147
      %v6266 = vadd.f32 %v5875, %v6152
      %v6267 = vadd.f32 %v5876, %v6157
      %v6268 = vadd.f32 %v5877, %v6162
      %v6269 = vadd.f32 %v5878, %v6167
      %v6270 = vadd.f32 %v5879, %v6172
      %v6271 = vadd.f32 %v5880, %v6177
      %v6272 = vadd.f32 %v5881, %v6182
      %v6273 = vadd.f32 %v5882, %v6187
      %v6274 = vadd.f32 %v5883, %v6192
      %v6275 = vadd.f32 %v5884, %v6197
      %v6276 = vadd.f32 %v5885, %v6202
      %v6277 = vadd.f32 %v5886, %v6207
      %v6278 = vadd.f32 %v5887, %v6212
      %v6279 = vadd.f32 %v5888, %v6217
      %v6280 = vadd.f32 %v5889, %v6222
      %v6281 = vadd.f32 %v5890, %v6227
      %v6282 = vadd.f32 %v5891, %v6232
      %v6283 = vadd.f32 %v5892, %v6237
      %v6284 = vadd.f32 %v5893, %v6242
      %v6285 = vadd.f32 %v5894, %v6247
      %v6286 = vadd.f32 %v5895, %v6252
      %v6287 = vld [vmem:[%s5896 + $0x12] sm:$0xff]
      %v6288 = vld [vmem:[%s5896 + $0x1a] sm:$0xff]
      %v6289 = vld [vmem:[%s5896 + $0x4a] sm:$0xff]
      %v6290 = vld [vmem:[%s5896 + $0x52] sm:$0xff]
      %v6291 = vld [vmem:[%s5896 + $0x82] sm:$0xff]
      %v6292 = vld [vmem:[%s5896 + $0x8a] sm:$0xff]
      %v6293 = vld [vmem:[%s5896 + $0xba] sm:$0xff]
      %v6294 = vld [vmem:[%s5896 + $0xc2] sm:$0xff]
      %v6295 = vld [vmem:[%s5896 + $0xf2] sm:$0xff]
      %v6296 = vld [vmem:[%s5896 + $0xfa] sm:$0xff]
      %v6297 = vld [vmem:[%s5896 + $0x12a] sm:$0xff]
      %v6298 = vld [vmem:[%s5896 + $0x132] sm:$0xff]
      %v6299 = vld [vmem:[%s5896 + $0x162] sm:$0xff]
      %v6300 = vld [vmem:[%s5896 + $0x16a] sm:$0xff]
      %v6301 = vld [vmem:[%s5896 + $0x19a] sm:$0xff]
      %v6302 = vld [vmem:[%s5896 + $0x1a2] sm:$0xff]
      %v6303 = vld [vmem:[%s5896 + $0x1d2] sm:$0xff]
      %v6304 = vld [vmem:[%s5896 + $0x1da] sm:$0xff]
      %v6305 = vld [vmem:[%s5896 + $0x20a] sm:$0xff]
      %v6306 = vld [vmem:[%s5896 + $0x212] sm:$0xff]
      %v6307 = vld [vmem:[%s5896 + $0x242] sm:$0xff]
      %v6308 = vld [vmem:[%s5896 + $0x24a] sm:$0xff]
      %v6309 = vld [vmem:[%s5896 + $0x27a] sm:$0xff]
      %v6310 = vld [vmem:[%s5896 + $0x282] sm:$0xff]
      %v6311 = vld [vmem:[%s5896 + $0x2b2] sm:$0xff]
      %v6312 = vld [vmem:[%s5896 + $0x2ba] sm:$0xff]
      %v6313 = vld [vmem:[%s5896 + $0x2ea] sm:$0xff]
      %v6314 = vld [vmem:[%s5896 + $0x2f2] sm:$0xff]
      %v6315 = vld [vmem:[%s5896 + $0x322] sm:$0xff]
      %v6316 = vld [vmem:[%s5896 + $0x32a] sm:$0xff]
      %v6317 = vld [vmem:[%s5896 + $0x35a] sm:$0xff]
      %v6318 = vld [vmem:[%s5896 + $0x362] sm:$0xff]
      %s6319 = scalar_lea.vmem %s1, 64
      %v6320 = vld [vmem:[%s6319] sm:$0xf]
      %v6322 = vsel %vm293, %v6287, 0
      %v6325 = vsel %vm293, %v6288, 0
      %v6328 = vsel %vm293, %v6289, 0
      %v6331 = vsel %vm293, %v6290, 0
      %v6334 = vsel %vm293, %v6291, 0
      %v6337 = vsel %vm293, %v6292, 0
      %v6340 = vsel %vm293, %v6293, 0
      %v6343 = vsel %vm293, %v6294, 0
      %v6346 = vsel %vm293, %v6295, 0
      %v6349 = vsel %vm293, %v6296, 0
      %v6352 = vsel %vm293, %v6297, 0
      %v6355 = vsel %vm293, %v6298, 0
      %v6358 = vsel %vm293, %v6299, 0
      %v6361 = vsel %vm293, %v6300, 0
      %v6364 = vsel %vm293, %v6301, 0
      %v6367 = vsel %vm293, %v6302, 0
      %v6370 = vsel %vm293, %v6303, 0
      %v6373 = vsel %vm293, %v6304, 0
      %v6376 = vsel %vm293, %v6305, 0
      %v6379 = vsel %vm293, %v6306, 0
      %v6382 = vsel %vm293, %v6307, 0
      %v6385 = vsel %vm293, %v6308, 0
      %v6388 = vsel %vm293, %v6309, 0
      %v6391 = vsel %vm293, %v6310, 0
      %v6394 = vsel %vm293, %v6311, 0
      %v6397 = vsel %vm293, %v6312, 0
      %v6400 = vsel %vm293, %v6313, 0
      %v6403 = vsel %vm293, %v6314, 0
      %v6406 = vsel %vm293, %v6315, 0
      %v6409 = vsel %vm293, %v6316, 0
      %v6412 = vsel %vm293, %v6317, 0
      %v6415 = vsel %vm293, %v6318, 0
      %v6418 = vsel %vm390, %v6320, 0
      %6420 = vmatprep.subr.mxu0 0.0
      %6421 = vmatpush1.msra.mxu0 %v6418
      %6422 = vmatprep.subr.mxu0 0.0
      %6423 = vmatpush1.msra.mxu0 0.0
      %6424 = vmatprep.subr.mxu0 0.0
      %6425 = vmatpush1.msra.mxu0 0.0
      %6426 = vmatprep.subr.mxu0 0.0
      %6427 = vmatpush1.msra.mxu0 0.0
      %6428 = vmatprep.subr.mxu0 0.0
      %6429 = vmatpush1.msra.mxu0 0.0
      %6430 = vmatprep.subr.mxu0 0.0
      %6431 = vmatpush1.msra.mxu0 0.0
      %6432 = vmatprep.subr.mxu0 0.0
      %6433 = vmatpush1.msra.mxu0 0.0
      %6434 = vmatprep.subr.mxu0 0.0
      %6435 = vmatpush1.msra.mxu0 0.0
      %6436 = vmatprep.subr.mxu0 0.0
      %6437 = vmatpush1.msra.mxu0 0.0
      %6438 = vmatprep.subr.mxu0 0.0
      %6439 = vmatpush1.msra.mxu0 0.0
      %6440 = vmatprep.subr.mxu0 0.0
      %6441 = vmatpush1.msra.mxu0 0.0
      %6442 = vmatprep.subr.mxu0 0.0
      %6443 = vmatpush1.msra.mxu0 0.0
      %6444 = vmatprep.subr.mxu0 0.0
      %6445 = vmatpush1.msra.mxu0 0.0
      %6446 = vmatprep.subr.mxu0 0.0
      %6447 = vmatpush1.msra.mxu0 0.0
      %6448 = vmatprep.subr.mxu0 0.0
      %6449 = vmatpush1.msra.mxu0 0.0
      %6450 = vmatprep.subr.mxu0 0.0
      %6451 = vmatpush1.msra.mxu0 0.0
      %6452 = vmatprep.subr.mxu0 0.0
      %6453 = vmatpush1.msra.mxu0 0.0
      %6454 = vmatprep.subr.mxu0 0.0
      %6455 = vmatpush1.msra.mxu0 0.0
      %6456 = vmatprep.subr.mxu0 0.0
      %6457 = vmatpush1.msra.mxu0 0.0
      %6458 = vmatprep.subr.mxu0 0.0
      %6459 = vmatpush1.msra.mxu0 0.0
      %6460 = vmatprep.subr.mxu0 0.0
      %6461 = vmatpush1.msra.mxu0 0.0
      %6462 = vmatprep.subr.mxu0 0.0
      %6463 = vmatpush1.msra.mxu0 0.0
      %6464 = vmatprep.subr.mxu0 0.0
      %6465 = vmatpush1.msra.mxu0 0.0
      %6466 = vmatprep.subr.mxu0 0.0
      %6467 = vmatpush1.msra.mxu0 0.0
      %6468 = vmatprep.subr.mxu0 0.0
      %6469 = vmatpush1.msra.mxu0 0.0
      %6470 = vmatprep.subr.mxu0 0.0
      %6471 = vmatpush1.msra.mxu0 0.0
      %6472 = vmatprep.subr.mxu0 0.0
      %6473 = vmatpush1.msra.mxu0 0.0
      %6474 = vmatprep.subr.mxu0 0.0
      %6475 = vmatpush1.msra.mxu0 0.0
      %6476 = vmatprep.subr.mxu0 0.0
      %6477 = vmatpush1.msra.mxu0 0.0
      %6478 = vmatprep.subr.mxu0 0.0
      %6479 = vmatpush1.msra.mxu0 0.0
      %6480 = vmatprep.subr.mxu0 0.0
      %6481 = vmatpush1.msra.mxu0 0.0
      %6482 = vmatprep.subr.mxu0 0.0
      %6483 = vmatpush1.msra.mxu0 0.0
      %6484 = vmatprep.mubr.f32.mxu0 0.0
      %6485 = vmatmul.mubr.f32.gmra.mrb[0].mxu0 %v6322
      %v6486 = vpop.f32.mrb[0].mxu0
      %v6487 = vadd.f32 0.0, %v6486
      %v6488 = vpop.f32.mrb[0].mxu0
      %6489 = vmatprep.mubr.f32.mxu0 0.0
      %6490 = vmatmul.mubr.f32.gmra.mrb[0].mxu0 %v6325
      %v6491 = vpop.f32.mrb[0].mxu0
      %v6492 = vadd.f32 0.0, %v6491
      %v6493 = vpop.f32.mrb[0].mxu0
      %6494 = vmatprep.mubr.f32.mxu0 0.0
      %6495 = vmatmul.mubr.f32.gmra.mrb[0].mxu0 %v6328
      %v6496 = vpop.f32.mrb[0].mxu0
      %v6497 = vadd.f32 0.0, %v6496
      %v6498 = vpop.f32.mrb[0].mxu0
      %6499 = vmatprep.mubr.f32.mxu0 0.0
      %6500 = vmatmul.mubr.f32.gmra.mrb[0].mxu0 %v6331
      %v6501 = vpop.f32.mrb[0].mxu0
      %v6502 = vadd.f32 0.0, %v6501
      %v6503 = vpop.f32.mrb[0].mxu0
      %6504 = vmatprep.mubr.f32.mxu0 0.0
      %6505 = vmatmul.mubr.f32.gmra.mrb[0].mxu0 %v6334
      %v6506 = vpop.f32.mrb[0].mxu0
      %v6507 = vadd.f32 0.0, %v6506
      %v6508 = vpop.f32.mrb[0].mxu0
      %6509 = vmatprep.mubr.f32.mxu0 0.0
      %6510 = vmatmul.mubr.f32.gmra.mrb[0].mxu0 %v6337
      %v6511 = vpop.f32.mrb[0].mxu0
      %v6512 = vadd.f32 0.0, %v6511
      %v6513 = vpop.f32.mrb[0].mxu0
      %6514 = vmatprep.mubr.f32.mxu0 0.0
      %6515 = vmatmul.mubr.f32.gmra.mrb[0].mxu0 %v6340
      %v6516 = vpop.f32.mrb[0].mxu0
      %v6517 = vadd.f32 0.0, %v6516
      %v6518 = vpop.f32.mrb[0].mxu0
      %6519 = vmatprep.mubr.f32.mxu0 0.0
      %6520 = vmatmul.mubr.f32.gmra.mrb[0].mxu0 %v6343
      %v6521 = vpop.f32.mrb[0].mxu0
      %v6522 = vadd.f32 0.0, %v6521
      %v6523 = vpop.f32.mrb[0].mxu0
      %6524 = vmatprep.mubr.f32.mxu0 0.0
      %6525 = vmatmul.mubr.f32.gmra.mrb[0].mxu0 %v6346
      %v6526 = vpop.f32.mrb[0].mxu0
      %v6527 = vadd.f32 0.0, %v6526
      %v6528 = vpop.f32.mrb[0].mxu0
      %6529 = vmatprep.mubr.f32.mxu0 0.0
      %6530 = vmatmul.mubr.f32.gmra.mrb[0].mxu0 %v6349
      %v6531 = vpop.f32.mrb[0].mxu0
      %v6532 = vadd.f32 0.0, %v6531
      %v6533 = vpop.f32.mrb[0].mxu0
      %6534 = vmatprep.mubr.f32.mxu0 0.0
      %6535 = vmatmul.mubr.f32.gmra.mrb[0].mxu0 %v6352
      %v6536 = vpop.f32.mrb[0].mxu0
      %v6537 = vadd.f32 0.0, %v6536
      %v6538 = vpop.f32.mrb[0].mxu0
      %6539 = vmatprep.mubr.f32.mxu0 0.0
      %6540 = vmatmul.mubr.f32.gmra.mrb[0].mxu0 %v6355
      %v6541 = vpop.f32.mrb[0].mxu0
      %v6542 = vadd.f32 0.0, %v6541
      %v6543 = vpop.f32.mrb[0].mxu0
      %6544 = vmatprep.mubr.f32.mxu0 0.0
      %6545 = vmatmul.mubr.f32.gmra.mrb[0].mxu0 %v6358
      %v6546 = vpop.f32.mrb[0].mxu0
      %v6547 = vadd.f32 0.0, %v6546
      %v6548 = vpop.f32.mrb[0].mxu0
      %6549 = vmatprep.mubr.f32.mxu0 0.0
      %6550 = vmatmul.mubr.f32.gmra.mrb[0].mxu0 %v6361
      %v6551 = vpop.f32.mrb[0].mxu0
      %v6552 = vadd.f32 0.0, %v6551
      %v6553 = vpop.f32.mrb[0].mxu0
      %6554 = vmatprep.mubr.f32.mxu0 0.0
      %6555 = vmatmul.mubr.f32.gmra.mrb[0].mxu0 %v6364
      %v6556 = vpop.f32.mrb[0].mxu0
      %v6557 = vadd.f32 0.0, %v6556
      %v6558 = vpop.f32.mrb[0].mxu0
      %6559 = vmatprep.mubr.f32.mxu0 0.0
      %6560 = vmatmul.mubr.f32.gmra.mrb[0].mxu0 %v6367
      %v6561 = vpop.f32.mrb[0].mxu0
      %v6562 = vadd.f32 0.0, %v6561
      %v6563 = vpop.f32.mrb[0].mxu0
      %6564 = vmatprep.mubr.f32.mxu0 0.0
      %6565 = vmatmul.mubr.f32.gmra.mrb[0].mxu0 %v6370
      %v6566 = vpop.f32.mrb[0].mxu0
      %v6567 = vadd.f32 0.0, %v6566
      %v6568 = vpop.f32.mrb[0].mxu0
      %6569 = vmatprep.mubr.f32.mxu0 0.0
      %6570 = vmatmul.mubr.f32.gmra.mrb[0].mxu0 %v6373
      %v6571 = vpop.f32.mrb[0].mxu0
      %v6572 = vadd.f32 0.0, %v6571
      %v6573 = vpop.f32.mrb[0].mxu0
      %6574 = vmatprep.mubr.f32.mxu0 0.0
      %6575 = vmatmul.mubr.f32.gmra.mrb[0].mxu0 %v6376
      %v6576 = vpop.f32.mrb[0].mxu0
      %v6577 = vadd.f32 0.0, %v6576
      %v6578 = vpop.f32.mrb[0].mxu0
      %6579 = vmatprep.mubr.f32.mxu0 0.0
      %6580 = vmatmul.mubr.f32.gmra.mrb[0].mxu0 %v6379
      %v6581 = vpop.f32.mrb[0].mxu0
      %v6582 = vadd.f32 0.0, %v6581
      %v6583 = vpop.f32.mrb[0].mxu0
      %6584 = vmatprep.mubr.f32.mxu0 0.0
      %6585 = vmatmul.mubr.f32.gmra.mrb[0].mxu0 %v6382
      %v6586 = vpop.f32.mrb[0].mxu0
      %v6587 = vadd.f32 0.0, %v6586
      %v6588 = vpop.f32.mrb[0].mxu0
      %6589 = vmatprep.mubr.f32.mxu0 0.0
      %6590 = vmatmul.mubr.f32.gmra.mrb[0].mxu0 %v6385
      %v6591 = vpop.f32.mrb[0].mxu0
      %v6592 = vadd.f32 0.0, %v6591
      %v6593 = vpop.f32.mrb[0].mxu0
      %6594 = vmatprep.mubr.f32.mxu0 0.0
      %6595 = vmatmul.mubr.f32.gmra.mrb[0].mxu0 %v6388
      %v6596 = vpop.f32.mrb[0].mxu0
      %v6597 = vadd.f32 0.0, %v6596
      %v6598 = vpop.f32.mrb[0].mxu0
      %6599 = vmatprep.mubr.f32.mxu0 0.0
      %6600 = vmatmul.mubr.f32.gmra.mrb[0].mxu0 %v6391
      %v6601 = vpop.f32.mrb[0].mxu0
      %v6602 = vadd.f32 0.0, %v6601
      %v6603 = vpop.f32.mrb[0].mxu0
      %6604 = vmatprep.mubr.f32.mxu0 0.0
      %6605 = vmatmul.mubr.f32.gmra.mrb[0].mxu0 %v6394
      %v6606 = vpop.f32.mrb[0].mxu0
      %v6607 = vadd.f32 0.0, %v6606
      %v6608 = vpop.f32.mrb[0].mxu0
      %6609 = vmatprep.mubr.f32.mxu0 0.0
      %6610 = vmatmul.mubr.f32.gmra.mrb[0].mxu0 %v6397
      %v6611 = vpop.f32.mrb[0].mxu0
      %v6612 = vadd.f32 0.0, %v6611
      %v6613 = vpop.f32.mrb[0].mxu0
      %6614 = vmatprep.mubr.f32.mxu0 0.0
      %6615 = vmatmul.mubr.f32.gmra.mrb[0].mxu0 %v6400
      %v6616 = vpop.f32.mrb[0].mxu0
      %v6617 = vadd.f32 0.0, %v6616
      %v6618 = vpop.f32.mrb[0].mxu0
      %6619 = vmatprep.mubr.f32.mxu0 0.0
      %6620 = vmatmul.mubr.f32.gmra.mrb[0].mxu0 %v6403
      %v6621 = vpop.f32.mrb[0].mxu0
      %v6622 = vadd.f32 0.0, %v6621
      %v6623 = vpop.f32.mrb[0].mxu0
      %6624 = vmatprep.mubr.f32.mxu0 0.0
      %6625 = vmatmul.mubr.f32.gmra.mrb[0].mxu0 %v6406
      %v6626 = vpop.f32.mrb[0].mxu0
      %v6627 = vadd.f32 0.0, %v6626
      %v6628 = vpop.f32.mrb[0].mxu0
      %6629 = vmatprep.mubr.f32.mxu0 0.0
      %6630 = vmatmul.mubr.f32.gmra.mrb[0].mxu0 %v6409
      %v6631 = vpop.f32.mrb[0].mxu0
      %v6632 = vadd.f32 0.0, %v6631
      %v6633 = vpop.f32.mrb[0].mxu0
      %6634 = vmatprep.mubr.f32.mxu0 0.0
      %6635 = vmatmul.mubr.f32.gmra.mrb[0].mxu0 %v6412
      %v6636 = vpop.f32.mrb[0].mxu0
      %v6637 = vadd.f32 0.0, %v6636
      %v6638 = vpop.f32.mrb[0].mxu0
      %6639 = vmatprep.mubr.f32.mxu0 0.0
      %6640 = vmatmul.mubr.f32.gmra.mrb[0].mxu0 %v6415
      %v6641 = vpop.f32.mrb[0].mxu0
      %v6642 = vadd.f32 0.0, %v6641
      %v6643 = vpop.f32.mrb[0].mxu0
      %6644 = vdwg.mxu0
      %v6645 = vadd.f32 %v6255, %v6487
      %v6646 = vadd.f32 %v6256, %v6492
      %v6647 = vadd.f32 %v6257, %v6497
      %v6648 = vadd.f32 %v6258, %v6502
      %v6649 = vadd.f32 %v6259, %v6507
      %v6650 = vadd.f32 %v6260, %v6512
      %v6651 = vadd.f32 %v6261, %v6517
      %v6652 = vadd.f32 %v6262, %v6522
      %v6653 = vadd.f32 %v6263, %v6527
      %v6654 = vadd.f32 %v6264, %v6532
      %v6655 = vadd.f32 %v6265, %v6537
      %v6656 = vadd.f32 %v6266, %v6542
      %v6657 = vadd.f32 %v6267, %v6547
      %v6658 = vadd.f32 %v6268, %v6552
      %v6659 = vadd.f32 %v6269, %v6557
      %v6660 = vadd.f32 %v6270, %v6562
      %v6661 = vadd.f32 %v6271, %v6567
      %v6662 = vadd.f32 %v6272, %v6572
      %v6663 = vadd.f32 %v6273, %v6577
      %v6664 = vadd.f32 %v6274, %v6582
      %v6665 = vadd.f32 %v6275, %v6587
      %v6666 = vadd.f32 %v6276, %v6592
      %v6667 = vadd.f32 %v6277, %v6597
      %v6668 = vadd.f32 %v6278, %v6602
      %v6669 = vadd.f32 %v6279, %v6607
      %v6670 = vadd.f32 %v6280, %v6612
      %v6671 = vadd.f32 %v6281, %v6617
      %v6672 = vadd.f32 %v6282, %v6622
      %v6673 = vadd.f32 %v6283, %v6627
      %v6674 = vadd.f32 %v6284, %v6632
      %v6675 = vadd.f32 %v6285, %v6637
      %v6676 = vadd.f32 %v6286, %v6642
      %v6677 = vld [vmem:[%s5896 + $0x1e] sm:$0xff]
      %v6678 = vld [vmem:[%s5896 + $0x26] sm:$0xff]
      %v6679 = vld [vmem:[%s5896 + $0x56] sm:$0xff]
      %v6680 = vld [vmem:[%s5896 + $0x5e] sm:$0xff]
      %v6681 = vld [vmem:[%s5896 + $0x8e] sm:$0xff]
      %v6682 = vld [vmem:[%s5896 + $0x96] sm:$0xff]
      %v6683 = vld [vmem:[%s5896 + $0xc6] sm:$0xff]
      %v6684 = vld [vmem:[%s5896 + $0xce] sm:$0xff]
      %v6685 = vld [vmem:[%s5896 + $0xfe] sm:$0xff]
      %v6686 = vld [vmem:[%s5896 + $0x106] sm:$0xff]
      %v6687 = vld [vmem:[%s5896 + $0x136] sm:$0xff]
      %v6688 = vld [vmem:[%s5896 + $0x13e] sm:$0xff]
      %v6689 = vld [vmem:[%s5896 + $0x16e] sm:$0xff]
      %v6690 = vld [vmem:[%s5896 + $0x176] sm:$0xff]
      %v6691 = vld [vmem:[%s5896 + $0x1a6] sm:$0xff]
      %v6692 = vld [vmem:[%s5896 + $0x1ae] sm:$0xff]
      %v6693 = vld [vmem:[%s5896 + $0x1de] sm:$0xff]
      %v6694 = vld [vmem:[%s5896 + $0x1e6] sm:$0xff]
      %v6695 = vld [vmem:[%s5896 + $0x216] sm:$0xff]
      %v6696 = vld [vmem:[%s5896 + $0x21e] sm:$0xff]
      %v6697 = vld [vmem:[%s5896 + $0x24e] sm:$0xff]
      %v6698 = vld [vmem:[%s5896 + $0x256] sm:$0xff]
      %v6699 = vld [vmem:[%s5896 + $0x286] sm:$0xff]
      %v6700 = vld [vmem:[%s5896 + $0x28e] sm:$0xff]
      %v6701 = vld [vmem:[%s5896 + $0x2be] sm:$0xff]
      %v6702 = vld [vmem:[%s5896 + $0x2c6] sm:$0xff]
      %v6703 = vld [vmem:[%s5896 + $0x2f6] sm:$0xff]
      %v6704 = vld [vmem:[%s5896 + $0x2fe] sm:$0xff]
      %v6705 = vld [vmem:[%s5896 + $0x32e] sm:$0xff]
      %v6706 = vld [vmem:[%s5896 + $0x336] sm:$0xff]
      %v6707 = vld [vmem:[%s5896 + $0x366] sm:$0xff]
      %v6708 = vld [vmem:[%s5896 + $0x36e] sm:$0xff]
      %s6709 = scalar_lea.vmem %s1, 68
      %v6710 = vld [vmem:[%s6709] sm:$0xf]
      %v6712 = vsel %vm293, %v6677, 0
      %v6715 = vsel %vm293, %v6678, 0
      %v6718 = vsel %vm293, %v6679, 0
      %v6721 = vsel %vm293, %v6680, 0
      %v6724 = vsel %vm293, %v6681, 0
      %v6727 = vsel %vm293, %v6682, 0
      %v6730 = vsel %vm293, %v6683, 0
      %v6733 = vsel %vm293, %v6684, 0
      %v6736 = vsel %vm293, %v6685, 0
      %v6739 = vsel %vm293, %v6686, 0
      %v6742 = vsel %vm293, %v6687, 0
      %v6745 = vsel %vm293, %v6688, 0
      %v6748 = vsel %vm293, %v6689, 0
      %v6751 = vsel %vm293, %v6690, 0
      %v6754 = vsel %vm293, %v6691, 0
      %v6757 = vsel %vm293, %v6692, 0
      %v6760 = vsel %vm293, %v6693, 0
      %v6763 = vsel %vm293, %v6694, 0
      %v6766 = vsel %vm293, %v6695, 0
      %v6769 = vsel %vm293, %v6696, 0
      %v6772 = vsel %vm293, %v6697, 0
      %v6775 = vsel %vm293, %v6698, 0
      %v6778 = vsel %vm293, %v6699, 0
      %v6781 = vsel %vm293, %v6700, 0
      %v6784 = vsel %vm293, %v6701, 0
      %v6787 = vsel %vm293, %v6702, 0
      %v6790 = vsel %vm293, %v6703, 0
      %v6793 = vsel %vm293, %v6704, 0
      %v6796 = vsel %vm293, %v6705, 0
      %v6799 = vsel %vm293, %v6706, 0
      %v6802 = vsel %vm293, %v6707, 0
      %v6805 = vsel %vm293, %v6708, 0
      %v6808 = vsel %vm390, %v6710, 0
      %6810 = vmatprep.subr.mxu0 0.0
      %6811 = vmatpush1.msra.mxu0 %v6808
      %6812 = vmatprep.subr.mxu0 0.0
      %6813 = vmatpush1.msra.mxu0 0.0
      %6814 = vmatprep.subr.mxu0 0.0
      %6815 = vmatpush1.msra.mxu0 0.0
      %6816 = vmatprep.subr.mxu0 0.0
      %6817 = vmatpush1.msra.mxu0 0.0
      %6818 = vmatprep.subr.mxu0 0.0
      %6819 = vmatpush1.msra.mxu0 0.0
      %6820 = vmatprep.subr.mxu0 0.0
      %6821 = vmatpush1.msra.mxu0 0.0
      %6822 = vmatprep.subr.mxu0 0.0
      %6823 = vmatpush1.msra.mxu0 0.0
      %6824 = vmatprep.subr.mxu0 0.0
      %6825 = vmatpush1.msra.mxu0 0.0
      %6826 = vmatprep.subr.mxu0 0.0
      %6827 = vmatpush1.msra.mxu0 0.0
      %6828 = vmatprep.subr.mxu0 0.0
      %6829 = vmatpush1.msra.mxu0 0.0
      %6830 = vmatprep.subr.mxu0 0.0
      %6831 = vmatpush1.msra.mxu0 0.0
      %6832 = vmatprep.subr.mxu0 0.0
      %6833 = vmatpush1.msra.mxu0 0.0
      %6834 = vmatprep.subr.mxu0 0.0
      %6835 = vmatpush1.msra.mxu0 0.0
      %6836 = vmatprep.subr.mxu0 0.0
      %6837 = vmatpush1.msra.mxu0 0.0
      %6838 = vmatprep.subr.mxu0 0.0
      %6839 = vmatpush1.msra.mxu0 0.0
      %6840 = vmatprep.subr.mxu0 0.0
      %6841 = vmatpush1.msra.mxu0 0.0
      %6842 = vmatprep.subr.mxu0 0.0
      %6843 = vmatpush1.msra.mxu0 0.0
      %6844 = vmatprep.subr.mxu0 0.0
      %6845 = vmatpush1.msra.mxu0 0.0
      %6846 = vmatprep.subr.mxu0 0.0
      %6847 = vmatpush1.msra.mxu0 0.0
      %6848 = vmatprep.subr.mxu0 0.0
      %6849 = vmatpush1.msra.mxu0 0.0
      %6850 = vmatprep.subr.mxu0 0.0
      %6851 = vmatpush1.msra.mxu0 0.0
      %6852 = vmatprep.subr.mxu0 0.0
      %6853 = vmatpush1.msra.mxu0 0.0
      %6854 = vmatprep.subr.mxu0 0.0
      %6855 = vmatpush1.msra.mxu0 0.0
      %6856 = vmatprep.subr.mxu0 0.0
      %6857 = vmatpush1.msra.mxu0 0.0
      %6858 = vmatprep.subr.mxu0 0.0
      %6859 = vmatpush1.msra.mxu0 0.0
      %6860 = vmatprep.subr.mxu0 0.0
      %6861 = vmatpush1.msra.mxu0 0.0
      %6862 = vmatprep.subr.mxu0 0.0
      %6863 = vmatpush1.msra.mxu0 0.0
      %6864 = vmatprep.subr.mxu0 0.0
      %6865 = vmatpush1.msra.mxu0 0.0
      %6866 = vmatprep.subr.mxu0 0.0
      %6867 = vmatpush1.msra.mxu0 0.0
      %6868 = vmatprep.subr.mxu0 0.0
      %6869 = vmatpush1.msra.mxu0 0.0
      %6870 = vmatprep.subr.mxu0 0.0
      %6871 = vmatpush1.msra.mxu0 0.0
      %6872 = vmatprep.subr.mxu0 0.0
      %6873 = vmatpush1.msra.mxu0 0.0
      %6874 = vmatprep.mubr.f32.mxu0 0.0
      %6875 = vmatmul.mubr.f32.gmra.mrb[0].mxu0 %v6712
      %v6876 = vpop.f32.mrb[0].mxu0
      %v6877 = vadd.f32 0.0, %v6876
      %v6878 = vpop.f32.mrb[0].mxu0
      %6879 = vmatprep.mubr.f32.mxu0 0.0
      %6880 = vmatmul.mubr.f32.gmra.mrb[0].mxu0 %v6715
      %v6881 = vpop.f32.mrb[0].mxu0
      %v6882 = vadd.f32 0.0, %v6881
      %v6883 = vpop.f32.mrb[0].mxu0
      %6884 = vmatprep.mubr.f32.mxu0 0.0
      %6885 = vmatmul.mubr.f32.gmra.mrb[0].mxu0 %v6718
      %v6886 = vpop.f32.mrb[0].mxu0
      %v6887 = vadd.f32 0.0, %v6886
      %v6888 = vpop.f32.mrb[0].mxu0
      %6889 = vmatprep.mubr.f32.mxu0 0.0
      %6890 = vmatmul.mubr.f32.gmra.mrb[0].mxu0 %v6721
      %v6891 = vpop.f32.mrb[0].mxu0
      %v6892 = vadd.f32 0.0, %v6891
      %v6893 = vpop.f32.mrb[0].mxu0
      %6894 = vmatprep.mubr.f32.mxu0 0.0
      %6895 = vmatmul.mubr.f32.gmra.mrb[0].mxu0 %v6724
      %v6896 = vpop.f32.mrb[0].mxu0
      %v6897 = vadd.f32 0.0, %v6896
      %v6898 = vpop.f32.mrb[0].mxu0
      %6899 = vmatprep.mubr.f32.mxu0 0.0
      %6900 = vmatmul.mubr.f32.gmra.mrb[0].mxu0 %v6727
      %v6901 = vpop.f32.mrb[0].mxu0
      %v6902 = vadd.f32 0.0, %v6901
      %v6903 = vpop.f32.mrb[0].mxu0
      %6904 = vmatprep.mubr.f32.mxu0 0.0
      %6905 = vmatmul.mubr.f32.gmra.mrb[0].mxu0 %v6730
      %v6906 = vpop.f32.mrb[0].mxu0
      %v6907 = vadd.f32 0.0, %v6906
      %v6908 = vpop.f32.mrb[0].mxu0
      %6909 = vmatprep.mubr.f32.mxu0 0.0
      %6910 = vmatmul.mubr.f32.gmra.mrb[0].mxu0 %v6733
      %v6911 = vpop.f32.mrb[0].mxu0
      %v6912 = vadd.f32 0.0, %v6911
      %v6913 = vpop.f32.mrb[0].mxu0
      %6914 = vmatprep.mubr.f32.mxu0 0.0
      %6915 = vmatmul.mubr.f32.gmra.mrb[0].mxu0 %v6736
      %v6916 = vpop.f32.mrb[0].mxu0
      %v6917 = vadd.f32 0.0, %v6916
      %v6918 = vpop.f32.mrb[0].mxu0
      %6919 = vmatprep.mubr.f32.mxu0 0.0
      %6920 = vmatmul.mubr.f32.gmra.mrb[0].mxu0 %v6739
      %v6921 = vpop.f32.mrb[0].mxu0
      %v6922 = vadd.f32 0.0, %v6921
      %v6923 = vpop.f32.mrb[0].mxu0
      %6924 = vmatprep.mubr.f32.mxu0 0.0
      %6925 = vmatmul.mubr.f32.gmra.mrb[0].mxu0 %v6742
      %v6926 = vpop.f32.mrb[0].mxu0
      %v6927 = vadd.f32 0.0, %v6926
      %v6928 = vpop.f32.mrb[0].mxu0
      %6929 = vmatprep.mubr.f32.mxu0 0.0
      %6930 = vmatmul.mubr.f32.gmra.mrb[0].mxu0 %v6745
      %v6931 = vpop.f32.mrb[0].mxu0
      %v6932 = vadd.f32 0.0, %v6931
      %v6933 = vpop.f32.mrb[0].mxu0
      %6934 = vmatprep.mubr.f32.mxu0 0.0
      %6935 = vmatmul.mubr.f32.gmra.mrb[0].mxu0 %v6748
      %v6936 = vpop.f32.mrb[0].mxu0
      %v6937 = vadd.f32 0.0, %v6936
      %v6938 = vpop.f32.mrb[0].mxu0
      %6939 = vmatprep.mubr.f32.mxu0 0.0
      %6940 = vmatmul.mubr.f32.gmra.mrb[0].mxu0 %v6751
      %v6941 = vpop.f32.mrb[0].mxu0
      %v6942 = vadd.f32 0.0, %v6941
      %v6943 = vpop.f32.mrb[0].mxu0
      %6944 = vmatprep.mubr.f32.mxu0 0.0
      %6945 = vmatmul.mubr.f32.gmra.mrb[0].mxu0 %v6754
      %v6946 = vpop.f32.mrb[0].mxu0
      %v6947 = vadd.f32 0.0, %v6946
      %v6948 = vpop.f32.mrb[0].mxu0
      %6949 = vmatprep.mubr.f32.mxu0 0.0
      %6950 = vmatmul.mubr.f32.gmra.mrb[0].mxu0 %v6757
      %v6951 = vpop.f32.mrb[0].mxu0
      %v6952 = vadd.f32 0.0, %v6951
      %v6953 = vpop.f32.mrb[0].mxu0
      %6954 = vmatprep.mubr.f32.mxu0 0.0
      %6955 = vmatmul.mubr.f32.gmra.mrb[0].mxu0 %v6760
      %v6956 = vpop.f32.mrb[0].mxu0
      %v6957 = vadd.f32 0.0, %v6956
      %v6958 = vpop.f32.mrb[0].mxu0
      %6959 = vmatprep.mubr.f32.mxu0 0.0
      %6960 = vmatmul.mubr.f32.gmra.mrb[0].mxu0 %v6763
      %v6961 = vpop.f32.mrb[0].mxu0
      %v6962 = vadd.f32 0.0, %v6961
      %v6963 = vpop.f32.mrb[0].mxu0
      %6964 = vmatprep.mubr.f32.mxu0 0.0
      %6965 = vmatmul.mubr.f32.gmra.mrb[0].mxu0 %v6766
      %v6966 = vpop.f32.mrb[0].mxu0
      %v6967 = vadd.f32 0.0, %v6966
      %v6968 = vpop.f32.mrb[0].mxu0
      %6969 = vmatprep.mubr.f32.mxu0 0.0
      %6970 = vmatmul.mubr.f32.gmra.mrb[0].mxu0 %v6769
      %v6971 = vpop.f32.mrb[0].mxu0
      %v6972 = vadd.f32 0.0, %v6971
      %v6973 = vpop.f32.mrb[0].mxu0
      %6974 = vmatprep.mubr.f32.mxu0 0.0
      %6975 = vmatmul.mubr.f32.gmra.mrb[0].mxu0 %v6772
      %v6976 = vpop.f32.mrb[0].mxu0
      %v6977 = vadd.f32 0.0, %v6976
      %v6978 = vpop.f32.mrb[0].mxu0
      %6979 = vmatprep.mubr.f32.mxu0 0.0
      %6980 = vmatmul.mubr.f32.gmra.mrb[0].mxu0 %v6775
      %v6981 = vpop.f32.mrb[0].mxu0
      %v6982 = vadd.f32 0.0, %v6981
      %v6983 = vpop.f32.mrb[0].mxu0
      %6984 = vmatprep.mubr.f32.mxu0 0.0
      %6985 = vmatmul.mubr.f32.gmra.mrb[0].mxu0 %v6778
      %v6986 = vpop.f32.mrb[0].mxu0
      %v6987 = vadd.f32 0.0, %v6986
      %v6988 = vpop.f32.mrb[0].mxu0
      %6989 = vmatprep.mubr.f32.mxu0 0.0
      %6990 = vmatmul.mubr.f32.gmra.mrb[0].mxu0 %v6781
      %v6991 = vpop.f32.mrb[0].mxu0
      %v6992 = vadd.f32 0.0, %v6991
      %v6993 = vpop.f32.mrb[0].mxu0
      %6994 = vmatprep.mubr.f32.mxu0 0.0
      %6995 = vmatmul.mubr.f32.gmra.mrb[0].mxu0 %v6784
      %v6996 = vpop.f32.mrb[0].mxu0
      %v6997 = vadd.f32 0.0, %v6996
      %v6998 = vpop.f32.mrb[0].mxu0
      %6999 = vmatprep.mubr.f32.mxu0 0.0
      %7000 = vmatmul.mubr.f32.gmra.mrb[0].mxu0 %v6787
      %v7001 = vpop.f32.mrb[0].mxu0
      %v7002 = vadd.f32 0.0, %v7001
      %v7003 = vpop.f32.mrb[0].mxu0
      %7004 = vmatprep.mubr.f32.mxu0 0.0
      %7005 = vmatmul.mubr.f32.gmra.mrb[0].mxu0 %v6790
      %v7006 = vpop.f32.mrb[0].mxu0
      %v7007 = vadd.f32 0.0, %v7006
      %v7008 = vpop.f32.mrb[0].mxu0
      %7009 = vmatprep.mubr.f32.mxu0 0.0
      %7010 = vmatmul.mubr.f32.gmra.mrb[0].mxu0 %v6793
      %v7011 = vpop.f32.mrb[0].mxu0
      %v7012 = vadd.f32 0.0, %v7011
      %v7013 = vpop.f32.mrb[0].mxu0
      %7014 = vmatprep.mubr.f32.mxu0 0.0
      %7015 = vmatmul.mubr.f32.gmra.mrb[0].mxu0 %v6796
      %v7016 = vpop.f32.mrb[0].mxu0
      %v7017 = vadd.f32 0.0, %v7016
      %v7018 = vpop.f32.mrb[0].mxu0
      %7019 = vmatprep.mubr.f32.mxu0 0.0
      %7020 = vmatmul.mubr.f32.gmra.mrb[0].mxu0 %v6799
      %v7021 = vpop.f32.mrb[0].mxu0
      %v7022 = vadd.f32 0.0, %v7021
      %v7023 = vpop.f32.mrb[0].mxu0
      %7024 = vmatprep.mubr.f32.mxu0 0.0
      %7025 = vmatmul.mubr.f32.gmra.mrb[0].mxu0 %v6802
      %v7026 = vpop.f32.mrb[0].mxu0
      %v7027 = vadd.f32 0.0, %v7026
      %v7028 = vpop.f32.mrb[0].mxu0
      %7029 = vmatprep.mubr.f32.mxu0 0.0
      %7030 = vmatmul.mubr.f32.gmra.mrb[0].mxu0 %v6805
      %v7031 = vpop.f32.mrb[0].mxu0
      %v7032 = vadd.f32 0.0, %v7031
      %v7033 = vpop.f32.mrb[0].mxu0
      %7034 = vdwg.mxu0
      %v7035 = vadd.f32 %v6645, %v6877
      %v7036 = vadd.f32 %v6646, %v6882
      %v7037 = vadd.f32 %v6647, %v6887
      %v7038 = vadd.f32 %v6648, %v6892
      %v7039 = vadd.f32 %v6649, %v6897
      %v7040 = vadd.f32 %v6650, %v6902
      %v7041 = vadd.f32 %v6651, %v6907
      %v7042 = vadd.f32 %v6652, %v6912
      %v7043 = vadd.f32 %v6653, %v6917
      %v7044 = vadd.f32 %v6654, %v6922
      %v7045 = vadd.f32 %v6655, %v6927
      %v7046 = vadd.f32 %v6656, %v6932
      %v7047 = vadd.f32 %v6657, %v6937
      %v7048 = vadd.f32 %v6658, %v6942
      %v7049 = vadd.f32 %v6659, %v6947
      %v7050 = vadd.f32 %v6660, %v6952
      %v7051 = vadd.f32 %v6661, %v6957
      %v7052 = vadd.f32 %v6662, %v6962
      %v7053 = vadd.f32 %v6663, %v6967
      %v7054 = vadd.f32 %v6664, %v6972
      %v7055 = vadd.f32 %v6665, %v6977
      %v7056 = vadd.f32 %v6666, %v6982
      %v7057 = vadd.f32 %v6667, %v6987
      %v7058 = vadd.f32 %v6668, %v6992
      %v7059 = vadd.f32 %v6669, %v6997
      %v7060 = vadd.f32 %v6670, %v7002
      %v7061 = vadd.f32 %v6671, %v7007
      %v7062 = vadd.f32 %v6672, %v7012
      %v7063 = vadd.f32 %v6673, %v7017
      %v7064 = vadd.f32 %v6674, %v7022
      %v7065 = vadd.f32 %v6675, %v7027
      %v7066 = vadd.f32 %v6676, %v7032
      %s7067 = scalar_lea.vmem %s2, 1
      %v7068 = vld [vmem:[%s7067] sm:$0x1]
      %v7070 = vlaneseq
      %v7071 = vshrl.u32 %v7070, 7
      %v7072 = vsub.s32 0, %v7071
      %v7073 = vrot.slane %v7068, %v7072
      %v7075 = vadd.f32 %v7035, %v7073
      %v7076 = vadd.f32 %v7036, %v7073
      %v7077 = vadd.f32 %v7037, %v7073
      %v7078 = vadd.f32 %v7038, %v7073
      %v7079 = vadd.f32 %v7039, %v7073
      %v7080 = vadd.f32 %v7040, %v7073
      %v7081 = vadd.f32 %v7041, %v7073
      %v7082 = vadd.f32 %v7042, %v7073
      %v7083 = vadd.f32 %v7043, %v7073
      %v7084 = vadd.f32 %v7044, %v7073
      %v7085 = vadd.f32 %v7045, %v7073
      %v7086 = vadd.f32 %v7046, %v7073
      %v7087 = vadd.f32 %v7047, %v7073
      %v7088 = vadd.f32 %v7048, %v7073
      %v7089 = vadd.f32 %v7049, %v7073
      %v7090 = vadd.f32 %v7050, %v7073
      %v7091 = vadd.f32 %v7051, %v7073
      %v7092 = vadd.f32 %v7052, %v7073
      %v7093 = vadd.f32 %v7053, %v7073
      %v7094 = vadd.f32 %v7054, %v7073
      %v7095 = vadd.f32 %v7055, %v7073
      %v7096 = vadd.f32 %v7056, %v7073
      %v7097 = vadd.f32 %v7057, %v7073
      %v7098 = vadd.f32 %v7058, %v7073
      %v7099 = vadd.f32 %v7059, %v7073
      %v7100 = vadd.f32 %v7060, %v7073
      %v7101 = vadd.f32 %v7061, %v7073
      %v7102 = vadd.f32 %v7062, %v7073
      %v7103 = vadd.f32 %v7063, %v7073
      %v7104 = vadd.f32 %v7064, %v7073
      %v7105 = vadd.f32 %v7065, %v7073
      %v7106 = vadd.f32 %v7066, %v7073
      %v7107 = vmax.f32 %v7075, 0.0
      %v7108 = vmax.f32 %v7076, 0.0
      %v7109 = vmax.f32 %v7077, 0.0
      %v7110 = vmax.f32 %v7078, 0.0
      %v7111 = vmax.f32 %v7079, 0.0
      %v7112 = vmax.f32 %v7080, 0.0
      %v7113 = vmax.f32 %v7081, 0.0
      %v7114 = vmax.f32 %v7082, 0.0
      %v7115 = vmax.f32 %v7083, 0.0
      %v7116 = vmax.f32 %v7084, 0.0
      %v7117 = vmax.f32 %v7085, 0.0
      %v7118 = vmax.f32 %v7086, 0.0
      %v7119 = vmax.f32 %v7087, 0.0
      %v7120 = vmax.f32 %v7088, 0.0
      %v7121 = vmax.f32 %v7089, 0.0
      %v7122 = vmax.f32 %v7090, 0.0
      %v7123 = vmax.f32 %v7091, 0.0
      %v7124 = vmax.f32 %v7092, 0.0
      %v7125 = vmax.f32 %v7093, 0.0
      %v7126 = vmax.f32 %v7094, 0.0
      %v7127 = vmax.f32 %v7095, 0.0
      %v7128 = vmax.f32 %v7096, 0.0
      %v7129 = vmax.f32 %v7097, 0.0
      %v7130 = vmax.f32 %v7098, 0.0
      %v7131 = vmax.f32 %v7099, 0.0
      %v7132 = vmax.f32 %v7100, 0.0
      %v7133 = vmax.f32 %v7101, 0.0
      %v7134 = vmax.f32 %v7102, 0.0
      %v7135 = vmax.f32 %v7103, 0.0
      %v7136 = vmax.f32 %v7104, 0.0
      %v7137 = vmax.f32 %v7105, 0.0
      %v7138 = vmax.f32 %v7106, 0.0
      %s7139 = scalar_lea.vmem %s3, 8
      %v7140 = vld [vmem:[%s7139] sm:$0xff]
      %vm7141 = vcmask 64512
      %v7143 = vsel %vm7141, %v7107, 0
      %v7146 = vsel %vm7141, %v7108, 0
      %v7149 = vsel %vm7141, %v7109, 0
      %v7152 = vsel %vm7141, %v7110, 0
      %v7155 = vsel %vm7141, %v7111, 0
      %v7158 = vsel %vm7141, %v7112, 0
      %v7161 = vsel %vm7141, %v7113, 0
      %v7164 = vsel %vm7141, %v7114, 0
      %v7167 = vsel %vm7141, %v7115, 0
      %v7170 = vsel %vm7141, %v7116, 0
      %v7173 = vsel %vm7141, %v7117, 0
      %v7176 = vsel %vm7141, %v7118, 0
      %v7179 = vsel %vm7141, %v7119, 0
      %v7182 = vsel %vm7141, %v7120, 0
      %v7185 = vsel %vm7141, %v7121, 0
      %v7188 = vsel %vm7141, %v7122, 0
      %v7191 = vsel %vm7141, %v7123, 0
      %v7194 = vsel %vm7141, %v7124, 0
      %v7197 = vsel %vm7141, %v7125, 0
      %v7200 = vsel %vm7141, %v7126, 0
      %v7203 = vsel %vm7141, %v7127, 0
      %v7206 = vsel %vm7141, %v7128, 0
      %v7209 = vsel %vm7141, %v7129, 0
      %v7212 = vsel %vm7141, %v7130, 0
      %v7215 = vsel %vm7141, %v7131, 0
      %v7218 = vsel %vm7141, %v7132, 0
      %v7221 = vsel %vm7141, %v7133, 0
      %v7224 = vsel %vm7141, %v7134, 0
      %v7227 = vsel %vm7141, %v7135, 0
      %v7230 = vsel %vm7141, %v7136, 0
      %v7233 = vsel %vm7141, %v7137, 0
      %v7236 = vsel %vm7141, %v7138, 0
      %7238 = vmatprep.subr.mxu0 0.0
      %7239 = vmatpush1.msra.mxu0 %v7140
      %7240 = vmatprep.subr.mxu0 0.0
      %7241 = vmatpush1.msra.mxu0 0.0
      %7242 = vmatprep.subr.mxu0 0.0
      %7243 = vmatpush1.msra.mxu0 0.0
      %7244 = vmatprep.subr.mxu0 0.0
      %7245 = vmatpush1.msra.mxu0 0.0
      %7246 = vmatprep.subr.mxu0 0.0
      %7247 = vmatpush1.msra.mxu0 0.0
      %7248 = vmatprep.subr.mxu0 0.0
      %7249 = vmatpush1.msra.mxu0 0.0
      %7250 = vmatprep.subr.mxu0 0.0
      %7251 = vmatpush1.msra.mxu0 0.0
      %7252 = vmatprep.subr.mxu0 0.0
      %7253 = vmatpush1.msra.mxu0 0.0
      %7254 = vmatprep.subr.mxu0 0.0
      %7255 = vmatpush1.msra.mxu0 0.0
      %7256 = vmatprep.subr.mxu0 0.0
      %7257 = vmatpush1.msra.mxu0 0.0
      %7258 = vmatprep.subr.mxu0 0.0
      %7259 = vmatpush1.msra.mxu0 0.0
      %7260 = vmatprep.subr.mxu0 0.0
      %7261 = vmatpush1.msra.mxu0 0.0
      %7262 = vmatprep.subr.mxu0 0.0
      %7263 = vmatpush1.msra.mxu0 0.0
      %7264 = vmatprep.subr.mxu0 0.0
      %7265 = vmatpush1.msra.mxu0 0.0
      %7266 = vmatprep.subr.mxu0 0.0
      %7267 = vmatpush1.msra.mxu0 0.0
      %7268 = vmatprep.subr.mxu0 0.0
      %7269 = vmatpush1.msra.mxu0 0.0
      %7270 = vmatprep.subr.mxu0 0.0
      %7271 = vmatpush1.msra.mxu0 0.0
      %7272 = vmatprep.subr.mxu0 0.0
      %7273 = vmatpush1.msra.mxu0 0.0
      %7274 = vmatprep.subr.mxu0 0.0
      %7275 = vmatpush1.msra.mxu0 0.0
      %7276 = vmatprep.subr.mxu0 0.0
      %7277 = vmatpush1.msra.mxu0 0.0
      %7278 = vmatprep.subr.mxu0 0.0
      %7279 = vmatpush1.msra.mxu0 0.0
      %7280 = vmatprep.subr.mxu0 0.0
      %7281 = vmatpush1.msra.mxu0 0.0
      %7282 = vmatprep.subr.mxu0 0.0
      %7283 = vmatpush1.msra.mxu0 0.0
      %7284 = vmatprep.subr.mxu0 0.0
      %7285 = vmatpush1.msra.mxu0 0.0
      %7286 = vmatprep.subr.mxu0 0.0
      %7287 = vmatpush1.msra.mxu0 0.0
      %7288 = vmatprep.subr.mxu0 0.0
      %7289 = vmatpush1.msra.mxu0 0.0
      %7290 = vmatprep.subr.mxu0 0.0
      %7291 = vmatpush1.msra.mxu0 0.0
      %7292 = vmatprep.subr.mxu0 0.0
      %7293 = vmatpush1.msra.mxu0 0.0
      %7294 = vmatprep.subr.mxu0 0.0
      %7295 = vmatpush1.msra.mxu0 0.0
      %7296 = vmatprep.subr.mxu0 0.0
      %7297 = vmatpush1.msra.mxu0 0.0
      %7298 = vmatprep.subr.mxu0 0.0
      %7299 = vmatpush1.msra.mxu0 0.0
      %7300 = vmatprep.subr.mxu0 0.0
      %7301 = vmatpush1.msra.mxu0 0.0
      %7302 = vmatprep.mubr.f32.mxu0 0.0
      %7303 = vmatmul.mubr.f32.gmra.mrb[0].mxu0 %v7143
      %v7304 = vpop.f32.mrb[0].mxu0
      %v7305 = vadd.f32 0.0, %v7304
      %v7306 = vpop.f32.mrb[0].mxu0
      %7307 = vmatprep.mubr.f32.mxu0 0.0
      %7308 = vmatmul.mubr.f32.gmra.mrb[0].mxu0 %v7146
      %v7309 = vpop.f32.mrb[0].mxu0
      %v7310 = vadd.f32 0.0, %v7309
      %v7311 = vpop.f32.mrb[0].mxu0
      %7312 = vmatprep.mubr.f32.mxu0 0.0
      %7313 = vmatmul.mubr.f32.gmra.mrb[0].mxu0 %v7149
      %v7314 = vpop.f32.mrb[0].mxu0
      %v7315 = vadd.f32 0.0, %v7314
      %v7316 = vpop.f32.mrb[0].mxu0
      %7317 = vmatprep.mubr.f32.mxu0 0.0
      %7318 = vmatmul.mubr.f32.gmra.mrb[0].mxu0 %v7152
      %v7319 = vpop.f32.mrb[0].mxu0
      %v7320 = vadd.f32 0.0, %v7319
      %v7321 = vpop.f32.mrb[0].mxu0
      %7322 = vmatprep.mubr.f32.mxu0 0.0
      %7323 = vmatmul.mubr.f32.gmra.mrb[0].mxu0 %v7155
      %v7324 = vpop.f32.mrb[0].mxu0
      %v7325 = vadd.f32 0.0, %v7324
      %v7326 = vpop.f32.mrb[0].mxu0
      %7327 = vmatprep.mubr.f32.mxu0 0.0
      %7328 = vmatmul.mubr.f32.gmra.mrb[0].mxu0 %v7158
      %v7329 = vpop.f32.mrb[0].mxu0
      %v7330 = vadd.f32 0.0, %v7329
      %v7331 = vpop.f32.mrb[0].mxu0
      %7332 = vmatprep.mubr.f32.mxu0 0.0
      %7333 = vmatmul.mubr.f32.gmra.mrb[0].mxu0 %v7161
      %v7334 = vpop.f32.mrb[0].mxu0
      %v7335 = vadd.f32 0.0, %v7334
      %v7336 = vpop.f32.mrb[0].mxu0
      %7337 = vmatprep.mubr.f32.mxu0 0.0
      %7338 = vmatmul.mubr.f32.gmra.mrb[0].mxu0 %v7164
      %v7339 = vpop.f32.mrb[0].mxu0
      %v7340 = vadd.f32 0.0, %v7339
      %v7341 = vpop.f32.mrb[0].mxu0
      %7342 = vmatprep.mubr.f32.mxu0 0.0
      %7343 = vmatmul.mubr.f32.gmra.mrb[0].mxu0 %v7167
      %v7344 = vpop.f32.mrb[0].mxu0
      %v7345 = vadd.f32 0.0, %v7344
      %v7346 = vpop.f32.mrb[0].mxu0
      %7347 = vmatprep.mubr.f32.mxu0 0.0
      %7348 = vmatmul.mubr.f32.gmra.mrb[0].mxu0 %v7170
      %v7349 = vpop.f32.mrb[0].mxu0
      %v7350 = vadd.f32 0.0, %v7349
      %v7351 = vpop.f32.mrb[0].mxu0
      %7352 = vmatprep.mubr.f32.mxu0 0.0
      %7353 = vmatmul.mubr.f32.gmra.mrb[0].mxu0 %v7173
      %v7354 = vpop.f32.mrb[0].mxu0
      %v7355 = vadd.f32 0.0, %v7354
      %v7356 = vpop.f32.mrb[0].mxu0
      %7357 = vmatprep.mubr.f32.mxu0 0.0
      %7358 = vmatmul.mubr.f32.gmra.mrb[0].mxu0 %v7176
      %v7359 = vpop.f32.mrb[0].mxu0
      %v7360 = vadd.f32 0.0, %v7359
      %v7361 = vpop.f32.mrb[0].mxu0
      %7362 = vmatprep.mubr.f32.mxu0 0.0
      %7363 = vmatmul.mubr.f32.gmra.mrb[0].mxu0 %v7179
      %v7364 = vpop.f32.mrb[0].mxu0
      %v7365 = vadd.f32 0.0, %v7364
      %v7366 = vpop.f32.mrb[0].mxu0
      %7367 = vmatprep.mubr.f32.mxu0 0.0
      %7368 = vmatmul.mubr.f32.gmra.mrb[0].mxu0 %v7182
      %v7369 = vpop.f32.mrb[0].mxu0
      %v7370 = vadd.f32 0.0, %v7369
      %v7371 = vpop.f32.mrb[0].mxu0
      %7372 = vmatprep.mubr.f32.mxu0 0.0
      %7373 = vmatmul.mubr.f32.gmra.mrb[0].mxu0 %v7185
      %v7374 = vpop.f32.mrb[0].mxu0
      %v7375 = vadd.f32 0.0, %v7374
      %v7376 = vpop.f32.mrb[0].mxu0
      %7377 = vmatprep.mubr.f32.mxu0 0.0
      %7378 = vmatmul.mubr.f32.gmra.mrb[0].mxu0 %v7188
      %v7379 = vpop.f32.mrb[0].mxu0
      %v7380 = vadd.f32 0.0, %v7379
      %v7381 = vpop.f32.mrb[0].mxu0
      %7382 = vmatprep.mubr.f32.mxu0 0.0
      %7383 = vmatmul.mubr.f32.gmra.mrb[0].mxu0 %v7191
      %v7384 = vpop.f32.mrb[0].mxu0
      %v7385 = vadd.f32 0.0, %v7384
      %v7386 = vpop.f32.mrb[0].mxu0
      %7387 = vmatprep.mubr.f32.mxu0 0.0
      %7388 = vmatmul.mubr.f32.gmra.mrb[0].mxu0 %v7194
      %v7389 = vpop.f32.mrb[0].mxu0
      %v7390 = vadd.f32 0.0, %v7389
      %v7391 = vpop.f32.mrb[0].mxu0
      %7392 = vmatprep.mubr.f32.mxu0 0.0
      %7393 = vmatmul.mubr.f32.gmra.mrb[0].mxu0 %v7197
      %v7394 = vpop.f32.mrb[0].mxu0
      %v7395 = vadd.f32 0.0, %v7394
      %v7396 = vpop.f32.mrb[0].mxu0
      %7397 = vmatprep.mubr.f32.mxu0 0.0
      %7398 = vmatmul.mubr.f32.gmra.mrb[0].mxu0 %v7200
      %v7399 = vpop.f32.mrb[0].mxu0
      %v7400 = vadd.f32 0.0, %v7399
      %v7401 = vpop.f32.mrb[0].mxu0
      %7402 = vmatprep.mubr.f32.mxu0 0.0
      %7403 = vmatmul.mubr.f32.gmra.mrb[0].mxu0 %v7203
      %v7404 = vpop.f32.mrb[0].mxu0
      %v7405 = vadd.f32 0.0, %v7404
      %v7406 = vpop.f32.mrb[0].mxu0
      %7407 = vmatprep.mubr.f32.mxu0 0.0
      %7408 = vmatmul.mubr.f32.gmra.mrb[0].mxu0 %v7206
      %v7409 = vpop.f32.mrb[0].mxu0
      %v7410 = vadd.f32 0.0, %v7409
      %v7411 = vpop.f32.mrb[0].mxu0
      %7412 = vmatprep.mubr.f32.mxu0 0.0
      %7413 = vmatmul.mubr.f32.gmra.mrb[0].mxu0 %v7209
      %v7414 = vpop.f32.mrb[0].mxu0
      %v7415 = vadd.f32 0.0, %v7414
      %v7416 = vpop.f32.mrb[0].mxu0
      %7417 = vmatprep.mubr.f32.mxu0 0.0
      %7418 = vmatmul.mubr.f32.gmra.mrb[0].mxu0 %v7212
      %v7419 = vpop.f32.mrb[0].mxu0
      %v7420 = vadd.f32 0.0, %v7419
      %v7421 = vpop.f32.mrb[0].mxu0
      %7422 = vmatprep.mubr.f32.mxu0 0.0
      %7423 = vmatmul.mubr.f32.gmra.mrb[0].mxu0 %v7215
      %v7424 = vpop.f32.mrb[0].mxu0
      %v7425 = vadd.f32 0.0, %v7424
      %v7426 = vpop.f32.mrb[0].mxu0
      %7427 = vmatprep.mubr.f32.mxu0 0.0
      %7428 = vmatmul.mubr.f32.gmra.mrb[0].mxu0 %v7218
      %v7429 = vpop.f32.mrb[0].mxu0
      %v7430 = vadd.f32 0.0, %v7429
      %v7431 = vpop.f32.mrb[0].mxu0
      %7432 = vmatprep.mubr.f32.mxu0 0.0
      %7433 = vmatmul.mubr.f32.gmra.mrb[0].mxu0 %v7221
      %v7434 = vpop.f32.mrb[0].mxu0
      %v7435 = vadd.f32 0.0, %v7434
      %v7436 = vpop.f32.mrb[0].mxu0
      %7437 = vmatprep.mubr.f32.mxu0 0.0
      %7438 = vmatmul.mubr.f32.gmra.mrb[0].mxu0 %v7224
      %v7439 = vpop.f32.mrb[0].mxu0
      %v7440 = vadd.f32 0.0, %v7439
      %v7441 = vpop.f32.mrb[0].mxu0
      %7442 = vmatprep.mubr.f32.mxu0 0.0
      %7443 = vmatmul.mubr.f32.gmra.mrb[0].mxu0 %v7227
      %v7444 = vpop.f32.mrb[0].mxu0
      %v7445 = vadd.f32 0.0, %v7444
      %v7446 = vpop.f32.mrb[0].mxu0
      %7447 = vmatprep.mubr.f32.mxu0 0.0
      %7448 = vmatmul.mubr.f32.gmra.mrb[0].mxu0 %v7230
      %v7449 = vpop.f32.mrb[0].mxu0
      %v7450 = vadd.f32 0.0, %v7449
      %v7451 = vpop.f32.mrb[0].mxu0
      %7452 = vmatprep.mubr.f32.mxu0 0.0
      %7453 = vmatmul.mubr.f32.gmra.mrb[0].mxu0 %v7233
      %v7454 = vpop.f32.mrb[0].mxu0
      %v7455 = vadd.f32 0.0, %v7454
      %v7456 = vpop.f32.mrb[0].mxu0
      %7457 = vmatprep.mubr.f32.mxu0 0.0
      %7458 = vmatmul.mubr.f32.gmra.mrb[0].mxu0 %v7236
      %v7459 = vpop.f32.mrb[0].mxu0
      %v7460 = vadd.f32 0.0, %v7459
      %v7461 = vpop.f32.mrb[0].mxu0
      %7462 = vdwg.mxu0
      %v7464 = vsel %vm7141, %v3714, 0
      %v7467 = vsel %vm7141, %v3715, 0
      %v7470 = vsel %vm7141, %v3716, 0
      %v7473 = vsel %vm7141, %v3717, 0
      %v7476 = vsel %vm7141, %v3718, 0
      %v7479 = vsel %vm7141, %v3719, 0
      %v7482 = vsel %vm7141, %v3720, 0
      %v7485 = vsel %vm7141, %v3721, 0
      %v7488 = vsel %vm7141, %v3722, 0
      %v7491 = vsel %vm7141, %v3723, 0
      %v7494 = vsel %vm7141, %v3724, 0
      %v7497 = vsel %vm7141, %v3725, 0
      %v7500 = vsel %vm7141, %v3726, 0
      %v7503 = vsel %vm7141, %v3727, 0
      %v7506 = vsel %vm7141, %v3728, 0
      %v7509 = vsel %vm7141, %v3729, 0
      %v7512 = vsel %vm7141, %v3730, 0
      %v7515 = vsel %vm7141, %v3731, 0
      %v7518 = vsel %vm7141, %v3732, 0
      %v7521 = vsel %vm7141, %v3733, 0
      %v7524 = vsel %vm7141, %v3734, 0
      %v7527 = vsel %vm7141, %v3735, 0
      %v7530 = vsel %vm7141, %v3736, 0
      %v7533 = vsel %vm7141, %v3737, 0
      %v7536 = vsel %vm7141, %v3738, 0
      %v7539 = vsel %vm7141, %v3739, 0
      %v7542 = vsel %vm7141, %v3740, 0
      %v7545 = vsel %vm7141, %v3741, 0
      %v7548 = vsel %vm7141, %v3742, 0
      %v7551 = vsel %vm7141, %v3743, 0
      %v7554 = vsel %vm7141, %v3744, 0
      %v7557 = vsel %vm7141, %v3745, 0
      %7559 = vmatprep.subr.mxu0 0.0
      %7560 = vmatpush1.msra.mxu0 %v3746
      %7561 = vmatprep.subr.mxu0 0.0
      %7562 = vmatpush1.msra.mxu0 0.0
      %7563 = vmatprep.subr.mxu0 0.0
      %7564 = vmatpush1.msra.mxu0 0.0
      %7565 = vmatprep.subr.mxu0 0.0
      %7566 = vmatpush1.msra.mxu0 0.0
      %7567 = vmatprep.subr.mxu0 0.0
      %7568 = vmatpush1.msra.mxu0 0.0
      %7569 = vmatprep.subr.mxu0 0.0
      %7570 = vmatpush1.msra.mxu0 0.0
      %7571 = vmatprep.subr.mxu0 0.0
      %7572 = vmatpush1.msra.mxu0 0.0
      %7573 = vmatprep.subr.mxu0 0.0
      %7574 = vmatpush1.msra.mxu0 0.0
      %7575 = vmatprep.subr.mxu0 0.0
      %7576 = vmatpush1.msra.mxu0 0.0
      %7577 = vmatprep.subr.mxu0 0.0
      %7578 = vmatpush1.msra.mxu0 0.0
      %7579 = vmatprep.subr.mxu0 0.0
      %7580 = vmatpush1.msra.mxu0 0.0
      %7581 = vmatprep.subr.mxu0 0.0
      %7582 = vmatpush1.msra.mxu0 0.0
      %7583 = vmatprep.subr.mxu0 0.0
      %7584 = vmatpush1.msra.mxu0 0.0
      %7585 = vmatprep.subr.mxu0 0.0
      %7586 = vmatpush1.msra.mxu0 0.0
      %7587 = vmatprep.subr.mxu0 0.0
      %7588 = vmatpush1.msra.mxu0 0.0
      %7589 = vmatprep.subr.mxu0 0.0
      %7590 = vmatpush1.msra.mxu0 0.0
      %7591 = vmatprep.subr.mxu0 0.0
      %7592 = vmatpush1.msra.mxu0 0.0
      %7593 = vmatprep.subr.mxu0 0.0
      %7594 = vmatpush1.msra.mxu0 0.0
      %7595 = vmatprep.subr.mxu0 0.0
      %7596 = vmatpush1.msra.mxu0 0.0
      %7597 = vmatprep.subr.mxu0 0.0
      %7598 = vmatpush1.msra.mxu0 0.0
      %7599 = vmatprep.subr.mxu0 0.0
      %7600 = vmatpush1.msra.mxu0 0.0
      %7601 = vmatprep.subr.mxu0 0.0
      %7602 = vmatpush1.msra.mxu0 0.0
      %7603 = vmatprep.subr.mxu0 0.0
      %7604 = vmatpush1.msra.mxu0 0.0
      %7605 = vmatprep.subr.mxu0 0.0
      %7606 = vmatpush1.msra.mxu0 0.0
      %7607 = vmatprep.subr.mxu0 0.0
      %7608 = vmatpush1.msra.mxu0 0.0
      %7609 = vmatprep.subr.mxu0 0.0
      %7610 = vmatpush1.msra.mxu0 0.0
      %7611 = vmatprep.subr.mxu0 0.0
      %7612 = vmatpush1.msra.mxu0 0.0
      %7613 = vmatprep.subr.mxu0 0.0
      %7614 = vmatpush1.msra.mxu0 0.0
      %7615 = vmatprep.subr.mxu0 0.0
      %7616 = vmatpush1.msra.mxu0 0.0
      %7617 = vmatprep.subr.mxu0 0.0
      %7618 = vmatpush1.msra.mxu0 0.0
      %7619 = vmatprep.subr.mxu0 0.0
      %7620 = vmatpush1.msra.mxu0 0.0
      %7621 = vmatprep.subr.mxu0 0.0
      %7622 = vmatpush1.msra.mxu0 0.0
      %7623 = vmatprep.mubr.f32.mxu0 0.0
      %7624 = vmatmul.mubr.f32.gmra.mrb[0].mxu0 %v7464
      %v7625 = vpop.f32.mrb[0].mxu0
      %v7626 = vadd.f32 %v7305, %v7625
      %v7627 = vpop.f32.mrb[0].mxu0
      %7628 = vmatprep.mubr.f32.mxu0 0.0
      %7629 = vmatmul.mubr.f32.gmra.mrb[0].mxu0 %v7467
      %v7630 = vpop.f32.mrb[0].mxu0
      %v7631 = vadd.f32 %v7310, %v7630
      %v7632 = vpop.f32.mrb[0].mxu0
      %7633 = vmatprep.mubr.f32.mxu0 0.0
      %7634 = vmatmul.mubr.f32.gmra.mrb[0].mxu0 %v7470
      %v7635 = vpop.f32.mrb[0].mxu0
      %v7636 = vadd.f32 %v7315, %v7635
      %v7637 = vpop.f32.mrb[0].mxu0
      %7638 = vmatprep.mubr.f32.mxu0 0.0
      %7639 = vmatmul.mubr.f32.gmra.mrb[0].mxu0 %v7473
      %v7640 = vpop.f32.mrb[0].mxu0
      %v7641 = vadd.f32 %v7320, %v7640
      %v7642 = vpop.f32.mrb[0].mxu0
      %7643 = vmatprep.mubr.f32.mxu0 0.0
      %7644 = vmatmul.mubr.f32.gmra.mrb[0].mxu0 %v7476
      %v7645 = vpop.f32.mrb[0].mxu0
      %v7646 = vadd.f32 %v7325, %v7645
      %v7647 = vpop.f32.mrb[0].mxu0
      %7648 = vmatprep.mubr.f32.mxu0 0.0
      %7649 = vmatmul.mubr.f32.gmra.mrb[0].mxu0 %v7479
      %v7650 = vpop.f32.mrb[0].mxu0
      %v7651 = vadd.f32 %v7330, %v7650
      %v7652 = vpop.f32.mrb[0].mxu0
      %7653 = vmatprep.mubr.f32.mxu0 0.0
      %7654 = vmatmul.mubr.f32.gmra.mrb[0].mxu0 %v7482
      %v7655 = vpop.f32.mrb[0].mxu0
      %v7656 = vadd.f32 %v7335, %v7655
      %v7657 = vpop.f32.mrb[0].mxu0
      %7658 = vmatprep.mubr.f32.mxu0 0.0
      %7659 = vmatmul.mubr.f32.gmra.mrb[0].mxu0 %v7485
      %v7660 = vpop.f32.mrb[0].mxu0
      %v7661 = vadd.f32 %v7340, %v7660
      %v7662 = vpop.f32.mrb[0].mxu0
      %7663 = vmatprep.mubr.f32.mxu0 0.0
      %7664 = vmatmul.mubr.f32.gmra.mrb[0].mxu0 %v7488
      %v7665 = vpop.f32.mrb[0].mxu0
      %v7666 = vadd.f32 %v7345, %v7665
      %v7667 = vpop.f32.mrb[0].mxu0
      %7668 = vmatprep.mubr.f32.mxu0 0.0
      %7669 = vmatmul.mubr.f32.gmra.mrb[0].mxu0 %v7491
      %v7670 = vpop.f32.mrb[0].mxu0
      %v7671 = vadd.f32 %v7350, %v7670
      %v7672 = vpop.f32.mrb[0].mxu0
      %7673 = vmatprep.mubr.f32.mxu0 0.0
      %7674 = vmatmul.mubr.f32.gmra.mrb[0].mxu0 %v7494
      %v7675 = vpop.f32.mrb[0].mxu0
      %v7676 = vadd.f32 %v7355, %v7675
      %v7677 = vpop.f32.mrb[0].mxu0
      %7678 = vmatprep.mubr.f32.mxu0 0.0
      %7679 = vmatmul.mubr.f32.gmra.mrb[0].mxu0 %v7497
      %v7680 = vpop.f32.mrb[0].mxu0
      %v7681 = vadd.f32 %v7360, %v7680
      %v7682 = vpop.f32.mrb[0].mxu0
      %7683 = vmatprep.mubr.f32.mxu0 0.0
      %7684 = vmatmul.mubr.f32.gmra.mrb[0].mxu0 %v7500
      %v7685 = vpop.f32.mrb[0].mxu0
      %v7686 = vadd.f32 %v7365, %v7685
      %v7687 = vpop.f32.mrb[0].mxu0
      %7688 = vmatprep.mubr.f32.mxu0 0.0
      %7689 = vmatmul.mubr.f32.gmra.mrb[0].mxu0 %v7503
      %v7690 = vpop.f32.mrb[0].mxu0
      %v7691 = vadd.f32 %v7370, %v7690
      %v7692 = vpop.f32.mrb[0].mxu0
      %7693 = vmatprep.mubr.f32.mxu0 0.0
      %7694 = vmatmul.mubr.f32.gmra.mrb[0].mxu0 %v7506
      %v7695 = vpop.f32.mrb[0].mxu0
      %v7696 = vadd.f32 %v7375, %v7695
      %v7697 = vpop.f32.mrb[0].mxu0
      %7698 = vmatprep.mubr.f32.mxu0 0.0
      %7699 = vmatmul.mubr.f32.gmra.mrb[0].mxu0 %v7509
      %v7700 = vpop.f32.mrb[0].mxu0
      %v7701 = vadd.f32 %v7380, %v7700
      %v7702 = vpop.f32.mrb[0].mxu0
      %7703 = vmatprep.mubr.f32.mxu0 0.0
      %7704 = vmatmul.mubr.f32.gmra.mrb[0].mxu0 %v7512
      %v7705 = vpop.f32.mrb[0].mxu0
      %v7706 = vadd.f32 %v7385, %v7705
      %v7707 = vpop.f32.mrb[0].mxu0
      %7708 = vmatprep.mubr.f32.mxu0 0.0
      %7709 = vmatmul.mubr.f32.gmra.mrb[0].mxu0 %v7515
      %v7710 = vpop.f32.mrb[0].mxu0
      %v7711 = vadd.f32 %v7390, %v7710
      %v7712 = vpop.f32.mrb[0].mxu0
      %7713 = vmatprep.mubr.f32.mxu0 0.0
      %7714 = vmatmul.mubr.f32.gmra.mrb[0].mxu0 %v7518
      %v7715 = vpop.f32.mrb[0].mxu0
      %v7716 = vadd.f32 %v7395, %v7715
      %v7717 = vpop.f32.mrb[0].mxu0
      %7718 = vmatprep.mubr.f32.mxu0 0.0
      %7719 = vmatmul.mubr.f32.gmra.mrb[0].mxu0 %v7521
      %v7720 = vpop.f32.mrb[0].mxu0
      %v7721 = vadd.f32 %v7400, %v7720
      %v7722 = vpop.f32.mrb[0].mxu0
      %7723 = vmatprep.mubr.f32.mxu0 0.0
      %7724 = vmatmul.mubr.f32.gmra.mrb[0].mxu0 %v7524
      %v7725 = vpop.f32.mrb[0].mxu0
      %v7726 = vadd.f32 %v7405, %v7725
      %v7727 = vpop.f32.mrb[0].mxu0
      %7728 = vmatprep.mubr.f32.mxu0 0.0
      %7729 = vmatmul.mubr.f32.gmra.mrb[0].mxu0 %v7527
      %v7730 = vpop.f32.mrb[0].mxu0
      %v7731 = vadd.f32 %v7410, %v7730
      %v7732 = vpop.f32.mrb[0].mxu0
      %7733 = vmatprep.mubr.f32.mxu0 0.0
      %7734 = vmatmul.mubr.f32.gmra.mrb[0].mxu0 %v7530
      %v7735 = vpop.f32.mrb[0].mxu0
      %v7736 = vadd.f32 %v7415, %v7735
      %v7737 = vpop.f32.mrb[0].mxu0
      %7738 = vmatprep.mubr.f32.mxu0 0.0
      %7739 = vmatmul.mubr.f32.gmra.mrb[0].mxu0 %v7533
      %v7740 = vpop.f32.mrb[0].mxu0
      %v7741 = vadd.f32 %v7420, %v7740
      %v7742 = vpop.f32.mrb[0].mxu0
      %7743 = vmatprep.mubr.f32.mxu0 0.0
      %7744 = vmatmul.mubr.f32.gmra.mrb[0].mxu0 %v7536
      %v7745 = vpop.f32.mrb[0].mxu0
      %v7746 = vadd.f32 %v7425, %v7745
      %v7747 = vpop.f32.mrb[0].mxu0
      %7748 = vmatprep.mubr.f32.mxu0 0.0
      %7749 = vmatmul.mubr.f32.gmra.mrb[0].mxu0 %v7539
      %v7750 = vpop.f32.mrb[0].mxu0
      %v7751 = vadd.f32 %v7430, %v7750
      %v7752 = vpop.f32.mrb[0].mxu0
      %7753 = vmatprep.mubr.f32.mxu0 0.0
      %7754 = vmatmul.mubr.f32.gmra.mrb[0].mxu0 %v7542
      %v7755 = vpop.f32.mrb[0].mxu0
      %v7756 = vadd.f32 %v7435, %v7755
      %v7757 = vpop.f32.mrb[0].mxu0
      %7758 = vmatprep.mubr.f32.mxu0 0.0
      %7759 = vmatmul.mubr.f32.gmra.mrb[0].mxu0 %v7545
      %v7760 = vpop.f32.mrb[0].mxu0
      %v7761 = vadd.f32 %v7440, %v7760
      %v7762 = vpop.f32.mrb[0].mxu0
      %7763 = vmatprep.mubr.f32.mxu0 0.0
      %7764 = vmatmul.mubr.f32.gmra.mrb[0].mxu0 %v7548
      %v7765 = vpop.f32.mrb[0].mxu0
      %v7766 = vadd.f32 %v7445, %v7765
      %v7767 = vpop.f32.mrb[0].mxu0
      %7768 = vmatprep.mubr.f32.mxu0 0.0
      %7769 = vmatmul.mubr.f32.gmra.mrb[0].mxu0 %v7551
      %v7770 = vpop.f32.mrb[0].mxu0
      %v7771 = vadd.f32 %v7450, %v7770
      %v7772 = vpop.f32.mrb[0].mxu0
      %7773 = vmatprep.mubr.f32.mxu0 0.0
      %7774 = vmatmul.mubr.f32.gmra.mrb[0].mxu0 %v7554
      %v7775 = vpop.f32.mrb[0].mxu0
      %v7776 = vadd.f32 %v7455, %v7775
      %v7777 = vpop.f32.mrb[0].mxu0
      %7778 = vmatprep.mubr.f32.mxu0 0.0
      %7779 = vmatmul.mubr.f32.gmra.mrb[0].mxu0 %v7557
      %v7780 = vpop.f32.mrb[0].mxu0
      %v7781 = vadd.f32 %v7460, %v7780
      %v7782 = vpop.f32.mrb[0].mxu0
      %7783 = vdwg.mxu0
      %v7784 = vld [vmem:[%s219] sm:$0xff]
      %v7785 = vld [vmem:[%s219 + $0x8] sm:$0xff]
      %v7786 = vld [vmem:[%s219 + $0x38] sm:$0xff]
      %v7787 = vld [vmem:[%s219 + $0x40] sm:$0xff]
      %v7788 = vld [vmem:[%s219 + $0x70] sm:$0xff]
      %v7789 = vld [vmem:[%s219 + $0x78] sm:$0xff]
      %v7790 = vld [vmem:[%s219 + $0xa8] sm:$0xff]
      %v7791 = vld [vmem:[%s219 + $0xb0] sm:$0xff]
      %v7792 = vld [vmem:[%s219 + $0xe0] sm:$0xff]
      %v7793 = vld [vmem:[%s219 + $0xe8] sm:$0xff]
      %v7794 = vld [vmem:[%s219 + $0x118] sm:$0xff]
      %v7795 = vld [vmem:[%s219 + $0x120] sm:$0xff]
      %v7796 = vld [vmem:[%s219 + $0x150] sm:$0xff]
      %v7797 = vld [vmem:[%s219 + $0x158] sm:$0xff]
      %v7798 = vld [vmem:[%s219 + $0x188] sm:$0xff]
      %v7799 = vld [vmem:[%s219 + $0x190] sm:$0xff]
      %v7800 = vld [vmem:[%s219 + $0x1c0] sm:$0xff]
      %v7801 = vld [vmem:[%s219 + $0x1c8] sm:$0xff]
      %v7802 = vld [vmem:[%s219 + $0x1f8] sm:$0xff]
      %v7803 = vld [vmem:[%s219 + $0x200] sm:$0xff]
      %v7804 = vld [vmem:[%s219 + $0x230] sm:$0xff]
      %v7805 = vld [vmem:[%s219 + $0x238] sm:$0xff]
      %v7806 = vld [vmem:[%s219 + $0x268] sm:$0xff]
      %v7807 = vld [vmem:[%s219 + $0x270] sm:$0xff]
      %v7808 = vld [vmem:[%s219 + $0x2a0] sm:$0xff]
      %v7809 = vld [vmem:[%s219 + $0x2a8] sm:$0xff]
      %v7810 = vld [vmem:[%s219 + $0x2d8] sm:$0xff]
      %v7811 = vld [vmem:[%s219 + $0x2e0] sm:$0xff]
      %v7812 = vld [vmem:[%s219 + $0x310] sm:$0xff]
      %v7813 = vld [vmem:[%s219 + $0x318] sm:$0xff]
      %v7814 = vld [vmem:[%s219 + $0x348] sm:$0xff]
      %v7815 = vld [vmem:[%s219 + $0x350] sm:$0xff]
      %s7816 = scalar_lea.vmem %s1, 72
      %v7817 = vld [vmem:[%s7816] sm:$0xf]
      %v7818 = vld [vmem:[%s219 + $0x12] sm:$0xff]
      %v7819 = vld [vmem:[%s219 + $0x1a] sm:$0xff]
      %v7820 = vld [vmem:[%s219 + $0x4a] sm:$0xff]
      %v7821 = vld [vmem:[%s219 + $0x52] sm:$0xff]
      %v7822 = vld [vmem:[%s219 + $0x82] sm:$0xff]
      %v7823 = vld [vmem:[%s219 + $0x8a] sm:$0xff]
      %v7824 = vld [vmem:[%s219 + $0xba] sm:$0xff]
      %v7825 = vld [vmem:[%s219 + $0xc2] sm:$0xff]
      %v7826 = vld [vmem:[%s219 + $0xf2] sm:$0xff]
      %v7827 = vld [vmem:[%s219 + $0xfa] sm:$0xff]
      %v7828 = vld [vmem:[%s219 + $0x12a] sm:$0xff]
      %v7829 = vld [vmem:[%s219 + $0x132] sm:$0xff]
      %v7830 = vld [vmem:[%s219 + $0x162] sm:$0xff]
      %v7831 = vld [vmem:[%s219 + $0x16a] sm:$0xff]
      %v7832 = vld [vmem:[%s219 + $0x19a] sm:$0xff]
      %v7833 = vld [vmem:[%s219 + $0x1a2] sm:$0xff]
      %v7834 = vld [vmem:[%s219 + $0x1d2] sm:$0xff]
      %v7835 = vld [vmem:[%s219 + $0x1da] sm:$0xff]
      %v7836 = vld [vmem:[%s219 + $0x20a] sm:$0xff]
      %v7837 = vld [vmem:[%s219 + $0x212] sm:$0xff]
      %v7838 = vld [vmem:[%s219 + $0x242] sm:$0xff]
      %v7839 = vld [vmem:[%s219 + $0x24a] sm:$0xff]
      %v7840 = vld [vmem:[%s219 + $0x27a] sm:$0xff]
      %v7841 = vld [vmem:[%s219 + $0x282] sm:$0xff]
      %v7842 = vld [vmem:[%s219 + $0x2b2] sm:$0xff]
      %v7843 = vld [vmem:[%s219 + $0x2ba] sm:$0xff]
      %v7844 = vld [vmem:[%s219 + $0x2ea] sm:$0xff]
      %v7845 = vld [vmem:[%s219 + $0x2f2] sm:$0xff]
      %v7846 = vld [vmem:[%s219 + $0x322] sm:$0xff]
      %v7847 = vld [vmem:[%s219 + $0x32a] sm:$0xff]
      %v7848 = vld [vmem:[%s219 + $0x35a] sm:$0xff]
      %v7849 = vld [vmem:[%s219 + $0x362] sm:$0xff]
      %s7850 = scalar_lea.vmem %s1, 76
      %v7851 = vld [vmem:[%s7850] sm:$0xf]
      %v7853 = vsel %vm293, %v7818, 0
      %v7856 = vsel %vm293, %v7819, 0
      %v7859 = vsel %vm293, %v7820, 0
      %v7862 = vsel %vm293, %v7821, 0
      %v7865 = vsel %vm293, %v7822, 0
      %v7868 = vsel %vm293, %v7823, 0
      %v7871 = vsel %vm293, %v7824, 0
      %v7874 = vsel %vm293, %v7825, 0
      %v7877 = vsel %vm293, %v7826, 0
      %v7880 = vsel %vm293, %v7827, 0
      %v7883 = vsel %vm293, %v7828, 0
      %v7886 = vsel %vm293, %v7829, 0
      %v7889 = vsel %vm293, %v7830, 0
      %v7892 = vsel %vm293, %v7831, 0
      %v7895 = vsel %vm293, %v7832, 0
      %v7898 = vsel %vm293, %v7833, 0
      %v7901 = vsel %vm293, %v7834, 0
      %v7904 = vsel %vm293, %v7835, 0
      %v7907 = vsel %vm293, %v7836, 0
      %v7910 = vsel %vm293, %v7837, 0
      %v7913 = vsel %vm293, %v7838, 0
      %v7916 = vsel %vm293, %v7839, 0
      %v7919 = vsel %vm293, %v7840, 0
      %v7922 = vsel %vm293, %v7841, 0
      %v7925 = vsel %vm293, %v7842, 0
      %v7928 = vsel %vm293, %v7843, 0
      %v7931 = vsel %vm293, %v7844, 0
      %v7934 = vsel %vm293, %v7845, 0
      %v7937 = vsel %vm293, %v7846, 0
      %v7940 = vsel %vm293, %v7847, 0
      %v7943 = vsel %vm293, %v7848, 0
      %v7946 = vsel %vm293, %v7849, 0
      %v7949 = vsel %vm390, %v7851, 0
      %7951 = vmatprep.subr.mxu0 0.0
      %7952 = vmatpush1.msra.mxu0 %v7949
      %7953 = vmatprep.subr.mxu0 0.0
      %7954 = vmatpush1.msra.mxu0 0.0
      %7955 = vmatprep.subr.mxu0 0.0
      %7956 = vmatpush1.msra.mxu0 0.0
      %7957 = vmatprep.subr.mxu0 0.0
      %7958 = vmatpush1.msra.mxu0 0.0
      %7959 = vmatprep.subr.mxu0 0.0
      %7960 = vmatpush1.msra.mxu0 0.0
      %7961 = vmatprep.subr.mxu0 0.0
      %7962 = vmatpush1.msra.mxu0 0.0
      %7963 = vmatprep.subr.mxu0 0.0
      %7964 = vmatpush1.msra.mxu0 0.0
      %7965 = vmatprep.subr.mxu0 0.0
      %7966 = vmatpush1.msra.mxu0 0.0
      %7967 = vmatprep.subr.mxu0 0.0
      %7968 = vmatpush1.msra.mxu0 0.0
      %7969 = vmatprep.subr.mxu0 0.0
      %7970 = vmatpush1.msra.mxu0 0.0
      %7971 = vmatprep.subr.mxu0 0.0
      %7972 = vmatpush1.msra.mxu0 0.0
      %7973 = vmatprep.subr.mxu0 0.0
      %7974 = vmatpush1.msra.mxu0 0.0
      %7975 = vmatprep.subr.mxu0 0.0
      %7976 = vmatpush1.msra.mxu0 0.0
      %7977 = vmatprep.subr.mxu0 0.0
      %7978 = vmatpush1.msra.mxu0 0.0
      %7979 = vmatprep.subr.mxu0 0.0
      %7980 = vmatpush1.msra.mxu0 0.0
      %7981 = vmatprep.subr.mxu0 0.0
      %7982 = vmatpush1.msra.mxu0 0.0
      %7983 = vmatprep.subr.mxu0 0.0
      %7984 = vmatpush1.msra.mxu0 0.0
      %7985 = vmatprep.subr.mxu0 0.0
      %7986 = vmatpush1.msra.mxu0 0.0
      %7987 = vmatprep.subr.mxu0 0.0
      %7988 = vmatpush1.msra.mxu0 0.0
      %7989 = vmatprep.subr.mxu0 0.0
      %7990 = vmatpush1.msra.mxu0 0.0
      %7991 = vmatprep.subr.mxu0 0.0
      %7992 = vmatpush1.msra.mxu0 0.0
      %7993 = vmatprep.subr.mxu0 0.0
      %7994 = vmatpush1.msra.mxu0 0.0
      %7995 = vmatprep.subr.mxu0 0.0
      %7996 = vmatpush1.msra.mxu0 0.0
      %7997 = vmatprep.subr.mxu0 0.0
      %7998 = vmatpush1.msra.mxu0 0.0
      %7999 = vmatprep.subr.mxu0 0.0
      %8000 = vmatpush1.msra.mxu0 0.0
      %8001 = vmatprep.subr.mxu0 0.0
      %8002 = vmatpush1.msra.mxu0 0.0
      %8003 = vmatprep.subr.mxu0 0.0
      %8004 = vmatpush1.msra.mxu0 0.0
      %8005 = vmatprep.subr.mxu0 0.0
      %8006 = vmatpush1.msra.mxu0 0.0
      %8007 = vmatprep.subr.mxu0 0.0
      %8008 = vmatpush1.msra.mxu0 0.0
      %8009 = vmatprep.subr.mxu0 0.0
      %8010 = vmatpush1.msra.mxu0 0.0
      %8011 = vmatprep.subr.mxu0 0.0
      %8012 = vmatpush1.msra.mxu0 0.0
      %8013 = vmatprep.subr.mxu0 0.0
      %8014 = vmatpush1.msra.mxu0 0.0
      %8015 = vmatprep.mubr.f32.mxu0 0.0
      %8016 = vmatmul.mubr.f32.gmra.mrb[0].mxu0 %v7853
      %v8017 = vpop.f32.mrb[0].mxu0
      %v8018 = vadd.f32 0.0, %v8017
      %v8019 = vpop.f32.mrb[0].mxu0
      %8020 = vmatprep.mubr.f32.mxu0 0.0
      %8021 = vmatmul.mubr.f32.gmra.mrb[0].mxu0 %v7856
      %v8022 = vpop.f32.mrb[0].mxu0
      %v8023 = vadd.f32 0.0, %v8022
      %v8024 = vpop.f32.mrb[0].mxu0
      %8025 = vmatprep.mubr.f32.mxu0 0.0
      %8026 = vmatmul.mubr.f32.gmra.mrb[0].mxu0 %v7859
      %v8027 = vpop.f32.mrb[0].mxu0
      %v8028 = vadd.f32 0.0, %v8027
      %v8029 = vpop.f32.mrb[0].mxu0
      %8030 = vmatprep.mubr.f32.mxu0 0.0
      %8031 = vmatmul.mubr.f32.gmra.mrb[0].mxu0 %v7862
      %v8032 = vpop.f32.mrb[0].mxu0
      %v8033 = vadd.f32 0.0, %v8032
      %v8034 = vpop.f32.mrb[0].mxu0
      %8035 = vmatprep.mubr.f32.mxu0 0.0
      %8036 = vmatmul.mubr.f32.gmra.mrb[0].mxu0 %v7865
      %v8037 = vpop.f32.mrb[0].mxu0
      %v8038 = vadd.f32 0.0, %v8037
      %v8039 = vpop.f32.mrb[0].mxu0
      %8040 = vmatprep.mubr.f32.mxu0 0.0
      %8041 = vmatmul.mubr.f32.gmra.mrb[0].mxu0 %v7868
      %v8042 = vpop.f32.mrb[0].mxu0
      %v8043 = vadd.f32 0.0, %v8042
      %v8044 = vpop.f32.mrb[0].mxu0
      %8045 = vmatprep.mubr.f32.mxu0 0.0
      %8046 = vmatmul.mubr.f32.gmra.mrb[0].mxu0 %v7871
      %v8047 = vpop.f32.mrb[0].mxu0
      %v8048 = vadd.f32 0.0, %v8047
      %v8049 = vpop.f32.mrb[0].mxu0
      %8050 = vmatprep.mubr.f32.mxu0 0.0
      %8051 = vmatmul.mubr.f32.gmra.mrb[0].mxu0 %v7874
      %v8052 = vpop.f32.mrb[0].mxu0
      %v8053 = vadd.f32 0.0, %v8052
      %v8054 = vpop.f32.mrb[0].mxu0
      %8055 = vmatprep.mubr.f32.mxu0 0.0
      %8056 = vmatmul.mubr.f32.gmra.mrb[0].mxu0 %v7877
      %v8057 = vpop.f32.mrb[0].mxu0
      %v8058 = vadd.f32 0.0, %v8057
      %v8059 = vpop.f32.mrb[0].mxu0
      %8060 = vmatprep.mubr.f32.mxu0 0.0
      %8061 = vmatmul.mubr.f32.gmra.mrb[0].mxu0 %v7880
      %v8062 = vpop.f32.mrb[0].mxu0
      %v8063 = vadd.f32 0.0, %v8062
      %v8064 = vpop.f32.mrb[0].mxu0
      %8065 = vmatprep.mubr.f32.mxu0 0.0
      %8066 = vmatmul.mubr.f32.gmra.mrb[0].mxu0 %v7883
      %v8067 = vpop.f32.mrb[0].mxu0
      %v8068 = vadd.f32 0.0, %v8067
      %v8069 = vpop.f32.mrb[0].mxu0
      %8070 = vmatprep.mubr.f32.mxu0 0.0
      %8071 = vmatmul.mubr.f32.gmra.mrb[0].mxu0 %v7886
      %v8072 = vpop.f32.mrb[0].mxu0
      %v8073 = vadd.f32 0.0, %v8072
      %v8074 = vpop.f32.mrb[0].mxu0
      %8075 = vmatprep.mubr.f32.mxu0 0.0
      %8076 = vmatmul.mubr.f32.gmra.mrb[0].mxu0 %v7889
      %v8077 = vpop.f32.mrb[0].mxu0
      %v8078 = vadd.f32 0.0, %v8077
      %v8079 = vpop.f32.mrb[0].mxu0
      %8080 = vmatprep.mubr.f32.mxu0 0.0
      %8081 = vmatmul.mubr.f32.gmra.mrb[0].mxu0 %v7892
      %v8082 = vpop.f32.mrb[0].mxu0
      %v8083 = vadd.f32 0.0, %v8082
      %v8084 = vpop.f32.mrb[0].mxu0
      %8085 = vmatprep.mubr.f32.mxu0 0.0
      %8086 = vmatmul.mubr.f32.gmra.mrb[0].mxu0 %v7895
      %v8087 = vpop.f32.mrb[0].mxu0
      %v8088 = vadd.f32 0.0, %v8087
      %v8089 = vpop.f32.mrb[0].mxu0
      %8090 = vmatprep.mubr.f32.mxu0 0.0
      %8091 = vmatmul.mubr.f32.gmra.mrb[0].mxu0 %v7898
      %v8092 = vpop.f32.mrb[0].mxu0
      %v8093 = vadd.f32 0.0, %v8092
      %v8094 = vpop.f32.mrb[0].mxu0
      %8095 = vmatprep.mubr.f32.mxu0 0.0
      %8096 = vmatmul.mubr.f32.gmra.mrb[0].mxu0 %v7901
      %v8097 = vpop.f32.mrb[0].mxu0
      %v8098 = vadd.f32 0.0, %v8097
      %v8099 = vpop.f32.mrb[0].mxu0
      %8100 = vmatprep.mubr.f32.mxu0 0.0
      %8101 = vmatmul.mubr.f32.gmra.mrb[0].mxu0 %v7904
      %v8102 = vpop.f32.mrb[0].mxu0
      %v8103 = vadd.f32 0.0, %v8102
      %v8104 = vpop.f32.mrb[0].mxu0
      %8105 = vmatprep.mubr.f32.mxu0 0.0
      %8106 = vmatmul.mubr.f32.gmra.mrb[0].mxu0 %v7907
      %v8107 = vpop.f32.mrb[0].mxu0
      %v8108 = vadd.f32 0.0, %v8107
      %v8109 = vpop.f32.mrb[0].mxu0
      %8110 = vmatprep.mubr.f32.mxu0 0.0
      %8111 = vmatmul.mubr.f32.gmra.mrb[0].mxu0 %v7910
      %v8112 = vpop.f32.mrb[0].mxu0
      %v8113 = vadd.f32 0.0, %v8112
      %v8114 = vpop.f32.mrb[0].mxu0
      %8115 = vmatprep.mubr.f32.mxu0 0.0
      %8116 = vmatmul.mubr.f32.gmra.mrb[0].mxu0 %v7913
      %v8117 = vpop.f32.mrb[0].mxu0
      %v8118 = vadd.f32 0.0, %v8117
      %v8119 = vpop.f32.mrb[0].mxu0
      %8120 = vmatprep.mubr.f32.mxu0 0.0
      %8121 = vmatmul.mubr.f32.gmra.mrb[0].mxu0 %v7916
      %v8122 = vpop.f32.mrb[0].mxu0
      %v8123 = vadd.f32 0.0, %v8122
      %v8124 = vpop.f32.mrb[0].mxu0
      %8125 = vmatprep.mubr.f32.mxu0 0.0
      %8126 = vmatmul.mubr.f32.gmra.mrb[0].mxu0 %v7919
      %v8127 = vpop.f32.mrb[0].mxu0
      %v8128 = vadd.f32 0.0, %v8127
      %v8129 = vpop.f32.mrb[0].mxu0
      %8130 = vmatprep.mubr.f32.mxu0 0.0
      %8131 = vmatmul.mubr.f32.gmra.mrb[0].mxu0 %v7922
      %v8132 = vpop.f32.mrb[0].mxu0
      %v8133 = vadd.f32 0.0, %v8132
      %v8134 = vpop.f32.mrb[0].mxu0
      %8135 = vmatprep.mubr.f32.mxu0 0.0
      %8136 = vmatmul.mubr.f32.gmra.mrb[0].mxu0 %v7925
      %v8137 = vpop.f32.mrb[0].mxu0
      %v8138 = vadd.f32 0.0, %v8137
      %v8139 = vpop.f32.mrb[0].mxu0
      %8140 = vmatprep.mubr.f32.mxu0 0.0
      %8141 = vmatmul.mubr.f32.gmra.mrb[0].mxu0 %v7928
      %v8142 = vpop.f32.mrb[0].mxu0
      %v8143 = vadd.f32 0.0, %v8142
      %v8144 = vpop.f32.mrb[0].mxu0
      %8145 = vmatprep.mubr.f32.mxu0 0.0
      %8146 = vmatmul.mubr.f32.gmra.mrb[0].mxu0 %v7931
      %v8147 = vpop.f32.mrb[0].mxu0
      %v8148 = vadd.f32 0.0, %v8147
      %v8149 = vpop.f32.mrb[0].mxu0
      %8150 = vmatprep.mubr.f32.mxu0 0.0
      %8151 = vmatmul.mubr.f32.gmra.mrb[0].mxu0 %v7934
      %v8152 = vpop.f32.mrb[0].mxu0
      %v8153 = vadd.f32 0.0, %v8152
      %v8154 = vpop.f32.mrb[0].mxu0
      %8155 = vmatprep.mubr.f32.mxu0 0.0
      %8156 = vmatmul.mubr.f32.gmra.mrb[0].mxu0 %v7937
      %v8157 = vpop.f32.mrb[0].mxu0
      %v8158 = vadd.f32 0.0, %v8157
      %v8159 = vpop.f32.mrb[0].mxu0
      %8160 = vmatprep.mubr.f32.mxu0 0.0
      %8161 = vmatmul.mubr.f32.gmra.mrb[0].mxu0 %v7940
      %v8162 = vpop.f32.mrb[0].mxu0
      %v8163 = vadd.f32 0.0, %v8162
      %v8164 = vpop.f32.mrb[0].mxu0
      %8165 = vmatprep.mubr.f32.mxu0 0.0
      %8166 = vmatmul.mubr.f32.gmra.mrb[0].mxu0 %v7943
      %v8167 = vpop.f32.mrb[0].mxu0
      %v8168 = vadd.f32 0.0, %v8167
      %v8169 = vpop.f32.mrb[0].mxu0
      %8170 = vmatprep.mubr.f32.mxu0 0.0
      %8171 = vmatmul.mubr.f32.gmra.mrb[0].mxu0 %v7946
      %v8172 = vpop.f32.mrb[0].mxu0
      %v8173 = vadd.f32 0.0, %v8172
      %v8174 = vpop.f32.mrb[0].mxu0
      %8175 = vdwg.mxu0
      %v8177 = vsel %vm293, %v7784, 0
      %v8180 = vsel %vm293, %v7785, 0
      %v8183 = vsel %vm293, %v7786, 0
      %v8186 = vsel %vm293, %v7787, 0
      %v8189 = vsel %vm293, %v7788, 0
      %v8192 = vsel %vm293, %v7789, 0
      %v8195 = vsel %vm293, %v7790, 0
      %v8198 = vsel %vm293, %v7791, 0
      %v8201 = vsel %vm293, %v7792, 0
      %v8204 = vsel %vm293, %v7793, 0
      %v8207 = vsel %vm293, %v7794, 0
      %v8210 = vsel %vm293, %v7795, 0
      %v8213 = vsel %vm293, %v7796, 0
      %v8216 = vsel %vm293, %v7797, 0
      %v8219 = vsel %vm293, %v7798, 0
      %v8222 = vsel %vm293, %v7799, 0
      %v8225 = vsel %vm293, %v7800, 0
      %v8228 = vsel %vm293, %v7801, 0
      %v8231 = vsel %vm293, %v7802, 0
      %v8234 = vsel %vm293, %v7803, 0
      %v8237 = vsel %vm293, %v7804, 0
      %v8240 = vsel %vm293, %v7805, 0
      %v8243 = vsel %vm293, %v7806, 0
      %v8246 = vsel %vm293, %v7807, 0
      %v8249 = vsel %vm293, %v7808, 0
      %v8252 = vsel %vm293, %v7809, 0
      %v8255 = vsel %vm293, %v7810, 0
      %v8258 = vsel %vm293, %v7811, 0
      %v8261 = vsel %vm293, %v7812, 0
      %v8264 = vsel %vm293, %v7813, 0
      %v8267 = vsel %vm293, %v7814, 0
      %v8270 = vsel %vm293, %v7815, 0
      %v8273 = vsel %vm390, %v7817, 0
      %8275 = vmatprep.subr.mxu0 0.0
      %8276 = vmatpush1.msra.mxu0 %v8273
      %8277 = vmatprep.subr.mxu0 0.0
      %8278 = vmatpush1.msra.mxu0 0.0
      %8279 = vmatprep.subr.mxu0 0.0
      %8280 = vmatpush1.msra.mxu0 0.0
      %8281 = vmatprep.subr.mxu0 0.0
      %8282 = vmatpush1.msra.mxu0 0.0
      %8283 = vmatprep.subr.mxu0 0.0
      %8284 = vmatpush1.msra.mxu0 0.0
      %8285 = vmatprep.subr.mxu0 0.0
      %8286 = vmatpush1.msra.mxu0 0.0
      %8287 = vmatprep.subr.mxu0 0.0
      %8288 = vmatpush1.msra.mxu0 0.0
      %8289 = vmatprep.subr.mxu0 0.0
      %8290 = vmatpush1.msra.mxu0 0.0
      %8291 = vmatprep.subr.mxu0 0.0
      %8292 = vmatpush1.msra.mxu0 0.0
      %8293 = vmatprep.subr.mxu0 0.0
      %8294 = vmatpush1.msra.mxu0 0.0
      %8295 = vmatprep.subr.mxu0 0.0
      %8296 = vmatpush1.msra.mxu0 0.0
      %8297 = vmatprep.subr.mxu0 0.0
      %8298 = vmatpush1.msra.mxu0 0.0
      %8299 = vmatprep.subr.mxu0 0.0
      %8300 = vmatpush1.msra.mxu0 0.0
      %8301 = vmatprep.subr.mxu0 0.0
      %8302 = vmatpush1.msra.mxu0 0.0
      %8303 = vmatprep.subr.mxu0 0.0
      %8304 = vmatpush1.msra.mxu0 0.0
      %8305 = vmatprep.subr.mxu0 0.0
      %8306 = vmatpush1.msra.mxu0 0.0
      %8307 = vmatprep.subr.mxu0 0.0
      %8308 = vmatpush1.msra.mxu0 0.0
      %8309 = vmatprep.subr.mxu0 0.0
      %8310 = vmatpush1.msra.mxu0 0.0
      %8311 = vmatprep.subr.mxu0 0.0
      %8312 = vmatpush1.msra.mxu0 0.0
      %8313 = vmatprep.subr.mxu0 0.0
      %8314 = vmatpush1.msra.mxu0 0.0
      %8315 = vmatprep.subr.mxu0 0.0
      %8316 = vmatpush1.msra.mxu0 0.0
      %8317 = vmatprep.subr.mxu0 0.0
      %8318 = vmatpush1.msra.mxu0 0.0
      %8319 = vmatprep.subr.mxu0 0.0
      %8320 = vmatpush1.msra.mxu0 0.0
      %8321 = vmatprep.subr.mxu0 0.0
      %8322 = vmatpush1.msra.mxu0 0.0
      %8323 = vmatprep.subr.mxu0 0.0
      %8324 = vmatpush1.msra.mxu0 0.0
      %8325 = vmatprep.subr.mxu0 0.0
      %8326 = vmatpush1.msra.mxu0 0.0
      %8327 = vmatprep.subr.mxu0 0.0
      %8328 = vmatpush1.msra.mxu0 0.0
      %8329 = vmatprep.subr.mxu0 0.0
      %8330 = vmatpush1.msra.mxu0 0.0
      %8331 = vmatprep.subr.mxu0 0.0
      %8332 = vmatpush1.msra.mxu0 0.0
      %8333 = vmatprep.subr.mxu0 0.0
      %8334 = vmatpush1.msra.mxu0 0.0
      %8335 = vmatprep.subr.mxu0 0.0
      %8336 = vmatpush1.msra.mxu0 0.0
      %8337 = vmatprep.subr.mxu0 0.0
      %8338 = vmatpush1.msra.mxu0 0.0
      %8339 = vmatprep.mubr.f32.mxu0 0.0
      %8340 = vmatmul.mubr.f32.gmra.mrb[0].mxu0 %v8177
      %v8341 = vpop.f32.mrb[0].mxu0
      %v8342 = vadd.f32 %v8018, %v8341
      %v8343 = vpop.f32.mrb[0].mxu0
      %8344 = vmatprep.mubr.f32.mxu0 0.0
      %8345 = vmatmul.mubr.f32.gmra.mrb[0].mxu0 %v8180
      %v8346 = vpop.f32.mrb[0].mxu0
      %v8347 = vadd.f32 %v8023, %v8346
      %v8348 = vpop.f32.mrb[0].mxu0
      %8349 = vmatprep.mubr.f32.mxu0 0.0
      %8350 = vmatmul.mubr.f32.gmra.mrb[0].mxu0 %v8183
      %v8351 = vpop.f32.mrb[0].mxu0
      %v8352 = vadd.f32 %v8028, %v8351
      %v8353 = vpop.f32.mrb[0].mxu0
      %8354 = vmatprep.mubr.f32.mxu0 0.0
      %8355 = vmatmul.mubr.f32.gmra.mrb[0].mxu0 %v8186
      %v8356 = vpop.f32.mrb[0].mxu0
      %v8357 = vadd.f32 %v8033, %v8356
      %v8358 = vpop.f32.mrb[0].mxu0
      %8359 = vmatprep.mubr.f32.mxu0 0.0
      %8360 = vmatmul.mubr.f32.gmra.mrb[0].mxu0 %v8189
      %v8361 = vpop.f32.mrb[0].mxu0
      %v8362 = vadd.f32 %v8038, %v8361
      %v8363 = vpop.f32.mrb[0].mxu0
      %8364 = vmatprep.mubr.f32.mxu0 0.0
      %8365 = vmatmul.mubr.f32.gmra.mrb[0].mxu0 %v8192
      %v8366 = vpop.f32.mrb[0].mxu0
      %v8367 = vadd.f32 %v8043, %v8366
      %v8368 = vpop.f32.mrb[0].mxu0
      %8369 = vmatprep.mubr.f32.mxu0 0.0
      %8370 = vmatmul.mubr.f32.gmra.mrb[0].mxu0 %v8195
      %v8371 = vpop.f32.mrb[0].mxu0
      %v8372 = vadd.f32 %v8048, %v8371
      %v8373 = vpop.f32.mrb[0].mxu0
      %8374 = vmatprep.mubr.f32.mxu0 0.0
      %8375 = vmatmul.mubr.f32.gmra.mrb[0].mxu0 %v8198
      %v8376 = vpop.f32.mrb[0].mxu0
      %v8377 = vadd.f32 %v8053, %v8376
      %v8378 = vpop.f32.mrb[0].mxu0
      %8379 = vmatprep.mubr.f32.mxu0 0.0
      %8380 = vmatmul.mubr.f32.gmra.mrb[0].mxu0 %v8201
      %v8381 = vpop.f32.mrb[0].mxu0
      %v8382 = vadd.f32 %v8058, %v8381
      %v8383 = vpop.f32.mrb[0].mxu0
      %8384 = vmatprep.mubr.f32.mxu0 0.0
      %8385 = vmatmul.mubr.f32.gmra.mrb[0].mxu0 %v8204
      %v8386 = vpop.f32.mrb[0].mxu0
      %v8387 = vadd.f32 %v8063, %v8386
      %v8388 = vpop.f32.mrb[0].mxu0
      %8389 = vmatprep.mubr.f32.mxu0 0.0
      %8390 = vmatmul.mubr.f32.gmra.mrb[0].mxu0 %v8207
      %v8391 = vpop.f32.mrb[0].mxu0
      %v8392 = vadd.f32 %v8068, %v8391
      %v8393 = vpop.f32.mrb[0].mxu0
      %8394 = vmatprep.mubr.f32.mxu0 0.0
      %8395 = vmatmul.mubr.f32.gmra.mrb[0].mxu0 %v8210
      %v8396 = vpop.f32.mrb[0].mxu0
      %v8397 = vadd.f32 %v8073, %v8396
      %v8398 = vpop.f32.mrb[0].mxu0
      %8399 = vmatprep.mubr.f32.mxu0 0.0
      %8400 = vmatmul.mubr.f32.gmra.mrb[0].mxu0 %v8213
      %v8401 = vpop.f32.mrb[0].mxu0
      %v8402 = vadd.f32 %v8078, %v8401
      %v8403 = vpop.f32.mrb[0].mxu0
      %8404 = vmatprep.mubr.f32.mxu0 0.0
      %8405 = vmatmul.mubr.f32.gmra.mrb[0].mxu0 %v8216
      %v8406 = vpop.f32.mrb[0].mxu0
      %v8407 = vadd.f32 %v8083, %v8406
      %v8408 = vpop.f32.mrb[0].mxu0
      %8409 = vmatprep.mubr.f32.mxu0 0.0
      %8410 = vmatmul.mubr.f32.gmra.mrb[0].mxu0 %v8219
      %v8411 = vpop.f32.mrb[0].mxu0
      %v8412 = vadd.f32 %v8088, %v8411
      %v8413 = vpop.f32.mrb[0].mxu0
      %8414 = vmatprep.mubr.f32.mxu0 0.0
      %8415 = vmatmul.mubr.f32.gmra.mrb[0].mxu0 %v8222
      %v8416 = vpop.f32.mrb[0].mxu0
      %v8417 = vadd.f32 %v8093, %v8416
      %v8418 = vpop.f32.mrb[0].mxu0
      %8419 = vmatprep.mubr.f32.mxu0 0.0
      %8420 = vmatmul.mubr.f32.gmra.mrb[0].mxu0 %v8225
      %v8421 = vpop.f32.mrb[0].mxu0
      %v8422 = vadd.f32 %v8098, %v8421
      %v8423 = vpop.f32.mrb[0].mxu0
      %8424 = vmatprep.mubr.f32.mxu0 0.0
      %8425 = vmatmul.mubr.f32.gmra.mrb[0].mxu0 %v8228
      %v8426 = vpop.f32.mrb[0].mxu0
      %v8427 = vadd.f32 %v8103, %v8426
      %v8428 = vpop.f32.mrb[0].mxu0
      %8429 = vmatprep.mubr.f32.mxu0 0.0
      %8430 = vmatmul.mubr.f32.gmra.mrb[0].mxu0 %v8231
      %v8431 = vpop.f32.mrb[0].mxu0
      %v8432 = vadd.f32 %v8108, %v8431
      %v8433 = vpop.f32.mrb[0].mxu0
      %8434 = vmatprep.mubr.f32.mxu0 0.0
      %8435 = vmatmul.mubr.f32.gmra.mrb[0].mxu0 %v8234
      %v8436 = vpop.f32.mrb[0].mxu0
      %v8437 = vadd.f32 %v8113, %v8436
      %v8438 = vpop.f32.mrb[0].mxu0
      %8439 = vmatprep.mubr.f32.mxu0 0.0
      %8440 = vmatmul.mubr.f32.gmra.mrb[0].mxu0 %v8237
      %v8441 = vpop.f32.mrb[0].mxu0
      %v8442 = vadd.f32 %v8118, %v8441
      %v8443 = vpop.f32.mrb[0].mxu0
      %8444 = vmatprep.mubr.f32.mxu0 0.0
      %8445 = vmatmul.mubr.f32.gmra.mrb[0].mxu0 %v8240
      %v8446 = vpop.f32.mrb[0].mxu0
      %v8447 = vadd.f32 %v8123, %v8446
      %v8448 = vpop.f32.mrb[0].mxu0
      %8449 = vmatprep.mubr.f32.mxu0 0.0
      %8450 = vmatmul.mubr.f32.gmra.mrb[0].mxu0 %v8243
      %v8451 = vpop.f32.mrb[0].mxu0
      %v8452 = vadd.f32 %v8128, %v8451
      %v8453 = vpop.f32.mrb[0].mxu0
      %8454 = vmatprep.mubr.f32.mxu0 0.0
      %8455 = vmatmul.mubr.f32.gmra.mrb[0].mxu0 %v8246
      %v8456 = vpop.f32.mrb[0].mxu0
      %v8457 = vadd.f32 %v8133, %v8456
      %v8458 = vpop.f32.mrb[0].mxu0
      %8459 = vmatprep.mubr.f32.mxu0 0.0
      %8460 = vmatmul.mubr.f32.gmra.mrb[0].mxu0 %v8249
      %v8461 = vpop.f32.mrb[0].mxu0
      %v8462 = vadd.f32 %v8138, %v8461
      %v8463 = vpop.f32.mrb[0].mxu0
      %8464 = vmatprep.mubr.f32.mxu0 0.0
      %8465 = vmatmul.mubr.f32.gmra.mrb[0].mxu0 %v8252
      %v8466 = vpop.f32.mrb[0].mxu0
      %v8467 = vadd.f32 %v8143, %v8466
      %v8468 = vpop.f32.mrb[0].mxu0
      %8469 = vmatprep.mubr.f32.mxu0 0.0
      %8470 = vmatmul.mubr.f32.gmra.mrb[0].mxu0 %v8255
      %v8471 = vpop.f32.mrb[0].mxu0
      %v8472 = vadd.f32 %v8148, %v8471
      %v8473 = vpop.f32.mrb[0].mxu0
      %8474 = vmatprep.mubr.f32.mxu0 0.0
      %8475 = vmatmul.mubr.f32.gmra.mrb[0].mxu0 %v8258
      %v8476 = vpop.f32.mrb[0].mxu0
      %v8477 = vadd.f32 %v8153, %v8476
      %v8478 = vpop.f32.mrb[0].mxu0
      %8479 = vmatprep.mubr.f32.mxu0 0.0
      %8480 = vmatmul.mubr.f32.gmra.mrb[0].mxu0 %v8261
      %v8481 = vpop.f32.mrb[0].mxu0
      %v8482 = vadd.f32 %v8158, %v8481
      %v8483 = vpop.f32.mrb[0].mxu0
      %8484 = vmatprep.mubr.f32.mxu0 0.0
      %8485 = vmatmul.mubr.f32.gmra.mrb[0].mxu0 %v8264
      %v8486 = vpop.f32.mrb[0].mxu0
      %v8487 = vadd.f32 %v8163, %v8486
      %v8488 = vpop.f32.mrb[0].mxu0
      %8489 = vmatprep.mubr.f32.mxu0 0.0
      %8490 = vmatmul.mubr.f32.gmra.mrb[0].mxu0 %v8267
      %v8491 = vpop.f32.mrb[0].mxu0
      %v8492 = vadd.f32 %v8168, %v8491
      %v8493 = vpop.f32.mrb[0].mxu0
      %8494 = vmatprep.mubr.f32.mxu0 0.0
      %8495 = vmatmul.mubr.f32.gmra.mrb[0].mxu0 %v8270
      %v8496 = vpop.f32.mrb[0].mxu0
      %v8497 = vadd.f32 %v8173, %v8496
      %v8498 = vpop.f32.mrb[0].mxu0
      %8499 = vdwg.mxu0
      %v8500 = vld [vmem:[%s219 + $0x24] sm:$0xff]
      %v8501 = vld [vmem:[%s219 + $0x2c] sm:$0xff]
      %v8502 = vld [vmem:[%s219 + $0x5c] sm:$0xff]
      %v8503 = vld [vmem:[%s219 + $0x64] sm:$0xff]
      %v8504 = vld [vmem:[%s219 + $0x94] sm:$0xff]
      %v8505 = vld [vmem:[%s219 + $0x9c] sm:$0xff]
      %v8506 = vld [vmem:[%s219 + $0xcc] sm:$0xff]
      %v8507 = vld [vmem:[%s219 + $0xd4] sm:$0xff]
      %v8508 = vld [vmem:[%s219 + $0x104] sm:$0xff]
      %v8509 = vld [vmem:[%s219 + $0x10c] sm:$0xff]
      %v8510 = vld [vmem:[%s219 + $0x13c] sm:$0xff]
      %v8511 = vld [vmem:[%s219 + $0x144] sm:$0xff]
      %v8512 = vld [vmem:[%s219 + $0x174] sm:$0xff]
      %v8513 = vld [vmem:[%s219 + $0x17c] sm:$0xff]
      %v8514 = vld [vmem:[%s219 + $0x1ac] sm:$0xff]
      %v8515 = vld [vmem:[%s219 + $0x1b4] sm:$0xff]
      %v8516 = vld [vmem:[%s219 + $0x1e4] sm:$0xff]
      %v8517 = vld [vmem:[%s219 + $0x1ec] sm:$0xff]
      %v8518 = vld [vmem:[%s219 + $0x21c] sm:$0xff]
      %v8519 = vld [vmem:[%s219 + $0x224] sm:$0xff]
      %v8520 = vld [vmem:[%s219 + $0x254] sm:$0xff]
      %v8521 = vld [vmem:[%s219 + $0x25c] sm:$0xff]
      %v8522 = vld [vmem:[%s219 + $0x28c] sm:$0xff]
      %v8523 = vld [vmem:[%s219 + $0x294] sm:$0xff]
      %v8524 = vld [vmem:[%s219 + $0x2c4] sm:$0xff]
      %v8525 = vld [vmem:[%s219 + $0x2cc] sm:$0xff]
      %v8526 = vld [vmem:[%s219 + $0x2fc] sm:$0xff]
      %v8527 = vld [vmem:[%s219 + $0x304] sm:$0xff]
      %v8528 = vld [vmem:[%s219 + $0x334] sm:$0xff]
      %v8529 = vld [vmem:[%s219 + $0x33c] sm:$0xff]
      %v8530 = vld [vmem:[%s219 + $0x36c] sm:$0xff]
      %v8531 = vld [vmem:[%s219 + $0x374] sm:$0xff]
      %s8532 = scalar_lea.vmem %s1, 80
      %v8533 = vld [vmem:[%s8532] sm:$0xf]
      %v8535 = vsel %vm293, %v8500, 0
      %v8538 = vsel %vm293, %v8501, 0
      %v8541 = vsel %vm293, %v8502, 0
      %v8544 = vsel %vm293, %v8503, 0
      %v8547 = vsel %vm293, %v8504, 0
      %v8550 = vsel %vm293, %v8505, 0
      %v8553 = vsel %vm293, %v8506, 0
      %v8556 = vsel %vm293, %v8507, 0
      %v8559 = vsel %vm293, %v8508, 0
      %v8562 = vsel %vm293, %v8509, 0
      %v8565 = vsel %vm293, %v8510, 0
      %v8568 = vsel %vm293, %v8511, 0
      %v8571 = vsel %vm293, %v8512, 0
      %v8574 = vsel %vm293, %v8513, 0
      %v8577 = vsel %vm293, %v8514, 0
      %v8580 = vsel %vm293, %v8515, 0
      %v8583 = vsel %vm293, %v8516, 0
      %v8586 = vsel %vm293, %v8517, 0
      %v8589 = vsel %vm293, %v8518, 0
      %v8592 = vsel %vm293, %v8519, 0
      %v8595 = vsel %vm293, %v8520, 0
      %v8598 = vsel %vm293, %v8521, 0
      %v8601 = vsel %vm293, %v8522, 0
      %v8604 = vsel %vm293, %v8523, 0
      %v8607 = vsel %vm293, %v8524, 0
      %v8610 = vsel %vm293, %v8525, 0
      %v8613 = vsel %vm293, %v8526, 0
      %v8616 = vsel %vm293, %v8527, 0
      %v8619 = vsel %vm293, %v8528, 0
      %v8622 = vsel %vm293, %v8529, 0
      %v8625 = vsel %vm293, %v8530, 0
      %v8628 = vsel %vm293, %v8531, 0
      %v8631 = vsel %vm390, %v8533, 0
      %8633 = vmatprep.subr.mxu0 0.0
      %8634 = vmatpush1.msra.mxu0 %v8631
      %8635 = vmatprep.subr.mxu0 0.0
      %8636 = vmatpush1.msra.mxu0 0.0
      %8637 = vmatprep.subr.mxu0 0.0
      %8638 = vmatpush1.msra.mxu0 0.0
      %8639 = vmatprep.subr.mxu0 0.0
      %8640 = vmatpush1.msra.mxu0 0.0
      %8641 = vmatprep.subr.mxu0 0.0
      %8642 = vmatpush1.msra.mxu0 0.0
      %8643 = vmatprep.subr.mxu0 0.0
      %8644 = vmatpush1.msra.mxu0 0.0
      %8645 = vmatprep.subr.mxu0 0.0
      %8646 = vmatpush1.msra.mxu0 0.0
      %8647 = vmatprep.subr.mxu0 0.0
      %8648 = vmatpush1.msra.mxu0 0.0
      %8649 = vmatprep.subr.mxu0 0.0
      %8650 = vmatpush1.msra.mxu0 0.0
      %8651 = vmatprep.subr.mxu0 0.0
      %8652 = vmatpush1.msra.mxu0 0.0
      %8653 = vmatprep.subr.mxu0 0.0
      %8654 = vmatpush1.msra.mxu0 0.0
      %8655 = vmatprep.subr.mxu0 0.0
      %8656 = vmatpush1.msra.mxu0 0.0
      %8657 = vmatprep.subr.mxu0 0.0
      %8658 = vmatpush1.msra.mxu0 0.0
      %8659 = vmatprep.subr.mxu0 0.0
      %8660 = vmatpush1.msra.mxu0 0.0
      %8661 = vmatprep.subr.mxu0 0.0
      %8662 = vmatpush1.msra.mxu0 0.0
      %8663 = vmatprep.subr.mxu0 0.0
      %8664 = vmatpush1.msra.mxu0 0.0
      %8665 = vmatprep.subr.mxu0 0.0
      %8666 = vmatpush1.msra.mxu0 0.0
      %8667 = vmatprep.subr.mxu0 0.0
      %8668 = vmatpush1.msra.mxu0 0.0
      %8669 = vmatprep.subr.mxu0 0.0
      %8670 = vmatpush1.msra.mxu0 0.0
      %8671 = vmatprep.subr.mxu0 0.0
      %8672 = vmatpush1.msra.mxu0 0.0
      %8673 = vmatprep.subr.mxu0 0.0
      %8674 = vmatpush1.msra.mxu0 0.0
      %8675 = vmatprep.subr.mxu0 0.0
      %8676 = vmatpush1.msra.mxu0 0.0
      %8677 = vmatprep.subr.mxu0 0.0
      %8678 = vmatpush1.msra.mxu0 0.0
      %8679 = vmatprep.subr.mxu0 0.0
      %8680 = vmatpush1.msra.mxu0 0.0
      %8681 = vmatprep.subr.mxu0 0.0
      %8682 = vmatpush1.msra.mxu0 0.0
      %8683 = vmatprep.subr.mxu0 0.0
      %8684 = vmatpush1.msra.mxu0 0.0
      %8685 = vmatprep.subr.mxu0 0.0
      %8686 = vmatpush1.msra.mxu0 0.0
      %8687 = vmatprep.subr.mxu0 0.0
      %8688 = vmatpush1.msra.mxu0 0.0
      %8689 = vmatprep.subr.mxu0 0.0
      %8690 = vmatpush1.msra.mxu0 0.0
      %8691 = vmatprep.subr.mxu0 0.0
      %8692 = vmatpush1.msra.mxu0 0.0
      %8693 = vmatprep.subr.mxu0 0.0
      %8694 = vmatpush1.msra.mxu0 0.0
      %8695 = vmatprep.subr.mxu0 0.0
      %8696 = vmatpush1.msra.mxu0 0.0
      %8697 = vmatprep.mubr.f32.mxu0 0.0
      %8698 = vmatmul.mubr.f32.gmra.mrb[0].mxu0 %v8535
      %v8699 = vpop.f32.mrb[0].mxu0
      %v8700 = vadd.f32 0.0, %v8699
      %v8701 = vpop.f32.mrb[0].mxu0
      %8702 = vmatprep.mubr.f32.mxu0 0.0
      %8703 = vmatmul.mubr.f32.gmra.mrb[0].mxu0 %v8538
      %v8704 = vpop.f32.mrb[0].mxu0
      %v8705 = vadd.f32 0.0, %v8704
      %v8706 = vpop.f32.mrb[0].mxu0
      %8707 = vmatprep.mubr.f32.mxu0 0.0
      %8708 = vmatmul.mubr.f32.gmra.mrb[0].mxu0 %v8541
      %v8709 = vpop.f32.mrb[0].mxu0
      %v8710 = vadd.f32 0.0, %v8709
      %v8711 = vpop.f32.mrb[0].mxu0
      %8712 = vmatprep.mubr.f32.mxu0 0.0
      %8713 = vmatmul.mubr.f32.gmra.mrb[0].mxu0 %v8544
      %v8714 = vpop.f32.mrb[0].mxu0
      %v8715 = vadd.f32 0.0, %v8714
      %v8716 = vpop.f32.mrb[0].mxu0
      %8717 = vmatprep.mubr.f32.mxu0 0.0
      %8718 = vmatmul.mubr.f32.gmra.mrb[0].mxu0 %v8547
      %v8719 = vpop.f32.mrb[0].mxu0
      %v8720 = vadd.f32 0.0, %v8719
      %v8721 = vpop.f32.mrb[0].mxu0
      %8722 = vmatprep.mubr.f32.mxu0 0.0
      %8723 = vmatmul.mubr.f32.gmra.mrb[0].mxu0 %v8550
      %v8724 = vpop.f32.mrb[0].mxu0
      %v8725 = vadd.f32 0.0, %v8724
      %v8726 = vpop.f32.mrb[0].mxu0
      %8727 = vmatprep.mubr.f32.mxu0 0.0
      %8728 = vmatmul.mubr.f32.gmra.mrb[0].mxu0 %v8553
      %v8729 = vpop.f32.mrb[0].mxu0
      %v8730 = vadd.f32 0.0, %v8729
      %v8731 = vpop.f32.mrb[0].mxu0
      %8732 = vmatprep.mubr.f32.mxu0 0.0
      %8733 = vmatmul.mubr.f32.gmra.mrb[0].mxu0 %v8556
      %v8734 = vpop.f32.mrb[0].mxu0
      %v8735 = vadd.f32 0.0, %v8734
      %v8736 = vpop.f32.mrb[0].mxu0
      %8737 = vmatprep.mubr.f32.mxu0 0.0
      %8738 = vmatmul.mubr.f32.gmra.mrb[0].mxu0 %v8559
      %v8739 = vpop.f32.mrb[0].mxu0
      %v8740 = vadd.f32 0.0, %v8739
      %v8741 = vpop.f32.mrb[0].mxu0
      %8742 = vmatprep.mubr.f32.mxu0 0.0
      %8743 = vmatmul.mubr.f32.gmra.mrb[0].mxu0 %v8562
      %v8744 = vpop.f32.mrb[0].mxu0
      %v8745 = vadd.f32 0.0, %v8744
      %v8746 = vpop.f32.mrb[0].mxu0
      %8747 = vmatprep.mubr.f32.mxu0 0.0
      %8748 = vmatmul.mubr.f32.gmra.mrb[0].mxu0 %v8565
      %v8749 = vpop.f32.mrb[0].mxu0
      %v8750 = vadd.f32 0.0, %v8749
      %v8751 = vpop.f32.mrb[0].mxu0
      %8752 = vmatprep.mubr.f32.mxu0 0.0
      %8753 = vmatmul.mubr.f32.gmra.mrb[0].mxu0 %v8568
      %v8754 = vpop.f32.mrb[0].mxu0
      %v8755 = vadd.f32 0.0, %v8754
      %v8756 = vpop.f32.mrb[0].mxu0
      %8757 = vmatprep.mubr.f32.mxu0 0.0
      %8758 = vmatmul.mubr.f32.gmra.mrb[0].mxu0 %v8571
      %v8759 = vpop.f32.mrb[0].mxu0
      %v8760 = vadd.f32 0.0, %v8759
      %v8761 = vpop.f32.mrb[0].mxu0
      %8762 = vmatprep.mubr.f32.mxu0 0.0
      %8763 = vmatmul.mubr.f32.gmra.mrb[0].mxu0 %v8574
      %v8764 = vpop.f32.mrb[0].mxu0
      %v8765 = vadd.f32 0.0, %v8764
      %v8766 = vpop.f32.mrb[0].mxu0
      %8767 = vmatprep.mubr.f32.mxu0 0.0
      %8768 = vmatmul.mubr.f32.gmra.mrb[0].mxu0 %v8577
      %v8769 = vpop.f32.mrb[0].mxu0
      %v8770 = vadd.f32 0.0, %v8769
      %v8771 = vpop.f32.mrb[0].mxu0
      %8772 = vmatprep.mubr.f32.mxu0 0.0
      %8773 = vmatmul.mubr.f32.gmra.mrb[0].mxu0 %v8580
      %v8774 = vpop.f32.mrb[0].mxu0
      %v8775 = vadd.f32 0.0, %v8774
      %v8776 = vpop.f32.mrb[0].mxu0
      %8777 = vmatprep.mubr.f32.mxu0 0.0
      %8778 = vmatmul.mubr.f32.gmra.mrb[0].mxu0 %v8583
      %v8779 = vpop.f32.mrb[0].mxu0
      %v8780 = vadd.f32 0.0, %v8779
      %v8781 = vpop.f32.mrb[0].mxu0
      %8782 = vmatprep.mubr.f32.mxu0 0.0
      %8783 = vmatmul.mubr.f32.gmra.mrb[0].mxu0 %v8586
      %v8784 = vpop.f32.mrb[0].mxu0
      %v8785 = vadd.f32 0.0, %v8784
      %v8786 = vpop.f32.mrb[0].mxu0
      %8787 = vmatprep.mubr.f32.mxu0 0.0
      %8788 = vmatmul.mubr.f32.gmra.mrb[0].mxu0 %v8589
      %v8789 = vpop.f32.mrb[0].mxu0
      %v8790 = vadd.f32 0.0, %v8789
      %v8791 = vpop.f32.mrb[0].mxu0
      %8792 = vmatprep.mubr.f32.mxu0 0.0
      %8793 = vmatmul.mubr.f32.gmra.mrb[0].mxu0 %v8592
      %v8794 = vpop.f32.mrb[0].mxu0
      %v8795 = vadd.f32 0.0, %v8794
      %v8796 = vpop.f32.mrb[0].mxu0
      %8797 = vmatprep.mubr.f32.mxu0 0.0
      %8798 = vmatmul.mubr.f32.gmra.mrb[0].mxu0 %v8595
      %v8799 = vpop.f32.mrb[0].mxu0
      %v8800 = vadd.f32 0.0, %v8799
      %v8801 = vpop.f32.mrb[0].mxu0
      %8802 = vmatprep.mubr.f32.mxu0 0.0
      %8803 = vmatmul.mubr.f32.gmra.mrb[0].mxu0 %v8598
      %v8804 = vpop.f32.mrb[0].mxu0
      %v8805 = vadd.f32 0.0, %v8804
      %v8806 = vpop.f32.mrb[0].mxu0
      %8807 = vmatprep.mubr.f32.mxu0 0.0
      %8808 = vmatmul.mubr.f32.gmra.mrb[0].mxu0 %v8601
      %v8809 = vpop.f32.mrb[0].mxu0
      %v8810 = vadd.f32 0.0, %v8809
      %v8811 = vpop.f32.mrb[0].mxu0
      %8812 = vmatprep.mubr.f32.mxu0 0.0
      %8813 = vmatmul.mubr.f32.gmra.mrb[0].mxu0 %v8604
      %v8814 = vpop.f32.mrb[0].mxu0
      %v8815 = vadd.f32 0.0, %v8814
      %v8816 = vpop.f32.mrb[0].mxu0
      %8817 = vmatprep.mubr.f32.mxu0 0.0
      %8818 = vmatmul.mubr.f32.gmra.mrb[0].mxu0 %v8607
      %v8819 = vpop.f32.mrb[0].mxu0
      %v8820 = vadd.f32 0.0, %v8819
      %v8821 = vpop.f32.mrb[0].mxu0
      %8822 = vmatprep.mubr.f32.mxu0 0.0
      %8823 = vmatmul.mubr.f32.gmra.mrb[0].mxu0 %v8610
      %v8824 = vpop.f32.mrb[0].mxu0
      %v8825 = vadd.f32 0.0, %v8824
      %v8826 = vpop.f32.mrb[0].mxu0
      %8827 = vmatprep.mubr.f32.mxu0 0.0
      %8828 = vmatmul.mubr.f32.gmra.mrb[0].mxu0 %v8613
      %v8829 = vpop.f32.mrb[0].mxu0
      %v8830 = vadd.f32 0.0, %v8829
      %v8831 = vpop.f32.mrb[0].mxu0
      %8832 = vmatprep.mubr.f32.mxu0 0.0
      %8833 = vmatmul.mubr.f32.gmra.mrb[0].mxu0 %v8616
      %v8834 = vpop.f32.mrb[0].mxu0
      %v8835 = vadd.f32 0.0, %v8834
      %v8836 = vpop.f32.mrb[0].mxu0
      %8837 = vmatprep.mubr.f32.mxu0 0.0
      %8838 = vmatmul.mubr.f32.gmra.mrb[0].mxu0 %v8619
      %v8839 = vpop.f32.mrb[0].mxu0
      %v8840 = vadd.f32 0.0, %v8839
      %v8841 = vpop.f32.mrb[0].mxu0
      %8842 = vmatprep.mubr.f32.mxu0 0.0
      %8843 = vmatmul.mubr.f32.gmra.mrb[0].mxu0 %v8622
      %v8844 = vpop.f32.mrb[0].mxu0
      %v8845 = vadd.f32 0.0, %v8844
      %v8846 = vpop.f32.mrb[0].mxu0
      %8847 = vmatprep.mubr.f32.mxu0 0.0
      %8848 = vmatmul.mubr.f32.gmra.mrb[0].mxu0 %v8625
      %v8849 = vpop.f32.mrb[0].mxu0
      %v8850 = vadd.f32 0.0, %v8849
      %v8851 = vpop.f32.mrb[0].mxu0
      %8852 = vmatprep.mubr.f32.mxu0 0.0
      %8853 = vmatmul.mubr.f32.gmra.mrb[0].mxu0 %v8628
      %v8854 = vpop.f32.mrb[0].mxu0
      %v8855 = vadd.f32 0.0, %v8854
      %v8856 = vpop.f32.mrb[0].mxu0
      %8857 = vdwg.mxu0
      %v8858 = vadd.f32 %v8342, %v8700
      %v8859 = vadd.f32 %v8347, %v8705
      %v8860 = vadd.f32 %v8352, %v8710
      %v8861 = vadd.f32 %v8357, %v8715
      %v8862 = vadd.f32 %v8362, %v8720
      %v8863 = vadd.f32 %v8367, %v8725
      %v8864 = vadd.f32 %v8372, %v8730
      %v8865 = vadd.f32 %v8377, %v8735
      %v8866 = vadd.f32 %v8382, %v8740
      %v8867 = vadd.f32 %v8387, %v8745
      %v8868 = vadd.f32 %v8392, %v8750
      %v8869 = vadd.f32 %v8397, %v8755
      %v8870 = vadd.f32 %v8402, %v8760
      %v8871 = vadd.f32 %v8407, %v8765
      %v8872 = vadd.f32 %v8412, %v8770
      %v8873 = vadd.f32 %v8417, %v8775
      %v8874 = vadd.f32 %v8422, %v8780
      %v8875 = vadd.f32 %v8427, %v8785
      %v8876 = vadd.f32 %v8432, %v8790
      %v8877 = vadd.f32 %v8437, %v8795
      %v8878 = vadd.f32 %v8442, %v8800
      %v8879 = vadd.f32 %v8447, %v8805
      %v8880 = vadd.f32 %v8452, %v8810
      %v8881 = vadd.f32 %v8457, %v8815
      %v8882 = vadd.f32 %v8462, %v8820
      %v8883 = vadd.f32 %v8467, %v8825
      %v8884 = vadd.f32 %v8472, %v8830
      %v8885 = vadd.f32 %v8477, %v8835
      %v8886 = vadd.f32 %v8482, %v8840
      %v8887 = vadd.f32 %v8487, %v8845
      %v8888 = vadd.f32 %v8492, %v8850
      %v8889 = vadd.f32 %v8497, %v8855
      %v8890 = vld [vmem:[%s1333] sm:$0xff]
      %v8891 = vld [vmem:[%s1333 + $0x8] sm:$0xff]
      %v8892 = vld [vmem:[%s1333 + $0x38] sm:$0xff]
      %v8893 = vld [vmem:[%s1333 + $0x40] sm:$0xff]
      %v8894 = vld [vmem:[%s1333 + $0x70] sm:$0xff]
      %v8895 = vld [vmem:[%s1333 + $0x78] sm:$0xff]
      %v8896 = vld [vmem:[%s1333 + $0xa8] sm:$0xff]
      %v8897 = vld [vmem:[%s1333 + $0xb0] sm:$0xff]
      %v8898 = vld [vmem:[%s1333 + $0xe0] sm:$0xff]
      %v8899 = vld [vmem:[%s1333 + $0xe8] sm:$0xff]
      %v8900 = vld [vmem:[%s1333 + $0x118] sm:$0xff]
      %v8901 = vld [vmem:[%s1333 + $0x120] sm:$0xff]
      %v8902 = vld [vmem:[%s1333 + $0x150] sm:$0xff]
      %v8903 = vld [vmem:[%s1333 + $0x158] sm:$0xff]
      %v8904 = vld [vmem:[%s1333 + $0x188] sm:$0xff]
      %v8905 = vld [vmem:[%s1333 + $0x190] sm:$0xff]
      %v8906 = vld [vmem:[%s1333 + $0x1c0] sm:$0xff]
      %v8907 = vld [vmem:[%s1333 + $0x1c8] sm:$0xff]
      %v8908 = vld [vmem:[%s1333 + $0x1f8] sm:$0xff]
      %v8909 = vld [vmem:[%s1333 + $0x200] sm:$0xff]
      %v8910 = vld [vmem:[%s1333 + $0x230] sm:$0xff]
      %v8911 = vld [vmem:[%s1333 + $0x238] sm:$0xff]
      %v8912 = vld [vmem:[%s1333 + $0x268] sm:$0xff]
      %v8913 = vld [vmem:[%s1333 + $0x270] sm:$0xff]
      %v8914 = vld [vmem:[%s1333 + $0x2a0] sm:$0xff]
      %v8915 = vld [vmem:[%s1333 + $0x2a8] sm:$0xff]
      %v8916 = vld [vmem:[%s1333 + $0x2d8] sm:$0xff]
      %v8917 = vld [vmem:[%s1333 + $0x2e0] sm:$0xff]
      %v8918 = vld [vmem:[%s1333 + $0x310] sm:$0xff]
      %v8919 = vld [vmem:[%s1333 + $0x318] sm:$0xff]
      %v8920 = vld [vmem:[%s1333 + $0x348] sm:$0xff]
      %v8921 = vld [vmem:[%s1333 + $0x350] sm:$0xff]
      %s8922 = scalar_lea.vmem %s1, 84
      %v8923 = vld [vmem:[%s8922] sm:$0xf]
      %v8925 = vsel %vm293, %v8890, 0
      %v8928 = vsel %vm293, %v8891, 0
      %v8931 = vsel %vm293, %v8892, 0
      %v8934 = vsel %vm293, %v8893, 0
      %v8937 = vsel %vm293, %v8894, 0
      %v8940 = vsel %vm293, %v8895, 0
      %v8943 = vsel %vm293, %v8896, 0
      %v8946 = vsel %vm293, %v8897, 0
      %v8949 = vsel %vm293, %v8898, 0
      %v8952 = vsel %vm293, %v8899, 0
      %v8955 = vsel %vm293, %v8900, 0
      %v8958 = vsel %vm293, %v8901, 0
      %v8961 = vsel %vm293, %v8902, 0
      %v8964 = vsel %vm293, %v8903, 0
      %v8967 = vsel %vm293, %v8904, 0
      %v8970 = vsel %vm293, %v8905, 0
      %v8973 = vsel %vm293, %v8906, 0
      %v8976 = vsel %vm293, %v8907, 0
      %v8979 = vsel %vm293, %v8908, 0
      %v8982 = vsel %vm293, %v8909, 0
      %v8985 = vsel %vm293, %v8910, 0
      %v8988 = vsel %vm293, %v8911, 0
      %v8991 = vsel %vm293, %v8912, 0
      %v8994 = vsel %vm293, %v8913, 0
      %v8997 = vsel %vm293, %v8914, 0
      %v9000 = vsel %vm293, %v8915, 0
      %v9003 = vsel %vm293, %v8916, 0
      %v9006 = vsel %vm293, %v8917, 0
      %v9009 = vsel %vm293, %v8918, 0
      %v9012 = vsel %vm293, %v8919, 0
      %v9015 = vsel %vm293, %v8920, 0
      %v9018 = vsel %vm293, %v8921, 0
      %v9021 = vsel %vm390, %v8923, 0
      %9023 = vmatprep.subr.mxu0 0.0
      %9024 = vmatpush1.msra.mxu0 %v9021
      %9025 = vmatprep.subr.mxu0 0.0
      %9026 = vmatpush1.msra.mxu0 0.0
      %9027 = vmatprep.subr.mxu0 0.0
      %9028 = vmatpush1.msra.mxu0 0.0
      %9029 = vmatprep.subr.mxu0 0.0
      %9030 = vmatpush1.msra.mxu0 0.0
      %9031 = vmatprep.subr.mxu0 0.0
      %9032 = vmatpush1.msra.mxu0 0.0
      %9033 = vmatprep.subr.mxu0 0.0
      %9034 = vmatpush1.msra.mxu0 0.0
      %9035 = vmatprep.subr.mxu0 0.0
      %9036 = vmatpush1.msra.mxu0 0.0
      %9037 = vmatprep.subr.mxu0 0.0
      %9038 = vmatpush1.msra.mxu0 0.0
      %9039 = vmatprep.subr.mxu0 0.0
      %9040 = vmatpush1.msra.mxu0 0.0
      %9041 = vmatprep.subr.mxu0 0.0
      %9042 = vmatpush1.msra.mxu0 0.0
      %9043 = vmatprep.subr.mxu0 0.0
      %9044 = vmatpush1.msra.mxu0 0.0
      %9045 = vmatprep.subr.mxu0 0.0
      %9046 = vmatpush1.msra.mxu0 0.0
      %9047 = vmatprep.subr.mxu0 0.0
      %9048 = vmatpush1.msra.mxu0 0.0
      %9049 = vmatprep.subr.mxu0 0.0
      %9050 = vmatpush1.msra.mxu0 0.0
      %9051 = vmatprep.subr.mxu0 0.0
      %9052 = vmatpush1.msra.mxu0 0.0
      %9053 = vmatprep.subr.mxu0 0.0
      %9054 = vmatpush1.msra.mxu0 0.0
      %9055 = vmatprep.subr.mxu0 0.0
      %9056 = vmatpush1.msra.mxu0 0.0
      %9057 = vmatprep.subr.mxu0 0.0
      %9058 = vmatpush1.msra.mxu0 0.0
      %9059 = vmatprep.subr.mxu0 0.0
      %9060 = vmatpush1.msra.mxu0 0.0
      %9061 = vmatprep.subr.mxu0 0.0
      %9062 = vmatpush1.msra.mxu0 0.0
      %9063 = vmatprep.subr.mxu0 0.0
      %9064 = vmatpush1.msra.mxu0 0.0
      %9065 = vmatprep.subr.mxu0 0.0
      %9066 = vmatpush1.msra.mxu0 0.0
      %9067 = vmatprep.subr.mxu0 0.0
      %9068 = vmatpush1.msra.mxu0 0.0
      %9069 = vmatprep.subr.mxu0 0.0
      %9070 = vmatpush1.msra.mxu0 0.0
      %9071 = vmatprep.subr.mxu0 0.0
      %9072 = vmatpush1.msra.mxu0 0.0
      %9073 = vmatprep.subr.mxu0 0.0
      %9074 = vmatpush1.msra.mxu0 0.0
      %9075 = vmatprep.subr.mxu0 0.0
      %9076 = vmatpush1.msra.mxu0 0.0
      %9077 = vmatprep.subr.mxu0 0.0
      %9078 = vmatpush1.msra.mxu0 0.0
      %9079 = vmatprep.subr.mxu0 0.0
      %9080 = vmatpush1.msra.mxu0 0.0
      %9081 = vmatprep.subr.mxu0 0.0
      %9082 = vmatpush1.msra.mxu0 0.0
      %9083 = vmatprep.subr.mxu0 0.0
      %9084 = vmatpush1.msra.mxu0 0.0
      %9085 = vmatprep.subr.mxu0 0.0
      %9086 = vmatpush1.msra.mxu0 0.0
      %9087 = vmatprep.mubr.f32.mxu0 0.0
      %9088 = vmatmul.mubr.f32.gmra.mrb[0].mxu0 %v8925
      %v9089 = vpop.f32.mrb[0].mxu0
      %v9090 = vadd.f32 0.0, %v9089
      %v9091 = vpop.f32.mrb[0].mxu0
      %9092 = vmatprep.mubr.f32.mxu0 0.0
      %9093 = vmatmul.mubr.f32.gmra.mrb[0].mxu0 %v8928
      %v9094 = vpop.f32.mrb[0].mxu0
      %v9095 = vadd.f32 0.0, %v9094
      %v9096 = vpop.f32.mrb[0].mxu0
      %9097 = vmatprep.mubr.f32.mxu0 0.0
      %9098 = vmatmul.mubr.f32.gmra.mrb[0].mxu0 %v8931
      %v9099 = vpop.f32.mrb[0].mxu0
      %v9100 = vadd.f32 0.0, %v9099
      %v9101 = vpop.f32.mrb[0].mxu0
      %9102 = vmatprep.mubr.f32.mxu0 0.0
      %9103 = vmatmul.mubr.f32.gmra.mrb[0].mxu0 %v8934
      %v9104 = vpop.f32.mrb[0].mxu0
      %v9105 = vadd.f32 0.0, %v9104
      %v9106 = vpop.f32.mrb[0].mxu0
      %9107 = vmatprep.mubr.f32.mxu0 0.0
      %9108 = vmatmul.mubr.f32.gmra.mrb[0].mxu0 %v8937
      %v9109 = vpop.f32.mrb[0].mxu0
      %v9110 = vadd.f32 0.0, %v9109
      %v9111 = vpop.f32.mrb[0].mxu0
      %9112 = vmatprep.mubr.f32.mxu0 0.0
      %9113 = vmatmul.mubr.f32.gmra.mrb[0].mxu0 %v8940
      %v9114 = vpop.f32.mrb[0].mxu0
      %v9115 = vadd.f32 0.0, %v9114
      %v9116 = vpop.f32.mrb[0].mxu0
      %9117 = vmatprep.mubr.f32.mxu0 0.0
      %9118 = vmatmul.mubr.f32.gmra.mrb[0].mxu0 %v8943
      %v9119 = vpop.f32.mrb[0].mxu0
      %v9120 = vadd.f32 0.0, %v9119
      %v9121 = vpop.f32.mrb[0].mxu0
      %9122 = vmatprep.mubr.f32.mxu0 0.0
      %9123 = vmatmul.mubr.f32.gmra.mrb[0].mxu0 %v8946
      %v9124 = vpop.f32.mrb[0].mxu0
      %v9125 = vadd.f32 0.0, %v9124
      %v9126 = vpop.f32.mrb[0].mxu0
      %9127 = vmatprep.mubr.f32.mxu0 0.0
      %9128 = vmatmul.mubr.f32.gmra.mrb[0].mxu0 %v8949
      %v9129 = vpop.f32.mrb[0].mxu0
      %v9130 = vadd.f32 0.0, %v9129
      %v9131 = vpop.f32.mrb[0].mxu0
      %9132 = vmatprep.mubr.f32.mxu0 0.0
      %9133 = vmatmul.mubr.f32.gmra.mrb[0].mxu0 %v8952
      %v9134 = vpop.f32.mrb[0].mxu0
      %v9135 = vadd.f32 0.0, %v9134
      %v9136 = vpop.f32.mrb[0].mxu0
      %9137 = vmatprep.mubr.f32.mxu0 0.0
      %9138 = vmatmul.mubr.f32.gmra.mrb[0].mxu0 %v8955
      %v9139 = vpop.f32.mrb[0].mxu0
      %v9140 = vadd.f32 0.0, %v9139
      %v9141 = vpop.f32.mrb[0].mxu0
      %9142 = vmatprep.mubr.f32.mxu0 0.0
      %9143 = vmatmul.mubr.f32.gmra.mrb[0].mxu0 %v8958
      %v9144 = vpop.f32.mrb[0].mxu0
      %v9145 = vadd.f32 0.0, %v9144
      %v9146 = vpop.f32.mrb[0].mxu0
      %9147 = vmatprep.mubr.f32.mxu0 0.0
      %9148 = vmatmul.mubr.f32.gmra.mrb[0].mxu0 %v8961
      %v9149 = vpop.f32.mrb[0].mxu0
      %v9150 = vadd.f32 0.0, %v9149
      %v9151 = vpop.f32.mrb[0].mxu0
      %9152 = vmatprep.mubr.f32.mxu0 0.0
      %9153 = vmatmul.mubr.f32.gmra.mrb[0].mxu0 %v8964
      %v9154 = vpop.f32.mrb[0].mxu0
      %v9155 = vadd.f32 0.0, %v9154
      %v9156 = vpop.f32.mrb[0].mxu0
      %9157 = vmatprep.mubr.f32.mxu0 0.0
      %9158 = vmatmul.mubr.f32.gmra.mrb[0].mxu0 %v8967
      %v9159 = vpop.f32.mrb[0].mxu0
      %v9160 = vadd.f32 0.0, %v9159
      %v9161 = vpop.f32.mrb[0].mxu0
      %9162 = vmatprep.mubr.f32.mxu0 0.0
      %9163 = vmatmul.mubr.f32.gmra.mrb[0].mxu0 %v8970
      %v9164 = vpop.f32.mrb[0].mxu0
      %v9165 = vadd.f32 0.0, %v9164
      %v9166 = vpop.f32.mrb[0].mxu0
      %9167 = vmatprep.mubr.f32.mxu0 0.0
      %9168 = vmatmul.mubr.f32.gmra.mrb[0].mxu0 %v8973
      %v9169 = vpop.f32.mrb[0].mxu0
      %v9170 = vadd.f32 0.0, %v9169
      %v9171 = vpop.f32.mrb[0].mxu0
      %9172 = vmatprep.mubr.f32.mxu0 0.0
      %9173 = vmatmul.mubr.f32.gmra.mrb[0].mxu0 %v8976
      %v9174 = vpop.f32.mrb[0].mxu0
      %v9175 = vadd.f32 0.0, %v9174
      %v9176 = vpop.f32.mrb[0].mxu0
      %9177 = vmatprep.mubr.f32.mxu0 0.0
      %9178 = vmatmul.mubr.f32.gmra.mrb[0].mxu0 %v8979
      %v9179 = vpop.f32.mrb[0].mxu0
      %v9180 = vadd.f32 0.0, %v9179
      %v9181 = vpop.f32.mrb[0].mxu0
      %9182 = vmatprep.mubr.f32.mxu0 0.0
      %9183 = vmatmul.mubr.f32.gmra.mrb[0].mxu0 %v8982
      %v9184 = vpop.f32.mrb[0].mxu0
      %v9185 = vadd.f32 0.0, %v9184
      %v9186 = vpop.f32.mrb[0].mxu0
      %9187 = vmatprep.mubr.f32.mxu0 0.0
      %9188 = vmatmul.mubr.f32.gmra.mrb[0].mxu0 %v8985
      %v9189 = vpop.f32.mrb[0].mxu0
      %v9190 = vadd.f32 0.0, %v9189
      %v9191 = vpop.f32.mrb[0].mxu0
      %9192 = vmatprep.mubr.f32.mxu0 0.0
      %9193 = vmatmul.mubr.f32.gmra.mrb[0].mxu0 %v8988
      %v9194 = vpop.f32.mrb[0].mxu0
      %v9195 = vadd.f32 0.0, %v9194
      %v9196 = vpop.f32.mrb[0].mxu0
      %9197 = vmatprep.mubr.f32.mxu0 0.0
      %9198 = vmatmul.mubr.f32.gmra.mrb[0].mxu0 %v8991
      %v9199 = vpop.f32.mrb[0].mxu0
      %v9200 = vadd.f32 0.0, %v9199
      %v9201 = vpop.f32.mrb[0].mxu0
      %9202 = vmatprep.mubr.f32.mxu0 0.0
      %9203 = vmatmul.mubr.f32.gmra.mrb[0].mxu0 %v8994
      %v9204 = vpop.f32.mrb[0].mxu0
      %v9205 = vadd.f32 0.0, %v9204
      %v9206 = vpop.f32.mrb[0].mxu0
      %9207 = vmatprep.mubr.f32.mxu0 0.0
      %9208 = vmatmul.mubr.f32.gmra.mrb[0].mxu0 %v8997
      %v9209 = vpop.f32.mrb[0].mxu0
      %v9210 = vadd.f32 0.0, %v9209
      %v9211 = vpop.f32.mrb[0].mxu0
      %9212 = vmatprep.mubr.f32.mxu0 0.0
      %9213 = vmatmul.mubr.f32.gmra.mrb[0].mxu0 %v9000
      %v9214 = vpop.f32.mrb[0].mxu0
      %v9215 = vadd.f32 0.0, %v9214
      %v9216 = vpop.f32.mrb[0].mxu0
      %9217 = vmatprep.mubr.f32.mxu0 0.0
      %9218 = vmatmul.mubr.f32.gmra.mrb[0].mxu0 %v9003
      %v9219 = vpop.f32.mrb[0].mxu0
      %v9220 = vadd.f32 0.0, %v9219
      %v9221 = vpop.f32.mrb[0].mxu0
      %9222 = vmatprep.mubr.f32.mxu0 0.0
      %9223 = vmatmul.mubr.f32.gmra.mrb[0].mxu0 %v9006
      %v9224 = vpop.f32.mrb[0].mxu0
      %v9225 = vadd.f32 0.0, %v9224
      %v9226 = vpop.f32.mrb[0].mxu0
      %9227 = vmatprep.mubr.f32.mxu0 0.0
      %9228 = vmatmul.mubr.f32.gmra.mrb[0].mxu0 %v9009
      %v9229 = vpop.f32.mrb[0].mxu0
      %v9230 = vadd.f32 0.0, %v9229
      %v9231 = vpop.f32.mrb[0].mxu0
      %9232 = vmatprep.mubr.f32.mxu0 0.0
      %9233 = vmatmul.mubr.f32.gmra.mrb[0].mxu0 %v9012
      %v9234 = vpop.f32.mrb[0].mxu0
      %v9235 = vadd.f32 0.0, %v9234
      %v9236 = vpop.f32.mrb[0].mxu0
      %9237 = vmatprep.mubr.f32.mxu0 0.0
      %9238 = vmatmul.mubr.f32.gmra.mrb[0].mxu0 %v9015
      %v9239 = vpop.f32.mrb[0].mxu0
      %v9240 = vadd.f32 0.0, %v9239
      %v9241 = vpop.f32.mrb[0].mxu0
      %9242 = vmatprep.mubr.f32.mxu0 0.0
      %9243 = vmatmul.mubr.f32.gmra.mrb[0].mxu0 %v9018
      %v9244 = vpop.f32.mrb[0].mxu0
      %v9245 = vadd.f32 0.0, %v9244
      %v9246 = vpop.f32.mrb[0].mxu0
      %9247 = vdwg.mxu0
      %v9248 = vadd.f32 %v8858, %v9090
      %v9249 = vadd.f32 %v8859, %v9095
      %v9250 = vadd.f32 %v8860, %v9100
      %v9251 = vadd.f32 %v8861, %v9105
      %v9252 = vadd.f32 %v8862, %v9110
      %v9253 = vadd.f32 %v8863, %v9115
      %v9254 = vadd.f32 %v8864, %v9120
      %v9255 = vadd.f32 %v8865, %v9125
      %v9256 = vadd.f32 %v8866, %v9130
      %v9257 = vadd.f32 %v8867, %v9135
      %v9258 = vadd.f32 %v8868, %v9140
      %v9259 = vadd.f32 %v8869, %v9145
      %v9260 = vadd.f32 %v8870, %v9150
      %v9261 = vadd.f32 %v8871, %v9155
      %v9262 = vadd.f32 %v8872, %v9160
      %v9263 = vadd.f32 %v8873, %v9165
      %v9264 = vadd.f32 %v8874, %v9170
      %v9265 = vadd.f32 %v8875, %v9175
      %v9266 = vadd.f32 %v8876, %v9180
      %v9267 = vadd.f32 %v8877, %v9185
      %v9268 = vadd.f32 %v8878, %v9190
      %v9269 = vadd.f32 %v8879, %v9195
      %v9270 = vadd.f32 %v8880, %v9200
      %v9271 = vadd.f32 %v8881, %v9205
      %v9272 = vadd.f32 %v8882, %v9210
      %v9273 = vadd.f32 %v8883, %v9215
      %v9274 = vadd.f32 %v8884, %v9220
      %v9275 = vadd.f32 %v8885, %v9225
      %v9276 = vadd.f32 %v8886, %v9230
      %v9277 = vadd.f32 %v8887, %v9235
      %v9278 = vadd.f32 %v8888, %v9240
      %v9279 = vadd.f32 %v8889, %v9245
      %s9280 = scalar_lea.vmem %s1, 88
      %v9281 = vld [vmem:[%s9280] sm:$0xf]
      %v9283 = vsel %vm390, %v9281, 0
      %9285 = vmatprep.subr.mxu0 0.0
      %9286 = vmatpush1.msra.mxu0 %v9283
      %9287 = vmatprep.subr.mxu0 0.0
      %9288 = vmatpush1.msra.mxu0 0.0
      %9289 = vmatprep.subr.mxu0 0.0
      %9290 = vmatpush1.msra.mxu0 0.0
      %9291 = vmatprep.subr.mxu0 0.0
      %9292 = vmatpush1.msra.mxu0 0.0
      %9293 = vmatprep.subr.mxu0 0.0
      %9294 = vmatpush1.msra.mxu0 0.0
      %9295 = vmatprep.subr.mxu0 0.0
      %9296 = vmatpush1.msra.mxu0 0.0
      %9297 = vmatprep.subr.mxu0 0.0
      %9298 = vmatpush1.msra.mxu0 0.0
      %9299 = vmatprep.subr.mxu0 0.0
      %9300 = vmatpush1.msra.mxu0 0.0
      %9301 = vmatprep.subr.mxu0 0.0
      %9302 = vmatpush1.msra.mxu0 0.0
      %9303 = vmatprep.subr.mxu0 0.0
      %9304 = vmatpush1.msra.mxu0 0.0
      %9305 = vmatprep.subr.mxu0 0.0
      %9306 = vmatpush1.msra.mxu0 0.0
      %9307 = vmatprep.subr.mxu0 0.0
      %9308 = vmatpush1.msra.mxu0 0.0
      %9309 = vmatprep.subr.mxu0 0.0
      %9310 = vmatpush1.msra.mxu0 0.0
      %9311 = vmatprep.subr.mxu0 0.0
      %9312 = vmatpush1.msra.mxu0 0.0
      %9313 = vmatprep.subr.mxu0 0.0
      %9314 = vmatpush1.msra.mxu0 0.0
      %9315 = vmatprep.subr.mxu0 0.0
      %9316 = vmatpush1.msra.mxu0 0.0
      %9317 = vmatprep.subr.mxu0 0.0
      %9318 = vmatpush1.msra.mxu0 0.0
      %9319 = vmatprep.subr.mxu0 0.0
      %9320 = vmatpush1.msra.mxu0 0.0
      %9321 = vmatprep.subr.mxu0 0.0
      %9322 = vmatpush1.msra.mxu0 0.0
      %9323 = vmatprep.subr.mxu0 0.0
      %9324 = vmatpush1.msra.mxu0 0.0
      %9325 = vmatprep.subr.mxu0 0.0
      %9326 = vmatpush1.msra.mxu0 0.0
      %9327 = vmatprep.subr.mxu0 0.0
      %9328 = vmatpush1.msra.mxu0 0.0
      %9329 = vmatprep.subr.mxu0 0.0
      %9330 = vmatpush1.msra.mxu0 0.0
      %9331 = vmatprep.subr.mxu0 0.0
      %9332 = vmatpush1.msra.mxu0 0.0
      %9333 = vmatprep.subr.mxu0 0.0
      %9334 = vmatpush1.msra.mxu0 0.0
      %9335 = vmatprep.subr.mxu0 0.0
      %9336 = vmatpush1.msra.mxu0 0.0
      %9337 = vmatprep.subr.mxu0 0.0
      %9338 = vmatpush1.msra.mxu0 0.0
      %9339 = vmatprep.subr.mxu0 0.0
      %9340 = vmatpush1.msra.mxu0 0.0
      %9341 = vmatprep.subr.mxu0 0.0
      %9342 = vmatpush1.msra.mxu0 0.0
      %9343 = vmatprep.subr.mxu0 0.0
      %9344 = vmatpush1.msra.mxu0 0.0
      %9345 = vmatprep.subr.mxu0 0.0
      %9346 = vmatpush1.msra.mxu0 0.0
      %9347 = vmatprep.subr.mxu0 0.0
      %9348 = vmatpush1.msra.mxu0 0.0
      %9349 = vmatprep.mubr.f32.mxu0 0.0
      %9350 = vmatmul.mubr.f32.gmra.mrb[0].mxu0 %v1759
      %v9351 = vpop.f32.mrb[0].mxu0
      %v9352 = vadd.f32 0.0, %v9351
      %v9353 = vpop.f32.mrb[0].mxu0
      %9354 = vmatprep.mubr.f32.mxu0 0.0
      %9355 = vmatmul.mubr.f32.gmra.mrb[0].mxu0 %v1762
      %v9356 = vpop.f32.mrb[0].mxu0
      %v9357 = vadd.f32 0.0, %v9356
      %v9358 = vpop.f32.mrb[0].mxu0
      %9359 = vmatprep.mubr.f32.mxu0 0.0
      %9360 = vmatmul.mubr.f32.gmra.mrb[0].mxu0 %v1765
      %v9361 = vpop.f32.mrb[0].mxu0
      %v9362 = vadd.f32 0.0, %v9361
      %v9363 = vpop.f32.mrb[0].mxu0
      %9364 = vmatprep.mubr.f32.mxu0 0.0
      %9365 = vmatmul.mubr.f32.gmra.mrb[0].mxu0 %v1768
      %v9366 = vpop.f32.mrb[0].mxu0
      %v9367 = vadd.f32 0.0, %v9366
      %v9368 = vpop.f32.mrb[0].mxu0
      %9369 = vmatprep.mubr.f32.mxu0 0.0
      %9370 = vmatmul.mubr.f32.gmra.mrb[0].mxu0 %v1771
      %v9371 = vpop.f32.mrb[0].mxu0
      %v9372 = vadd.f32 0.0, %v9371
      %v9373 = vpop.f32.mrb[0].mxu0
      %9374 = vmatprep.mubr.f32.mxu0 0.0
      %9375 = vmatmul.mubr.f32.gmra.mrb[0].mxu0 %v1774
      %v9376 = vpop.f32.mrb[0].mxu0
      %v9377 = vadd.f32 0.0, %v9376
      %v9378 = vpop.f32.mrb[0].mxu0
      %9379 = vmatprep.mubr.f32.mxu0 0.0
      %9380 = vmatmul.mubr.f32.gmra.mrb[0].mxu0 %v1777
      %v9381 = vpop.f32.mrb[0].mxu0
      %v9382 = vadd.f32 0.0, %v9381
      %v9383 = vpop.f32.mrb[0].mxu0
      %9384 = vmatprep.mubr.f32.mxu0 0.0
      %9385 = vmatmul.mubr.f32.gmra.mrb[0].mxu0 %v1780
      %v9386 = vpop.f32.mrb[0].mxu0
      %v9387 = vadd.f32 0.0, %v9386
      %v9388 = vpop.f32.mrb[0].mxu0
      %9389 = vmatprep.mubr.f32.mxu0 0.0
      %9390 = vmatmul.mubr.f32.gmra.mrb[0].mxu0 %v1783
      %v9391 = vpop.f32.mrb[0].mxu0
      %v9392 = vadd.f32 0.0, %v9391
      %v9393 = vpop.f32.mrb[0].mxu0
      %9394 = vmatprep.mubr.f32.mxu0 0.0
      %9395 = vmatmul.mubr.f32.gmra.mrb[0].mxu0 %v1786
      %v9396 = vpop.f32.mrb[0].mxu0
      %v9397 = vadd.f32 0.0, %v9396
      %v9398 = vpop.f32.mrb[0].mxu0
      %9399 = vmatprep.mubr.f32.mxu0 0.0
      %9400 = vmatmul.mubr.f32.gmra.mrb[0].mxu0 %v1789
      %v9401 = vpop.f32.mrb[0].mxu0
      %v9402 = vadd.f32 0.0, %v9401
      %v9403 = vpop.f32.mrb[0].mxu0
      %9404 = vmatprep.mubr.f32.mxu0 0.0
      %9405 = vmatmul.mubr.f32.gmra.mrb[0].mxu0 %v1792
      %v9406 = vpop.f32.mrb[0].mxu0
      %v9407 = vadd.f32 0.0, %v9406
      %v9408 = vpop.f32.mrb[0].mxu0
      %9409 = vmatprep.mubr.f32.mxu0 0.0
      %9410 = vmatmul.mubr.f32.gmra.mrb[0].mxu0 %v1795
      %v9411 = vpop.f32.mrb[0].mxu0
      %v9412 = vadd.f32 0.0, %v9411
      %v9413 = vpop.f32.mrb[0].mxu0
      %9414 = vmatprep.mubr.f32.mxu0 0.0
      %9415 = vmatmul.mubr.f32.gmra.mrb[0].mxu0 %v1798
      %v9416 = vpop.f32.mrb[0].mxu0
      %v9417 = vadd.f32 0.0, %v9416
      %v9418 = vpop.f32.mrb[0].mxu0
      %9419 = vmatprep.mubr.f32.mxu0 0.0
      %9420 = vmatmul.mubr.f32.gmra.mrb[0].mxu0 %v1801
      %v9421 = vpop.f32.mrb[0].mxu0
      %v9422 = vadd.f32 0.0, %v9421
      %v9423 = vpop.f32.mrb[0].mxu0
      %9424 = vmatprep.mubr.f32.mxu0 0.0
      %9425 = vmatmul.mubr.f32.gmra.mrb[0].mxu0 %v1804
      %v9426 = vpop.f32.mrb[0].mxu0
      %v9427 = vadd.f32 0.0, %v9426
      %v9428 = vpop.f32.mrb[0].mxu0
      %9429 = vmatprep.mubr.f32.mxu0 0.0
      %9430 = vmatmul.mubr.f32.gmra.mrb[0].mxu0 %v1807
      %v9431 = vpop.f32.mrb[0].mxu0
      %v9432 = vadd.f32 0.0, %v9431
      %v9433 = vpop.f32.mrb[0].mxu0
      %9434 = vmatprep.mubr.f32.mxu0 0.0
      %9435 = vmatmul.mubr.f32.gmra.mrb[0].mxu0 %v1810
      %v9436 = vpop.f32.mrb[0].mxu0
      %v9437 = vadd.f32 0.0, %v9436
      %v9438 = vpop.f32.mrb[0].mxu0
      %9439 = vmatprep.mubr.f32.mxu0 0.0
      %9440 = vmatmul.mubr.f32.gmra.mrb[0].mxu0 %v1813
      %v9441 = vpop.f32.mrb[0].mxu0
      %v9442 = vadd.f32 0.0, %v9441
      %v9443 = vpop.f32.mrb[0].mxu0
      %9444 = vmatprep.mubr.f32.mxu0 0.0
      %9445 = vmatmul.mubr.f32.gmra.mrb[0].mxu0 %v1816
      %v9446 = vpop.f32.mrb[0].mxu0
      %v9447 = vadd.f32 0.0, %v9446
      %v9448 = vpop.f32.mrb[0].mxu0
      %9449 = vmatprep.mubr.f32.mxu0 0.0
      %9450 = vmatmul.mubr.f32.gmra.mrb[0].mxu0 %v1819
      %v9451 = vpop.f32.mrb[0].mxu0
      %v9452 = vadd.f32 0.0, %v9451
      %v9453 = vpop.f32.mrb[0].mxu0
      %9454 = vmatprep.mubr.f32.mxu0 0.0
      %9455 = vmatmul.mubr.f32.gmra.mrb[0].mxu0 %v1822
      %v9456 = vpop.f32.mrb[0].mxu0
      %v9457 = vadd.f32 0.0, %v9456
      %v9458 = vpop.f32.mrb[0].mxu0
      %9459 = vmatprep.mubr.f32.mxu0 0.0
      %9460 = vmatmul.mubr.f32.gmra.mrb[0].mxu0 %v1825
      %v9461 = vpop.f32.mrb[0].mxu0
      %v9462 = vadd.f32 0.0, %v9461
      %v9463 = vpop.f32.mrb[0].mxu0
      %9464 = vmatprep.mubr.f32.mxu0 0.0
      %9465 = vmatmul.mubr.f32.gmra.mrb[0].mxu0 %v1828
      %v9466 = vpop.f32.mrb[0].mxu0
      %v9467 = vadd.f32 0.0, %v9466
      %v9468 = vpop.f32.mrb[0].mxu0
      %9469 = vmatprep.mubr.f32.mxu0 0.0
      %9470 = vmatmul.mubr.f32.gmra.mrb[0].mxu0 %v1831
      %v9471 = vpop.f32.mrb[0].mxu0
      %v9472 = vadd.f32 0.0, %v9471
      %v9473 = vpop.f32.mrb[0].mxu0
      %9474 = vmatprep.mubr.f32.mxu0 0.0
      %9475 = vmatmul.mubr.f32.gmra.mrb[0].mxu0 %v1834
      %v9476 = vpop.f32.mrb[0].mxu0
      %v9477 = vadd.f32 0.0, %v9476
      %v9478 = vpop.f32.mrb[0].mxu0
      %9479 = vmatprep.mubr.f32.mxu0 0.0
      %9480 = vmatmul.mubr.f32.gmra.mrb[0].mxu0 %v1837
      %v9481 = vpop.f32.mrb[0].mxu0
      %v9482 = vadd.f32 0.0, %v9481
      %v9483 = vpop.f32.mrb[0].mxu0
      %9484 = vmatprep.mubr.f32.mxu0 0.0
      %9485 = vmatmul.mubr.f32.gmra.mrb[0].mxu0 %v1840
      %v9486 = vpop.f32.mrb[0].mxu0
      %v9487 = vadd.f32 0.0, %v9486
      %v9488 = vpop.f32.mrb[0].mxu0
      %9489 = vmatprep.mubr.f32.mxu0 0.0
      %9490 = vmatmul.mubr.f32.gmra.mrb[0].mxu0 %v1843
      %v9491 = vpop.f32.mrb[0].mxu0
      %v9492 = vadd.f32 0.0, %v9491
      %v9493 = vpop.f32.mrb[0].mxu0
      %9494 = vmatprep.mubr.f32.mxu0 0.0
      %9495 = vmatmul.mubr.f32.gmra.mrb[0].mxu0 %v1846
      %v9496 = vpop.f32.mrb[0].mxu0
      %v9497 = vadd.f32 0.0, %v9496
      %v9498 = vpop.f32.mrb[0].mxu0
      %9499 = vmatprep.mubr.f32.mxu0 0.0
      %9500 = vmatmul.mubr.f32.gmra.mrb[0].mxu0 %v1849
      %v9501 = vpop.f32.mrb[0].mxu0
      %v9502 = vadd.f32 0.0, %v9501
      %v9503 = vpop.f32.mrb[0].mxu0
      %9504 = vmatprep.mubr.f32.mxu0 0.0
      %9505 = vmatmul.mubr.f32.gmra.mrb[0].mxu0 %v1852
      %v9506 = vpop.f32.mrb[0].mxu0
      %v9507 = vadd.f32 0.0, %v9506
      %v9508 = vpop.f32.mrb[0].mxu0
      %9509 = vdwg.mxu0
      %v9510 = vadd.f32 %v9248, %v9352
      %v9511 = vadd.f32 %v9249, %v9357
      %v9512 = vadd.f32 %v9250, %v9362
      %v9513 = vadd.f32 %v9251, %v9367
      %v9514 = vadd.f32 %v9252, %v9372
      %v9515 = vadd.f32 %v9253, %v9377
      %v9516 = vadd.f32 %v9254, %v9382
      %v9517 = vadd.f32 %v9255, %v9387
      %v9518 = vadd.f32 %v9256, %v9392
      %v9519 = vadd.f32 %v9257, %v9397
      %v9520 = vadd.f32 %v9258, %v9402
      %v9521 = vadd.f32 %v9259, %v9407
      %v9522 = vadd.f32 %v9260, %v9412
      %v9523 = vadd.f32 %v9261, %v9417
      %v9524 = vadd.f32 %v9262, %v9422
      %v9525 = vadd.f32 %v9263, %v9427
      %v9526 = vadd.f32 %v9264, %v9432
      %v9527 = vadd.f32 %v9265, %v9437
      %v9528 = vadd.f32 %v9266, %v9442
      %v9529 = vadd.f32 %v9267, %v9447
      %v9530 = vadd.f32 %v9268, %v9452
      %v9531 = vadd.f32 %v9269, %v9457
      %v9532 = vadd.f32 %v9270, %v9462
      %v9533 = vadd.f32 %v9271, %v9467
      %v9534 = vadd.f32 %v9272, %v9472
      %v9535 = vadd.f32 %v9273, %v9477
      %v9536 = vadd.f32 %v9274, %v9482
      %v9537 = vadd.f32 %v9275, %v9487
      %v9538 = vadd.f32 %v9276, %v9492
      %v9539 = vadd.f32 %v9277, %v9497
      %v9540 = vadd.f32 %v9278, %v9502
      %v9541 = vadd.f32 %v9279, %v9507
      %v9542 = vld [vmem:[%s1333 + $0x24] sm:$0xff]
      %v9543 = vld [vmem:[%s1333 + $0x2c] sm:$0xff]
      %v9544 = vld [vmem:[%s1333 + $0x5c] sm:$0xff]
      %v9545 = vld [vmem:[%s1333 + $0x64] sm:$0xff]
      %v9546 = vld [vmem:[%s1333 + $0x94] sm:$0xff]
      %v9547 = vld [vmem:[%s1333 + $0x9c] sm:$0xff]
      %v9548 = vld [vmem:[%s1333 + $0xcc] sm:$0xff]
      %v9549 = vld [vmem:[%s1333 + $0xd4] sm:$0xff]
      %v9550 = vld [vmem:[%s1333 + $0x104] sm:$0xff]
      %v9551 = vld [vmem:[%s1333 + $0x10c] sm:$0xff]
      %v9552 = vld [vmem:[%s1333 + $0x13c] sm:$0xff]
      %v9553 = vld [vmem:[%s1333 + $0x144] sm:$0xff]
      %v9554 = vld [vmem:[%s1333 + $0x174] sm:$0xff]
      %v9555 = vld [vmem:[%s1333 + $0x17c] sm:$0xff]
      %v9556 = vld [vmem:[%s1333 + $0x1ac] sm:$0xff]
      %v9557 = vld [vmem:[%s1333 + $0x1b4] sm:$0xff]
      %v9558 = vld [vmem:[%s1333 + $0x1e4] sm:$0xff]
      %v9559 = vld [vmem:[%s1333 + $0x1ec] sm:$0xff]
      %v9560 = vld [vmem:[%s1333 + $0x21c] sm:$0xff]
      %v9561 = vld [vmem:[%s1333 + $0x224] sm:$0xff]
      %v9562 = vld [vmem:[%s1333 + $0x254] sm:$0xff]
      %v9563 = vld [vmem:[%s1333 + $0x25c] sm:$0xff]
      %v9564 = vld [vmem:[%s1333 + $0x28c] sm:$0xff]
      %v9565 = vld [vmem:[%s1333 + $0x294] sm:$0xff]
      %v9566 = vld [vmem:[%s1333 + $0x2c4] sm:$0xff]
      %v9567 = vld [vmem:[%s1333 + $0x2cc] sm:$0xff]
      %v9568 = vld [vmem:[%s1333 + $0x2fc] sm:$0xff]
      %v9569 = vld [vmem:[%s1333 + $0x304] sm:$0xff]
      %v9570 = vld [vmem:[%s1333 + $0x334] sm:$0xff]
      %v9571 = vld [vmem:[%s1333 + $0x33c] sm:$0xff]
      %v9572 = vld [vmem:[%s1333 + $0x36c] sm:$0xff]
      %v9573 = vld [vmem:[%s1333 + $0x374] sm:$0xff]
      %s9574 = scalar_lea.vmem %s1, 92
      %v9575 = vld [vmem:[%s9574] sm:$0xf]
      %v9577 = vsel %vm293, %v9542, 0
      %v9580 = vsel %vm293, %v9543, 0
      %v9583 = vsel %vm293, %v9544, 0
      %v9586 = vsel %vm293, %v9545, 0
      %v9589 = vsel %vm293, %v9546, 0
      %v9592 = vsel %vm293, %v9547, 0
      %v9595 = vsel %vm293, %v9548, 0
      %v9598 = vsel %vm293, %v9549, 0
      %v9601 = vsel %vm293, %v9550, 0
      %v9604 = vsel %vm293, %v9551, 0
      %v9607 = vsel %vm293, %v9552, 0
      %v9610 = vsel %vm293, %v9553, 0
      %v9613 = vsel %vm293, %v9554, 0
      %v9616 = vsel %vm293, %v9555, 0
      %v9619 = vsel %vm293, %v9556, 0
      %v9622 = vsel %vm293, %v9557, 0
      %v9625 = vsel %vm293, %v9558, 0
      %v9628 = vsel %vm293, %v9559, 0
      %v9631 = vsel %vm293, %v9560, 0
      %v9634 = vsel %vm293, %v9561, 0
      %v9637 = vsel %vm293, %v9562, 0
      %v9640 = vsel %vm293, %v9563, 0
      %v9643 = vsel %vm293, %v9564, 0
      %v9646 = vsel %vm293, %v9565, 0
      %v9649 = vsel %vm293, %v9566, 0
      %v9652 = vsel %vm293, %v9567, 0
      %v9655 = vsel %vm293, %v9568, 0
      %v9658 = vsel %vm293, %v9569, 0
      %v9661 = vsel %vm293, %v9570, 0
      %v9664 = vsel %vm293, %v9571, 0
      %v9667 = vsel %vm293, %v9572, 0
      %v9670 = vsel %vm293, %v9573, 0
      %v9673 = vsel %vm390, %v9575, 0
      %9675 = vmatprep.subr.mxu0 0.0
      %9676 = vmatpush1.msra.mxu0 %v9673
      %9677 = vmatprep.subr.mxu0 0.0
      %9678 = vmatpush1.msra.mxu0 0.0
      %9679 = vmatprep.subr.mxu0 0.0
      %9680 = vmatpush1.msra.mxu0 0.0
      %9681 = vmatprep.subr.mxu0 0.0
      %9682 = vmatpush1.msra.mxu0 0.0
      %9683 = vmatprep.subr.mxu0 0.0
      %9684 = vmatpush1.msra.mxu0 0.0
      %9685 = vmatprep.subr.mxu0 0.0
      %9686 = vmatpush1.msra.mxu0 0.0
      %9687 = vmatprep.subr.mxu0 0.0
      %9688 = vmatpush1.msra.mxu0 0.0
      %9689 = vmatprep.subr.mxu0 0.0
      %9690 = vmatpush1.msra.mxu0 0.0
      %9691 = vmatprep.subr.mxu0 0.0
      %9692 = vmatpush1.msra.mxu0 0.0
      %9693 = vmatprep.subr.mxu0 0.0
      %9694 = vmatpush1.msra.mxu0 0.0
      %9695 = vmatprep.subr.mxu0 0.0
      %9696 = vmatpush1.msra.mxu0 0.0
      %9697 = vmatprep.subr.mxu0 0.0
      %9698 = vmatpush1.msra.mxu0 0.0
      %9699 = vmatprep.subr.mxu0 0.0
      %9700 = vmatpush1.msra.mxu0 0.0
      %9701 = vmatprep.subr.mxu0 0.0
      %9702 = vmatpush1.msra.mxu0 0.0
      %9703 = vmatprep.subr.mxu0 0.0
      %9704 = vmatpush1.msra.mxu0 0.0
      %9705 = vmatprep.subr.mxu0 0.0
      %9706 = vmatpush1.msra.mxu0 0.0
      %9707 = vmatprep.subr.mxu0 0.0
      %9708 = vmatpush1.msra.mxu0 0.0
      %9709 = vmatprep.subr.mxu0 0.0
      %9710 = vmatpush1.msra.mxu0 0.0
      %9711 = vmatprep.subr.mxu0 0.0
      %9712 = vmatpush1.msra.mxu0 0.0
      %9713 = vmatprep.subr.mxu0 0.0
      %9714 = vmatpush1.msra.mxu0 0.0
      %9715 = vmatprep.subr.mxu0 0.0
      %9716 = vmatpush1.msra.mxu0 0.0
      %9717 = vmatprep.subr.mxu0 0.0
      %9718 = vmatpush1.msra.mxu0 0.0
      %9719 = vmatprep.subr.mxu0 0.0
      %9720 = vmatpush1.msra.mxu0 0.0
      %9721 = vmatprep.subr.mxu0 0.0
      %9722 = vmatpush1.msra.mxu0 0.0
      %9723 = vmatprep.subr.mxu0 0.0
      %9724 = vmatpush1.msra.mxu0 0.0
      %9725 = vmatprep.subr.mxu0 0.0
      %9726 = vmatpush1.msra.mxu0 0.0
      %9727 = vmatprep.subr.mxu0 0.0
      %9728 = vmatpush1.msra.mxu0 0.0
      %9729 = vmatprep.subr.mxu0 0.0
      %9730 = vmatpush1.msra.mxu0 0.0
      %9731 = vmatprep.subr.mxu0 0.0
      %9732 = vmatpush1.msra.mxu0 0.0
      %9733 = vmatprep.subr.mxu0 0.0
      %9734 = vmatpush1.msra.mxu0 0.0
      %9735 = vmatprep.subr.mxu0 0.0
      %9736 = vmatpush1.msra.mxu0 0.0
      %9737 = vmatprep.subr.mxu0 0.0
      %9738 = vmatpush1.msra.mxu0 0.0
      %9739 = vmatprep.mubr.f32.mxu0 0.0
      %9740 = vmatmul.mubr.f32.gmra.mrb[0].mxu0 %v9577
      %v9741 = vpop.f32.mrb[0].mxu0
      %v9742 = vadd.f32 0.0, %v9741
      %v9743 = vpop.f32.mrb[0].mxu0
      %9744 = vmatprep.mubr.f32.mxu0 0.0
      %9745 = vmatmul.mubr.f32.gmra.mrb[0].mxu0 %v9580
      %v9746 = vpop.f32.mrb[0].mxu0
      %v9747 = vadd.f32 0.0, %v9746
      %v9748 = vpop.f32.mrb[0].mxu0
      %9749 = vmatprep.mubr.f32.mxu0 0.0
      %9750 = vmatmul.mubr.f32.gmra.mrb[0].mxu0 %v9583
      %v9751 = vpop.f32.mrb[0].mxu0
      %v9752 = vadd.f32 0.0, %v9751
      %v9753 = vpop.f32.mrb[0].mxu0
      %9754 = vmatprep.mubr.f32.mxu0 0.0
      %9755 = vmatmul.mubr.f32.gmra.mrb[0].mxu0 %v9586
      %v9756 = vpop.f32.mrb[0].mxu0
      %v9757 = vadd.f32 0.0, %v9756
      %v9758 = vpop.f32.mrb[0].mxu0
      %9759 = vmatprep.mubr.f32.mxu0 0.0
      %9760 = vmatmul.mubr.f32.gmra.mrb[0].mxu0 %v9589
      %v9761 = vpop.f32.mrb[0].mxu0
      %v9762 = vadd.f32 0.0, %v9761
      %v9763 = vpop.f32.mrb[0].mxu0
      %9764 = vmatprep.mubr.f32.mxu0 0.0
      %9765 = vmatmul.mubr.f32.gmra.mrb[0].mxu0 %v9592
      %v9766 = vpop.f32.mrb[0].mxu0
      %v9767 = vadd.f32 0.0, %v9766
      %v9768 = vpop.f32.mrb[0].mxu0
      %9769 = vmatprep.mubr.f32.mxu0 0.0
      %9770 = vmatmul.mubr.f32.gmra.mrb[0].mxu0 %v9595
      %v9771 = vpop.f32.mrb[0].mxu0
      %v9772 = vadd.f32 0.0, %v9771
      %v9773 = vpop.f32.mrb[0].mxu0
      %9774 = vmatprep.mubr.f32.mxu0 0.0
      %9775 = vmatmul.mubr.f32.gmra.mrb[0].mxu0 %v9598
      %v9776 = vpop.f32.mrb[0].mxu0
      %v9777 = vadd.f32 0.0, %v9776
      %v9778 = vpop.f32.mrb[0].mxu0
      %9779 = vmatprep.mubr.f32.mxu0 0.0
      %9780 = vmatmul.mubr.f32.gmra.mrb[0].mxu0 %v9601
      %v9781 = vpop.f32.mrb[0].mxu0
      %v9782 = vadd.f32 0.0, %v9781
      %v9783 = vpop.f32.mrb[0].mxu0
      %9784 = vmatprep.mubr.f32.mxu0 0.0
      %9785 = vmatmul.mubr.f32.gmra.mrb[0].mxu0 %v9604
      %v9786 = vpop.f32.mrb[0].mxu0
      %v9787 = vadd.f32 0.0, %v9786
      %v9788 = vpop.f32.mrb[0].mxu0
      %9789 = vmatprep.mubr.f32.mxu0 0.0
      %9790 = vmatmul.mubr.f32.gmra.mrb[0].mxu0 %v9607
      %v9791 = vpop.f32.mrb[0].mxu0
      %v9792 = vadd.f32 0.0, %v9791
      %v9793 = vpop.f32.mrb[0].mxu0
      %9794 = vmatprep.mubr.f32.mxu0 0.0
      %9795 = vmatmul.mubr.f32.gmra.mrb[0].mxu0 %v9610
      %v9796 = vpop.f32.mrb[0].mxu0
      %v9797 = vadd.f32 0.0, %v9796
      %v9798 = vpop.f32.mrb[0].mxu0
      %9799 = vmatprep.mubr.f32.mxu0 0.0
      %9800 = vmatmul.mubr.f32.gmra.mrb[0].mxu0 %v9613
      %v9801 = vpop.f32.mrb[0].mxu0
      %v9802 = vadd.f32 0.0, %v9801
      %v9803 = vpop.f32.mrb[0].mxu0
      %9804 = vmatprep.mubr.f32.mxu0 0.0
      %9805 = vmatmul.mubr.f32.gmra.mrb[0].mxu0 %v9616
      %v9806 = vpop.f32.mrb[0].mxu0
      %v9807 = vadd.f32 0.0, %v9806
      %v9808 = vpop.f32.mrb[0].mxu0
      %9809 = vmatprep.mubr.f32.mxu0 0.0
      %9810 = vmatmul.mubr.f32.gmra.mrb[0].mxu0 %v9619
      %v9811 = vpop.f32.mrb[0].mxu0
      %v9812 = vadd.f32 0.0, %v9811
      %v9813 = vpop.f32.mrb[0].mxu0
      %9814 = vmatprep.mubr.f32.mxu0 0.0
      %9815 = vmatmul.mubr.f32.gmra.mrb[0].mxu0 %v9622
      %v9816 = vpop.f32.mrb[0].mxu0
      %v9817 = vadd.f32 0.0, %v9816
      %v9818 = vpop.f32.mrb[0].mxu0
      %9819 = vmatprep.mubr.f32.mxu0 0.0
      %9820 = vmatmul.mubr.f32.gmra.mrb[0].mxu0 %v9625
      %v9821 = vpop.f32.mrb[0].mxu0
      %v9822 = vadd.f32 0.0, %v9821
      %v9823 = vpop.f32.mrb[0].mxu0
      %9824 = vmatprep.mubr.f32.mxu0 0.0
      %9825 = vmatmul.mubr.f32.gmra.mrb[0].mxu0 %v9628
      %v9826 = vpop.f32.mrb[0].mxu0
      %v9827 = vadd.f32 0.0, %v9826
      %v9828 = vpop.f32.mrb[0].mxu0
      %9829 = vmatprep.mubr.f32.mxu0 0.0
      %9830 = vmatmul.mubr.f32.gmra.mrb[0].mxu0 %v9631
      %v9831 = vpop.f32.mrb[0].mxu0
      %v9832 = vadd.f32 0.0, %v9831
      %v9833 = vpop.f32.mrb[0].mxu0
      %9834 = vmatprep.mubr.f32.mxu0 0.0
      %9835 = vmatmul.mubr.f32.gmra.mrb[0].mxu0 %v9634
      %v9836 = vpop.f32.mrb[0].mxu0
      %v9837 = vadd.f32 0.0, %v9836
      %v9838 = vpop.f32.mrb[0].mxu0
      %9839 = vmatprep.mubr.f32.mxu0 0.0
      %9840 = vmatmul.mubr.f32.gmra.mrb[0].mxu0 %v9637
      %v9841 = vpop.f32.mrb[0].mxu0
      %v9842 = vadd.f32 0.0, %v9841
      %v9843 = vpop.f32.mrb[0].mxu0
      %9844 = vmatprep.mubr.f32.mxu0 0.0
      %9845 = vmatmul.mubr.f32.gmra.mrb[0].mxu0 %v9640
      %v9846 = vpop.f32.mrb[0].mxu0
      %v9847 = vadd.f32 0.0, %v9846
      %v9848 = vpop.f32.mrb[0].mxu0
      %9849 = vmatprep.mubr.f32.mxu0 0.0
      %9850 = vmatmul.mubr.f32.gmra.mrb[0].mxu0 %v9643
      %v9851 = vpop.f32.mrb[0].mxu0
      %v9852 = vadd.f32 0.0, %v9851
      %v9853 = vpop.f32.mrb[0].mxu0
      %9854 = vmatprep.mubr.f32.mxu0 0.0
      %9855 = vmatmul.mubr.f32.gmra.mrb[0].mxu0 %v9646
      %v9856 = vpop.f32.mrb[0].mxu0
      %v9857 = vadd.f32 0.0, %v9856
      %v9858 = vpop.f32.mrb[0].mxu0
      %9859 = vmatprep.mubr.f32.mxu0 0.0
      %9860 = vmatmul.mubr.f32.gmra.mrb[0].mxu0 %v9649
      %v9861 = vpop.f32.mrb[0].mxu0
      %v9862 = vadd.f32 0.0, %v9861
      %v9863 = vpop.f32.mrb[0].mxu0
      %9864 = vmatprep.mubr.f32.mxu0 0.0
      %9865 = vmatmul.mubr.f32.gmra.mrb[0].mxu0 %v9652
      %v9866 = vpop.f32.mrb[0].mxu0
      %v9867 = vadd.f32 0.0, %v9866
      %v9868 = vpop.f32.mrb[0].mxu0
      %9869 = vmatprep.mubr.f32.mxu0 0.0
      %9870 = vmatmul.mubr.f32.gmra.mrb[0].mxu0 %v9655
      %v9871 = vpop.f32.mrb[0].mxu0
      %v9872 = vadd.f32 0.0, %v9871
      %v9873 = vpop.f32.mrb[0].mxu0
      %9874 = vmatprep.mubr.f32.mxu0 0.0
      %9875 = vmatmul.mubr.f32.gmra.mrb[0].mxu0 %v9658
      %v9876 = vpop.f32.mrb[0].mxu0
      %v9877 = vadd.f32 0.0, %v9876
      %v9878 = vpop.f32.mrb[0].mxu0
      %9879 = vmatprep.mubr.f32.mxu0 0.0
      %9880 = vmatmul.mubr.f32.gmra.mrb[0].mxu0 %v9661
      %v9881 = vpop.f32.mrb[0].mxu0
      %v9882 = vadd.f32 0.0, %v9881
      %v9883 = vpop.f32.mrb[0].mxu0
      %9884 = vmatprep.mubr.f32.mxu0 0.0
      %9885 = vmatmul.mubr.f32.gmra.mrb[0].mxu0 %v9664
      %v9886 = vpop.f32.mrb[0].mxu0
      %v9887 = vadd.f32 0.0, %v9886
      %v9888 = vpop.f32.mrb[0].mxu0
      %9889 = vmatprep.mubr.f32.mxu0 0.0
      %9890 = vmatmul.mubr.f32.gmra.mrb[0].mxu0 %v9667
      %v9891 = vpop.f32.mrb[0].mxu0
      %v9892 = vadd.f32 0.0, %v9891
      %v9893 = vpop.f32.mrb[0].mxu0
      %9894 = vmatprep.mubr.f32.mxu0 0.0
      %9895 = vmatmul.mubr.f32.gmra.mrb[0].mxu0 %v9670
      %v9896 = vpop.f32.mrb[0].mxu0
      %v9897 = vadd.f32 0.0, %v9896
      %v9898 = vpop.f32.mrb[0].mxu0
      %9899 = vdwg.mxu0
      %v9900 = vadd.f32 %v9510, %v9742
      %v9901 = vadd.f32 %v9511, %v9747
      %v9902 = vadd.f32 %v9512, %v9752
      %v9903 = vadd.f32 %v9513, %v9757
      %v9904 = vadd.f32 %v9514, %v9762
      %v9905 = vadd.f32 %v9515, %v9767
      %v9906 = vadd.f32 %v9516, %v9772
      %v9907 = vadd.f32 %v9517, %v9777
      %v9908 = vadd.f32 %v9518, %v9782
      %v9909 = vadd.f32 %v9519, %v9787
      %v9910 = vadd.f32 %v9520, %v9792
      %v9911 = vadd.f32 %v9521, %v9797
      %v9912 = vadd.f32 %v9522, %v9802
      %v9913 = vadd.f32 %v9523, %v9807
      %v9914 = vadd.f32 %v9524, %v9812
      %v9915 = vadd.f32 %v9525, %v9817
      %v9916 = vadd.f32 %v9526, %v9822
      %v9917 = vadd.f32 %v9527, %v9827
      %v9918 = vadd.f32 %v9528, %v9832
      %v9919 = vadd.f32 %v9529, %v9837
      %v9920 = vadd.f32 %v9530, %v9842
      %v9921 = vadd.f32 %v9531, %v9847
      %v9922 = vadd.f32 %v9532, %v9852
      %v9923 = vadd.f32 %v9533, %v9857
      %v9924 = vadd.f32 %v9534, %v9862
      %v9925 = vadd.f32 %v9535, %v9867
      %v9926 = vadd.f32 %v9536, %v9872
      %v9927 = vadd.f32 %v9537, %v9877
      %v9928 = vadd.f32 %v9538, %v9882
      %v9929 = vadd.f32 %v9539, %v9887
      %v9930 = vadd.f32 %v9540, %v9892
      %v9931 = vadd.f32 %v9541, %v9897
      %s9932 = scalar_lea.vmem %s219, 2016
      %v9933 = vld [vmem:[%s9932] sm:$0xff]
      %v9934 = vld [vmem:[%s9932 + $0x8] sm:$0xff]
      %v9935 = vld [vmem:[%s9932 + $0x38] sm:$0xff]
      %v9936 = vld [vmem:[%s9932 + $0x40] sm:$0xff]
      %v9937 = vld [vmem:[%s9932 + $0x70] sm:$0xff]
      %v9938 = vld [vmem:[%s9932 + $0x78] sm:$0xff]
      %v9939 = vld [vmem:[%s9932 + $0xa8] sm:$0xff]
      %v9940 = vld [vmem:[%s9932 + $0xb0] sm:$0xff]
      %v9941 = vld [vmem:[%s9932 + $0xe0] sm:$0xff]
      %v9942 = vld [vmem:[%s9932 + $0xe8] sm:$0xff]
      %v9943 = vld [vmem:[%s9932 + $0x118] sm:$0xff]
      %v9944 = vld [vmem:[%s9932 + $0x120] sm:$0xff]
      %v9945 = vld [vmem:[%s9932 + $0x150] sm:$0xff]
      %v9946 = vld [vmem:[%s9932 + $0x158] sm:$0xff]
      %v9947 = vld [vmem:[%s9932 + $0x188] sm:$0xff]
      %v9948 = vld [vmem:[%s9932 + $0x190] sm:$0xff]
      %v9949 = vld [vmem:[%s9932 + $0x1c0] sm:$0xff]
      %v9950 = vld [vmem:[%s9932 + $0x1c8] sm:$0xff]
      %v9951 = vld [vmem:[%s9932 + $0x1f8] sm:$0xff]
      %v9952 = vld [vmem:[%s9932 + $0x200] sm:$0xff]
      %v9953 = vld [vmem:[%s9932 + $0x230] sm:$0xff]
      %v9954 = vld [vmem:[%s9932 + $0x238] sm:$0xff]
      %v9955 = vld [vmem:[%s9932 + $0x268] sm:$0xff]
      %v9956 = vld [vmem:[%s9932 + $0x270] sm:$0xff]
      %v9957 = vld [vmem:[%s9932 + $0x2a0] sm:$0xff]
      %v9958 = vld [vmem:[%s9932 + $0x2a8] sm:$0xff]
      %v9959 = vld [vmem:[%s9932 + $0x2d8] sm:$0xff]
      %v9960 = vld [vmem:[%s9932 + $0x2e0] sm:$0xff]
      %v9961 = vld [vmem:[%s9932 + $0x310] sm:$0xff]
      %v9962 = vld [vmem:[%s9932 + $0x318] sm:$0xff]
      %v9963 = vld [vmem:[%s9932 + $0x348] sm:$0xff]
      %v9964 = vld [vmem:[%s9932 + $0x350] sm:$0xff]
      %s9965 = scalar_lea.vmem %s1, 96
      %v9966 = vld [vmem:[%s9965] sm:$0xf]
      %v9968 = vsel %vm293, %v9933, 0
      %v9971 = vsel %vm293, %v9934, 0
      %v9974 = vsel %vm293, %v9935, 0
      %v9977 = vsel %vm293, %v9936, 0
      %v9980 = vsel %vm293, %v9937, 0
      %v9983 = vsel %vm293, %v9938, 0
      %v9986 = vsel %vm293, %v9939, 0
      %v9989 = vsel %vm293, %v9940, 0
      %v9992 = vsel %vm293, %v9941, 0
      %v9995 = vsel %vm293, %v9942, 0
      %v9998 = vsel %vm293, %v9943, 0
      %v10001 = vsel %vm293, %v9944, 0
      %v10004 = vsel %vm293, %v9945, 0
      %v10007 = vsel %vm293, %v9946, 0
      %v10010 = vsel %vm293, %v9947, 0
      %v10013 = vsel %vm293, %v9948, 0
      %v10016 = vsel %vm293, %v9949, 0
      %v10019 = vsel %vm293, %v9950, 0
      %v10022 = vsel %vm293, %v9951, 0
      %v10025 = vsel %vm293, %v9952, 0
      %v10028 = vsel %vm293, %v9953, 0
      %v10031 = vsel %vm293, %v9954, 0
      %v10034 = vsel %vm293, %v9955, 0
      %v10037 = vsel %vm293, %v9956, 0
      %v10040 = vsel %vm293, %v9957, 0
      %v10043 = vsel %vm293, %v9958, 0
      %v10046 = vsel %vm293, %v9959, 0
      %v10049 = vsel %vm293, %v9960, 0
      %v10052 = vsel %vm293, %v9961, 0
      %v10055 = vsel %vm293, %v9962, 0
      %v10058 = vsel %vm293, %v9963, 0
      %v10061 = vsel %vm293, %v9964, 0
      %v10064 = vsel %vm390, %v9966, 0
      %10066 = vmatprep.subr.mxu0 0.0
      %10067 = vmatpush1.msra.mxu0 %v10064
      %10068 = vmatprep.subr.mxu0 0.0
      %10069 = vmatpush1.msra.mxu0 0.0
      %10070 = vmatprep.subr.mxu0 0.0
      %10071 = vmatpush1.msra.mxu0 0.0
      %10072 = vmatprep.subr.mxu0 0.0
      %10073 = vmatpush1.msra.mxu0 0.0
      %10074 = vmatprep.subr.mxu0 0.0
      %10075 = vmatpush1.msra.mxu0 0.0
      %10076 = vmatprep.subr.mxu0 0.0
      %10077 = vmatpush1.msra.mxu0 0.0
      %10078 = vmatprep.subr.mxu0 0.0
      %10079 = vmatpush1.msra.mxu0 0.0
      %10080 = vmatprep.subr.mxu0 0.0
      %10081 = vmatpush1.msra.mxu0 0.0
      %10082 = vmatprep.subr.mxu0 0.0
      %10083 = vmatpush1.msra.mxu0 0.0
      %10084 = vmatprep.subr.mxu0 0.0
      %10085 = vmatpush1.msra.mxu0 0.0
      %10086 = vmatprep.subr.mxu0 0.0
      %10087 = vmatpush1.msra.mxu0 0.0
      %10088 = vmatprep.subr.mxu0 0.0
      %10089 = vmatpush1.msra.mxu0 0.0
      %10090 = vmatprep.subr.mxu0 0.0
      %10091 = vmatpush1.msra.mxu0 0.0
      %10092 = vmatprep.subr.mxu0 0.0
      %10093 = vmatpush1.msra.mxu0 0.0
      %10094 = vmatprep.subr.mxu0 0.0
      %10095 = vmatpush1.msra.mxu0 0.0
      %10096 = vmatprep.subr.mxu0 0.0
      %10097 = vmatpush1.msra.mxu0 0.0
      %10098 = vmatprep.subr.mxu0 0.0
      %10099 = vmatpush1.msra.mxu0 0.0
      %10100 = vmatprep.subr.mxu0 0.0
      %10101 = vmatpush1.msra.mxu0 0.0
      %10102 = vmatprep.subr.mxu0 0.0
      %10103 = vmatpush1.msra.mxu0 0.0
      %10104 = vmatprep.subr.mxu0 0.0
      %10105 = vmatpush1.msra.mxu0 0.0
      %10106 = vmatprep.subr.mxu0 0.0
      %10107 = vmatpush1.msra.mxu0 0.0
      %10108 = vmatprep.subr.mxu0 0.0
      %10109 = vmatpush1.msra.mxu0 0.0
      %10110 = vmatprep.subr.mxu0 0.0
      %10111 = vmatpush1.msra.mxu0 0.0
      %10112 = vmatprep.subr.mxu0 0.0
      %10113 = vmatpush1.msra.mxu0 0.0
      %10114 = vmatprep.subr.mxu0 0.0
      %10115 = vmatpush1.msra.mxu0 0.0
      %10116 = vmatprep.subr.mxu0 0.0
      %10117 = vmatpush1.msra.mxu0 0.0
      %10118 = vmatprep.subr.mxu0 0.0
      %10119 = vmatpush1.msra.mxu0 0.0
      %10120 = vmatprep.subr.mxu0 0.0
      %10121 = vmatpush1.msra.mxu0 0.0
      %10122 = vmatprep.subr.mxu0 0.0
      %10123 = vmatpush1.msra.mxu0 0.0
      %10124 = vmatprep.subr.mxu0 0.0
      %10125 = vmatpush1.msra.mxu0 0.0
      %10126 = vmatprep.subr.mxu0 0.0
      %10127 = vmatpush1.msra.mxu0 0.0
      %10128 = vmatprep.subr.mxu0 0.0
      %10129 = vmatpush1.msra.mxu0 0.0
      %10130 = vmatprep.mubr.f32.mxu0 0.0
      %10131 = vmatmul.mubr.f32.gmra.mrb[0].mxu0 %v9968
      %v10132 = vpop.f32.mrb[0].mxu0
      %v10133 = vadd.f32 0.0, %v10132
      %v10134 = vpop.f32.mrb[0].mxu0
      %10135 = vmatprep.mubr.f32.mxu0 0.0
      %10136 = vmatmul.mubr.f32.gmra.mrb[0].mxu0 %v9971
      %v10137 = vpop.f32.mrb[0].mxu0
      %v10138 = vadd.f32 0.0, %v10137
      %v10139 = vpop.f32.mrb[0].mxu0
      %10140 = vmatprep.mubr.f32.mxu0 0.0
      %10141 = vmatmul.mubr.f32.gmra.mrb[0].mxu0 %v9974
      %v10142 = vpop.f32.mrb[0].mxu0
      %v10143 = vadd.f32 0.0, %v10142
      %v10144 = vpop.f32.mrb[0].mxu0
      %10145 = vmatprep.mubr.f32.mxu0 0.0
      %10146 = vmatmul.mubr.f32.gmra.mrb[0].mxu0 %v9977
      %v10147 = vpop.f32.mrb[0].mxu0
      %v10148 = vadd.f32 0.0, %v10147
      %v10149 = vpop.f32.mrb[0].mxu0
      %10150 = vmatprep.mubr.f32.mxu0 0.0
      %10151 = vmatmul.mubr.f32.gmra.mrb[0].mxu0 %v9980
      %v10152 = vpop.f32.mrb[0].mxu0
      %v10153 = vadd.f32 0.0, %v10152
      %v10154 = vpop.f32.mrb[0].mxu0
      %10155 = vmatprep.mubr.f32.mxu0 0.0
      %10156 = vmatmul.mubr.f32.gmra.mrb[0].mxu0 %v9983
      %v10157 = vpop.f32.mrb[0].mxu0
      %v10158 = vadd.f32 0.0, %v10157
      %v10159 = vpop.f32.mrb[0].mxu0
      %10160 = vmatprep.mubr.f32.mxu0 0.0
      %10161 = vmatmul.mubr.f32.gmra.mrb[0].mxu0 %v9986
      %v10162 = vpop.f32.mrb[0].mxu0
      %v10163 = vadd.f32 0.0, %v10162
      %v10164 = vpop.f32.mrb[0].mxu0
      %10165 = vmatprep.mubr.f32.mxu0 0.0
      %10166 = vmatmul.mubr.f32.gmra.mrb[0].mxu0 %v9989
      %v10167 = vpop.f32.mrb[0].mxu0
      %v10168 = vadd.f32 0.0, %v10167
      %v10169 = vpop.f32.mrb[0].mxu0
      %10170 = vmatprep.mubr.f32.mxu0 0.0
      %10171 = vmatmul.mubr.f32.gmra.mrb[0].mxu0 %v9992
      %v10172 = vpop.f32.mrb[0].mxu0
      %v10173 = vadd.f32 0.0, %v10172
      %v10174 = vpop.f32.mrb[0].mxu0
      %10175 = vmatprep.mubr.f32.mxu0 0.0
      %10176 = vmatmul.mubr.f32.gmra.mrb[0].mxu0 %v9995
      %v10177 = vpop.f32.mrb[0].mxu0
      %v10178 = vadd.f32 0.0, %v10177
      %v10179 = vpop.f32.mrb[0].mxu0
      %10180 = vmatprep.mubr.f32.mxu0 0.0
      %10181 = vmatmul.mubr.f32.gmra.mrb[0].mxu0 %v9998
      %v10182 = vpop.f32.mrb[0].mxu0
      %v10183 = vadd.f32 0.0, %v10182
      %v10184 = vpop.f32.mrb[0].mxu0
      %10185 = vmatprep.mubr.f32.mxu0 0.0
      %10186 = vmatmul.mubr.f32.gmra.mrb[0].mxu0 %v10001
      %v10187 = vpop.f32.mrb[0].mxu0
      %v10188 = vadd.f32 0.0, %v10187
      %v10189 = vpop.f32.mrb[0].mxu0
      %10190 = vmatprep.mubr.f32.mxu0 0.0
      %10191 = vmatmul.mubr.f32.gmra.mrb[0].mxu0 %v10004
      %v10192 = vpop.f32.mrb[0].mxu0
      %v10193 = vadd.f32 0.0, %v10192
      %v10194 = vpop.f32.mrb[0].mxu0
      %10195 = vmatprep.mubr.f32.mxu0 0.0
      %10196 = vmatmul.mubr.f32.gmra.mrb[0].mxu0 %v10007
      %v10197 = vpop.f32.mrb[0].mxu0
      %v10198 = vadd.f32 0.0, %v10197
      %v10199 = vpop.f32.mrb[0].mxu0
      %10200 = vmatprep.mubr.f32.mxu0 0.0
      %10201 = vmatmul.mubr.f32.gmra.mrb[0].mxu0 %v10010
      %v10202 = vpop.f32.mrb[0].mxu0
      %v10203 = vadd.f32 0.0, %v10202
      %v10204 = vpop.f32.mrb[0].mxu0
      %10205 = vmatprep.mubr.f32.mxu0 0.0
      %10206 = vmatmul.mubr.f32.gmra.mrb[0].mxu0 %v10013
      %v10207 = vpop.f32.mrb[0].mxu0
      %v10208 = vadd.f32 0.0, %v10207
      %v10209 = vpop.f32.mrb[0].mxu0
      %10210 = vmatprep.mubr.f32.mxu0 0.0
      %10211 = vmatmul.mubr.f32.gmra.mrb[0].mxu0 %v10016
      %v10212 = vpop.f32.mrb[0].mxu0
      %v10213 = vadd.f32 0.0, %v10212
      %v10214 = vpop.f32.mrb[0].mxu0
      %10215 = vmatprep.mubr.f32.mxu0 0.0
      %10216 = vmatmul.mubr.f32.gmra.mrb[0].mxu0 %v10019
      %v10217 = vpop.f32.mrb[0].mxu0
      %v10218 = vadd.f32 0.0, %v10217
      %v10219 = vpop.f32.mrb[0].mxu0
      %10220 = vmatprep.mubr.f32.mxu0 0.0
      %10221 = vmatmul.mubr.f32.gmra.mrb[0].mxu0 %v10022
      %v10222 = vpop.f32.mrb[0].mxu0
      %v10223 = vadd.f32 0.0, %v10222
      %v10224 = vpop.f32.mrb[0].mxu0
      %10225 = vmatprep.mubr.f32.mxu0 0.0
      %10226 = vmatmul.mubr.f32.gmra.mrb[0].mxu0 %v10025
      %v10227 = vpop.f32.mrb[0].mxu0
      %v10228 = vadd.f32 0.0, %v10227
      %v10229 = vpop.f32.mrb[0].mxu0
      %10230 = vmatprep.mubr.f32.mxu0 0.0
      %10231 = vmatmul.mubr.f32.gmra.mrb[0].mxu0 %v10028
      %v10232 = vpop.f32.mrb[0].mxu0
      %v10233 = vadd.f32 0.0, %v10232
      %v10234 = vpop.f32.mrb[0].mxu0
      %10235 = vmatprep.mubr.f32.mxu0 0.0
      %10236 = vmatmul.mubr.f32.gmra.mrb[0].mxu0 %v10031
      %v10237 = vpop.f32.mrb[0].mxu0
      %v10238 = vadd.f32 0.0, %v10237
      %v10239 = vpop.f32.mrb[0].mxu0
      %10240 = vmatprep.mubr.f32.mxu0 0.0
      %10241 = vmatmul.mubr.f32.gmra.mrb[0].mxu0 %v10034
      %v10242 = vpop.f32.mrb[0].mxu0
      %v10243 = vadd.f32 0.0, %v10242
      %v10244 = vpop.f32.mrb[0].mxu0
      %10245 = vmatprep.mubr.f32.mxu0 0.0
      %10246 = vmatmul.mubr.f32.gmra.mrb[0].mxu0 %v10037
      %v10247 = vpop.f32.mrb[0].mxu0
      %v10248 = vadd.f32 0.0, %v10247
      %v10249 = vpop.f32.mrb[0].mxu0
      %10250 = vmatprep.mubr.f32.mxu0 0.0
      %10251 = vmatmul.mubr.f32.gmra.mrb[0].mxu0 %v10040
      %v10252 = vpop.f32.mrb[0].mxu0
      %v10253 = vadd.f32 0.0, %v10252
      %v10254 = vpop.f32.mrb[0].mxu0
      %10255 = vmatprep.mubr.f32.mxu0 0.0
      %10256 = vmatmul.mubr.f32.gmra.mrb[0].mxu0 %v10043
      %v10257 = vpop.f32.mrb[0].mxu0
      %v10258 = vadd.f32 0.0, %v10257
      %v10259 = vpop.f32.mrb[0].mxu0
      %10260 = vmatprep.mubr.f32.mxu0 0.0
      %10261 = vmatmul.mubr.f32.gmra.mrb[0].mxu0 %v10046
      %v10262 = vpop.f32.mrb[0].mxu0
      %v10263 = vadd.f32 0.0, %v10262
      %v10264 = vpop.f32.mrb[0].mxu0
      %10265 = vmatprep.mubr.f32.mxu0 0.0
      %10266 = vmatmul.mubr.f32.gmra.mrb[0].mxu0 %v10049
      %v10267 = vpop.f32.mrb[0].mxu0
      %v10268 = vadd.f32 0.0, %v10267
      %v10269 = vpop.f32.mrb[0].mxu0
      %10270 = vmatprep.mubr.f32.mxu0 0.0
      %10271 = vmatmul.mubr.f32.gmra.mrb[0].mxu0 %v10052
      %v10272 = vpop.f32.mrb[0].mxu0
      %v10273 = vadd.f32 0.0, %v10272
      %v10274 = vpop.f32.mrb[0].mxu0
      %10275 = vmatprep.mubr.f32.mxu0 0.0
      %10276 = vmatmul.mubr.f32.gmra.mrb[0].mxu0 %v10055
      %v10277 = vpop.f32.mrb[0].mxu0
      %v10278 = vadd.f32 0.0, %v10277
      %v10279 = vpop.f32.mrb[0].mxu0
      %10280 = vmatprep.mubr.f32.mxu0 0.0
      %10281 = vmatmul.mubr.f32.gmra.mrb[0].mxu0 %v10058
      %v10282 = vpop.f32.mrb[0].mxu0
      %v10283 = vadd.f32 0.0, %v10282
      %v10284 = vpop.f32.mrb[0].mxu0
      %10285 = vmatprep.mubr.f32.mxu0 0.0
      %10286 = vmatmul.mubr.f32.gmra.mrb[0].mxu0 %v10061
      %v10287 = vpop.f32.mrb[0].mxu0
      %v10288 = vadd.f32 0.0, %v10287
      %v10289 = vpop.f32.mrb[0].mxu0
      %10290 = vdwg.mxu0
      %v10291 = vadd.f32 %v9900, %v10133
      %v10292 = vadd.f32 %v9901, %v10138
      %v10293 = vadd.f32 %v9902, %v10143
      %v10294 = vadd.f32 %v9903, %v10148
      %v10295 = vadd.f32 %v9904, %v10153
      %v10296 = vadd.f32 %v9905, %v10158
      %v10297 = vadd.f32 %v9906, %v10163
      %v10298 = vadd.f32 %v9907, %v10168
      %v10299 = vadd.f32 %v9908, %v10173
      %v10300 = vadd.f32 %v9909, %v10178
      %v10301 = vadd.f32 %v9910, %v10183
      %v10302 = vadd.f32 %v9911, %v10188
      %v10303 = vadd.f32 %v9912, %v10193
      %v10304 = vadd.f32 %v9913, %v10198
      %v10305 = vadd.f32 %v9914, %v10203
      %v10306 = vadd.f32 %v9915, %v10208
      %v10307 = vadd.f32 %v9916, %v10213
      %v10308 = vadd.f32 %v9917, %v10218
      %v10309 = vadd.f32 %v9918, %v10223
      %v10310 = vadd.f32 %v9919, %v10228
      %v10311 = vadd.f32 %v9920, %v10233
      %v10312 = vadd.f32 %v9921, %v10238
      %v10313 = vadd.f32 %v9922, %v10243
      %v10314 = vadd.f32 %v9923, %v10248
      %v10315 = vadd.f32 %v9924, %v10253
      %v10316 = vadd.f32 %v9925, %v10258
      %v10317 = vadd.f32 %v9926, %v10263
      %v10318 = vadd.f32 %v9927, %v10268
      %v10319 = vadd.f32 %v9928, %v10273
      %v10320 = vadd.f32 %v9929, %v10278
      %v10321 = vadd.f32 %v9930, %v10283
      %v10322 = vadd.f32 %v9931, %v10288
      %v10323 = vld [vmem:[%s9932 + $0x12] sm:$0xff]
      %v10324 = vld [vmem:[%s9932 + $0x1a] sm:$0xff]
      %v10325 = vld [vmem:[%s9932 + $0x4a] sm:$0xff]
      %v10326 = vld [vmem:[%s9932 + $0x52] sm:$0xff]
      %v10327 = vld [vmem:[%s9932 + $0x82] sm:$0xff]
      %v10328 = vld [vmem:[%s9932 + $0x8a] sm:$0xff]
      %v10329 = vld [vmem:[%s9932 + $0xba] sm:$0xff]
      %v10330 = vld [vmem:[%s9932 + $0xc2] sm:$0xff]
      %v10331 = vld [vmem:[%s9932 + $0xf2] sm:$0xff]
      %v10332 = vld [vmem:[%s9932 + $0xfa] sm:$0xff]
      %v10333 = vld [vmem:[%s9932 + $0x12a] sm:$0xff]
      %v10334 = vld [vmem:[%s9932 + $0x132] sm:$0xff]
      %v10335 = vld [vmem:[%s9932 + $0x162] sm:$0xff]
      %v10336 = vld [vmem:[%s9932 + $0x16a] sm:$0xff]
      %v10337 = vld [vmem:[%s9932 + $0x19a] sm:$0xff]
      %v10338 = vld [vmem:[%s9932 + $0x1a2] sm:$0xff]
      %v10339 = vld [vmem:[%s9932 + $0x1d2] sm:$0xff]
      %v10340 = vld [vmem:[%s9932 + $0x1da] sm:$0xff]
      %v10341 = vld [vmem:[%s9932 + $0x20a] sm:$0xff]
      %v10342 = vld [vmem:[%s9932 + $0x212] sm:$0xff]
      %v10343 = vld [vmem:[%s9932 + $0x242] sm:$0xff]
      %v10344 = vld [vmem:[%s9932 + $0x24a] sm:$0xff]
      %v10345 = vld [vmem:[%s9932 + $0x27a] sm:$0xff]
      %v10346 = vld [vmem:[%s9932 + $0x282] sm:$0xff]
      %v10347 = vld [vmem:[%s9932 + $0x2b2] sm:$0xff]
      %v10348 = vld [vmem:[%s9932 + $0x2ba] sm:$0xff]
      %v10349 = vld [vmem:[%s9932 + $0x2ea] sm:$0xff]
      %v10350 = vld [vmem:[%s9932 + $0x2f2] sm:$0xff]
      %v10351 = vld [vmem:[%s9932 + $0x322] sm:$0xff]
      %v10352 = vld [vmem:[%s9932 + $0x32a] sm:$0xff]
      %v10353 = vld [vmem:[%s9932 + $0x35a] sm:$0xff]
      %v10354 = vld [vmem:[%s9932 + $0x362] sm:$0xff]
      %s10355 = scalar_lea.vmem %s1, 100
      %v10356 = vld [vmem:[%s10355] sm:$0xf]
      %v10358 = vsel %vm293, %v10323, 0
      %v10361 = vsel %vm293, %v10324, 0
      %v10364 = vsel %vm293, %v10325, 0
      %v10367 = vsel %vm293, %v10326, 0
      %v10370 = vsel %vm293, %v10327, 0
      %v10373 = vsel %vm293, %v10328, 0
      %v10376 = vsel %vm293, %v10329, 0
      %v10379 = vsel %vm293, %v10330, 0
      %v10382 = vsel %vm293, %v10331, 0
      %v10385 = vsel %vm293, %v10332, 0
      %v10388 = vsel %vm293, %v10333, 0
      %v10391 = vsel %vm293, %v10334, 0
      %v10394 = vsel %vm293, %v10335, 0
      %v10397 = vsel %vm293, %v10336, 0
      %v10400 = vsel %vm293, %v10337, 0
      %v10403 = vsel %vm293, %v10338, 0
      %v10406 = vsel %vm293, %v10339, 0
      %v10409 = vsel %vm293, %v10340, 0
      %v10412 = vsel %vm293, %v10341, 0
      %v10415 = vsel %vm293, %v10342, 0
      %v10418 = vsel %vm293, %v10343, 0
      %v10421 = vsel %vm293, %v10344, 0
      %v10424 = vsel %vm293, %v10345, 0
      %v10427 = vsel %vm293, %v10346, 0
      %v10430 = vsel %vm293, %v10347, 0
      %v10433 = vsel %vm293, %v10348, 0
      %v10436 = vsel %vm293, %v10349, 0
      %v10439 = vsel %vm293, %v10350, 0
      %v10442 = vsel %vm293, %v10351, 0
      %v10445 = vsel %vm293, %v10352, 0
      %v10448 = vsel %vm293, %v10353, 0
      %v10451 = vsel %vm293, %v10354, 0
      %v10454 = vsel %vm390, %v10356, 0
      %10456 = vmatprep.subr.mxu0 0.0
      %10457 = vmatpush1.msra.mxu0 %v10454
      %10458 = vmatprep.subr.mxu0 0.0
      %10459 = vmatpush1.msra.mxu0 0.0
      %10460 = vmatprep.subr.mxu0 0.0
      %10461 = vmatpush1.msra.mxu0 0.0
      %10462 = vmatprep.subr.mxu0 0.0
      %10463 = vmatpush1.msra.mxu0 0.0
      %10464 = vmatprep.subr.mxu0 0.0
      %10465 = vmatpush1.msra.mxu0 0.0
      %10466 = vmatprep.subr.mxu0 0.0
      %10467 = vmatpush1.msra.mxu0 0.0
      %10468 = vmatprep.subr.mxu0 0.0
      %10469 = vmatpush1.msra.mxu0 0.0
      %10470 = vmatprep.subr.mxu0 0.0
      %10471 = vmatpush1.msra.mxu0 0.0
      %10472 = vmatprep.subr.mxu0 0.0
      %10473 = vmatpush1.msra.mxu0 0.0
      %10474 = vmatprep.subr.mxu0 0.0
      %10475 = vmatpush1.msra.mxu0 0.0
      %10476 = vmatprep.subr.mxu0 0.0
      %10477 = vmatpush1.msra.mxu0 0.0
      %10478 = vmatprep.subr.mxu0 0.0
      %10479 = vmatpush1.msra.mxu0 0.0
      %10480 = vmatprep.subr.mxu0 0.0
      %10481 = vmatpush1.msra.mxu0 0.0
      %10482 = vmatprep.subr.mxu0 0.0
      %10483 = vmatpush1.msra.mxu0 0.0
      %10484 = vmatprep.subr.mxu0 0.0
      %10485 = vmatpush1.msra.mxu0 0.0
      %10486 = vmatprep.subr.mxu0 0.0
      %10487 = vmatpush1.msra.mxu0 0.0
      %10488 = vmatprep.subr.mxu0 0.0
      %10489 = vmatpush1.msra.mxu0 0.0
      %10490 = vmatprep.subr.mxu0 0.0
      %10491 = vmatpush1.msra.mxu0 0.0
      %10492 = vmatprep.subr.mxu0 0.0
      %10493 = vmatpush1.msra.mxu0 0.0
      %10494 = vmatprep.subr.mxu0 0.0
      %10495 = vmatpush1.msra.mxu0 0.0
      %10496 = vmatprep.subr.mxu0 0.0
      %10497 = vmatpush1.msra.mxu0 0.0
      %10498 = vmatprep.subr.mxu0 0.0
      %10499 = vmatpush1.msra.mxu0 0.0
      %10500 = vmatprep.subr.mxu0 0.0
      %10501 = vmatpush1.msra.mxu0 0.0
      %10502 = vmatprep.subr.mxu0 0.0
      %10503 = vmatpush1.msra.mxu0 0.0
      %10504 = vmatprep.subr.mxu0 0.0
      %10505 = vmatpush1.msra.mxu0 0.0
      %10506 = vmatprep.subr.mxu0 0.0
      %10507 = vmatpush1.msra.mxu0 0.0
      %10508 = vmatprep.subr.mxu0 0.0
      %10509 = vmatpush1.msra.mxu0 0.0
      %10510 = vmatprep.subr.mxu0 0.0
      %10511 = vmatpush1.msra.mxu0 0.0
      %10512 = vmatprep.subr.mxu0 0.0
      %10513 = vmatpush1.msra.mxu0 0.0
      %10514 = vmatprep.subr.mxu0 0.0
      %10515 = vmatpush1.msra.mxu0 0.0
      %10516 = vmatprep.subr.mxu0 0.0
      %10517 = vmatpush1.msra.mxu0 0.0
      %10518 = vmatprep.subr.mxu0 0.0
      %10519 = vmatpush1.msra.mxu0 0.0
      %10520 = vmatprep.mubr.f32.mxu0 0.0
      %10521 = vmatmul.mubr.f32.gmra.mrb[0].mxu0 %v10358
      %v10522 = vpop.f32.mrb[0].mxu0
      %v10523 = vadd.f32 0.0, %v10522
      %v10524 = vpop.f32.mrb[0].mxu0
      %10525 = vmatprep.mubr.f32.mxu0 0.0
      %10526 = vmatmul.mubr.f32.gmra.mrb[0].mxu0 %v10361
      %v10527 = vpop.f32.mrb[0].mxu0
      %v10528 = vadd.f32 0.0, %v10527
      %v10529 = vpop.f32.mrb[0].mxu0
      %10530 = vmatprep.mubr.f32.mxu0 0.0
      %10531 = vmatmul.mubr.f32.gmra.mrb[0].mxu0 %v10364
      %v10532 = vpop.f32.mrb[0].mxu0
      %v10533 = vadd.f32 0.0, %v10532
      %v10534 = vpop.f32.mrb[0].mxu0
      %10535 = vmatprep.mubr.f32.mxu0 0.0
      %10536 = vmatmul.mubr.f32.gmra.mrb[0].mxu0 %v10367
      %v10537 = vpop.f32.mrb[0].mxu0
      %v10538 = vadd.f32 0.0, %v10537
      %v10539 = vpop.f32.mrb[0].mxu0
      %10540 = vmatprep.mubr.f32.mxu0 0.0
      %10541 = vmatmul.mubr.f32.gmra.mrb[0].mxu0 %v10370
      %v10542 = vpop.f32.mrb[0].mxu0
      %v10543 = vadd.f32 0.0, %v10542
      %v10544 = vpop.f32.mrb[0].mxu0
      %10545 = vmatprep.mubr.f32.mxu0 0.0
      %10546 = vmatmul.mubr.f32.gmra.mrb[0].mxu0 %v10373
      %v10547 = vpop.f32.mrb[0].mxu0
      %v10548 = vadd.f32 0.0, %v10547
      %v10549 = vpop.f32.mrb[0].mxu0
      %10550 = vmatprep.mubr.f32.mxu0 0.0
      %10551 = vmatmul.mubr.f32.gmra.mrb[0].mxu0 %v10376
      %v10552 = vpop.f32.mrb[0].mxu0
      %v10553 = vadd.f32 0.0, %v10552
      %v10554 = vpop.f32.mrb[0].mxu0
      %10555 = vmatprep.mubr.f32.mxu0 0.0
      %10556 = vmatmul.mubr.f32.gmra.mrb[0].mxu0 %v10379
      %v10557 = vpop.f32.mrb[0].mxu0
      %v10558 = vadd.f32 0.0, %v10557
      %v10559 = vpop.f32.mrb[0].mxu0
      %10560 = vmatprep.mubr.f32.mxu0 0.0
      %10561 = vmatmul.mubr.f32.gmra.mrb[0].mxu0 %v10382
      %v10562 = vpop.f32.mrb[0].mxu0
      %v10563 = vadd.f32 0.0, %v10562
      %v10564 = vpop.f32.mrb[0].mxu0
      %10565 = vmatprep.mubr.f32.mxu0 0.0
      %10566 = vmatmul.mubr.f32.gmra.mrb[0].mxu0 %v10385
      %v10567 = vpop.f32.mrb[0].mxu0
      %v10568 = vadd.f32 0.0, %v10567
      %v10569 = vpop.f32.mrb[0].mxu0
      %10570 = vmatprep.mubr.f32.mxu0 0.0
      %10571 = vmatmul.mubr.f32.gmra.mrb[0].mxu0 %v10388
      %v10572 = vpop.f32.mrb[0].mxu0
      %v10573 = vadd.f32 0.0, %v10572
      %v10574 = vpop.f32.mrb[0].mxu0
      %10575 = vmatprep.mubr.f32.mxu0 0.0
      %10576 = vmatmul.mubr.f32.gmra.mrb[0].mxu0 %v10391
      %v10577 = vpop.f32.mrb[0].mxu0
      %v10578 = vadd.f32 0.0, %v10577
      %v10579 = vpop.f32.mrb[0].mxu0
      %10580 = vmatprep.mubr.f32.mxu0 0.0
      %10581 = vmatmul.mubr.f32.gmra.mrb[0].mxu0 %v10394
      %v10582 = vpop.f32.mrb[0].mxu0
      %v10583 = vadd.f32 0.0, %v10582
      %v10584 = vpop.f32.mrb[0].mxu0
      %10585 = vmatprep.mubr.f32.mxu0 0.0
      %10586 = vmatmul.mubr.f32.gmra.mrb[0].mxu0 %v10397
      %v10587 = vpop.f32.mrb[0].mxu0
      %v10588 = vadd.f32 0.0, %v10587
      %v10589 = vpop.f32.mrb[0].mxu0
      %10590 = vmatprep.mubr.f32.mxu0 0.0
      %10591 = vmatmul.mubr.f32.gmra.mrb[0].mxu0 %v10400
      %v10592 = vpop.f32.mrb[0].mxu0
      %v10593 = vadd.f32 0.0, %v10592
      %v10594 = vpop.f32.mrb[0].mxu0
      %10595 = vmatprep.mubr.f32.mxu0 0.0
      %10596 = vmatmul.mubr.f32.gmra.mrb[0].mxu0 %v10403
      %v10597 = vpop.f32.mrb[0].mxu0
      %v10598 = vadd.f32 0.0, %v10597
      %v10599 = vpop.f32.mrb[0].mxu0
      %10600 = vmatprep.mubr.f32.mxu0 0.0
      %10601 = vmatmul.mubr.f32.gmra.mrb[0].mxu0 %v10406
      %v10602 = vpop.f32.mrb[0].mxu0
      %v10603 = vadd.f32 0.0, %v10602
      %v10604 = vpop.f32.mrb[0].mxu0
      %10605 = vmatprep.mubr.f32.mxu0 0.0
      %10606 = vmatmul.mubr.f32.gmra.mrb[0].mxu0 %v10409
      %v10607 = vpop.f32.mrb[0].mxu0
      %v10608 = vadd.f32 0.0, %v10607
      %v10609 = vpop.f32.mrb[0].mxu0
      %10610 = vmatprep.mubr.f32.mxu0 0.0
      %10611 = vmatmul.mubr.f32.gmra.mrb[0].mxu0 %v10412
      %v10612 = vpop.f32.mrb[0].mxu0
      %v10613 = vadd.f32 0.0, %v10612
      %v10614 = vpop.f32.mrb[0].mxu0
      %10615 = vmatprep.mubr.f32.mxu0 0.0
      %10616 = vmatmul.mubr.f32.gmra.mrb[0].mxu0 %v10415
      %v10617 = vpop.f32.mrb[0].mxu0
      %v10618 = vadd.f32 0.0, %v10617
      %v10619 = vpop.f32.mrb[0].mxu0
      %10620 = vmatprep.mubr.f32.mxu0 0.0
      %10621 = vmatmul.mubr.f32.gmra.mrb[0].mxu0 %v10418
      %v10622 = vpop.f32.mrb[0].mxu0
      %v10623 = vadd.f32 0.0, %v10622
      %v10624 = vpop.f32.mrb[0].mxu0
      %10625 = vmatprep.mubr.f32.mxu0 0.0
      %10626 = vmatmul.mubr.f32.gmra.mrb[0].mxu0 %v10421
      %v10627 = vpop.f32.mrb[0].mxu0
      %v10628 = vadd.f32 0.0, %v10627
      %v10629 = vpop.f32.mrb[0].mxu0
      %10630 = vmatprep.mubr.f32.mxu0 0.0
      %10631 = vmatmul.mubr.f32.gmra.mrb[0].mxu0 %v10424
      %v10632 = vpop.f32.mrb[0].mxu0
      %v10633 = vadd.f32 0.0, %v10632
      %v10634 = vpop.f32.mrb[0].mxu0
      %10635 = vmatprep.mubr.f32.mxu0 0.0
      %10636 = vmatmul.mubr.f32.gmra.mrb[0].mxu0 %v10427
      %v10637 = vpop.f32.mrb[0].mxu0
      %v10638 = vadd.f32 0.0, %v10637
      %v10639 = vpop.f32.mrb[0].mxu0
      %10640 = vmatprep.mubr.f32.mxu0 0.0
      %10641 = vmatmul.mubr.f32.gmra.mrb[0].mxu0 %v10430
      %v10642 = vpop.f32.mrb[0].mxu0
      %v10643 = vadd.f32 0.0, %v10642
      %v10644 = vpop.f32.mrb[0].mxu0
      %10645 = vmatprep.mubr.f32.mxu0 0.0
      %10646 = vmatmul.mubr.f32.gmra.mrb[0].mxu0 %v10433
      %v10647 = vpop.f32.mrb[0].mxu0
      %v10648 = vadd.f32 0.0, %v10647
      %v10649 = vpop.f32.mrb[0].mxu0
      %10650 = vmatprep.mubr.f32.mxu0 0.0
      %10651 = vmatmul.mubr.f32.gmra.mrb[0].mxu0 %v10436
      %v10652 = vpop.f32.mrb[0].mxu0
      %v10653 = vadd.f32 0.0, %v10652
      %v10654 = vpop.f32.mrb[0].mxu0
      %10655 = vmatprep.mubr.f32.mxu0 0.0
      %10656 = vmatmul.mubr.f32.gmra.mrb[0].mxu0 %v10439
      %v10657 = vpop.f32.mrb[0].mxu0
      %v10658 = vadd.f32 0.0, %v10657
      %v10659 = vpop.f32.mrb[0].mxu0
      %10660 = vmatprep.mubr.f32.mxu0 0.0
      %10661 = vmatmul.mubr.f32.gmra.mrb[0].mxu0 %v10442
      %v10662 = vpop.f32.mrb[0].mxu0
      %v10663 = vadd.f32 0.0, %v10662
      %v10664 = vpop.f32.mrb[0].mxu0
      %10665 = vmatprep.mubr.f32.mxu0 0.0
      %10666 = vmatmul.mubr.f32.gmra.mrb[0].mxu0 %v10445
      %v10667 = vpop.f32.mrb[0].mxu0
      %v10668 = vadd.f32 0.0, %v10667
      %v10669 = vpop.f32.mrb[0].mxu0
      %10670 = vmatprep.mubr.f32.mxu0 0.0
      %10671 = vmatmul.mubr.f32.gmra.mrb[0].mxu0 %v10448
      %v10672 = vpop.f32.mrb[0].mxu0
      %v10673 = vadd.f32 0.0, %v10672
      %v10674 = vpop.f32.mrb[0].mxu0
      %10675 = vmatprep.mubr.f32.mxu0 0.0
      %10676 = vmatmul.mubr.f32.gmra.mrb[0].mxu0 %v10451
      %v10677 = vpop.f32.mrb[0].mxu0
      %v10678 = vadd.f32 0.0, %v10677
      %v10679 = vpop.f32.mrb[0].mxu0
      %10680 = vdwg.mxu0
      %v10681 = vadd.f32 %v10291, %v10523
      %v10682 = vadd.f32 %v10292, %v10528
      %v10683 = vadd.f32 %v10293, %v10533
      %v10684 = vadd.f32 %v10294, %v10538
      %v10685 = vadd.f32 %v10295, %v10543
      %v10686 = vadd.f32 %v10296, %v10548
      %v10687 = vadd.f32 %v10297, %v10553
      %v10688 = vadd.f32 %v10298, %v10558
      %v10689 = vadd.f32 %v10299, %v10563
      %v10690 = vadd.f32 %v10300, %v10568
      %v10691 = vadd.f32 %v10301, %v10573
      %v10692 = vadd.f32 %v10302, %v10578
      %v10693 = vadd.f32 %v10303, %v10583
      %v10694 = vadd.f32 %v10304, %v10588
      %v10695 = vadd.f32 %v10305, %v10593
      %v10696 = vadd.f32 %v10306, %v10598
      %v10697 = vadd.f32 %v10307, %v10603
      %v10698 = vadd.f32 %v10308, %v10608
      %v10699 = vadd.f32 %v10309, %v10613
      %v10700 = vadd.f32 %v10310, %v10618
      %v10701 = vadd.f32 %v10311, %v10623
      %v10702 = vadd.f32 %v10312, %v10628
      %v10703 = vadd.f32 %v10313, %v10633
      %v10704 = vadd.f32 %v10314, %v10638
      %v10705 = vadd.f32 %v10315, %v10643
      %v10706 = vadd.f32 %v10316, %v10648
      %v10707 = vadd.f32 %v10317, %v10653
      %v10708 = vadd.f32 %v10318, %v10658
      %v10709 = vadd.f32 %v10319, %v10663
      %v10710 = vadd.f32 %v10320, %v10668
      %v10711 = vadd.f32 %v10321, %v10673
      %v10712 = vadd.f32 %v10322, %v10678
      %v10713 = vld [vmem:[%s9932 + $0x24] sm:$0xff]
      %v10714 = vld [vmem:[%s9932 + $0x2c] sm:$0xff]
      %v10715 = vld [vmem:[%s9932 + $0x5c] sm:$0xff]
      %v10716 = vld [vmem:[%s9932 + $0x64] sm:$0xff]
      %v10717 = vld [vmem:[%s9932 + $0x94] sm:$0xff]
      %v10718 = vld [vmem:[%s9932 + $0x9c] sm:$0xff]
      %v10719 = vld [vmem:[%s9932 + $0xcc] sm:$0xff]
      %v10720 = vld [vmem:[%s9932 + $0xd4] sm:$0xff]
      %v10721 = vld [vmem:[%s9932 + $0x104] sm:$0xff]
      %v10722 = vld [vmem:[%s9932 + $0x10c] sm:$0xff]
      %v10723 = vld [vmem:[%s9932 + $0x13c] sm:$0xff]
      %v10724 = vld [vmem:[%s9932 + $0x144] sm:$0xff]
      %v10725 = vld [vmem:[%s9932 + $0x174] sm:$0xff]
      %v10726 = vld [vmem:[%s9932 + $0x17c] sm:$0xff]
      %v10727 = vld [vmem:[%s9932 + $0x1ac] sm:$0xff]
      %v10728 = vld [vmem:[%s9932 + $0x1b4] sm:$0xff]
      %v10729 = vld [vmem:[%s9932 + $0x1e4] sm:$0xff]
      %v10730 = vld [vmem:[%s9932 + $0x1ec] sm:$0xff]
      %v10731 = vld [vmem:[%s9932 + $0x21c] sm:$0xff]
      %v10732 = vld [vmem:[%s9932 + $0x224] sm:$0xff]
      %v10733 = vld [vmem:[%s9932 + $0x254] sm:$0xff]
      %v10734 = vld [vmem:[%s9932 + $0x25c] sm:$0xff]
      %v10735 = vld [vmem:[%s9932 + $0x28c] sm:$0xff]
      %v10736 = vld [vmem:[%s9932 + $0x294] sm:$0xff]
      %v10737 = vld [vmem:[%s9932 + $0x2c4] sm:$0xff]
      %v10738 = vld [vmem:[%s9932 + $0x2cc] sm:$0xff]
      %v10739 = vld [vmem:[%s9932 + $0x2fc] sm:$0xff]
      %v10740 = vld [vmem:[%s9932 + $0x304] sm:$0xff]
      %v10741 = vld [vmem:[%s9932 + $0x334] sm:$0xff]
      %v10742 = vld [vmem:[%s9932 + $0x33c] sm:$0xff]
      %v10743 = vld [vmem:[%s9932 + $0x36c] sm:$0xff]
      %v10744 = vld [vmem:[%s9932 + $0x374] sm:$0xff]
      %s10745 = scalar_lea.vmem %s1, 104
      %v10746 = vld [vmem:[%s10745] sm:$0xf]
      %v10748 = vsel %vm293, %v10713, 0
      %v10751 = vsel %vm293, %v10714, 0
      %v10754 = vsel %vm293, %v10715, 0
      %v10757 = vsel %vm293, %v10716, 0
      %v10760 = vsel %vm293, %v10717, 0
      %v10763 = vsel %vm293, %v10718, 0
      %v10766 = vsel %vm293, %v10719, 0
      %v10769 = vsel %vm293, %v10720, 0
      %v10772 = vsel %vm293, %v10721, 0
      %v10775 = vsel %vm293, %v10722, 0
      %v10778 = vsel %vm293, %v10723, 0
      %v10781 = vsel %vm293, %v10724, 0
      %v10784 = vsel %vm293, %v10725, 0
      %v10787 = vsel %vm293, %v10726, 0
      %v10790 = vsel %vm293, %v10727, 0
      %v10793 = vsel %vm293, %v10728, 0
      %v10796 = vsel %vm293, %v10729, 0
      %v10799 = vsel %vm293, %v10730, 0
      %v10802 = vsel %vm293, %v10731, 0
      %v10805 = vsel %vm293, %v10732, 0
      %v10808 = vsel %vm293, %v10733, 0
      %v10811 = vsel %vm293, %v10734, 0
      %v10814 = vsel %vm293, %v10735, 0
      %v10817 = vsel %vm293, %v10736, 0
      %v10820 = vsel %vm293, %v10737, 0
      %v10823 = vsel %vm293, %v10738, 0
      %v10826 = vsel %vm293, %v10739, 0
      %v10829 = vsel %vm293, %v10740, 0
      %v10832 = vsel %vm293, %v10741, 0
      %v10835 = vsel %vm293, %v10742, 0
      %v10838 = vsel %vm293, %v10743, 0
      %v10841 = vsel %vm293, %v10744, 0
      %v10844 = vsel %vm390, %v10746, 0
      %10846 = vmatprep.subr.mxu0 0.0
      %10847 = vmatpush1.msra.mxu0 %v10844
      %10848 = vmatprep.subr.mxu0 0.0
      %10849 = vmatpush1.msra.mxu0 0.0
      %10850 = vmatprep.subr.mxu0 0.0
      %10851 = vmatpush1.msra.mxu0 0.0
      %10852 = vmatprep.subr.mxu0 0.0
      %10853 = vmatpush1.msra.mxu0 0.0
      %10854 = vmatprep.subr.mxu0 0.0
      %10855 = vmatpush1.msra.mxu0 0.0
      %10856 = vmatprep.subr.mxu0 0.0
      %10857 = vmatpush1.msra.mxu0 0.0
      %10858 = vmatprep.subr.mxu0 0.0
      %10859 = vmatpush1.msra.mxu0 0.0
      %10860 = vmatprep.subr.mxu0 0.0
      %10861 = vmatpush1.msra.mxu0 0.0
      %10862 = vmatprep.subr.mxu0 0.0
      %10863 = vmatpush1.msra.mxu0 0.0
      %10864 = vmatprep.subr.mxu0 0.0
      %10865 = vmatpush1.msra.mxu0 0.0
      %10866 = vmatprep.subr.mxu0 0.0
      %10867 = vmatpush1.msra.mxu0 0.0
      %10868 = vmatprep.subr.mxu0 0.0
      %10869 = vmatpush1.msra.mxu0 0.0
      %10870 = vmatprep.subr.mxu0 0.0
      %10871 = vmatpush1.msra.mxu0 0.0
      %10872 = vmatprep.subr.mxu0 0.0
      %10873 = vmatpush1.msra.mxu0 0.0
      %10874 = vmatprep.subr.mxu0 0.0
      %10875 = vmatpush1.msra.mxu0 0.0
      %10876 = vmatprep.subr.mxu0 0.0
      %10877 = vmatpush1.msra.mxu0 0.0
      %10878 = vmatprep.subr.mxu0 0.0
      %10879 = vmatpush1.msra.mxu0 0.0
      %10880 = vmatprep.subr.mxu0 0.0
      %10881 = vmatpush1.msra.mxu0 0.0
      %10882 = vmatprep.subr.mxu0 0.0
      %10883 = vmatpush1.msra.mxu0 0.0
      %10884 = vmatprep.subr.mxu0 0.0
      %10885 = vmatpush1.msra.mxu0 0.0
      %10886 = vmatprep.subr.mxu0 0.0
      %10887 = vmatpush1.msra.mxu0 0.0
      %10888 = vmatprep.subr.mxu0 0.0
      %10889 = vmatpush1.msra.mxu0 0.0
      %10890 = vmatprep.subr.mxu0 0.0
      %10891 = vmatpush1.msra.mxu0 0.0
      %10892 = vmatprep.subr.mxu0 0.0
      %10893 = vmatpush1.msra.mxu0 0.0
      %10894 = vmatprep.subr.mxu0 0.0
      %10895 = vmatpush1.msra.mxu0 0.0
      %10896 = vmatprep.subr.mxu0 0.0
      %10897 = vmatpush1.msra.mxu0 0.0
      %10898 = vmatprep.subr.mxu0 0.0
      %10899 = vmatpush1.msra.mxu0 0.0
      %10900 = vmatprep.subr.mxu0 0.0
      %10901 = vmatpush1.msra.mxu0 0.0
      %10902 = vmatprep.subr.mxu0 0.0
      %10903 = vmatpush1.msra.mxu0 0.0
      %10904 = vmatprep.subr.mxu0 0.0
      %10905 = vmatpush1.msra.mxu0 0.0
      %10906 = vmatprep.subr.mxu0 0.0
      %10907 = vmatpush1.msra.mxu0 0.0
      %10908 = vmatprep.subr.mxu0 0.0
      %10909 = vmatpush1.msra.mxu0 0.0
      %10910 = vmatprep.mubr.f32.mxu0 0.0
      %10911 = vmatmul.mubr.f32.gmra.mrb[0].mxu0 %v10748
      %v10912 = vpop.f32.mrb[0].mxu0
      %v10913 = vadd.f32 0.0, %v10912
      %v10914 = vpop.f32.mrb[0].mxu0
      %10915 = vmatprep.mubr.f32.mxu0 0.0
      %10916 = vmatmul.mubr.f32.gmra.mrb[0].mxu0 %v10751
      %v10917 = vpop.f32.mrb[0].mxu0
      %v10918 = vadd.f32 0.0, %v10917
      %v10919 = vpop.f32.mrb[0].mxu0
      %10920 = vmatprep.mubr.f32.mxu0 0.0
      %10921 = vmatmul.mubr.f32.gmra.mrb[0].mxu0 %v10754
      %v10922 = vpop.f32.mrb[0].mxu0
      %v10923 = vadd.f32 0.0, %v10922
      %v10924 = vpop.f32.mrb[0].mxu0
      %10925 = vmatprep.mubr.f32.mxu0 0.0
      %10926 = vmatmul.mubr.f32.gmra.mrb[0].mxu0 %v10757
      %v10927 = vpop.f32.mrb[0].mxu0
      %v10928 = vadd.f32 0.0, %v10927
      %v10929 = vpop.f32.mrb[0].mxu0
      %10930 = vmatprep.mubr.f32.mxu0 0.0
      %10931 = vmatmul.mubr.f32.gmra.mrb[0].mxu0 %v10760
      %v10932 = vpop.f32.mrb[0].mxu0
      %v10933 = vadd.f32 0.0, %v10932
      %v10934 = vpop.f32.mrb[0].mxu0
      %10935 = vmatprep.mubr.f32.mxu0 0.0
      %10936 = vmatmul.mubr.f32.gmra.mrb[0].mxu0 %v10763
      %v10937 = vpop.f32.mrb[0].mxu0
      %v10938 = vadd.f32 0.0, %v10937
      %v10939 = vpop.f32.mrb[0].mxu0
      %10940 = vmatprep.mubr.f32.mxu0 0.0
      %10941 = vmatmul.mubr.f32.gmra.mrb[0].mxu0 %v10766
      %v10942 = vpop.f32.mrb[0].mxu0
      %v10943 = vadd.f32 0.0, %v10942
      %v10944 = vpop.f32.mrb[0].mxu0
      %10945 = vmatprep.mubr.f32.mxu0 0.0
      %10946 = vmatmul.mubr.f32.gmra.mrb[0].mxu0 %v10769
      %v10947 = vpop.f32.mrb[0].mxu0
      %v10948 = vadd.f32 0.0, %v10947
      %v10949 = vpop.f32.mrb[0].mxu0
      %10950 = vmatprep.mubr.f32.mxu0 0.0
      %10951 = vmatmul.mubr.f32.gmra.mrb[0].mxu0 %v10772
      %v10952 = vpop.f32.mrb[0].mxu0
      %v10953 = vadd.f32 0.0, %v10952
      %v10954 = vpop.f32.mrb[0].mxu0
      %10955 = vmatprep.mubr.f32.mxu0 0.0
      %10956 = vmatmul.mubr.f32.gmra.mrb[0].mxu0 %v10775
      %v10957 = vpop.f32.mrb[0].mxu0
      %v10958 = vadd.f32 0.0, %v10957
      %v10959 = vpop.f32.mrb[0].mxu0
      %10960 = vmatprep.mubr.f32.mxu0 0.0
      %10961 = vmatmul.mubr.f32.gmra.mrb[0].mxu0 %v10778
      %v10962 = vpop.f32.mrb[0].mxu0
      %v10963 = vadd.f32 0.0, %v10962
      %v10964 = vpop.f32.mrb[0].mxu0
      %10965 = vmatprep.mubr.f32.mxu0 0.0
      %10966 = vmatmul.mubr.f32.gmra.mrb[0].mxu0 %v10781
      %v10967 = vpop.f32.mrb[0].mxu0
      %v10968 = vadd.f32 0.0, %v10967
      %v10969 = vpop.f32.mrb[0].mxu0
      %10970 = vmatprep.mubr.f32.mxu0 0.0
      %10971 = vmatmul.mubr.f32.gmra.mrb[0].mxu0 %v10784
      %v10972 = vpop.f32.mrb[0].mxu0
      %v10973 = vadd.f32 0.0, %v10972
      %v10974 = vpop.f32.mrb[0].mxu0
      %10975 = vmatprep.mubr.f32.mxu0 0.0
      %10976 = vmatmul.mubr.f32.gmra.mrb[0].mxu0 %v10787
      %v10977 = vpop.f32.mrb[0].mxu0
      %v10978 = vadd.f32 0.0, %v10977
      %v10979 = vpop.f32.mrb[0].mxu0
      %10980 = vmatprep.mubr.f32.mxu0 0.0
      %10981 = vmatmul.mubr.f32.gmra.mrb[0].mxu0 %v10790
      %v10982 = vpop.f32.mrb[0].mxu0
      %v10983 = vadd.f32 0.0, %v10982
      %v10984 = vpop.f32.mrb[0].mxu0
      %10985 = vmatprep.mubr.f32.mxu0 0.0
      %10986 = vmatmul.mubr.f32.gmra.mrb[0].mxu0 %v10793
      %v10987 = vpop.f32.mrb[0].mxu0
      %v10988 = vadd.f32 0.0, %v10987
      %v10989 = vpop.f32.mrb[0].mxu0
      %10990 = vmatprep.mubr.f32.mxu0 0.0
      %10991 = vmatmul.mubr.f32.gmra.mrb[0].mxu0 %v10796
      %v10992 = vpop.f32.mrb[0].mxu0
      %v10993 = vadd.f32 0.0, %v10992
      %v10994 = vpop.f32.mrb[0].mxu0
      %10995 = vmatprep.mubr.f32.mxu0 0.0
      %10996 = vmatmul.mubr.f32.gmra.mrb[0].mxu0 %v10799
      %v10997 = vpop.f32.mrb[0].mxu0
      %v10998 = vadd.f32 0.0, %v10997
      %v10999 = vpop.f32.mrb[0].mxu0
      %11000 = vmatprep.mubr.f32.mxu0 0.0
      %11001 = vmatmul.mubr.f32.gmra.mrb[0].mxu0 %v10802
      %v11002 = vpop.f32.mrb[0].mxu0
      %v11003 = vadd.f32 0.0, %v11002
      %v11004 = vpop.f32.mrb[0].mxu0
      %11005 = vmatprep.mubr.f32.mxu0 0.0
      %11006 = vmatmul.mubr.f32.gmra.mrb[0].mxu0 %v10805
      %v11007 = vpop.f32.mrb[0].mxu0
      %v11008 = vadd.f32 0.0, %v11007
      %v11009 = vpop.f32.mrb[0].mxu0
      %11010 = vmatprep.mubr.f32.mxu0 0.0
      %11011 = vmatmul.mubr.f32.gmra.mrb[0].mxu0 %v10808
      %v11012 = vpop.f32.mrb[0].mxu0
      %v11013 = vadd.f32 0.0, %v11012
      %v11014 = vpop.f32.mrb[0].mxu0
      %11015 = vmatprep.mubr.f32.mxu0 0.0
      %11016 = vmatmul.mubr.f32.gmra.mrb[0].mxu0 %v10811
      %v11017 = vpop.f32.mrb[0].mxu0
      %v11018 = vadd.f32 0.0, %v11017
      %v11019 = vpop.f32.mrb[0].mxu0
      %11020 = vmatprep.mubr.f32.mxu0 0.0
      %11021 = vmatmul.mubr.f32.gmra.mrb[0].mxu0 %v10814
      %v11022 = vpop.f32.mrb[0].mxu0
      %v11023 = vadd.f32 0.0, %v11022
      %v11024 = vpop.f32.mrb[0].mxu0
      %11025 = vmatprep.mubr.f32.mxu0 0.0
      %11026 = vmatmul.mubr.f32.gmra.mrb[0].mxu0 %v10817
      %v11027 = vpop.f32.mrb[0].mxu0
      %v11028 = vadd.f32 0.0, %v11027
      %v11029 = vpop.f32.mrb[0].mxu0
      %11030 = vmatprep.mubr.f32.mxu0 0.0
      %11031 = vmatmul.mubr.f32.gmra.mrb[0].mxu0 %v10820
      %v11032 = vpop.f32.mrb[0].mxu0
      %v11033 = vadd.f32 0.0, %v11032
      %v11034 = vpop.f32.mrb[0].mxu0
      %11035 = vmatprep.mubr.f32.mxu0 0.0
      %11036 = vmatmul.mubr.f32.gmra.mrb[0].mxu0 %v10823
      %v11037 = vpop.f32.mrb[0].mxu0
      %v11038 = vadd.f32 0.0, %v11037
      %v11039 = vpop.f32.mrb[0].mxu0
      %11040 = vmatprep.mubr.f32.mxu0 0.0
      %11041 = vmatmul.mubr.f32.gmra.mrb[0].mxu0 %v10826
      %v11042 = vpop.f32.mrb[0].mxu0
      %v11043 = vadd.f32 0.0, %v11042
      %v11044 = vpop.f32.mrb[0].mxu0
      %11045 = vmatprep.mubr.f32.mxu0 0.0
      %11046 = vmatmul.mubr.f32.gmra.mrb[0].mxu0 %v10829
      %v11047 = vpop.f32.mrb[0].mxu0
      %v11048 = vadd.f32 0.0, %v11047
      %v11049 = vpop.f32.mrb[0].mxu0
      %11050 = vmatprep.mubr.f32.mxu0 0.0
      %11051 = vmatmul.mubr.f32.gmra.mrb[0].mxu0 %v10832
      %v11052 = vpop.f32.mrb[0].mxu0
      %v11053 = vadd.f32 0.0, %v11052
      %v11054 = vpop.f32.mrb[0].mxu0
      %11055 = vmatprep.mubr.f32.mxu0 0.0
      %11056 = vmatmul.mubr.f32.gmra.mrb[0].mxu0 %v10835
      %v11057 = vpop.f32.mrb[0].mxu0
      %v11058 = vadd.f32 0.0, %v11057
      %v11059 = vpop.f32.mrb[0].mxu0
      %11060 = vmatprep.mubr.f32.mxu0 0.0
      %11061 = vmatmul.mubr.f32.gmra.mrb[0].mxu0 %v10838
      %v11062 = vpop.f32.mrb[0].mxu0
      %v11063 = vadd.f32 0.0, %v11062
      %v11064 = vpop.f32.mrb[0].mxu0
      %11065 = vmatprep.mubr.f32.mxu0 0.0
      %11066 = vmatmul.mubr.f32.gmra.mrb[0].mxu0 %v10841
      %v11067 = vpop.f32.mrb[0].mxu0
      %v11068 = vadd.f32 0.0, %v11067
      %v11069 = vpop.f32.mrb[0].mxu0
      %11070 = vdwg.mxu0
      %v11071 = vadd.f32 %v10681, %v10913
      %v11072 = vadd.f32 %v10682, %v10918
      %v11073 = vadd.f32 %v10683, %v10923
      %v11074 = vadd.f32 %v10684, %v10928
      %v11075 = vadd.f32 %v10685, %v10933
      %v11076 = vadd.f32 %v10686, %v10938
      %v11077 = vadd.f32 %v10687, %v10943
      %v11078 = vadd.f32 %v10688, %v10948
      %v11079 = vadd.f32 %v10689, %v10953
      %v11080 = vadd.f32 %v10690, %v10958
      %v11081 = vadd.f32 %v10691, %v10963
      %v11082 = vadd.f32 %v10692, %v10968
      %v11083 = vadd.f32 %v10693, %v10973
      %v11084 = vadd.f32 %v10694, %v10978
      %v11085 = vadd.f32 %v10695, %v10983
      %v11086 = vadd.f32 %v10696, %v10988
      %v11087 = vadd.f32 %v10697, %v10993
      %v11088 = vadd.f32 %v10698, %v10998
      %v11089 = vadd.f32 %v10699, %v11003
      %v11090 = vadd.f32 %v10700, %v11008
      %v11091 = vadd.f32 %v10701, %v11013
      %v11092 = vadd.f32 %v10702, %v11018
      %v11093 = vadd.f32 %v10703, %v11023
      %v11094 = vadd.f32 %v10704, %v11028
      %v11095 = vadd.f32 %v10705, %v11033
      %v11096 = vadd.f32 %v10706, %v11038
      %v11097 = vadd.f32 %v10707, %v11043
      %v11098 = vadd.f32 %v10708, %v11048
      %v11099 = vadd.f32 %v10709, %v11053
      %v11100 = vadd.f32 %v10710, %v11058
      %v11101 = vadd.f32 %v10711, %v11063
      %v11102 = vadd.f32 %v10712, %v11068
      %s11103 = scalar_lea.vmem %s2, 2
      %v11104 = vld [vmem:[%s11103] sm:$0x1]
      %v11106 = vlaneseq
      %v11107 = vshrl.u32 %v11106, 7
      %v11108 = vsub.s32 0, %v11107
      %v11109 = vrot.slane %v11104, %v11108
      %v11111 = vadd.f32 %v11071, %v11109
      %v11112 = vadd.f32 %v11072, %v11109
      %v11113 = vadd.f32 %v11073, %v11109
      %v11114 = vadd.f32 %v11074, %v11109
      %v11115 = vadd.f32 %v11075, %v11109
      %v11116 = vadd.f32 %v11076, %v11109
      %v11117 = vadd.f32 %v11077, %v11109
      %v11118 = vadd.f32 %v11078, %v11109
      %v11119 = vadd.f32 %v11079, %v11109
      %v11120 = vadd.f32 %v11080, %v11109
      %v11121 = vadd.f32 %v11081, %v11109
      %v11122 = vadd.f32 %v11082, %v11109
      %v11123 = vadd.f32 %v11083, %v11109
      %v11124 = vadd.f32 %v11084, %v11109
      %v11125 = vadd.f32 %v11085, %v11109
      %v11126 = vadd.f32 %v11086, %v11109
      %v11127 = vadd.f32 %v11087, %v11109
      %v11128 = vadd.f32 %v11088, %v11109
      %v11129 = vadd.f32 %v11089, %v11109
      %v11130 = vadd.f32 %v11090, %v11109
      %v11131 = vadd.f32 %v11091, %v11109
      %v11132 = vadd.f32 %v11092, %v11109
      %v11133 = vadd.f32 %v11093, %v11109
      %v11134 = vadd.f32 %v11094, %v11109
      %v11135 = vadd.f32 %v11095, %v11109
      %v11136 = vadd.f32 %v11096, %v11109
      %v11137 = vadd.f32 %v11097, %v11109
      %v11138 = vadd.f32 %v11098, %v11109
      %v11139 = vadd.f32 %v11099, %v11109
      %v11140 = vadd.f32 %v11100, %v11109
      %v11141 = vadd.f32 %v11101, %v11109
      %v11142 = vadd.f32 %v11102, %v11109
      %v11143 = vmax.f32 %v11111, 0.0
      %v11144 = vmax.f32 %v11112, 0.0
      %v11145 = vmax.f32 %v11113, 0.0
      %v11146 = vmax.f32 %v11114, 0.0
      %v11147 = vmax.f32 %v11115, 0.0
      %v11148 = vmax.f32 %v11116, 0.0
      %v11149 = vmax.f32 %v11117, 0.0
      %v11150 = vmax.f32 %v11118, 0.0
      %v11151 = vmax.f32 %v11119, 0.0
      %v11152 = vmax.f32 %v11120, 0.0
      %v11153 = vmax.f32 %v11121, 0.0
      %v11154 = vmax.f32 %v11122, 0.0
      %v11155 = vmax.f32 %v11123, 0.0
      %v11156 = vmax.f32 %v11124, 0.0
      %v11157 = vmax.f32 %v11125, 0.0
      %v11158 = vmax.f32 %v11126, 0.0
      %v11159 = vmax.f32 %v11127, 0.0
      %v11160 = vmax.f32 %v11128, 0.0
      %v11161 = vmax.f32 %v11129, 0.0
      %v11162 = vmax.f32 %v11130, 0.0
      %v11163 = vmax.f32 %v11131, 0.0
      %v11164 = vmax.f32 %v11132, 0.0
      %v11165 = vmax.f32 %v11133, 0.0
      %v11166 = vmax.f32 %v11134, 0.0
      %v11167 = vmax.f32 %v11135, 0.0
      %v11168 = vmax.f32 %v11136, 0.0
      %v11169 = vmax.f32 %v11137, 0.0
      %v11170 = vmax.f32 %v11138, 0.0
      %v11171 = vmax.f32 %v11139, 0.0
      %v11172 = vmax.f32 %v11140, 0.0
      %v11173 = vmax.f32 %v11141, 0.0
      %v11174 = vmax.f32 %v11142, 0.0
      %s11175 = scalar_lea.vmem %s3, 16
      %v11176 = vld [vmem:[%s11175] sm:$0xff]
      %v11178 = vsel %vm7141, %v11143, 0
      %v11181 = vsel %vm7141, %v11144, 0
      %v11184 = vsel %vm7141, %v11145, 0
      %v11187 = vsel %vm7141, %v11146, 0
      %v11190 = vsel %vm7141, %v11147, 0
      %v11193 = vsel %vm7141, %v11148, 0
      %v11196 = vsel %vm7141, %v11149, 0
      %v11199 = vsel %vm7141, %v11150, 0
      %v11202 = vsel %vm7141, %v11151, 0
      %v11205 = vsel %vm7141, %v11152, 0
      %v11208 = vsel %vm7141, %v11153, 0
      %v11211 = vsel %vm7141, %v11154, 0
      %v11214 = vsel %vm7141, %v11155, 0
      %v11217 = vsel %vm7141, %v11156, 0
      %v11220 = vsel %vm7141, %v11157, 0
      %v11223 = vsel %vm7141, %v11158, 0
      %v11226 = vsel %vm7141, %v11159, 0
      %v11229 = vsel %vm7141, %v11160, 0
      %v11232 = vsel %vm7141, %v11161, 0
      %v11235 = vsel %vm7141, %v11162, 0
      %v11238 = vsel %vm7141, %v11163, 0
      %v11241 = vsel %vm7141, %v11164, 0
      %v11244 = vsel %vm7141, %v11165, 0
      %v11247 = vsel %vm7141, %v11166, 0
      %v11250 = vsel %vm7141, %v11167, 0
      %v11253 = vsel %vm7141, %v11168, 0
      %v11256 = vsel %vm7141, %v11169, 0
      %v11259 = vsel %vm7141, %v11170, 0
      %v11262 = vsel %vm7141, %v11171, 0
      %v11265 = vsel %vm7141, %v11172, 0
      %v11268 = vsel %vm7141, %v11173, 0
      %v11271 = vsel %vm7141, %v11174, 0
      %11273 = vmatprep.subr.mxu0 0.0
      %11274 = vmatpush1.msra.mxu0 %v11176
      %11275 = vmatprep.subr.mxu0 0.0
      %11276 = vmatpush1.msra.mxu0 0.0
      %11277 = vmatprep.subr.mxu0 0.0
      %11278 = vmatpush1.msra.mxu0 0.0
      %11279 = vmatprep.subr.mxu0 0.0
      %11280 = vmatpush1.msra.mxu0 0.0
      %11281 = vmatprep.subr.mxu0 0.0
      %11282 = vmatpush1.msra.mxu0 0.0
      %11283 = vmatprep.subr.mxu0 0.0
      %11284 = vmatpush1.msra.mxu0 0.0
      %11285 = vmatprep.subr.mxu0 0.0
      %11286 = vmatpush1.msra.mxu0 0.0
      %11287 = vmatprep.subr.mxu0 0.0
      %11288 = vmatpush1.msra.mxu0 0.0
      %11289 = vmatprep.subr.mxu0 0.0
      %11290 = vmatpush1.msra.mxu0 0.0
      %11291 = vmatprep.subr.mxu0 0.0
      %11292 = vmatpush1.msra.mxu0 0.0
      %11293 = vmatprep.subr.mxu0 0.0
      %11294 = vmatpush1.msra.mxu0 0.0
      %11295 = vmatprep.subr.mxu0 0.0
      %11296 = vmatpush1.msra.mxu0 0.0
      %11297 = vmatprep.subr.mxu0 0.0
      %11298 = vmatpush1.msra.mxu0 0.0
      %11299 = vmatprep.subr.mxu0 0.0
      %11300 = vmatpush1.msra.mxu0 0.0
      %11301 = vmatprep.subr.mxu0 0.0
      %11302 = vmatpush1.msra.mxu0 0.0
      %11303 = vmatprep.subr.mxu0 0.0
      %11304 = vmatpush1.msra.mxu0 0.0
      %11305 = vmatprep.subr.mxu0 0.0
      %11306 = vmatpush1.msra.mxu0 0.0
      %11307 = vmatprep.subr.mxu0 0.0
      %11308 = vmatpush1.msra.mxu0 0.0
      %11309 = vmatprep.subr.mxu0 0.0
      %11310 = vmatpush1.msra.mxu0 0.0
      %11311 = vmatprep.subr.mxu0 0.0
      %11312 = vmatpush1.msra.mxu0 0.0
      %11313 = vmatprep.subr.mxu0 0.0
      %11314 = vmatpush1.msra.mxu0 0.0
      %11315 = vmatprep.subr.mxu0 0.0
      %11316 = vmatpush1.msra.mxu0 0.0
      %11317 = vmatprep.subr.mxu0 0.0
      %11318 = vmatpush1.msra.mxu0 0.0
      %11319 = vmatprep.subr.mxu0 0.0
      %11320 = vmatpush1.msra.mxu0 0.0
      %11321 = vmatprep.subr.mxu0 0.0
      %11322 = vmatpush1.msra.mxu0 0.0
      %11323 = vmatprep.subr.mxu0 0.0
      %11324 = vmatpush1.msra.mxu0 0.0
      %11325 = vmatprep.subr.mxu0 0.0
      %11326 = vmatpush1.msra.mxu0 0.0
      %11327 = vmatprep.subr.mxu0 0.0
      %11328 = vmatpush1.msra.mxu0 0.0
      %11329 = vmatprep.subr.mxu0 0.0
      %11330 = vmatpush1.msra.mxu0 0.0
      %11331 = vmatprep.subr.mxu0 0.0
      %11332 = vmatpush1.msra.mxu0 0.0
      %11333 = vmatprep.subr.mxu0 0.0
      %11334 = vmatpush1.msra.mxu0 0.0
      %11335 = vmatprep.subr.mxu0 0.0
      %11336 = vmatpush1.msra.mxu0 0.0
      %11337 = vmatprep.mubr.f32.mxu0 0.0
      %11338 = vmatmul.mubr.f32.gmra.mrb[0].mxu0 %v11178
      %v11339 = vpop.f32.mrb[0].mxu0
      %v11340 = vadd.f32 0.0, %v11339
      %v11341 = vpop.f32.mrb[0].mxu0
      %11342 = vmatprep.mubr.f32.mxu0 0.0
      %11343 = vmatmul.mubr.f32.gmra.mrb[0].mxu0 %v11181
      %v11344 = vpop.f32.mrb[0].mxu0
      %v11345 = vadd.f32 0.0, %v11344
      %v11346 = vpop.f32.mrb[0].mxu0
      %11347 = vmatprep.mubr.f32.mxu0 0.0
      %11348 = vmatmul.mubr.f32.gmra.mrb[0].mxu0 %v11184
      %v11349 = vpop.f32.mrb[0].mxu0
      %v11350 = vadd.f32 0.0, %v11349
      %v11351 = vpop.f32.mrb[0].mxu0
      %11352 = vmatprep.mubr.f32.mxu0 0.0
      %11353 = vmatmul.mubr.f32.gmra.mrb[0].mxu0 %v11187
      %v11354 = vpop.f32.mrb[0].mxu0
      %v11355 = vadd.f32 0.0, %v11354
      %v11356 = vpop.f32.mrb[0].mxu0
      %11357 = vmatprep.mubr.f32.mxu0 0.0
      %11358 = vmatmul.mubr.f32.gmra.mrb[0].mxu0 %v11190
      %v11359 = vpop.f32.mrb[0].mxu0
      %v11360 = vadd.f32 0.0, %v11359
      %v11361 = vpop.f32.mrb[0].mxu0
      %11362 = vmatprep.mubr.f32.mxu0 0.0
      %11363 = vmatmul.mubr.f32.gmra.mrb[0].mxu0 %v11193
      %v11364 = vpop.f32.mrb[0].mxu0
      %v11365 = vadd.f32 0.0, %v11364
      %v11366 = vpop.f32.mrb[0].mxu0
      %11367 = vmatprep.mubr.f32.mxu0 0.0
      %11368 = vmatmul.mubr.f32.gmra.mrb[0].mxu0 %v11196
      %v11369 = vpop.f32.mrb[0].mxu0
      %v11370 = vadd.f32 0.0, %v11369
      %v11371 = vpop.f32.mrb[0].mxu0
      %11372 = vmatprep.mubr.f32.mxu0 0.0
      %11373 = vmatmul.mubr.f32.gmra.mrb[0].mxu0 %v11199
      %v11374 = vpop.f32.mrb[0].mxu0
      %v11375 = vadd.f32 0.0, %v11374
      %v11376 = vpop.f32.mrb[0].mxu0
      %11377 = vmatprep.mubr.f32.mxu0 0.0
      %11378 = vmatmul.mubr.f32.gmra.mrb[0].mxu0 %v11202
      %v11379 = vpop.f32.mrb[0].mxu0
      %v11380 = vadd.f32 0.0, %v11379
      %v11381 = vpop.f32.mrb[0].mxu0
      %11382 = vmatprep.mubr.f32.mxu0 0.0
      %11383 = vmatmul.mubr.f32.gmra.mrb[0].mxu0 %v11205
      %v11384 = vpop.f32.mrb[0].mxu0
      %v11385 = vadd.f32 0.0, %v11384
      %v11386 = vpop.f32.mrb[0].mxu0
      %11387 = vmatprep.mubr.f32.mxu0 0.0
      %11388 = vmatmul.mubr.f32.gmra.mrb[0].mxu0 %v11208
      %v11389 = vpop.f32.mrb[0].mxu0
      %v11390 = vadd.f32 0.0, %v11389
      %v11391 = vpop.f32.mrb[0].mxu0
      %11392 = vmatprep.mubr.f32.mxu0 0.0
      %11393 = vmatmul.mubr.f32.gmra.mrb[0].mxu0 %v11211
      %v11394 = vpop.f32.mrb[0].mxu0
      %v11395 = vadd.f32 0.0, %v11394
      %v11396 = vpop.f32.mrb[0].mxu0
      %11397 = vmatprep.mubr.f32.mxu0 0.0
      %11398 = vmatmul.mubr.f32.gmra.mrb[0].mxu0 %v11214
      %v11399 = vpop.f32.mrb[0].mxu0
      %v11400 = vadd.f32 0.0, %v11399
      %v11401 = vpop.f32.mrb[0].mxu0
      %11402 = vmatprep.mubr.f32.mxu0 0.0
      %11403 = vmatmul.mubr.f32.gmra.mrb[0].mxu0 %v11217
      %v11404 = vpop.f32.mrb[0].mxu0
      %v11405 = vadd.f32 0.0, %v11404
      %v11406 = vpop.f32.mrb[0].mxu0
      %11407 = vmatprep.mubr.f32.mxu0 0.0
      %11408 = vmatmul.mubr.f32.gmra.mrb[0].mxu0 %v11220
      %v11409 = vpop.f32.mrb[0].mxu0
      %v11410 = vadd.f32 0.0, %v11409
      %v11411 = vpop.f32.mrb[0].mxu0
      %11412 = vmatprep.mubr.f32.mxu0 0.0
      %11413 = vmatmul.mubr.f32.gmra.mrb[0].mxu0 %v11223
      %v11414 = vpop.f32.mrb[0].mxu0
      %v11415 = vadd.f32 0.0, %v11414
      %v11416 = vpop.f32.mrb[0].mxu0
      %11417 = vmatprep.mubr.f32.mxu0 0.0
      %11418 = vmatmul.mubr.f32.gmra.mrb[0].mxu0 %v11226
      %v11419 = vpop.f32.mrb[0].mxu0
      %v11420 = vadd.f32 0.0, %v11419
      %v11421 = vpop.f32.mrb[0].mxu0
      %11422 = vmatprep.mubr.f32.mxu0 0.0
      %11423 = vmatmul.mubr.f32.gmra.mrb[0].mxu0 %v11229
      %v11424 = vpop.f32.mrb[0].mxu0
      %v11425 = vadd.f32 0.0, %v11424
      %v11426 = vpop.f32.mrb[0].mxu0
      %11427 = vmatprep.mubr.f32.mxu0 0.0
      %11428 = vmatmul.mubr.f32.gmra.mrb[0].mxu0 %v11232
      %v11429 = vpop.f32.mrb[0].mxu0
      %v11430 = vadd.f32 0.0, %v11429
      %v11431 = vpop.f32.mrb[0].mxu0
      %11432 = vmatprep.mubr.f32.mxu0 0.0
      %11433 = vmatmul.mubr.f32.gmra.mrb[0].mxu0 %v11235
      %v11434 = vpop.f32.mrb[0].mxu0
      %v11435 = vadd.f32 0.0, %v11434
      %v11436 = vpop.f32.mrb[0].mxu0
      %11437 = vmatprep.mubr.f32.mxu0 0.0
      %11438 = vmatmul.mubr.f32.gmra.mrb[0].mxu0 %v11238
      %v11439 = vpop.f32.mrb[0].mxu0
      %v11440 = vadd.f32 0.0, %v11439
      %v11441 = vpop.f32.mrb[0].mxu0
      %11442 = vmatprep.mubr.f32.mxu0 0.0
      %11443 = vmatmul.mubr.f32.gmra.mrb[0].mxu0 %v11241
      %v11444 = vpop.f32.mrb[0].mxu0
      %v11445 = vadd.f32 0.0, %v11444
      %v11446 = vpop.f32.mrb[0].mxu0
      %11447 = vmatprep.mubr.f32.mxu0 0.0
      %11448 = vmatmul.mubr.f32.gmra.mrb[0].mxu0 %v11244
      %v11449 = vpop.f32.mrb[0].mxu0
      %v11450 = vadd.f32 0.0, %v11449
      %v11451 = vpop.f32.mrb[0].mxu0
      %11452 = vmatprep.mubr.f32.mxu0 0.0
      %11453 = vmatmul.mubr.f32.gmra.mrb[0].mxu0 %v11247
      %v11454 = vpop.f32.mrb[0].mxu0
      %v11455 = vadd.f32 0.0, %v11454
      %v11456 = vpop.f32.mrb[0].mxu0
      %11457 = vmatprep.mubr.f32.mxu0 0.0
      %11458 = vmatmul.mubr.f32.gmra.mrb[0].mxu0 %v11250
      %v11459 = vpop.f32.mrb[0].mxu0
      %v11460 = vadd.f32 0.0, %v11459
      %v11461 = vpop.f32.mrb[0].mxu0
      %11462 = vmatprep.mubr.f32.mxu0 0.0
      %11463 = vmatmul.mubr.f32.gmra.mrb[0].mxu0 %v11253
      %v11464 = vpop.f32.mrb[0].mxu0
      %v11465 = vadd.f32 0.0, %v11464
      %v11466 = vpop.f32.mrb[0].mxu0
      %11467 = vmatprep.mubr.f32.mxu0 0.0
      %11468 = vmatmul.mubr.f32.gmra.mrb[0].mxu0 %v11256
      %v11469 = vpop.f32.mrb[0].mxu0
      %v11470 = vadd.f32 0.0, %v11469
      %v11471 = vpop.f32.mrb[0].mxu0
      %11472 = vmatprep.mubr.f32.mxu0 0.0
      %11473 = vmatmul.mubr.f32.gmra.mrb[0].mxu0 %v11259
      %v11474 = vpop.f32.mrb[0].mxu0
      %v11475 = vadd.f32 0.0, %v11474
      %v11476 = vpop.f32.mrb[0].mxu0
      %11477 = vmatprep.mubr.f32.mxu0 0.0
      %11478 = vmatmul.mubr.f32.gmra.mrb[0].mxu0 %v11262
      %v11479 = vpop.f32.mrb[0].mxu0
      %v11480 = vadd.f32 0.0, %v11479
      %v11481 = vpop.f32.mrb[0].mxu0
      %11482 = vmatprep.mubr.f32.mxu0 0.0
      %11483 = vmatmul.mubr.f32.gmra.mrb[0].mxu0 %v11265
      %v11484 = vpop.f32.mrb[0].mxu0
      %v11485 = vadd.f32 0.0, %v11484
      %v11486 = vpop.f32.mrb[0].mxu0
      %11487 = vmatprep.mubr.f32.mxu0 0.0
      %11488 = vmatmul.mubr.f32.gmra.mrb[0].mxu0 %v11268
      %v11489 = vpop.f32.mrb[0].mxu0
      %v11490 = vadd.f32 0.0, %v11489
      %v11491 = vpop.f32.mrb[0].mxu0
      %11492 = vmatprep.mubr.f32.mxu0 0.0
      %11493 = vmatmul.mubr.f32.gmra.mrb[0].mxu0 %v11271
      %v11494 = vpop.f32.mrb[0].mxu0
      %v11495 = vadd.f32 0.0, %v11494
      %v11496 = vpop.f32.mrb[0].mxu0
      %11497 = vdwg.mxu0
      %v11498 = vadd.f32 %v7626, %v11340
      %v11499 = vadd.f32 %v7631, %v11345
      %v11500 = vadd.f32 %v7636, %v11350
      %v11501 = vadd.f32 %v7641, %v11355
      %v11502 = vadd.f32 %v7646, %v11360
      %v11503 = vadd.f32 %v7651, %v11365
      %v11504 = vadd.f32 %v7656, %v11370
      %v11505 = vadd.f32 %v7661, %v11375
      %v11506 = vadd.f32 %v7666, %v11380
      %v11507 = vadd.f32 %v7671, %v11385
      %v11508 = vadd.f32 %v7676, %v11390
      %v11509 = vadd.f32 %v7681, %v11395
      %v11510 = vadd.f32 %v7686, %v11400
      %v11511 = vadd.f32 %v7691, %v11405
      %v11512 = vadd.f32 %v7696, %v11410
      %v11513 = vadd.f32 %v7701, %v11415
      %v11514 = vadd.f32 %v7706, %v11420
      %v11515 = vadd.f32 %v7711, %v11425
      %v11516 = vadd.f32 %v7716, %v11430
      %v11517 = vadd.f32 %v7721, %v11435
      %v11518 = vadd.f32 %v7726, %v11440
      %v11519 = vadd.f32 %v7731, %v11445
      %v11520 = vadd.f32 %v7736, %v11450
      %v11521 = vadd.f32 %v7741, %v11455
      %v11522 = vadd.f32 %v7746, %v11460
      %v11523 = vadd.f32 %v7751, %v11465
      %v11524 = vadd.f32 %v7756, %v11470
      %v11525 = vadd.f32 %v7761, %v11475
      %v11526 = vadd.f32 %v7766, %v11480
      %v11527 = vadd.f32 %v7771, %v11485
      %v11528 = vadd.f32 %v7776, %v11490
      %v11529 = vadd.f32 %v7781, %v11495
      %v11530 = vld [vmem:[%s4] sm:$0x1]
      %v11532 = vlaneseq
      %v11533 = vshrl.u32 %v11532, 7
      %v11534 = vsub.s32 0, %v11533
      %v11535 = vrot.slane %v11530, %v11534
      %v11537 = vadd.f32 %v11498, %v11535
      %v11538 = vadd.f32 %v11499, %v11535
      %v11539 = vadd.f32 %v11500, %v11535
      %v11540 = vadd.f32 %v11501, %v11535
      %v11541 = vadd.f32 %v11502, %v11535
      %v11542 = vadd.f32 %v11503, %v11535
      %v11543 = vadd.f32 %v11504, %v11535
      %v11544 = vadd.f32 %v11505, %v11535
      %v11545 = vadd.f32 %v11506, %v11535
      %v11546 = vadd.f32 %v11507, %v11535
      %v11547 = vadd.f32 %v11508, %v11535
      %v11548 = vadd.f32 %v11509, %v11535
      %v11549 = vadd.f32 %v11510, %v11535
      %v11550 = vadd.f32 %v11511, %v11535
      %v11551 = vadd.f32 %v11512, %v11535
      %v11552 = vadd.f32 %v11513, %v11535
      %v11553 = vadd.f32 %v11514, %v11535
      %v11554 = vadd.f32 %v11515, %v11535
      %v11555 = vadd.f32 %v11516, %v11535
      %v11556 = vadd.f32 %v11517, %v11535
      %v11557 = vadd.f32 %v11518, %v11535
      %v11558 = vadd.f32 %v11519, %v11535
      %v11559 = vadd.f32 %v11520, %v11535
      %v11560 = vadd.f32 %v11521, %v11535
      %v11561 = vadd.f32 %v11522, %v11535
      %v11562 = vadd.f32 %v11523, %v11535
      %v11563 = vadd.f32 %v11524, %v11535
      %v11564 = vadd.f32 %v11525, %v11535
      %v11565 = vadd.f32 %v11526, %v11535
      %v11566 = vadd.f32 %v11527, %v11535
      %v11567 = vadd.f32 %v11528, %v11535
      %v11568 = vadd.f32 %v11529, %v11535
      %11569 = vst.msk [vmem:[%s224] sm:$0xff] %vm7141, %v11537
      %11570 = vst.msk [vmem:[%s224 + $0x8] sm:$0xff] %vm7141, %v11538
      %11571 = vst.msk [vmem:[%s224 + $0x10] sm:$0xff] %vm7141, %v11539
      %11572 = vst.msk [vmem:[%s224 + $0x18] sm:$0xff] %vm7141, %v11540
      %11573 = vst.msk [vmem:[%s224 + $0x20] sm:$0xff] %vm7141, %v11541
      %11574 = vst.msk [vmem:[%s224 + $0x28] sm:$0xff] %vm7141, %v11542
      %11575 = vst.msk [vmem:[%s224 + $0x30] sm:$0xff] %vm7141, %v11543
      %11576 = vst.msk [vmem:[%s224 + $0x38] sm:$0xff] %vm7141, %v11544
      %11577 = vst.msk [vmem:[%s224 + $0x40] sm:$0xff] %vm7141, %v11545
      %11578 = vst.msk [vmem:[%s224 + $0x48] sm:$0xff] %vm7141, %v11546
      %11579 = vst.msk [vmem:[%s224 + $0x50] sm:$0xff] %vm7141, %v11547
      %11580 = vst.msk [vmem:[%s224 + $0x58] sm:$0xff] %vm7141, %v11548
      %11581 = vst.msk [vmem:[%s224 + $0x60] sm:$0xff] %vm7141, %v11549
      %11582 = vst.msk [vmem:[%s224 + $0x68] sm:$0xff] %vm7141, %v11550
      %11583 = vst.msk [vmem:[%s224 + $0x70] sm:$0xff] %vm7141, %v11551
      %11584 = vst.msk [vmem:[%s224 + $0x78] sm:$0xff] %vm7141, %v11552
      %11585 = vst.msk [vmem:[%s224 + $0x80] sm:$0xff] %vm7141, %v11553
      %11586 = vst.msk [vmem:[%s224 + $0x88] sm:$0xff] %vm7141, %v11554
      %11587 = vst.msk [vmem:[%s224 + $0x90] sm:$0xff] %vm7141, %v11555
      %11588 = vst.msk [vmem:[%s224 + $0x98] sm:$0xff] %vm7141, %v11556
      %11589 = vst.msk [vmem:[%s224 + $0xa0] sm:$0xff] %vm7141, %v11557
      %11590 = vst.msk [vmem:[%s224 + $0xa8] sm:$0xff] %vm7141, %v11558
      %11591 = vst.msk [vmem:[%s224 + $0xb0] sm:$0xff] %vm7141, %v11559
      %11592 = vst.msk [vmem:[%s224 + $0xb8] sm:$0xff] %vm7141, %v11560
      %11593 = vst.msk [vmem:[%s224 + $0xc0] sm:$0xff] %vm7141, %v11561
      %11594 = vst.msk [vmem:[%s224 + $0xc8] sm:$0xff] %vm7141, %v11562
      %11595 = vst.msk [vmem:[%s224 + $0xd0] sm:$0xff] %vm7141, %v11563
      %11596 = vst.msk [vmem:[%s224 + $0xd8] sm:$0xff] %vm7141, %v11564
      %11597 = vst.msk [vmem:[%s224 + $0xe0] sm:$0xff] %vm7141, %v11565
      %11598 = vst.msk [vmem:[%s224 + $0xe8] sm:$0xff] %vm7141, %v11566
      %11599 = vst.msk [vmem:[%s224 + $0xf0] sm:$0xff] %vm7141, %v11567
      %11600 = vst.msk [vmem:[%s224 + $0xf8] sm:$0xff] %vm7141, %v11568
      %p11601 = scmp.lt.s32.totalorder %s16, 1
      %s11602 = scalar_select %p11601, %s16, 1
      %s11603 = smul.addr %s11602, 32
      %s11604 = smul.addr %s11603, 8
      %s11605 = scalar_lea.vmem %s5, %s11604
      // Predicated region
      $region41: #{tpu_custom_call.1} parent=39 // pred_check
        %p11606 = pneg %p144
      $region42: #{tpu_custom_call.1} parent=39 // pred_check_branch
        %11608 = sbr.rel (%p11606) target = $region44
      $region43: #{tpu_custom_call.1} parent=39 // pred_region
        _
      $region44: #{tpu_custom_call.1} parent=39 // pred_fallthru
        _
    $region40: #{tpu_custom_call.1} parent=5 // pred_fallthru
      _
    %p11609 = scmp.le.s32.totalorder 2, %s11
    // Predicated region
    $region45: #{tpu_custom_call.1} parent=5 // pred_check
      %p11610 = pneg %p11609
    $region46: #{tpu_custom_call.1} parent=5 // pred_check_branch
      %11612 = sbr.rel (%p11610) target = $region48
    $region47: #{tpu_custom_call.1} parent=5 // pred_region
      %s11613 = ssub.s32 %s11, 2
      // Predicated region
      $region49: #{tpu_custom_call.1} parent=47 // pred_check
        %p11614 = pneg %p150
      $region50: #{tpu_custom_call.1} parent=47 // pred_check_branch
        %11616 = sbr.rel (%p11614) target = $region52
      $region51: #{tpu_custom_call.1} parent=47 // pred_region
        %p11617 = scmp.lt.s32.totalorder %s17, 1
        %s11618 = scalar_select %p11617, %s17, 1
        %s11619 = smul.addr %s11618, 32
        %s11620 = smul.addr %s11619, 8
        %s11621 = scalar_lea.vmem %s5, %s11620
      $region52: #{tpu_custom_call.1} parent=47 // pred_fallthru
        _
    $region48: #{tpu_custom_call.1} parent=5 // pred_fallthru
      _
  $region6: #{tpu_custom_call.1} parent=0 // loop_footer
    %s15 = sadd.s32 1, %s11
  $region7: #{tpu_custom_call.1} parent=0 // loop_footer_branch
    %10 = sbr.rel target = $region3
  $region8: #{tpu_custom_call.1} parent=0 // loop_exit
    _

</llo_original>
